<compile_context>
chip_gen: v6e
topology: v6e:2x2x1
jax: 0.10.0
libtpu: 0.0.40
codegen_flags: <defaults>
</compile_context>

<pallas_src>
import functools

import jax
import jax.numpy as jnp
from jax import lax
from jax.experimental import pallas as pl
from jax.experimental.pallas import tpu as pltpu


# --------------------------------------------------------------------------- #
# Pallas kernel: one full sample (T, H, W, C) per grid step.
# --------------------------------------------------------------------------- #
def _cot_kernel(x_ref, wk_ref, bk_ref, we1_ref, be1_ref, we2_ref, be2_ref,
                gng_ref, gnb_ref, gm_ref, wc1_ref, bc1_ref, bns_ref, bnt_ref,
                ws1_ref, bs1_ref, ws2_ref, bs2_ref, out_ref, *, T, H, W, C):
    f32 = jnp.float32
    S = H * W
    Cwc = C // 8            # local-conv weight channels == GroupNorm groups
    share = C // Cwc        # = 8 (share_planes)

    x = x_ref[0].astype(f32)                                  # (T, H, W, C)

    # ---------- helpers ----------
    def pad_hw(a):                                            # (T,H,W,C)->(T,H+2,W+2,C)
        zc = jnp.zeros((T, H, 1, C), f32)
        a = jnp.concatenate([zc, a, zc], axis=2)
        zr = jnp.zeros((T, 1, W + 2, C), f32)
        return jnp.concatenate([zr, a, zr], axis=1)

    def tconv(a, w, b):
        # temporal (3,1,1) conv as ONE matmul with K = 3*Cin.
        # a: (T, S_, Cin), w: (3*Cin, Cout), b: (1, Cout) -> (T*S_, Cout)
        S_, Ci = a.shape[1], a.shape[2]
        z = jnp.zeros((1, S_, Ci), f32)
        a_prev = jnp.concatenate([z, a[:-1]], axis=0)         # value at t-1
        a_next = jnp.concatenate([a[1:], z], axis=0)          # value at t+1
        cat = jnp.concatenate([a_prev, a, a_next], axis=-1)   # (T, S_, 3*Ci)
        return jnp.dot(cat.reshape(T * S_, 3 * Ci), w,
                       preferred_element_type=f32) + b

    # ---------- key_embed: 3x3x3 grouped conv (+folded BN) + ReLU ----------
    xp = pad_hw(x)                                            # (T, H+2, W+2, C)
    zt = jnp.zeros((1, H + 2, W + 2, C), f32)
    xp = jnp.concatenate([zt, xp, zt], axis=0)                # (T+2, H+2, W+2, C)
    k_acc = jnp.zeros((T * S, C), f32)
    for dt in range(3):                                       # 3 temporal taps
        slabs = [xp[dt:dt + T, dh:dh + H, dw:dw + W, :].reshape(T * S, C)
                 for dh in range(3) for dw in range(3)]
        slab = jnp.concatenate(slabs, axis=-1)                # (T*S, 9*C), K fused
        k_acc = k_acc + jnp.dot(slab, wk_ref[dt],
                                preferred_element_type=f32)
    k = jnp.maximum(k_acc + bk_ref[...], 0.0)                 # (T*S, C)

    # ---------- embed(qk): two temporal convs + GroupNorm ----------
    x_flat = x.reshape(T * S, C)
    qk = jnp.concatenate([x_flat, k], axis=-1).reshape(T, S, 2 * C)
    y1 = jnp.maximum(tconv(qk, we1_ref[...], be1_ref[...]), 0.0)      # (T*S, C//2)
    y2 = tconv(y1.reshape(T, S, C // 2), we2_ref[...], be2_ref[...])  # (T*S, 9*Cwc)

    # GroupNorm: channels were pre-permuted to kk-major, so group = channel % Cwc.
    # Per-group sums done as a single tiny matmul against a 0/1 membership matrix.
    n_grp = float(T * S * 9)
    s1 = jnp.dot(jnp.sum(y2, axis=0, keepdims=True), gm_ref[...],
                 preferred_element_type=f32)                   # (1, Cwc) group sums
    mu_g = s1 / n_grp
    mu_c = jnp.concatenate([mu_g] * 9, axis=-1)                # scatter back (1, 9*Cwc)
    d = y2 - mu_c
    s2 = jnp.dot(jnp.sum(d * d, axis=0, keepdims=True), gm_ref[...],
                 preferred_element_type=f32)
    inv_g = lax.rsqrt(s2 / n_grp + 1e-5)
    inv_c = jnp.concatenate([inv_g] * 9, axis=-1)
    w_loc = d * inv_c * gng_ref[...] + gnb_ref[...]            # (T*S, 9*Cwc)

    # ---------- conv1x1 branch (temporal conv, folded BN) ----------
    x1 = tconv(x.reshape(T, S, C), wc1_ref[...], bc1_ref[...])  # (T*S, C)

    # ---------- local_conv (CotNet aggregation, 3x3 spatial) ----------
    x1p = pad_hw(x1.reshape(T, H, W, C))                        # (T, H+2, W+2, C)
    agg = jnp.zeros((T * S, C), f32)
    for kh in range(3):
        for kw in range(3):
            kk = kh * 3 + kw
            wblk = w_loc[:, kk * Cwc:(kk + 1) * Cwc]            # (T*S, Cwc)
            wexp = jnp.concatenate([wblk] * share, axis=-1)     # channel c -> c % Cwc
            xs = x1p[:, kh:kh + H, kw:kw + W, :].reshape(T * S, C)
            agg = agg + xs * wexp

    # ---------- bn (folded) + swish ----------
    a = agg * bns_ref[...] + bnt_ref[...]
    x2 = a * jax.nn.sigmoid(a)                                  # (T*S, C), EUP exp

    # ---------- SE attention over radix = {x2, k} ----------
    gap = jnp.mean((x2 + k).reshape(T, S, C), axis=1)           # (T, C)
    h1 = jnp.maximum(tconv(gap.reshape(T, 1, C),
                           ws1_ref[...], bs1_ref[...]), 0.0)    # (T, attn_chs)
    attn = tconv(h1.reshape(T, 1, h1.shape[-1]),
                 ws2_ref[...], bs2_ref[...])                    # (T, 2C), even/odd split
    a0 = attn[:, :C]
    a1 = attn[:, C:]
    m = jnp.maximum(a0, a1)
    e0 = jnp.exp(a0 - m)
    e1 = jnp.exp(a1 - m)
    inv = 1.0 / (e0 + e1)
    p0 = (e0 * inv)[:, None, :]                                 # (T, 1, C)
    p1 = (e1 * inv)[:, None, :]

    out = x2.reshape(T, S, C) * p0 + k.reshape(T, S, C) * p1
    out_ref[0] = out.reshape(T, H, W, C).astype(out_ref.dtype)


# --------------------------------------------------------------------------- #
# Host-side parameter preparation (BN folding, layout/permutation plumbing).
# --------------------------------------------------------------------------- #
def _prep_kernel_inputs(p, C):
    eps = 1e-5
    Cwc = C // 8
    Cw = 9 * Cwc
    Cm = C // 2
    A = p['se1_w'].shape[0]

    def bn_fold(gamma, beta, mean, var):
        s = gamma / jnp.sqrt(var + eps)
        return s, beta - mean * s

    def tmat(w):  # torch (Cout, Cin, 3, 1, 1) -> (3*Cin, Cout)
        co, ci = w.shape[0], w.shape[1]
        return jnp.transpose(w.reshape(co, ci, 3), (2, 1, 0)).reshape(3 * ci, co)

    # key_embed: grouped 3x3x3 conv as dense block-diagonal taps, BN folded
    groups, cg = 4, C // 4
    dense = jnp.zeros((3, 3, 3, C, C), jnp.float32)
    for gi in range(groups):
        blk = jnp.transpose(p['key_w'][gi * cg:(gi + 1) * cg], (2, 3, 4, 1, 0))
        dense = dense.at[:, :, :, gi * cg:(gi + 1) * cg,
                         gi * cg:(gi + 1) * cg].set(blk)
    s, t = bn_fold(p['key_bn_g'], p['key_bn_b'], p['key_bn_m'], p['key_bn_v'])
    wk = (dense * s).reshape(3, 9 * C, C)
    bk = t.reshape(1, C)

    # embed conv1 (+BN)
    s, t = bn_fold(p['e1_bn_g'], p['e1_bn_b'], p['e1_bn_m'], p['e1_bn_v'])
    we1 = tmat(p['e1_w']) * s
    be1 = t.reshape(1, Cm)

    # embed conv2 (+bias); output channels permuted to kk-major (kk*Cwc + wc)
    perm_w = jnp.array([(j % Cwc) * 9 + (j // Cwc) for j in range(Cw)], jnp.int32)
    we2 = tmat(p['e2_w'])[:, perm_w]
    be2 = p['e2_b'][perm_w].reshape(1, Cw)
    gng = p['gn_g'][perm_w].reshape(1, Cw)
    gnb = p['gn_b'][perm_w].reshape(1, Cw)
    gm = (jnp.arange(Cw)[:, None] % Cwc
          == jnp.arange(Cwc)[None, :]).astype(jnp.float32)       # (Cw, groups)

    # conv1x1 (+BN)
    s, t = bn_fold(p['c1_bn_g'], p['c1_bn_b'], p['c1_bn_m'], p['c1_bn_v'])
    wc1 = tmat(p['c1_w']) * s
    bc1 = t.reshape(1, C)

    # bn after local conv -> per-channel affine
    s, t = bn_fold(p['bn_g'], p['bn_b'], p['bn_m'], p['bn_v'])
    bns = s.reshape(1, C)
    bnt = t.reshape(1, C)

    # se conv1 (+bias, +BN)
    s, t = bn_fold(p['se1_bn_g'], p['se1_bn_b'], p['se1_bn_m'], p['se1_bn_v'])
    ws1 = tmat(p['se1_w']) * s
    bs1 = (p['se1_b'] * s + t).reshape(1, A)

    # se conv2 (+bias); output channels permuted to [all radix-0 | all radix-1]
    attn_perm = jnp.concatenate([jnp.arange(C) * 2, jnp.arange(C) * 2 + 1])
    ws2 = tmat(p['se2_w'])[:, attn_perm]
    bs2 = p['se2_b'][attn_perm].reshape(1, 2 * C)

    return (wk, bk, we1, be1, we2, be2, gng, gnb, gm,
            wc1, bc1, bns, bnt, ws1, bs1, ws2, bs2)


def cot_layer_forward(x, params, kernel_size=3):
    """x: (B, C, T, H, W) like PyTorch. Returns (B, C, T, H, W)."""
    assert kernel_size == 3
    B, C, T, H, W = x.shape
    assert C % 8 == 0 and C % 4 == 0, "dim must be divisible by share_planes=8 and groups=4"
    Cm, Cwc = C // 2, C // 8
    Cw = 9 * Cwc

    weights = _prep_kernel_inputs(params, C)
    x_tl = jnp.transpose(x, (0, 2, 3, 4, 1))                    # (B, T, H, W, C)

    kernel = functools.partial(_cot_kernel, T=T, H=H, W=W, C=C)

    def _full(arr):
        nd = arr.ndim
        return pl.BlockSpec(arr.shape, lambda b, _n=nd: (0,) * _n)

    in_specs = [pl.BlockSpec((1, T, H, W, C), lambda b: (b, 0, 0, 0, 0))]
    in_specs += [_full(wgt) for wgt in weights]

    flops = int(2 * B * T * H * W * (3 * 9 * C * C + 3 * 2 * C * Cm
                                     + 3 * Cm * Cw + 3 * C * C + 9 * C))
    wbytes = int(sum(int(w.size) for w in weights) * 4)
    cost = pl.CostEstimate(flops=flops,
                           transcendentals=int(4 * B * T * H * W * C),
                           bytes_accessed=int(2 * x.size * 4 + wbytes))

    out = pl.pallas_call(
        kernel,
        out_shape=jax.ShapeDtypeStruct((B, T, H, W, C), x.dtype),
        grid_spec=pltpu.PrefetchScalarGridSpec(
            num_scalar_prefetch=0,
            grid=(B,),
            in_specs=in_specs,
            out_specs=pl.BlockSpec((1, T, H, W, C), lambda b: (b, 0, 0, 0, 0)),
        ),
        compiler_params=pltpu.CompilerParams(
            dimension_semantics=("parallel",)),
        cost_estimate=cost,
    )(x_tl, *weights)

    return jnp.transpose(out, (0, 4, 1, 2, 3))


# --------------------------------------------------------------------------- #
# Pure-JAX reference (mirrors the PyTorch module in eval mode).
# --------------------------------------------------------------------------- #
def _reference(x, p, C):
    eps = 1e-5
    relu = lambda v: jnp.maximum(v, 0.0)

    def conv3d(xx, w, pad, groups=1, bias=None):
        dn = lax.conv_dimension_numbers(xx.shape, w.shape,
                                        ('NCDHW', 'OIDHW', 'NCDHW'))
        y = lax.conv_general_dilated(xx, w, (1, 1, 1), pad,
                                     dimension_numbers=dn,
                                     feature_group_count=groups,
                                     precision=lax.Precision.HIGHEST)
        if bias is not None:
            y = y + bias.reshape(1, -1, 1, 1, 1)
        return y

    def bn(xx, g, b, m, v):
        sh = (1, -1, 1, 1, 1)
        return ((xx - m.reshape(sh)) * (g / jnp.sqrt(v + eps)).reshape(sh)
                + b.reshape(sh))

    B, _, T, H, W = x.shape
    pad_k = [(1, 1)] * 3
    pad_t = [(1, 1), (0, 0), (0, 0)]
    Cwc = C // 8

    k = relu(bn(conv3d(x, p['key_w'], pad_k, groups=4),
                p['key_bn_g'], p['key_bn_b'], p['key_bn_m'], p['key_bn_v']))
    qk = jnp.concatenate([x, k], axis=1)
    wv = relu(bn(conv3d(qk, p['e1_w'], pad_t),
                 p['e1_bn_g'], p['e1_bn_b'], p['e1_bn_m'], p['e1_bn_v']))
    wv = conv3d(wv, p['e2_w'], pad_t, bias=p['e2_b'])
    # GroupNorm
    Cw = wv.shape[1]
    wr = wv.reshape(B, Cwc, Cw // Cwc, T, H, W)
    mu = wr.mean(axis=(2, 3, 4, 5), keepdims=True)
    var = ((wr - mu) ** 2).mean(axis=(2, 3, 4, 5), keepdims=True)
    wv = ((wr - mu) / jnp.sqrt(var + eps)).reshape(B, Cw, T, H, W)
    wv = wv * p['gn_g'].reshape(1, -1, 1, 1, 1) + p['gn_b'].reshape(1, -1, 1, 1, 1)
    wv = wv.reshape(B, 1, Cwc, 9, T, H, W)

    x1 = bn(conv3d(x, p['c1_w'], pad_t),
            p['c1_bn_g'], p['c1_bn_b'], p['c1_bn_m'], p['c1_bn_v'])

    outs = []
    for i in range(T):
        xi = x1[:, :, i]                                        # (B, C, H, W)
        wi = wv[:, 0, :, :, i]                                  # (B, Cwc, 9, H, W)
        xpad = jnp.pad(xi, ((0, 0), (0, 0), (1, 1), (1, 1)))
        acc = jnp.zeros_like(xi)
        for kh in range(3):
            for kw in range(3):
                kk = kh * 3 + kw
                wt = jnp.tile(wi[:, :, kk], (1, C // Cwc, 1, 1))  # c -> c % Cwc
                acc = acc + xpad[:, :, kh:kh + H, kw:kw + W] * wt
        outs.append(acc)
    x2 = jnp.stack(outs, axis=2)
    x2 = bn(x2, p['bn_g'], p['bn_b'], p['bn_m'], p['bn_v'])
    x2 = x2 * jax.nn.sigmoid(x2)

    xc = jnp.stack([x2, k], axis=2)                             # (B, C, 2, T, H, W)
    x_gap = xc.sum(axis=2).mean(axis=(3, 4), keepdims=True)     # (B, C, T, 1, 1)
    xa = relu(bn(conv3d(x_gap, p['se1_w'], pad_t, bias=p['se1_b']),
                 p['se1_bn_g'], p['se1_bn_b'], p['se1_bn_m'], p['se1_bn_v']))
    xa = conv3d(xa, p['se2_w'], pad_t, bias=p['se2_b'])         # (B, 2C, T, 1, 1)
    xa = jax.nn.softmax(xa.reshape(B, C, 2, T), axis=2)
    return (xc * xa.reshape(B, C, 2, T, 1, 1)).sum(axis=2)


# --------------------------------------------------------------------------- #
# Deterministic parameter construction + self-test.
# --------------------------------------------------------------------------- #
def _init_params(key, C):
    A = max(C * 2 // 4, 32)
    Cm = C // 2
    Cw = 9 * C // 8
    shapes = {
        'key_w': (C, C // 4, 3, 3, 3),
        'e1_w': (Cm, 2 * C, 3, 1, 1),
        'e2_w': (Cw, Cm, 3, 1, 1), 'e2_b': (Cw,),
        'c1_w': (C, C, 3, 1, 1),
        'se1_w': (A, C, 3, 1, 1), 'se1_b': (A,),
        'se2_w': (2 * C, A, 3, 1, 1), 'se2_b': (2 * C,),
    }
    bn_channels = {'key_bn': C, 'e1_bn': Cm, 'c1_bn': C, 'bn': C, 'se1_bn': A}
    keys = jax.random.split(key, len(shapes) + 4 * len(bn_channels) + 2)
    it = iter(keys)
    p = {}
    for name, shp in shapes.items():
        scale = 0.15 if name.endswith('_w') else 0.1
        p[name] = scale * jax.random.normal(next(it), shp, jnp.float32)
    for name, ch in bn_channels.items():
        p[name + '_g'] = 1.0 + 0.1 * jax.random.normal(next(it), (ch,), jnp.float32)
        p[name + '_b'] = 0.1 * jax.random.normal(next(it), (ch,), jnp.float32)
        p[name + '_m'] = 0.1 * jax.random.normal(next(it), (ch,), jnp.float32)
        p[name + '_v'] = jax.random.uniform(next(it), (ch,), jnp.float32, 0.5, 1.5)
    p['gn_g'] = 1.0 + 0.1 * jax.random.normal(next(it), (Cw,), jnp.float32)
    p['gn_b'] = 0.1 * jax.random.normal(next(it), (Cw,), jnp.float32)
    return p


if __name__ == "__main__":
    B, C, T, H, W = 2, 16, 4, 8, 8     # dim divisible by 8 (share_planes) and 4 (groups)

    key = jax.random.PRNGKey(0)
    kx, kp = jax.random.split(key)
    x = jax.random.normal(kx, (B, C, T, H, W), jnp.float32)
    params = _init_params(kp, C)

    out = cot_layer_forward(x, params)
    out = jax.block_until_ready(out)

    ref = _reference(x, params, C)
    assert out.shape == (B, C, T, H, W)
    max_err = float(jnp.max(jnp.abs(out - ref)))
    assert jnp.allclose(out, ref, rtol=2e-3, atol=2e-3), f"mismatch vs reference: {max_err}"

    print("KERNEL_OK")
</pallas_src>

<mosaic_0001>
module attributes {stable_mosaic.version = 11 : i64} {
  func.func @_cot_kernel(%arg0: i32, %arg1: memref<1x4x8x8x16xf32, #tpu.memory_space<vmem>>, %arg2: memref<3x144x16xf32, #tpu.memory_space<vmem>>, %arg3: memref<1x16xf32, #tpu.memory_space<vmem>>, %arg4: memref<96x8xf32, #tpu.memory_space<vmem>>, %arg5: memref<1x8xf32, #tpu.memory_space<vmem>>, %arg6: memref<24x18xf32, #tpu.memory_space<vmem>>, %arg7: memref<1x18xf32, #tpu.memory_space<vmem>>, %arg8: memref<1x18xf32, #tpu.memory_space<vmem>>, %arg9: memref<1x18xf32, #tpu.memory_space<vmem>>, %arg10: memref<18x2xf32, #tpu.memory_space<vmem>>, %arg11: memref<48x16xf32, #tpu.memory_space<vmem>>, %arg12: memref<1x16xf32, #tpu.memory_space<vmem>>, %arg13: memref<1x16xf32, #tpu.memory_space<vmem>>, %arg14: memref<1x16xf32, #tpu.memory_space<vmem>>, %arg15: memref<48x32xf32, #tpu.memory_space<vmem>>, %arg16: memref<1x32xf32, #tpu.memory_space<vmem>>, %arg17: memref<96x32xf32, #tpu.memory_space<vmem>>, %arg18: memref<1x32xf32, #tpu.memory_space<vmem>>, %arg19: memref<1x4x8x8x16xf32, #tpu.memory_space<vmem>>) attributes {dimension_semantics = [#tpu.dimension_semantics<parallel>], iteration_bounds = array<i64: 2>, scalar_prefetch = 0 : i64, scratch_operands = 0 : i64, tpu.core_type = #tpu.core_type<tc>, window_params = [{transform_indices = @transform_0, window_bounds = array<i64: 1, 4, 8, 8, 16>}, {pipeline_mode = #tpu.pipeline_mode<synchronous>, transform_indices = @transform_1, window_bounds = array<i64: 3, 144, 16>}, {pipeline_mode = #tpu.pipeline_mode<synchronous>, transform_indices = @transform_2, window_bounds = array<i64: 1, 16>}, {pipeline_mode = #tpu.pipeline_mode<synchronous>, transform_indices = @transform_3, window_bounds = array<i64: 96, 8>}, {pipeline_mode = #tpu.pipeline_mode<synchronous>, transform_indices = @transform_4, window_bounds = array<i64: 1, 8>}, {pipeline_mode = #tpu.pipeline_mode<synchronous>, transform_indices = @transform_5, window_bounds = array<i64: 24, 18>}, {pipeline_mode = #tpu.pipeline_mode<synchronous>, transform_indices = @transform_6, window_bounds = array<i64: 1, 18>}, {pipeline_mode = #tpu.pipeline_mode<synchronous>, transform_indices = @transform_7, window_bounds = array<i64: 1, 18>}, {pipeline_mode = #tpu.pipeline_mode<synchronous>, transform_indices = @transform_8, window_bounds = array<i64: 1, 18>}, {pipeline_mode = #tpu.pipeline_mode<synchronous>, transform_indices = @transform_9, window_bounds = array<i64: 18, 2>}, {pipeline_mode = #tpu.pipeline_mode<synchronous>, transform_indices = @transform_10, window_bounds = array<i64: 48, 16>}, {pipeline_mode = #tpu.pipeline_mode<synchronous>, transform_indices = @transform_11, window_bounds = array<i64: 1, 16>}, {pipeline_mode = #tpu.pipeline_mode<synchronous>, transform_indices = @transform_12, window_bounds = array<i64: 1, 16>}, {pipeline_mode = #tpu.pipeline_mode<synchronous>, transform_indices = @transform_13, window_bounds = array<i64: 1, 16>}, {pipeline_mode = #tpu.pipeline_mode<synchronous>, transform_indices = @transform_14, window_bounds = array<i64: 48, 32>}, {pipeline_mode = #tpu.pipeline_mode<synchronous>, transform_indices = @transform_15, window_bounds = array<i64: 1, 32>}, {pipeline_mode = #tpu.pipeline_mode<synchronous>, transform_indices = @transform_16, window_bounds = array<i64: 96, 32>}, {pipeline_mode = #tpu.pipeline_mode<synchronous>, transform_indices = @transform_17, window_bounds = array<i64: 1, 32>}, {transform_indices = @transform_18, window_bounds = array<i64: 1, 4, 8, 8, 16>}]} {
    %c0 = arith.constant 0 : index
    %c0_0 = arith.constant 0 : index
    %c0_1 = arith.constant 0 : index
    %c0_2 = arith.constant 0 : index
    %c0_3 = arith.constant 0 : index
    %0 = vector.load %arg1[%c0, %c0_0, %c0_1, %c0_2, %c0_3] : memref<1x4x8x8x16xf32, #tpu.memory_space<vmem>>, vector<1x4x8x8x16xf32>
    %1 = vector.shape_cast %0 : vector<1x4x8x8x16xf32> to vector<4x8x8x16xf32>
    %cst = arith.constant 0.000000e+00 : f32
    %2 = vector.broadcast %cst : f32 to vector<4x8x1x16xf32>
    %3 = tpu.concatenate %2, %1, %2 in 2 : vector<4x8x1x16xf32>, vector<4x8x8x16xf32>, vector<4x8x1x16xf32> -> vector<4x8x10x16xf32>
    %cst_4 = arith.constant 0.000000e+00 : f32
    %4 = vector.broadcast %cst_4 : f32 to vector<4x1x10x16xf32>
    %5 = tpu.concatenate %4, %3, %4 in 1 : vector<4x1x10x16xf32>, vector<4x8x10x16xf32>, vector<4x1x10x16xf32> -> vector<4x10x10x16xf32>
    %cst_5 = arith.constant 0.000000e+00 : f32
    %6 = vector.broadcast %cst_5 : f32 to vector<1x10x10x16xf32>
    %7 = tpu.concatenate %6, %5, %6 in 0 : vector<1x10x10x16xf32>, vector<4x10x10x16xf32>, vector<1x10x10x16xf32> -> vector<6x10x10x16xf32>
    %cst_6 = arith.constant 0.000000e+00 : f32
    %8 = vector.broadcast %cst_6 : f32 to vector<256x16xf32>
    %9 = vector.extract_strided_slice %7 {offsets = [0, 0, 0, 0], sizes = [4, 8, 8, 16], strides = [1, 1, 1, 1]} : vector<6x10x10x16xf32> to vector<4x8x8x16xf32>
    %10 = vector.shape_cast %9 : vector<4x8x8x16xf32> to vector<256x16xf32>
    %11 = vector.extract_strided_slice %7 {offsets = [0, 0, 1, 0], sizes = [4, 8, 8, 16], strides = [1, 1, 1, 1]} : vector<6x10x10x16xf32> to vector<4x8x8x16xf32>
    %12 = vector.shape_cast %11 : vector<4x8x8x16xf32> to vector<256x16xf32>
    %13 = vector.extract_strided_slice %7 {offsets = [0, 0, 2, 0], sizes = [4, 8, 8, 16], strides = [1, 1, 1, 1]} : vector<6x10x10x16xf32> to vector<4x8x8x16xf32>
    %14 = vector.shape_cast %13 : vector<4x8x8x16xf32> to vector<256x16xf32>
    %15 = vector.extract_strided_slice %7 {offsets = [0, 1, 0, 0], sizes = [4, 8, 8, 16], strides = [1, 1, 1, 1]} : vector<6x10x10x16xf32> to vector<4x8x8x16xf32>
    %16 = vector.shape_cast %15 : vector<4x8x8x16xf32> to vector<256x16xf32>
    %17 = vector.extract_strided_slice %7 {offsets = [0, 1, 1, 0], sizes = [4, 8, 8, 16], strides = [1, 1, 1, 1]} : vector<6x10x10x16xf32> to vector<4x8x8x16xf32>
    %18 = vector.shape_cast %17 : vector<4x8x8x16xf32> to vector<256x16xf32>
    %19 = vector.extract_strided_slice %7 {offsets = [0, 1, 2, 0], sizes = [4, 8, 8, 16], strides = [1, 1, 1, 1]} : vector<6x10x10x16xf32> to vector<4x8x8x16xf32>
    %20 = vector.shape_cast %19 : vector<4x8x8x16xf32> to vector<256x16xf32>
    %21 = vector.extract_strided_slice %7 {offsets = [0, 2, 0, 0], sizes = [4, 8, 8, 16], strides = [1, 1, 1, 1]} : vector<6x10x10x16xf32> to vector<4x8x8x16xf32>
    %22 = vector.shape_cast %21 : vector<4x8x8x16xf32> to vector<256x16xf32>
    %23 = vector.extract_strided_slice %7 {offsets = [0, 2, 1, 0], sizes = [4, 8, 8, 16], strides = [1, 1, 1, 1]} : vector<6x10x10x16xf32> to vector<4x8x8x16xf32>
    %24 = vector.shape_cast %23 : vector<4x8x8x16xf32> to vector<256x16xf32>
    %25 = vector.extract_strided_slice %7 {offsets = [0, 2, 2, 0], sizes = [4, 8, 8, 16], strides = [1, 1, 1, 1]} : vector<6x10x10x16xf32> to vector<4x8x8x16xf32>
    %26 = vector.shape_cast %25 : vector<4x8x8x16xf32> to vector<256x16xf32>
    %27 = tpu.concatenate %10, %12, %14, %16, %18, %20, %22, %24, %26 in 1 : vector<256x16xf32>, vector<256x16xf32>, vector<256x16xf32>, vector<256x16xf32>, vector<256x16xf32>, vector<256x16xf32>, vector<256x16xf32>, vector<256x16xf32>, vector<256x16xf32> -> vector<256x144xf32>
    %c0_7 = arith.constant 0 : index
    %c0_8 = arith.constant 0 : index
    %c0_9 = arith.constant 0 : index
    %28 = vector.load %arg2[%c0_7, %c0_8, %c0_9] : memref<3x144x16xf32, #tpu.memory_space<vmem>>, vector<1x144x16xf32>
    %29 = vector.shape_cast %28 : vector<1x144x16xf32> to vector<144x16xf32>
    %cst_10 = arith.constant dense<0.000000e+00> : vector<256x16xf32>
    %30 = tpu.matmul %27, %29, %cst_10 {dimension_numbers = #tpu.dot_dimension_numbers<[1], [0], [0], [1], [0, 0, 1, 1], [], []>} : vector<256x144xf32>, vector<144x16xf32>, vector<256x16xf32> -> vector<256x16xf32>
    %31 = arith.addf %8, %30 : vector<256x16xf32>
    %32 = vector.extract_strided_slice %7 {offsets = [1, 0, 0, 0], sizes = [4, 8, 8, 16], strides = [1, 1, 1, 1]} : vector<6x10x10x16xf32> to vector<4x8x8x16xf32>
    %33 = vector.shape_cast %32 : vector<4x8x8x16xf32> to vector<256x16xf32>
    %34 = vector.extract_strided_slice %7 {offsets = [1, 0, 1, 0], sizes = [4, 8, 8, 16], strides = [1, 1, 1, 1]} : vector<6x10x10x16xf32> to vector<4x8x8x16xf32>
    %35 = vector.shape_cast %34 : vector<4x8x8x16xf32> to vector<256x16xf32>
    %36 = vector.extract_strided_slice %7 {offsets = [1, 0, 2, 0], sizes = [4, 8, 8, 16], strides = [1, 1, 1, 1]} : vector<6x10x10x16xf32> to vector<4x8x8x16xf32>
    %37 = vector.shape_cast %36 : vector<4x8x8x16xf32> to vector<256x16xf32>
    %38 = vector.extract_strided_slice %7 {offsets = [1, 1, 0, 0], sizes = [4, 8, 8, 16], strides = [1, 1, 1, 1]} : vector<6x10x10x16xf32> to vector<4x8x8x16xf32>
    %39 = vector.shape_cast %38 : vector<4x8x8x16xf32> to vector<256x16xf32>
    %40 = vector.extract_strided_slice %7 {offsets = [1, 1, 1, 0], sizes = [4, 8, 8, 16], strides = [1, 1, 1, 1]} : vector<6x10x10x16xf32> to vector<4x8x8x16xf32>
    %41 = vector.shape_cast %40 : vector<4x8x8x16xf32> to vector<256x16xf32>
    %42 = vector.extract_strided_slice %7 {offsets = [1, 1, 2, 0], sizes = [4, 8, 8, 16], strides = [1, 1, 1, 1]} : vector<6x10x10x16xf32> to vector<4x8x8x16xf32>
    %43 = vector.shape_cast %42 : vector<4x8x8x16xf32> to vector<256x16xf32>
    %44 = vector.extract_strided_slice %7 {offsets = [1, 2, 0, 0], sizes = [4, 8, 8, 16], strides = [1, 1, 1, 1]} : vector<6x10x10x16xf32> to vector<4x8x8x16xf32>
    %45 = vector.shape_cast %44 : vector<4x8x8x16xf32> to vector<256x16xf32>
    %46 = vector.extract_strided_slice %7 {offsets = [1, 2, 1, 0], sizes = [4, 8, 8, 16], strides = [1, 1, 1, 1]} : vector<6x10x10x16xf32> to vector<4x8x8x16xf32>
    %47 = vector.shape_cast %46 : vector<4x8x8x16xf32> to vector<256x16xf32>
    %48 = vector.extract_strided_slice %7 {offsets = [1, 2, 2, 0], sizes = [4, 8, 8, 16], strides = [1, 1, 1, 1]} : vector<6x10x10x16xf32> to vector<4x8x8x16xf32>
    %49 = vector.shape_cast %48 : vector<4x8x8x16xf32> to vector<256x16xf32>
    %50 = tpu.concatenate %33, %35, %37, %39, %41, %43, %45, %47, %49 in 1 : vector<256x16xf32>, vector<256x16xf32>, vector<256x16xf32>, vector<256x16xf32>, vector<256x16xf32>, vector<256x16xf32>, vector<256x16xf32>, vector<256x16xf32>, vector<256x16xf32> -> vector<256x144xf32>
    %c1 = arith.constant 1 : index
    %c0_11 = arith.constant 0 : index
    %c0_12 = arith.constant 0 : index
    %51 = vector.load %arg2[%c1, %c0_11, %c0_12] : memref<3x144x16xf32, #tpu.memory_space<vmem>>, vector<1x144x16xf32>
    %52 = vector.shape_cast %51 : vector<1x144x16xf32> to vector<144x16xf32>
    %cst_13 = arith.constant dense<0.000000e+00> : vector<256x16xf32>
    %53 = tpu.matmul %50, %52, %cst_13 {dimension_numbers = #tpu.dot_dimension_numbers<[1], [0], [0], [1], [0, 0, 1, 1], [], []>} : vector<256x144xf32>, vector<144x16xf32>, vector<256x16xf32> -> vector<256x16xf32>
    %54 = arith.addf %31, %53 : vector<256x16xf32>
    %55 = vector.extract_strided_slice %7 {offsets = [2, 0, 0, 0], sizes = [4, 8, 8, 16], strides = [1, 1, 1, 1]} : vector<6x10x10x16xf32> to vector<4x8x8x16xf32>
    %56 = vector.shape_cast %55 : vector<4x8x8x16xf32> to vector<256x16xf32>
    %57 = vector.extract_strided_slice %7 {offsets = [2, 0, 1, 0], sizes = [4, 8, 8, 16], strides = [1, 1, 1, 1]} : vector<6x10x10x16xf32> to vector<4x8x8x16xf32>
    %58 = vector.shape_cast %57 : vector<4x8x8x16xf32> to vector<256x16xf32>
    %59 = vector.extract_strided_slice %7 {offsets = [2, 0, 2, 0], sizes = [4, 8, 8, 16], strides = [1, 1, 1, 1]} : vector<6x10x10x16xf32> to vector<4x8x8x16xf32>
    %60 = vector.shape_cast %59 : vector<4x8x8x16xf32> to vector<256x16xf32>
    %61 = vector.extract_strided_slice %7 {offsets = [2, 1, 0, 0], sizes = [4, 8, 8, 16], strides = [1, 1, 1, 1]} : vector<6x10x10x16xf32> to vector<4x8x8x16xf32>
    %62 = vector.shape_cast %61 : vector<4x8x8x16xf32> to vector<256x16xf32>
    %63 = vector.extract_strided_slice %7 {offsets = [2, 1, 1, 0], sizes = [4, 8, 8, 16], strides = [1, 1, 1, 1]} : vector<6x10x10x16xf32> to vector<4x8x8x16xf32>
    %64 = vector.shape_cast %63 : vector<4x8x8x16xf32> to vector<256x16xf32>
    %65 = vector.extract_strided_slice %7 {offsets = [2, 1, 2, 0], sizes = [4, 8, 8, 16], strides = [1, 1, 1, 1]} : vector<6x10x10x16xf32> to vector<4x8x8x16xf32>
    %66 = vector.shape_cast %65 : vector<4x8x8x16xf32> to vector<256x16xf32>
    %67 = vector.extract_strided_slice %7 {offsets = [2, 2, 0, 0], sizes = [4, 8, 8, 16], strides = [1, 1, 1, 1]} : vector<6x10x10x16xf32> to vector<4x8x8x16xf32>
    %68 = vector.shape_cast %67 : vector<4x8x8x16xf32> to vector<256x16xf32>
    %69 = vector.extract_strided_slice %7 {offsets = [2, 2, 1, 0], sizes = [4, 8, 8, 16], strides = [1, 1, 1, 1]} : vector<6x10x10x16xf32> to vector<4x8x8x16xf32>
    %70 = vector.shape_cast %69 : vector<4x8x8x16xf32> to vector<256x16xf32>
    %71 = vector.extract_strided_slice %7 {offsets = [2, 2, 2, 0], sizes = [4, 8, 8, 16], strides = [1, 1, 1, 1]} : vector<6x10x10x16xf32> to vector<4x8x8x16xf32>
    %72 = vector.shape_cast %71 : vector<4x8x8x16xf32> to vector<256x16xf32>
    %73 = tpu.concatenate %56, %58, %60, %62, %64, %66, %68, %70, %72 in 1 : vector<256x16xf32>, vector<256x16xf32>, vector<256x16xf32>, vector<256x16xf32>, vector<256x16xf32>, vector<256x16xf32>, vector<256x16xf32>, vector<256x16xf32>, vector<256x16xf32> -> vector<256x144xf32>
    %c2 = arith.constant 2 : index
    %c0_14 = arith.constant 0 : index
    %c0_15 = arith.constant 0 : index
    %74 = vector.load %arg2[%c2, %c0_14, %c0_15] : memref<3x144x16xf32, #tpu.memory_space<vmem>>, vector<1x144x16xf32>
    %75 = vector.shape_cast %74 : vector<1x144x16xf32> to vector<144x16xf32>
    %cst_16 = arith.constant dense<0.000000e+00> : vector<256x16xf32>
    %76 = tpu.matmul %73, %75, %cst_16 {dimension_numbers = #tpu.dot_dimension_numbers<[1], [0], [0], [1], [0, 0, 1, 1], [], []>} : vector<256x144xf32>, vector<144x16xf32>, vector<256x16xf32> -> vector<256x16xf32>
    %77 = arith.addf %54, %76 : vector<256x16xf32>
    %c0_17 = arith.constant 0 : index
    %c0_18 = arith.constant 0 : index
    %78 = vector.load %arg3[%c0_17, %c0_18] : memref<1x16xf32, #tpu.memory_space<vmem>>, vector<1x16xf32>
    %79 = vector.broadcast %78 : vector<1x16xf32> to vector<256x16xf32>
    %80 = arith.addf %77, %79 : vector<256x16xf32>
    %cst_19 = arith.constant 0.000000e+00 : f32
    %81 = vector.broadcast %cst_19 : f32 to vector<256x16xf32>
    %82 = arith.maximumf %80, %81 : vector<256x16xf32>
    %83 = vector.shape_cast %1 : vector<4x8x8x16xf32> to vector<256x16xf32>
    %84 = tpu.concatenate %83, %82 in 1 : vector<256x16xf32>, vector<256x16xf32> -> vector<256x32xf32>
    %85 = vector.shape_cast %84 : vector<256x32xf32> to vector<4x64x32xf32>
    %c0_20 = arith.constant 0 : index
    %c0_21 = arith.constant 0 : index
    %86 = vector.load %arg4[%c0_20, %c0_21] : memref<96x8xf32, #tpu.memory_space<vmem>>, vector<96x8xf32>
    %c0_22 = arith.constant 0 : index
    %c0_23 = arith.constant 0 : index
    %87 = vector.load %arg5[%c0_22, %c0_23] : memref<1x8xf32, #tpu.memory_space<vmem>>, vector<1x8xf32>
    %cst_24 = arith.constant 0.000000e+00 : f32
    %88 = vector.broadcast %cst_24 : f32 to vector<1x64x32xf32>
    %89 = vector.extract_strided_slice %85 {offsets = [0, 0, 0], sizes = [3, 64, 32], strides = [1, 1, 1]} : vector<4x64x32xf32> to vector<3x64x32xf32>
    %90 = tpu.concatenate %88, %89 in 0 : vector<1x64x32xf32>, vector<3x64x32xf32> -> vector<4x64x32xf32>
    %91 = vector.extract_strided_slice %85 {offsets = [1, 0, 0], sizes = [3, 64, 32], strides = [1, 1, 1]} : vector<4x64x32xf32> to vector<3x64x32xf32>
    %92 = tpu.concatenate %91, %88 in 0 : vector<3x64x32xf32>, vector<1x64x32xf32> -> vector<4x64x32xf32>
    %93 = tpu.concatenate %90, %85, %92 in 2 : vector<4x64x32xf32>, vector<4x64x32xf32>, vector<4x64x32xf32> -> vector<4x64x96xf32>
    %94 = vector.shape_cast %93 : vector<4x64x96xf32> to vector<256x96xf32>
    %cst_25 = arith.constant dense<0.000000e+00> : vector<256x8xf32>
    %95 = tpu.matmul %94, %86, %cst_25 {dimension_numbers = #tpu.dot_dimension_numbers<[1], [0], [0], [1], [0, 0, 1, 1], [], []>} : vector<256x96xf32>, vector<96x8xf32>, vector<256x8xf32> -> vector<256x8xf32>
    %96 = vector.broadcast %87 : vector<1x8xf32> to vector<256x8xf32>
    %97 = arith.addf %95, %96 : vector<256x8xf32>
    %cst_26 = arith.constant 0.000000e+00 : f32
    %98 = vector.broadcast %cst_26 : f32 to vector<256x8xf32>
    %99 = arith.maximumf %97, %98 : vector<256x8xf32>
    %100 = vector.shape_cast %99 : vector<256x8xf32> to vector<4x64x8xf32>
    %c0_27 = arith.constant 0 : index
    %c0_28 = arith.constant 0 : index
    %101 = vector.load %arg6[%c0_27, %c0_28] : memref<24x18xf32, #tpu.memory_space<vmem>>, vector<24x18xf32>
    %c0_29 = arith.constant 0 : index
    %c0_30 = arith.constant 0 : index
    %102 = vector.load %arg7[%c0_29, %c0_30] : memref<1x18xf32, #tpu.memory_space<vmem>>, vector<1x18xf32>
    %cst_31 = arith.constant 0.000000e+00 : f32
    %103 = vector.broadcast %cst_31 : f32 to vector<1x64x8xf32>
    %104 = vector.extract_strided_slice %100 {offsets = [0, 0, 0], sizes = [3, 64, 8], strides = [1, 1, 1]} : vector<4x64x8xf32> to vector<3x64x8xf32>
    %105 = tpu.concatenate %103, %104 in 0 : vector<1x64x8xf32>, vector<3x64x8xf32> -> vector<4x64x8xf32>
    %106 = vector.extract_strided_slice %100 {offsets = [1, 0, 0], sizes = [3, 64, 8], strides = [1, 1, 1]} : vector<4x64x8xf32> to vector<3x64x8xf32>
    %107 = tpu.concatenate %106, %103 in 0 : vector<3x64x8xf32>, vector<1x64x8xf32> -> vector<4x64x8xf32>
    %108 = tpu.concatenate %105, %100, %107 in 2 : vector<4x64x8xf32>, vector<4x64x8xf32>, vector<4x64x8xf32> -> vector<4x64x24xf32>
    %109 = vector.shape_cast %108 : vector<4x64x24xf32> to vector<256x24xf32>
    %cst_32 = arith.constant dense<0.000000e+00> : vector<256x18xf32>
    %110 = tpu.matmul %109, %101, %cst_32 {dimension_numbers = #tpu.dot_dimension_numbers<[1], [0], [0], [1], [0, 0, 1, 1], [], []>} : vector<256x24xf32>, vector<24x18xf32>, vector<256x18xf32> -> vector<256x18xf32>
    %111 = vector.broadcast %102 : vector<1x18xf32> to vector<256x18xf32>
    %112 = arith.addf %110, %111 : vector<256x18xf32>
    %cst_33 = arith.constant dense<0.000000e+00> : vector<18xf32>
    %113 = vector.multi_reduction <add>, %112, %cst_33 [0] : vector<256x18xf32> to vector<18xf32>
    %114 = vector.shape_cast %113 : vector<18xf32> to vector<1x18xf32>
    %c0_34 = arith.constant 0 : index
    %c0_35 = arith.constant 0 : index
    %115 = vector.load %arg10[%c0_34, %c0_35] : memref<18x2xf32, #tpu.memory_space<vmem>>, vector<18x2xf32>
    %cst_36 = arith.constant dense<0.000000e+00> : vector<1x2xf32>
    %116 = tpu.matmul %114, %115, %cst_36 {dimension_numbers = #tpu.dot_dimension_numbers<[1], [0], [0], [1], [0, 0, 1, 1], [], []>} : vector<1x18xf32>, vector<18x2xf32>, vector<1x2xf32> -> vector<1x2xf32>
    %cst_37 = arith.constant 2.304000e+03 : f32
    %117 = vector.broadcast %cst_37 : f32 to vector<1x2xf32>
    %118 = arith.divf %116, %117 : vector<1x2xf32>
    %119 = tpu.concatenate %118, %118, %118, %118, %118, %118, %118, %118, %118 in 1 : vector<1x2xf32>, vector<1x2xf32>, vector<1x2xf32>, vector<1x2xf32>, vector<1x2xf32>, vector<1x2xf32>, vector<1x2xf32>, vector<1x2xf32>, vector<1x2xf32> -> vector<1x18xf32>
    %120 = vector.broadcast %119 : vector<1x18xf32> to vector<256x18xf32>
    %121 = arith.subf %112, %120 : vector<256x18xf32>
    %122 = arith.mulf %121, %121 : vector<256x18xf32>
    %cst_38 = arith.constant dense<0.000000e+00> : vector<18xf32>
    %123 = vector.multi_reduction <add>, %122, %cst_38 [0] : vector<256x18xf32> to vector<18xf32>
    %124 = vector.shape_cast %123 : vector<18xf32> to vector<1x18xf32>
    %c0_39 = arith.constant 0 : index
    %c0_40 = arith.constant 0 : index
    %125 = vector.load %arg10[%c0_39, %c0_40] : memref<18x2xf32, #tpu.memory_space<vmem>>, vector<18x2xf32>
    %cst_41 = arith.constant dense<0.000000e+00> : vector<1x2xf32>
    %126 = tpu.matmul %124, %125, %cst_41 {dimension_numbers = #tpu.dot_dimension_numbers<[1], [0], [0], [1], [0, 0, 1, 1], [], []>} : vector<1x18xf32>, vector<18x2xf32>, vector<1x2xf32> -> vector<1x2xf32>
    %cst_42 = arith.constant 2.304000e+03 : f32
    %127 = vector.broadcast %cst_42 : f32 to vector<1x2xf32>
    %128 = arith.divf %126, %127 : vector<1x2xf32>
    %cst_43 = arith.constant 9.99999974E-6 : f32
    %129 = vector.broadcast %cst_43 : f32 to vector<1x2xf32>
    %130 = arith.addf %128, %129 : vector<1x2xf32>
    %131 = math.rsqrt %130 : vector<1x2xf32>
    %132 = tpu.concatenate %131, %131, %131, %131, %131, %131, %131, %131, %131 in 1 : vector<1x2xf32>, vector<1x2xf32>, vector<1x2xf32>, vector<1x2xf32>, vector<1x2xf32>, vector<1x2xf32>, vector<1x2xf32>, vector<1x2xf32>, vector<1x2xf32> -> vector<1x18xf32>
    %133 = vector.broadcast %132 : vector<1x18xf32> to vector<256x18xf32>
    %134 = arith.mulf %121, %133 : vector<256x18xf32>
    %c0_44 = arith.constant 0 : index
    %c0_45 = arith.constant 0 : index
    %135 = vector.load %arg8[%c0_44, %c0_45] : memref<1x18xf32, #tpu.memory_space<vmem>>, vector<1x18xf32>
    %136 = vector.broadcast %135 : vector<1x18xf32> to vector<256x18xf32>
    %137 = arith.mulf %134, %136 : vector<256x18xf32>
    %c0_46 = arith.constant 0 : index
    %c0_47 = arith.constant 0 : index
    %138 = vector.load %arg9[%c0_46, %c0_47] : memref<1x18xf32, #tpu.memory_space<vmem>>, vector<1x18xf32>
    %139 = vector.broadcast %138 : vector<1x18xf32> to vector<256x18xf32>
    %140 = arith.addf %137, %139 : vector<256x18xf32>
    %141 = vector.shape_cast %1 : vector<4x8x8x16xf32> to vector<4x64x16xf32>
    %c0_48 = arith.constant 0 : index
    %c0_49 = arith.constant 0 : index
    %142 = vector.load %arg11[%c0_48, %c0_49] : memref<48x16xf32, #tpu.memory_space<vmem>>, vector<48x16xf32>
    %c0_50 = arith.constant 0 : index
    %c0_51 = arith.constant 0 : index
    %143 = vector.load %arg12[%c0_50, %c0_51] : memref<1x16xf32, #tpu.memory_space<vmem>>, vector<1x16xf32>
    %cst_52 = arith.constant 0.000000e+00 : f32
    %144 = vector.broadcast %cst_52 : f32 to vector<1x64x16xf32>
    %145 = vector.extract_strided_slice %141 {offsets = [0, 0, 0], sizes = [3, 64, 16], strides = [1, 1, 1]} : vector<4x64x16xf32> to vector<3x64x16xf32>
    %146 = tpu.concatenate %144, %145 in 0 : vector<1x64x16xf32>, vector<3x64x16xf32> -> vector<4x64x16xf32>
    %147 = vector.extract_strided_slice %141 {offsets = [1, 0, 0], sizes = [3, 64, 16], strides = [1, 1, 1]} : vector<4x64x16xf32> to vector<3x64x16xf32>
    %148 = tpu.concatenate %147, %144 in 0 : vector<3x64x16xf32>, vector<1x64x16xf32> -> vector<4x64x16xf32>
    %149 = tpu.concatenate %146, %141, %148 in 2 : vector<4x64x16xf32>, vector<4x64x16xf32>, vector<4x64x16xf32> -> vector<4x64x48xf32>
    %150 = vector.shape_cast %149 : vector<4x64x48xf32> to vector<256x48xf32>
    %cst_53 = arith.constant dense<0.000000e+00> : vector<256x16xf32>
    %151 = tpu.matmul %150, %142, %cst_53 {dimension_numbers = #tpu.dot_dimension_numbers<[1], [0], [0], [1], [0, 0, 1, 1], [], []>} : vector<256x48xf32>, vector<48x16xf32>, vector<256x16xf32> -> vector<256x16xf32>
    %152 = vector.broadcast %143 : vector<1x16xf32> to vector<256x16xf32>
    %153 = arith.addf %151, %152 : vector<256x16xf32>
    %154 = vector.shape_cast %153 : vector<256x16xf32> to vector<4x8x8x16xf32>
    %cst_54 = arith.constant 0.000000e+00 : f32
    %155 = vector.broadcast %cst_54 : f32 to vector<4x8x1x16xf32>
    %156 = tpu.concatenate %155, %154, %155 in 2 : vector<4x8x1x16xf32>, vector<4x8x8x16xf32>, vector<4x8x1x16xf32> -> vector<4x8x10x16xf32>
    %cst_55 = arith.constant 0.000000e+00 : f32
    %157 = vector.broadcast %cst_55 : f32 to vector<4x1x10x16xf32>
    %158 = tpu.concatenate %157, %156, %157 in 1 : vector<4x1x10x16xf32>, vector<4x8x10x16xf32>, vector<4x1x10x16xf32> -> vector<4x10x10x16xf32>
    %cst_56 = arith.constant 0.000000e+00 : f32
    %159 = vector.broadcast %cst_56 : f32 to vector<256x16xf32>
    %160 = vector.extract_strided_slice %140 {offsets = [0, 0], sizes = [256, 2], strides = [1, 1]} : vector<256x18xf32> to vector<256x2xf32>
    %161 = tpu.concatenate %160, %160, %160, %160, %160, %160, %160, %160 in 1 : vector<256x2xf32>, vector<256x2xf32>, vector<256x2xf32>, vector<256x2xf32>, vector<256x2xf32>, vector<256x2xf32>, vector<256x2xf32>, vector<256x2xf32> -> vector<256x16xf32>
    %162 = vector.extract_strided_slice %158 {offsets = [0, 0, 0, 0], sizes = [4, 8, 8, 16], strides = [1, 1, 1, 1]} : vector<4x10x10x16xf32> to vector<4x8x8x16xf32>
    %163 = vector.shape_cast %162 : vector<4x8x8x16xf32> to vector<256x16xf32>
    %164 = arith.mulf %163, %161 : vector<256x16xf32>
    %165 = arith.addf %159, %164 : vector<256x16xf32>
    %166 = vector.extract_strided_slice %140 {offsets = [0, 2], sizes = [256, 2], strides = [1, 1]} : vector<256x18xf32> to vector<256x2xf32>
    %167 = tpu.concatenate %166, %166, %166, %166, %166, %166, %166, %166 in 1 : vector<256x2xf32>, vector<256x2xf32>, vector<256x2xf32>, vector<256x2xf32>, vector<256x2xf32>, vector<256x2xf32>, vector<256x2xf32>, vector<256x2xf32> -> vector<256x16xf32>
    %168 = vector.extract_strided_slice %158 {offsets = [0, 0, 1, 0], sizes = [4, 8, 8, 16], strides = [1, 1, 1, 1]} : vector<4x10x10x16xf32> to vector<4x8x8x16xf32>
    %169 = vector.shape_cast %168 : vector<4x8x8x16xf32> to vector<256x16xf32>
    %170 = arith.mulf %169, %167 : vector<256x16xf32>
    %171 = arith.addf %165, %170 : vector<256x16xf32>
    %172 = vector.extract_strided_slice %140 {offsets = [0, 4], sizes = [256, 2], strides = [1, 1]} : vector<256x18xf32> to vector<256x2xf32>
    %173 = tpu.concatenate %172, %172, %172, %172, %172, %172, %172, %172 in 1 : vector<256x2xf32>, vector<256x2xf32>, vector<256x2xf32>, vector<256x2xf32>, vector<256x2xf32>, vector<256x2xf32>, vector<256x2xf32>, vector<256x2xf32> -> vector<256x16xf32>
    %174 = vector.extract_strided_slice %158 {offsets = [0, 0, 2, 0], sizes = [4, 8, 8, 16], strides = [1, 1, 1, 1]} : vector<4x10x10x16xf32> to vector<4x8x8x16xf32>
    %175 = vector.shape_cast %174 : vector<4x8x8x16xf32> to vector<256x16xf32>
    %176 = arith.mulf %175, %173 : vector<256x16xf32>
    %177 = arith.addf %171, %176 : vector<256x16xf32>
    %178 = vector.extract_strided_slice %140 {offsets = [0, 6], sizes = [256, 2], strides = [1, 1]} : vector<256x18xf32> to vector<256x2xf32>
    %179 = tpu.concatenate %178, %178, %178, %178, %178, %178, %178, %178 in 1 : vector<256x2xf32>, vector<256x2xf32>, vector<256x2xf32>, vector<256x2xf32>, vector<256x2xf32>, vector<256x2xf32>, vector<256x2xf32>, vector<256x2xf32> -> vector<256x16xf32>
    %180 = vector.extract_strided_slice %158 {offsets = [0, 1, 0, 0], sizes = [4, 8, 8, 16], strides = [1, 1, 1, 1]} : vector<4x10x10x16xf32> to vector<4x8x8x16xf32>
    %181 = vector.shape_cast %180 : vector<4x8x8x16xf32> to vector<256x16xf32>
    %182 = arith.mulf %181, %179 : vector<256x16xf32>
    %183 = arith.addf %177, %182 : vector<256x16xf32>
    %184 = vector.extract_strided_slice %140 {offsets = [0, 8], sizes = [256, 2], strides = [1, 1]} : vector<256x18xf32> to vector<256x2xf32>
    %185 = tpu.concatenate %184, %184, %184, %184, %184, %184, %184, %184 in 1 : vector<256x2xf32>, vector<256x2xf32>, vector<256x2xf32>, vector<256x2xf32>, vector<256x2xf32>, vector<256x2xf32>, vector<256x2xf32>, vector<256x2xf32> -> vector<256x16xf32>
    %186 = vector.extract_strided_slice %158 {offsets = [0, 1, 1, 0], sizes = [4, 8, 8, 16], strides = [1, 1, 1, 1]} : vector<4x10x10x16xf32> to vector<4x8x8x16xf32>
    %187 = vector.shape_cast %186 : vector<4x8x8x16xf32> to vector<256x16xf32>
    %188 = arith.mulf %187, %185 : vector<256x16xf32>
    %189 = arith.addf %183, %188 : vector<256x16xf32>
    %190 = vector.extract_strided_slice %140 {offsets = [0, 10], sizes = [256, 2], strides = [1, 1]} : vector<256x18xf32> to vector<256x2xf32>
    %191 = tpu.concatenate %190, %190, %190, %190, %190, %190, %190, %190 in 1 : vector<256x2xf32>, vector<256x2xf32>, vector<256x2xf32>, vector<256x2xf32>, vector<256x2xf32>, vector<256x2xf32>, vector<256x2xf32>, vector<256x2xf32> -> vector<256x16xf32>
    %192 = vector.extract_strided_slice %158 {offsets = [0, 1, 2, 0], sizes = [4, 8, 8, 16], strides = [1, 1, 1, 1]} : vector<4x10x10x16xf32> to vector<4x8x8x16xf32>
    %193 = vector.shape_cast %192 : vector<4x8x8x16xf32> to vector<256x16xf32>
    %194 = arith.mulf %193, %191 : vector<256x16xf32>
    %195 = arith.addf %189, %194 : vector<256x16xf32>
    %196 = vector.extract_strided_slice %140 {offsets = [0, 12], sizes = [256, 2], strides = [1, 1]} : vector<256x18xf32> to vector<256x2xf32>
    %197 = tpu.concatenate %196, %196, %196, %196, %196, %196, %196, %196 in 1 : vector<256x2xf32>, vector<256x2xf32>, vector<256x2xf32>, vector<256x2xf32>, vector<256x2xf32>, vector<256x2xf32>, vector<256x2xf32>, vector<256x2xf32> -> vector<256x16xf32>
    %198 = vector.extract_strided_slice %158 {offsets = [0, 2, 0, 0], sizes = [4, 8, 8, 16], strides = [1, 1, 1, 1]} : vector<4x10x10x16xf32> to vector<4x8x8x16xf32>
    %199 = vector.shape_cast %198 : vector<4x8x8x16xf32> to vector<256x16xf32>
    %200 = arith.mulf %199, %197 : vector<256x16xf32>
    %201 = arith.addf %195, %200 : vector<256x16xf32>
    %202 = vector.extract_strided_slice %140 {offsets = [0, 14], sizes = [256, 2], strides = [1, 1]} : vector<256x18xf32> to vector<256x2xf32>
    %203 = tpu.concatenate %202, %202, %202, %202, %202, %202, %202, %202 in 1 : vector<256x2xf32>, vector<256x2xf32>, vector<256x2xf32>, vector<256x2xf32>, vector<256x2xf32>, vector<256x2xf32>, vector<256x2xf32>, vector<256x2xf32> -> vector<256x16xf32>
    %204 = vector.extract_strided_slice %158 {offsets = [0, 2, 1, 0], sizes = [4, 8, 8, 16], strides = [1, 1, 1, 1]} : vector<4x10x10x16xf32> to vector<4x8x8x16xf32>
    %205 = vector.shape_cast %204 : vector<4x8x8x16xf32> to vector<256x16xf32>
    %206 = arith.mulf %205, %203 : vector<256x16xf32>
    %207 = arith.addf %201, %206 : vector<256x16xf32>
    %208 = vector.extract_strided_slice %140 {offsets = [0, 16], sizes = [256, 2], strides = [1, 1]} : vector<256x18xf32> to vector<256x2xf32>
    %209 = tpu.concatenate %208, %208, %208, %208, %208, %208, %208, %208 in 1 : vector<256x2xf32>, vector<256x2xf32>, vector<256x2xf32>, vector<256x2xf32>, vector<256x2xf32>, vector<256x2xf32>, vector<256x2xf32>, vector<256x2xf32> -> vector<256x16xf32>
    %210 = vector.extract_strided_slice %158 {offsets = [0, 2, 2, 0], sizes = [4, 8, 8, 16], strides = [1, 1, 1, 1]} : vector<4x10x10x16xf32> to vector<4x8x8x16xf32>
    %211 = vector.shape_cast %210 : vector<4x8x8x16xf32> to vector<256x16xf32>
    %212 = arith.mulf %211, %209 : vector<256x16xf32>
    %213 = arith.addf %207, %212 : vector<256x16xf32>
    %c0_57 = arith.constant 0 : index
    %c0_58 = arith.constant 0 : index
    %214 = vector.load %arg13[%c0_57, %c0_58] : memref<1x16xf32, #tpu.memory_space<vmem>>, vector<1x16xf32>
    %215 = vector.broadcast %214 : vector<1x16xf32> to vector<256x16xf32>
    %216 = arith.mulf %213, %215 : vector<256x16xf32>
    %c0_59 = arith.constant 0 : index
    %c0_60 = arith.constant 0 : index
    %217 = vector.load %arg14[%c0_59, %c0_60] : memref<1x16xf32, #tpu.memory_space<vmem>>, vector<1x16xf32>
    %218 = vector.broadcast %217 : vector<1x16xf32> to vector<256x16xf32>
    %219 = arith.addf %216, %218 : vector<256x16xf32>
    %220 = arith.negf %219 : vector<256x16xf32>
    %221 = math.exp %220 : vector<256x16xf32>
    %cst_61 = arith.constant 1.000000e+00 : f32
    %222 = vector.broadcast %cst_61 : f32 to vector<256x16xf32>
    %223 = arith.addf %222, %221 : vector<256x16xf32>
    %224 = arith.divf %222, %223 : vector<256x16xf32>
    %225 = arith.mulf %219, %224 : vector<256x16xf32>
    %226 = arith.addf %225, %82 : vector<256x16xf32>
    %227 = vector.shape_cast %226 : vector<256x16xf32> to vector<4x64x16xf32>
    %cst_62 = arith.constant dense<0.000000e+00> : vector<4x16xf32>
    %228 = vector.multi_reduction <add>, %227, %cst_62 [1] : vector<4x64x16xf32> to vector<4x16xf32>
    %cst_63 = arith.constant 6.400000e+01 : f32
    %229 = vector.broadcast %cst_63 : f32 to vector<4x16xf32>
    %230 = arith.divf %228, %229 : vector<4x16xf32>
    %231 = vector.shape_cast %230 : vector<4x16xf32> to vector<4x1x16xf32>
    %c0_64 = arith.constant 0 : index
    %c0_65 = arith.constant 0 : index
    %232 = vector.load %arg15[%c0_64, %c0_65] : memref<48x32xf32, #tpu.memory_space<vmem>>, vector<48x32xf32>
    %c0_66 = arith.constant 0 : index
    %c0_67 = arith.constant 0 : index
    %233 = vector.load %arg16[%c0_66, %c0_67] : memref<1x32xf32, #tpu.memory_space<vmem>>, vector<1x32xf32>
    %cst_68 = arith.constant 0.000000e+00 : f32
    %234 = vector.broadcast %cst_68 : f32 to vector<1x1x16xf32>
    %235 = vector.extract_strided_slice %231 {offsets = [0, 0, 0], sizes = [3, 1, 16], strides = [1, 1, 1]} : vector<4x1x16xf32> to vector<3x1x16xf32>
    %236 = tpu.concatenate %234, %235 in 0 : vector<1x1x16xf32>, vector<3x1x16xf32> -> vector<4x1x16xf32>
    %237 = vector.extract_strided_slice %231 {offsets = [1, 0, 0], sizes = [3, 1, 16], strides = [1, 1, 1]} : vector<4x1x16xf32> to vector<3x1x16xf32>
    %238 = tpu.concatenate %237, %234 in 0 : vector<3x1x16xf32>, vector<1x1x16xf32> -> vector<4x1x16xf32>
    %239 = tpu.concatenate %236, %231, %238 in 2 : vector<4x1x16xf32>, vector<4x1x16xf32>, vector<4x1x16xf32> -> vector<4x1x48xf32>
    %240 = vector.shape_cast %239 : vector<4x1x48xf32> to vector<4x48xf32>
    %cst_69 = arith.constant dense<0.000000e+00> : vector<4x32xf32>
    %241 = tpu.matmul %240, %232, %cst_69 {dimension_numbers = #tpu.dot_dimension_numbers<[1], [0], [0], [1], [0, 0, 1, 1], [], []>} : vector<4x48xf32>, vector<48x32xf32>, vector<4x32xf32> -> vector<4x32xf32>
    %242 = vector.broadcast %233 : vector<1x32xf32> to vector<4x32xf32>
    %243 = arith.addf %241, %242 : vector<4x32xf32>
    %cst_70 = arith.constant 0.000000e+00 : f32
    %244 = vector.broadcast %cst_70 : f32 to vector<4x32xf32>
    %245 = arith.maximumf %243, %244 : vector<4x32xf32>
    %246 = vector.shape_cast %245 : vector<4x32xf32> to vector<4x1x32xf32>
    %c0_71 = arith.constant 0 : index
    %c0_72 = arith.constant 0 : index
    %247 = vector.load %arg17[%c0_71, %c0_72] : memref<96x32xf32, #tpu.memory_space<vmem>>, vector<96x32xf32>
    %c0_73 = arith.constant 0 : index
    %c0_74 = arith.constant 0 : index
    %248 = vector.load %arg18[%c0_73, %c0_74] : memref<1x32xf32, #tpu.memory_space<vmem>>, vector<1x32xf32>
    %cst_75 = arith.constant 0.000000e+00 : f32
    %249 = vector.broadcast %cst_75 : f32 to vector<1x1x32xf32>
    %250 = vector.extract_strided_slice %246 {offsets = [0, 0, 0], sizes = [3, 1, 32], strides = [1, 1, 1]} : vector<4x1x32xf32> to vector<3x1x32xf32>
    %251 = tpu.concatenate %249, %250 in 0 : vector<1x1x32xf32>, vector<3x1x32xf32> -> vector<4x1x32xf32>
    %252 = vector.extract_strided_slice %246 {offsets = [1, 0, 0], sizes = [3, 1, 32], strides = [1, 1, 1]} : vector<4x1x32xf32> to vector<3x1x32xf32>
    %253 = tpu.concatenate %252, %249 in 0 : vector<3x1x32xf32>, vector<1x1x32xf32> -> vector<4x1x32xf32>
    %254 = tpu.concatenate %251, %246, %253 in 2 : vector<4x1x32xf32>, vector<4x1x32xf32>, vector<4x1x32xf32> -> vector<4x1x96xf32>
    %255 = vector.shape_cast %254 : vector<4x1x96xf32> to vector<4x96xf32>
    %cst_76 = arith.constant dense<0.000000e+00> : vector<4x32xf32>
    %256 = tpu.matmul %255, %247, %cst_76 {dimension_numbers = #tpu.dot_dimension_numbers<[1], [0], [0], [1], [0, 0, 1, 1], [], []>} : vector<4x96xf32>, vector<96x32xf32>, vector<4x32xf32> -> vector<4x32xf32>
    %257 = vector.broadcast %248 : vector<1x32xf32> to vector<4x32xf32>
    %258 = arith.addf %256, %257 : vector<4x32xf32>
    %259 = vector.extract_strided_slice %258 {offsets = [0, 0], sizes = [4, 16], strides = [1, 1]} : vector<4x32xf32> to vector<4x16xf32>
    %260 = vector.extract_strided_slice %258 {offsets = [0, 16], sizes = [4, 16], strides = [1, 1]} : vector<4x32xf32> to vector<4x16xf32>
    %261 = arith.maximumf %259, %260 : vector<4x16xf32>
    %262 = arith.subf %259, %261 : vector<4x16xf32>
    %263 = math.exp %262 : vector<4x16xf32>
    %264 = arith.subf %260, %261 : vector<4x16xf32>
    %265 = math.exp %264 : vector<4x16xf32>
    %266 = arith.addf %263, %265 : vector<4x16xf32>
    %cst_77 = arith.constant 1.000000e+00 : f32
    %267 = vector.broadcast %cst_77 : f32 to vector<4x16xf32>
    %268 = arith.divf %267, %266 : vector<4x16xf32>
    %269 = arith.mulf %263, %268 : vector<4x16xf32>
    %270 = vector.shape_cast %269 : vector<4x16xf32> to vector<4x1x16xf32>
    %271 = arith.mulf %265, %268 : vector<4x16xf32>
    %272 = vector.shape_cast %271 : vector<4x16xf32> to vector<4x1x16xf32>
    %273 = vector.shape_cast %225 : vector<256x16xf32> to vector<4x64x16xf32>
    %274 = vector.broadcast %270 : vector<4x1x16xf32> to vector<4x64x16xf32>
    %275 = arith.mulf %273, %274 : vector<4x64x16xf32>
    %276 = vector.shape_cast %82 : vector<256x16xf32> to vector<4x64x16xf32>
    %277 = vector.broadcast %272 : vector<4x1x16xf32> to vector<4x64x16xf32>
    %278 = arith.mulf %276, %277 : vector<4x64x16xf32>
    %279 = arith.addf %275, %278 : vector<4x64x16xf32>
    %280 = vector.shape_cast %279 : vector<4x64x16xf32> to vector<4x8x8x16xf32>
    %c0_78 = arith.constant 0 : index
    %c0_79 = arith.constant 0 : index
    %c0_80 = arith.constant 0 : index
    %c0_81 = arith.constant 0 : index
    %c0_82 = arith.constant 0 : index
    %281 = vector.load %arg19[%c0_78, %c0_79, %c0_80, %c0_81, %c0_82] : memref<1x4x8x8x16xf32, #tpu.memory_space<vmem>>, vector<1x4x8x8x16xf32>
    %282 = vector.shape_cast %281 : vector<1x4x8x8x16xf32> to vector<4x8x8x16xf32>
    %283 = vector.shape_cast %280 : vector<4x8x8x16xf32> to vector<1x4x8x8x16xf32>
    tpu.vector_store %arg19[%c0_78, %c0_79, %c0_80, %c0_81, %c0_82], %283 {strides = array<i32>} : memref<1x4x8x8x16xf32, #tpu.memory_space<vmem>>, vector<1x4x8x8x16xf32>,
    return
  }
  func.func @transform_0(%arg0: i32) -> (i32, i32, i32, i32, i32) {
    %c0_i32 = arith.constant 0 : i32
    %c0_i32_0 = arith.constant 0 : i32
    %c0_i32_1 = arith.constant 0 : i32
    %c0_i32_2 = arith.constant 0 : i32
    %c0_i32_3 = arith.constant 0 : i32
    return %arg0, %c0_i32, %c0_i32_0, %c0_i32_1, %c0_i32_2 : i32, i32, i32, i32, i32
  }
  func.func @transform_1(%arg0: i32) -> (i32, i32, i32) {
    %c0_i32 = arith.constant 0 : i32
    %c0_i32_0 = arith.constant 0 : i32
    %c0_i32_1 = arith.constant 0 : i32
    %c0_i32_2 = arith.constant 0 : i32
    return %c0_i32, %c0_i32_0, %c0_i32_1 : i32, i32, i32
  }
  func.func @transform_2(%arg0: i32) -> (i32, i32) {
    %c0_i32 = arith.constant 0 : i32
    %c0_i32_0 = arith.constant 0 : i32
    %c0_i32_1 = arith.constant 0 : i32
    return %c0_i32, %c0_i32_0 : i32, i32
  }
  func.func @transform_3(%arg0: i32) -> (i32, i32) {
    %c0_i32 = arith.constant 0 : i32
    %c0_i32_0 = arith.constant 0 : i32
    %c0_i32_1 = arith.constant 0 : i32
    return %c0_i32, %c0_i32_0 : i32, i32
  }
  func.func @transform_4(%arg0: i32) -> (i32, i32) {
    %c0_i32 = arith.constant 0 : i32
    %c0_i32_0 = arith.constant 0 : i32
    %c0_i32_1 = arith.constant 0 : i32
    return %c0_i32, %c0_i32_0 : i32, i32
  }
  func.func @transform_5(%arg0: i32) -> (i32, i32) {
    %c0_i32 = arith.constant 0 : i32
    %c0_i32_0 = arith.constant 0 : i32
    %c0_i32_1 = arith.constant 0 : i32
    return %c0_i32, %c0_i32_0 : i32, i32
  }
  func.func @transform_6(%arg0: i32) -> (i32, i32) {
    %c0_i32 = arith.constant 0 : i32
    %c0_i32_0 = arith.constant 0 : i32
    %c0_i32_1 = arith.constant 0 : i32
    return %c0_i32, %c0_i32_0 : i32, i32
  }
  func.func @transform_7(%arg0: i32) -> (i32, i32) {
    %c0_i32 = arith.constant 0 : i32
    %c0_i32_0 = arith.constant 0 : i32
    %c0_i32_1 = arith.constant 0 : i32
    return %c0_i32, %c0_i32_0 : i32, i32
  }
  func.func @transform_8(%arg0: i32) -> (i32, i32) {
    %c0_i32 = arith.constant 0 : i32
    %c0_i32_0 = arith.constant 0 : i32
    %c0_i32_1 = arith.constant 0 : i32
    return %c0_i32, %c0_i32_0 : i32, i32
  }
  func.func @transform_9(%arg0: i32) -> (i32, i32) {
    %c0_i32 = arith.constant 0 : i32
    %c0_i32_0 = arith.constant 0 : i32
    %c0_i32_1 = arith.constant 0 : i32
    return %c0_i32, %c0_i32_0 : i32, i32
  }
  func.func @transform_10(%arg0: i32) -> (i32, i32) {
    %c0_i32 = arith.constant 0 : i32
    %c0_i32_0 = arith.constant 0 : i32
    %c0_i32_1 = arith.constant 0 : i32
    return %c0_i32, %c0_i32_0 : i32, i32
  }
  func.func @transform_11(%arg0: i32) -> (i32, i32) {
    %c0_i32 = arith.constant 0 : i32
    %c0_i32_0 = arith.constant 0 : i32
    %c0_i32_1 = arith.constant 0 : i32
    return %c0_i32, %c0_i32_0 : i32, i32
  }
  func.func @transform_12(%arg0: i32) -> (i32, i32) {
    %c0_i32 = arith.constant 0 : i32
    %c0_i32_0 = arith.constant 0 : i32
    %c0_i32_1 = arith.constant 0 : i32
    return %c0_i32, %c0_i32_0 : i32, i32
  }
  func.func @transform_13(%arg0: i32) -> (i32, i32) {
    %c0_i32 = arith.constant 0 : i32
    %c0_i32_0 = arith.constant 0 : i32
    %c0_i32_1 = arith.constant 0 : i32
    return %c0_i32, %c0_i32_0 : i32, i32
  }
  func.func @transform_14(%arg0: i32) -> (i32, i32) {
    %c0_i32 = arith.constant 0 : i32
    %c0_i32_0 = arith.constant 0 : i32
    %c0_i32_1 = arith.constant 0 : i32
    return %c0_i32, %c0_i32_0 : i32, i32
  }
  func.func @transform_15(%arg0: i32) -> (i32, i32) {
    %c0_i32 = arith.constant 0 : i32
    %c0_i32_0 = arith.constant 0 : i32
    %c0_i32_1 = arith.constant 0 : i32
    return %c0_i32, %c0_i32_0 : i32, i32
  }
  func.func @transform_16(%arg0: i32) -> (i32, i32) {
    %c0_i32 = arith.constant 0 : i32
    %c0_i32_0 = arith.constant 0 : i32
    %c0_i32_1 = arith.constant 0 : i32
    return %c0_i32, %c0_i32_0 : i32, i32
  }
  func.func @transform_17(%arg0: i32) -> (i32, i32) {
    %c0_i32 = arith.constant 0 : i32
    %c0_i32_0 = arith.constant 0 : i32
    %c0_i32_1 = arith.constant 0 : i32
    return %c0_i32, %c0_i32_0 : i32, i32
  }
  func.func @transform_18(%arg0: i32) -> (i32, i32, i32, i32, i32) {
    %c0_i32 = arith.constant 0 : i32
    %c0_i32_0 = arith.constant 0 : i32
    %c0_i32_1 = arith.constant 0 : i32
    %c0_i32_2 = arith.constant 0 : i32
    %c0_i32_3 = arith.constant 0 : i32
    return %arg0, %c0_i32, %c0_i32_0, %c0_i32_1, %c0_i32_2 : i32, i32, i32, i32, i32
  }
}

</mosaic_0001>

<llo_original>
// kernel: tpu_custom_call.1
$region0: #{tpu_custom_call.1}
  #allocation0 [shape = 'u32[]', space=smem, size = 0x4, offset = 0x4, fixed_abs, tag = 'smem constant byte address 0x4 - core index']
  #allocation1 [shape = 'u32[144,128]{1,0:T(1,128)}', space=vmem, size = 0x12000, scoped, tag = 'internal scratch']
  %s0 = inlined_call_operand.vmem [shape: f32[2,4,8,8,16], index: 0, kind: input, shape index: {}]
  %s1 = inlined_call_operand.vmem [shape: f32[3,144,16], index: 1, kind: input, shape index: {}]
  %s2 = inlined_call_operand.vmem [shape: f32[1,16], index: 2, kind: input, shape index: {}]
  %s3 = inlined_call_operand.vmem [shape: f32[96,8], index: 3, kind: input, shape index: {}]
  %s4 = inlined_call_operand.vmem [shape: f32[1,8], index: 4, kind: input, shape index: {}]
  %s5 = inlined_call_operand.vmem [shape: f32[24,18], index: 5, kind: input, shape index: {}]
  %s6 = inlined_call_operand.vmem [shape: f32[1,18], index: 6, kind: input, shape index: {}]
  %s7 = inlined_call_operand.vmem [shape: f32[1,18], index: 7, kind: input, shape index: {}]
  %s8 = inlined_call_operand.vmem [shape: f32[1,18], index: 8, kind: input, shape index: {}]
  %s9 = inlined_call_operand.vmem [shape: f32[18,2], index: 9, kind: input, shape index: {}]
  %s10 = inlined_call_operand.vmem [shape: f32[48,16], index: 10, kind: input, shape index: {}]
  %s11 = inlined_call_operand.vmem [shape: f32[1,16], index: 11, kind: input, shape index: {}]
  %s12 = inlined_call_operand.vmem [shape: f32[1,16], index: 12, kind: input, shape index: {}]
  %s13 = inlined_call_operand.vmem [shape: f32[1,16], index: 13, kind: input, shape index: {}]
  %s14 = inlined_call_operand.vmem [shape: f32[48,32], index: 14, kind: input, shape index: {}]
  %s15 = inlined_call_operand.vmem [shape: f32[1,32], index: 15, kind: input, shape index: {}]
  %s16 = inlined_call_operand.vmem [shape: f32[96,32], index: 16, kind: input, shape index: {}]
  %s17 = inlined_call_operand.vmem [shape: f32[1,32], index: 17, kind: input, shape index: {}]
  %s18 = inlined_call_operand.hbm [shape: f32[2,4,8,8,16], index: 18, kind: output, shape index: {}]
  %s19 = sld [smem:[#allocation0]]
  $region105: #{tpu_custom_call.1} parent=0
    _
  %s21 = ssub.s32 1, %s19
  %s22 = scalar_select 0, %s21, %s19
  $region1: #{tpu_custom_call.1} parent=0
    #allocation2 [shape = 'u8[262144]{0}', space=vmem, size = 0x40000, scoped, tag = 'output window, operand 0']
    #allocation3 [shape = 's32[2]{0}', space=sflag, size = 0x8, scoped, tag = 'scoped memory for tpu_custom_call.1']
    %23 = vsyncpa [#allocation3], 0
    %s24 = scalar_lea.sflag [#allocation3], 1
    %25 = vsyncpa %s24, 0
    loop: start=0, step=1, limit=4
    $region2: #{tpu_custom_call.1} parent=1 // loop_pre_header
      _
    $region3: #{tpu_custom_call.1} parent=1 // loop_header
      %s27 = sphi 0, %s31
      %p28 = scmp.ge.s32.totalorder %s27, 4
      %s37 = sphi 0, %s39
      %s40 = sphi 0, %s37
      %s41 = sphi 0, %s40
      %s57 = sphi 0, %s41
      %s61 = sphi 0, %s61
      %s63 = sphi 0, %s61
      %s64 = sphi 0, %s63
      %s78 = sphi 0, %s64
      %s82 = sphi 0, %s82
      %s84 = sphi 0, %s82
      %s85 = sphi 0, %s84
      %s99 = sphi 0, %s85
      %s103 = sphi 0, %s103
      %s105 = sphi 0, %s103
      %s106 = sphi 0, %s105
      %s120 = sphi 0, %s106
      %s124 = sphi 0, %s124
      %s126 = sphi 0, %s124
      %s127 = sphi 0, %s126
      %s141 = sphi 0, %s127
      %s145 = sphi 0, %s145
      %s147 = sphi 0, %s145
      %s148 = sphi 0, %s147
      %s162 = sphi 0, %s148
      %s166 = sphi 0, %s166
      %s168 = sphi 0, %s166
      %s169 = sphi 0, %s168
      %s183 = sphi 0, %s169
      %s187 = sphi 0, %s187
      %s189 = sphi 0, %s187
      %s190 = sphi 0, %s189
      %s204 = sphi 0, %s190
      %s208 = sphi 0, %s208
      %s210 = sphi 0, %s208
      %s211 = sphi 0, %s210
      %s225 = sphi 0, %s211
      %s229 = sphi 0, %s229
      %s231 = sphi 0, %s229
      %s232 = sphi 0, %s231
      %s246 = sphi 0, %s232
      %s250 = sphi 0, %s250
      %s252 = sphi 0, %s250
      %s253 = sphi 0, %s252
      %s267 = sphi 0, %s253
      %s271 = sphi 0, %s271
      %s273 = sphi 0, %s271
      %s274 = sphi 0, %s273
      %s288 = sphi 0, %s274
      %s292 = sphi 0, %s292
      %s294 = sphi 0, %s292
      %s295 = sphi 0, %s294
      %s309 = sphi 0, %s295
      %s313 = sphi 0, %s313
      %s315 = sphi 0, %s313
      %s316 = sphi 0, %s315
      %s330 = sphi 0, %s316
      %s334 = sphi 0, %s334
      %s336 = sphi 0, %s334
      %s337 = sphi 0, %s336
      %s351 = sphi 0, %s337
      %s355 = sphi 0, %s355
      %s357 = sphi 0, %s355
      %s358 = sphi 0, %s357
      %s372 = sphi 0, %s358
      %s376 = sphi 0, %s376
      %s378 = sphi 0, %s376
      %s379 = sphi 0, %s378
      %s393 = sphi 0, %s379
      %s397 = sphi 0, %s397
      %s399 = sphi 0, %s397
      %s400 = sphi 0, %s399
      %s414 = sphi 0, %s400
      %s420 = sphi 0, %s422
      %s423 = sphi 0, %s420
      %s424 = sphi 0, %s423
      %s440 = sphi 0, %s424
    $region4: #{tpu_custom_call.1} parent=1 // loop_header_branch
      %30 = sbr.rel (%p28) target = $region8
    $region5: #{tpu_custom_call.1} parent=1 // loop_body
      %s32 = ssub.s32 %s27, 1
      %s33 = ssub.s32 %s27, 2
      %s34 = sadd.s32 %s27, 1
      %s35 = ssub.s32 %s27, %s34
      %p36 = scmp.eq.s32.totalorder %s35, 0
      %s38 = sadd.s32 %s37, 1
      %s39 = scalar_select %p36, %s37, %s38
      %p42 = pneg %p36
      %p43 = scmp.eq.s32.totalorder %s27, 1
      %p44 = por %p42, %p43
      %p45 = scmp.ne.s32.totalorder %s37, %s40
      %p46 = scmp.eq.s32.totalorder %s27, 0
      %p47 = por %p45, %p46
      %p48 = scmp.ne.s32.totalorder %s37, %s40
      %p49 = scmp.eq.s32.totalorder %s32, 1
      %p50 = por %p48, %p49
      %p51 = scmp.ne.s32.totalorder %s40, %s41
      %p52 = scmp.eq.s32.totalorder %s32, 0
      %p53 = por %p51, %p52
      %p54 = scmp.ne.s32.totalorder %s40, %s41
      %p55 = scmp.eq.s32.totalorder %s33, 1
      %p56 = por %p54, %p55
      %p58 = scmp.ne.s32.totalorder %s41, %s57
      %p59 = scmp.eq.s32.totalorder %s33, 0
      %p60 = por %p58, %p59
      %s62 = sadd.s32 %s61, 1
      %p65 = scmp.eq.s32.totalorder %s27, 1
      %p66 = scmp.ne.s32.totalorder %s61, %s63
      %p67 = scmp.eq.s32.totalorder %s27, 0
      %p68 = por %p66, %p67
      %p69 = scmp.ne.s32.totalorder %s61, %s63
      %p70 = scmp.eq.s32.totalorder %s32, 1
      %p71 = por %p69, %p70
      %p72 = scmp.ne.s32.totalorder %s63, %s64
      %p73 = scmp.eq.s32.totalorder %s32, 0
      %p74 = por %p72, %p73
      %p75 = scmp.ne.s32.totalorder %s63, %s64
      %p76 = scmp.eq.s32.totalorder %s33, 1
      %p77 = por %p75, %p76
      %p79 = scmp.ne.s32.totalorder %s64, %s78
      %p80 = scmp.eq.s32.totalorder %s33, 0
      %p81 = por %p79, %p80
      %s83 = sadd.s32 %s82, 1
      %p86 = scmp.eq.s32.totalorder %s27, 1
      %p87 = scmp.ne.s32.totalorder %s82, %s84
      %p88 = scmp.eq.s32.totalorder %s27, 0
      %p89 = por %p87, %p88
      %p90 = scmp.ne.s32.totalorder %s82, %s84
      %p91 = scmp.eq.s32.totalorder %s32, 1
      %p92 = por %p90, %p91
      %p93 = scmp.ne.s32.totalorder %s84, %s85
      %p94 = scmp.eq.s32.totalorder %s32, 0
      %p95 = por %p93, %p94
      %p96 = scmp.ne.s32.totalorder %s84, %s85
      %p97 = scmp.eq.s32.totalorder %s33, 1
      %p98 = por %p96, %p97
      %p100 = scmp.ne.s32.totalorder %s85, %s99
      %p101 = scmp.eq.s32.totalorder %s33, 0
      %p102 = por %p100, %p101
      %s104 = sadd.s32 %s103, 1
      %p107 = scmp.eq.s32.totalorder %s27, 1
      %p108 = scmp.ne.s32.totalorder %s103, %s105
      %p109 = scmp.eq.s32.totalorder %s27, 0
      %p110 = por %p108, %p109
      %p111 = scmp.ne.s32.totalorder %s103, %s105
      %p112 = scmp.eq.s32.totalorder %s32, 1
      %p113 = por %p111, %p112
      %p114 = scmp.ne.s32.totalorder %s105, %s106
      %p115 = scmp.eq.s32.totalorder %s32, 0
      %p116 = por %p114, %p115
      %p117 = scmp.ne.s32.totalorder %s105, %s106
      %p118 = scmp.eq.s32.totalorder %s33, 1
      %p119 = por %p117, %p118
      %p121 = scmp.ne.s32.totalorder %s106, %s120
      %p122 = scmp.eq.s32.totalorder %s33, 0
      %p123 = por %p121, %p122
      %s125 = sadd.s32 %s124, 1
      %p128 = scmp.eq.s32.totalorder %s27, 1
      %p129 = scmp.ne.s32.totalorder %s124, %s126
      %p130 = scmp.eq.s32.totalorder %s27, 0
      %p131 = por %p129, %p130
      %p132 = scmp.ne.s32.totalorder %s124, %s126
      %p133 = scmp.eq.s32.totalorder %s32, 1
      %p134 = por %p132, %p133
      %p135 = scmp.ne.s32.totalorder %s126, %s127
      %p136 = scmp.eq.s32.totalorder %s32, 0
      %p137 = por %p135, %p136
      %p138 = scmp.ne.s32.totalorder %s126, %s127
      %p139 = scmp.eq.s32.totalorder %s33, 1
      %p140 = por %p138, %p139
      %p142 = scmp.ne.s32.totalorder %s127, %s141
      %p143 = scmp.eq.s32.totalorder %s33, 0
      %p144 = por %p142, %p143
      %s146 = sadd.s32 %s145, 1
      %p149 = scmp.eq.s32.totalorder %s27, 1
      %p150 = scmp.ne.s32.totalorder %s145, %s147
      %p151 = scmp.eq.s32.totalorder %s27, 0
      %p152 = por %p150, %p151
      %p153 = scmp.ne.s32.totalorder %s145, %s147
      %p154 = scmp.eq.s32.totalorder %s32, 1
      %p155 = por %p153, %p154
      %p156 = scmp.ne.s32.totalorder %s147, %s148
      %p157 = scmp.eq.s32.totalorder %s32, 0
      %p158 = por %p156, %p157
      %p159 = scmp.ne.s32.totalorder %s147, %s148
      %p160 = scmp.eq.s32.totalorder %s33, 1
      %p161 = por %p159, %p160
      %p163 = scmp.ne.s32.totalorder %s148, %s162
      %p164 = scmp.eq.s32.totalorder %s33, 0
      %p165 = por %p163, %p164
      %s167 = sadd.s32 %s166, 1
      %p170 = scmp.eq.s32.totalorder %s27, 1
      %p171 = scmp.ne.s32.totalorder %s166, %s168
      %p172 = scmp.eq.s32.totalorder %s27, 0
      %p173 = por %p171, %p172
      %p174 = scmp.ne.s32.totalorder %s166, %s168
      %p175 = scmp.eq.s32.totalorder %s32, 1
      %p176 = por %p174, %p175
      %p177 = scmp.ne.s32.totalorder %s168, %s169
      %p178 = scmp.eq.s32.totalorder %s32, 0
      %p179 = por %p177, %p178
      %p180 = scmp.ne.s32.totalorder %s168, %s169
      %p181 = scmp.eq.s32.totalorder %s33, 1
      %p182 = por %p180, %p181
      %p184 = scmp.ne.s32.totalorder %s169, %s183
      %p185 = scmp.eq.s32.totalorder %s33, 0
      %p186 = por %p184, %p185
      %s188 = sadd.s32 %s187, 1
      %p191 = scmp.eq.s32.totalorder %s27, 1
      %p192 = scmp.ne.s32.totalorder %s187, %s189
      %p193 = scmp.eq.s32.totalorder %s27, 0
      %p194 = por %p192, %p193
      %p195 = scmp.ne.s32.totalorder %s187, %s189
      %p196 = scmp.eq.s32.totalorder %s32, 1
      %p197 = por %p195, %p196
      %p198 = scmp.ne.s32.totalorder %s189, %s190
      %p199 = scmp.eq.s32.totalorder %s32, 0
      %p200 = por %p198, %p199
      %p201 = scmp.ne.s32.totalorder %s189, %s190
      %p202 = scmp.eq.s32.totalorder %s33, 1
      %p203 = por %p201, %p202
      %p205 = scmp.ne.s32.totalorder %s190, %s204
      %p206 = scmp.eq.s32.totalorder %s33, 0
      %p207 = por %p205, %p206
      %s209 = sadd.s32 %s208, 1
      %p212 = scmp.eq.s32.totalorder %s27, 1
      %p213 = scmp.ne.s32.totalorder %s208, %s210
      %p214 = scmp.eq.s32.totalorder %s27, 0
      %p215 = por %p213, %p214
      %p216 = scmp.ne.s32.totalorder %s208, %s210
      %p217 = scmp.eq.s32.totalorder %s32, 1
      %p218 = por %p216, %p217
      %p219 = scmp.ne.s32.totalorder %s210, %s211
      %p220 = scmp.eq.s32.totalorder %s32, 0
      %p221 = por %p219, %p220
      %p222 = scmp.ne.s32.totalorder %s210, %s211
      %p223 = scmp.eq.s32.totalorder %s33, 1
      %p224 = por %p222, %p223
      %p226 = scmp.ne.s32.totalorder %s211, %s225
      %p227 = scmp.eq.s32.totalorder %s33, 0
      %p228 = por %p226, %p227
      %s230 = sadd.s32 %s229, 1
      %p233 = scmp.eq.s32.totalorder %s27, 1
      %p234 = scmp.ne.s32.totalorder %s229, %s231
      %p235 = scmp.eq.s32.totalorder %s27, 0
      %p236 = por %p234, %p235
      %p237 = scmp.ne.s32.totalorder %s229, %s231
      %p238 = scmp.eq.s32.totalorder %s32, 1
      %p239 = por %p237, %p238
      %p240 = scmp.ne.s32.totalorder %s231, %s232
      %p241 = scmp.eq.s32.totalorder %s32, 0
      %p242 = por %p240, %p241
      %p243 = scmp.ne.s32.totalorder %s231, %s232
      %p244 = scmp.eq.s32.totalorder %s33, 1
      %p245 = por %p243, %p244
      %p247 = scmp.ne.s32.totalorder %s232, %s246
      %p248 = scmp.eq.s32.totalorder %s33, 0
      %p249 = por %p247, %p248
      %s251 = sadd.s32 %s250, 1
      %p254 = scmp.eq.s32.totalorder %s27, 1
      %p255 = scmp.ne.s32.totalorder %s250, %s252
      %p256 = scmp.eq.s32.totalorder %s27, 0
      %p257 = por %p255, %p256
      %p258 = scmp.ne.s32.totalorder %s250, %s252
      %p259 = scmp.eq.s32.totalorder %s32, 1
      %p260 = por %p258, %p259
      %p261 = scmp.ne.s32.totalorder %s252, %s253
      %p262 = scmp.eq.s32.totalorder %s32, 0
      %p263 = por %p261, %p262
      %p264 = scmp.ne.s32.totalorder %s252, %s253
      %p265 = scmp.eq.s32.totalorder %s33, 1
      %p266 = por %p264, %p265
      %p268 = scmp.ne.s32.totalorder %s253, %s267
      %p269 = scmp.eq.s32.totalorder %s33, 0
      %p270 = por %p268, %p269
      %s272 = sadd.s32 %s271, 1
      %p275 = scmp.eq.s32.totalorder %s27, 1
      %p276 = scmp.ne.s32.totalorder %s271, %s273
      %p277 = scmp.eq.s32.totalorder %s27, 0
      %p278 = por %p276, %p277
      %p279 = scmp.ne.s32.totalorder %s271, %s273
      %p280 = scmp.eq.s32.totalorder %s32, 1
      %p281 = por %p279, %p280
      %p282 = scmp.ne.s32.totalorder %s273, %s274
      %p283 = scmp.eq.s32.totalorder %s32, 0
      %p284 = por %p282, %p283
      %p285 = scmp.ne.s32.totalorder %s273, %s274
      %p286 = scmp.eq.s32.totalorder %s33, 1
      %p287 = por %p285, %p286
      %p289 = scmp.ne.s32.totalorder %s274, %s288
      %p290 = scmp.eq.s32.totalorder %s33, 0
      %p291 = por %p289, %p290
      %s293 = sadd.s32 %s292, 1
      %p296 = scmp.eq.s32.totalorder %s27, 1
      %p297 = scmp.ne.s32.totalorder %s292, %s294
      %p298 = scmp.eq.s32.totalorder %s27, 0
      %p299 = por %p297, %p298
      %p300 = scmp.ne.s32.totalorder %s292, %s294
      %p301 = scmp.eq.s32.totalorder %s32, 1
      %p302 = por %p300, %p301
      %p303 = scmp.ne.s32.totalorder %s294, %s295
      %p304 = scmp.eq.s32.totalorder %s32, 0
      %p305 = por %p303, %p304
      %p306 = scmp.ne.s32.totalorder %s294, %s295
      %p307 = scmp.eq.s32.totalorder %s33, 1
      %p308 = por %p306, %p307
      %p310 = scmp.ne.s32.totalorder %s295, %s309
      %p311 = scmp.eq.s32.totalorder %s33, 0
      %p312 = por %p310, %p311
      %s314 = sadd.s32 %s313, 1
      %p317 = scmp.eq.s32.totalorder %s27, 1
      %p318 = scmp.ne.s32.totalorder %s313, %s315
      %p319 = scmp.eq.s32.totalorder %s27, 0
      %p320 = por %p318, %p319
      %p321 = scmp.ne.s32.totalorder %s313, %s315
      %p322 = scmp.eq.s32.totalorder %s32, 1
      %p323 = por %p321, %p322
      %p324 = scmp.ne.s32.totalorder %s315, %s316
      %p325 = scmp.eq.s32.totalorder %s32, 0
      %p326 = por %p324, %p325
      %p327 = scmp.ne.s32.totalorder %s315, %s316
      %p328 = scmp.eq.s32.totalorder %s33, 1
      %p329 = por %p327, %p328
      %p331 = scmp.ne.s32.totalorder %s316, %s330
      %p332 = scmp.eq.s32.totalorder %s33, 0
      %p333 = por %p331, %p332
      %s335 = sadd.s32 %s334, 1
      %p338 = scmp.eq.s32.totalorder %s27, 1
      %p339 = scmp.ne.s32.totalorder %s334, %s336
      %p340 = scmp.eq.s32.totalorder %s27, 0
      %p341 = por %p339, %p340
      %p342 = scmp.ne.s32.totalorder %s334, %s336
      %p343 = scmp.eq.s32.totalorder %s32, 1
      %p344 = por %p342, %p343
      %p345 = scmp.ne.s32.totalorder %s336, %s337
      %p346 = scmp.eq.s32.totalorder %s32, 0
      %p347 = por %p345, %p346
      %p348 = scmp.ne.s32.totalorder %s336, %s337
      %p349 = scmp.eq.s32.totalorder %s33, 1
      %p350 = por %p348, %p349
      %p352 = scmp.ne.s32.totalorder %s337, %s351
      %p353 = scmp.eq.s32.totalorder %s33, 0
      %p354 = por %p352, %p353
      %s356 = sadd.s32 %s355, 1
      %p359 = scmp.eq.s32.totalorder %s27, 1
      %p360 = scmp.ne.s32.totalorder %s355, %s357
      %p361 = scmp.eq.s32.totalorder %s27, 0
      %p362 = por %p360, %p361
      %p363 = scmp.ne.s32.totalorder %s355, %s357
      %p364 = scmp.eq.s32.totalorder %s32, 1
      %p365 = por %p363, %p364
      %p366 = scmp.ne.s32.totalorder %s357, %s358
      %p367 = scmp.eq.s32.totalorder %s32, 0
      %p368 = por %p366, %p367
      %p369 = scmp.ne.s32.totalorder %s357, %s358
      %p370 = scmp.eq.s32.totalorder %s33, 1
      %p371 = por %p369, %p370
      %p373 = scmp.ne.s32.totalorder %s358, %s372
      %p374 = scmp.eq.s32.totalorder %s33, 0
      %p375 = por %p373, %p374
      %s377 = sadd.s32 %s376, 1
      %p380 = scmp.eq.s32.totalorder %s27, 1
      %p381 = scmp.ne.s32.totalorder %s376, %s378
      %p382 = scmp.eq.s32.totalorder %s27, 0
      %p383 = por %p381, %p382
      %p384 = scmp.ne.s32.totalorder %s376, %s378
      %p385 = scmp.eq.s32.totalorder %s32, 1
      %p386 = por %p384, %p385
      %p387 = scmp.ne.s32.totalorder %s378, %s379
      %p388 = scmp.eq.s32.totalorder %s32, 0
      %p389 = por %p387, %p388
      %p390 = scmp.ne.s32.totalorder %s378, %s379
      %p391 = scmp.eq.s32.totalorder %s33, 1
      %p392 = por %p390, %p391
      %p394 = scmp.ne.s32.totalorder %s379, %s393
      %p395 = scmp.eq.s32.totalorder %s33, 0
      %p396 = por %p394, %p395
      %s398 = sadd.s32 %s397, 1
      %p401 = scmp.eq.s32.totalorder %s27, 1
      %p402 = scmp.ne.s32.totalorder %s397, %s399
      %p403 = scmp.eq.s32.totalorder %s27, 0
      %p404 = por %p402, %p403
      %p405 = scmp.ne.s32.totalorder %s397, %s399
      %p406 = scmp.eq.s32.totalorder %s32, 1
      %p407 = por %p405, %p406
      %p408 = scmp.ne.s32.totalorder %s399, %s400
      %p409 = scmp.eq.s32.totalorder %s32, 0
      %p410 = por %p408, %p409
      %p411 = scmp.ne.s32.totalorder %s399, %s400
      %p412 = scmp.eq.s32.totalorder %s33, 1
      %p413 = por %p411, %p412
      %p415 = scmp.ne.s32.totalorder %s400, %s414
      %p416 = scmp.eq.s32.totalorder %s33, 0
      %p417 = por %p415, %p416
      %s418 = ssub.s32 %s27, %s34
      %p419 = scmp.eq.s32.totalorder %s418, 0
      %s421 = sadd.s32 %s420, 1
      %s422 = scalar_select %p419, %s420, %s421
      %p425 = pneg %p419
      %p426 = scmp.eq.s32.totalorder %s27, 1
      %p427 = por %p425, %p426
      %p428 = scmp.ne.s32.totalorder %s420, %s423
      %p429 = scmp.eq.s32.totalorder %s27, 0
      %p430 = por %p428, %p429
      %p431 = scmp.ne.s32.totalorder %s420, %s423
      %p432 = scmp.eq.s32.totalorder %s32, 1
      %p433 = por %p431, %p432
      %p434 = scmp.ne.s32.totalorder %s423, %s424
      %p435 = scmp.eq.s32.totalorder %s32, 0
      %p436 = por %p434, %p435
      %p437 = scmp.ne.s32.totalorder %s423, %s424
      %p438 = scmp.eq.s32.totalorder %s33, 1
      %p439 = por %p437, %p438
      %p441 = scmp.ne.s32.totalorder %s424, %s440
      %p442 = scmp.eq.s32.totalorder %s33, 0
      %p443 = por %p441, %p442
      %p444 = scmp.le.s32.totalorder 1, %s27
      %p445 = scmp.lt.s32.totalorder %s27, 3
      %p446 = pnand %p444, %p445
      %p447 = pneg %p446
      // Predicated region
      $region9: #{tpu_custom_call.1} parent=5 // pred_check
        _
      $region10: #{tpu_custom_call.1} parent=5 // pred_check_branch
        %449 = sbr.rel (%p446) target = $region12
      $region11: #{tpu_custom_call.1} parent=5 // pred_region
        %s450 = ssub.s32 %s27, 1
        // Predicated region
        $region13: #{tpu_custom_call.1} parent=11 // pred_check
          %p451 = pneg %p74
        $region14: #{tpu_custom_call.1} parent=11 // pred_check_branch
          %453 = sbr.rel (%p451) target = $region16
        $region15: #{tpu_custom_call.1} parent=11 // pred_region
          _
        $region16: #{tpu_custom_call.1} parent=11 // pred_fallthru
          _
        // Predicated region
        $region17: #{tpu_custom_call.1} parent=11 // pred_check
          %p454 = pneg %p95
        $region18: #{tpu_custom_call.1} parent=11 // pred_check_branch
          %456 = sbr.rel (%p454) target = $region20
        $region19: #{tpu_custom_call.1} parent=11 // pred_region
          _
        $region20: #{tpu_custom_call.1} parent=11 // pred_fallthru
          _
        // Predicated region
        $region21: #{tpu_custom_call.1} parent=11 // pred_check
          %p457 = pneg %p116
        $region22: #{tpu_custom_call.1} parent=11 // pred_check_branch
          %459 = sbr.rel (%p457) target = $region24
        $region23: #{tpu_custom_call.1} parent=11 // pred_region
          _
        $region24: #{tpu_custom_call.1} parent=11 // pred_fallthru
          _
        // Predicated region
        $region25: #{tpu_custom_call.1} parent=11 // pred_check
          %p460 = pneg %p137
        $region26: #{tpu_custom_call.1} parent=11 // pred_check_branch
          %462 = sbr.rel (%p460) target = $region28
        $region27: #{tpu_custom_call.1} parent=11 // pred_region
          _
        $region28: #{tpu_custom_call.1} parent=11 // pred_fallthru
          _
        // Predicated region
        $region29: #{tpu_custom_call.1} parent=11 // pred_check
          %p463 = pneg %p158
        $region30: #{tpu_custom_call.1} parent=11 // pred_check_branch
          %465 = sbr.rel (%p463) target = $region32
        $region31: #{tpu_custom_call.1} parent=11 // pred_region
          _
        $region32: #{tpu_custom_call.1} parent=11 // pred_fallthru
          _
        // Predicated region
        $region33: #{tpu_custom_call.1} parent=11 // pred_check
          %p466 = pneg %p179
        $region34: #{tpu_custom_call.1} parent=11 // pred_check_branch
          %468 = sbr.rel (%p466) target = $region36
        $region35: #{tpu_custom_call.1} parent=11 // pred_region
          _
        $region36: #{tpu_custom_call.1} parent=11 // pred_fallthru
          _
        // Predicated region
        $region37: #{tpu_custom_call.1} parent=11 // pred_check
          %p469 = pneg %p200
        $region38: #{tpu_custom_call.1} parent=11 // pred_check_branch
          %471 = sbr.rel (%p469) target = $region40
        $region39: #{tpu_custom_call.1} parent=11 // pred_region
          _
        $region40: #{tpu_custom_call.1} parent=11 // pred_fallthru
          _
        // Predicated region
        $region41: #{tpu_custom_call.1} parent=11 // pred_check
          %p472 = pneg %p221
        $region42: #{tpu_custom_call.1} parent=11 // pred_check_branch
          %474 = sbr.rel (%p472) target = $region44
        $region43: #{tpu_custom_call.1} parent=11 // pred_region
          _
        $region44: #{tpu_custom_call.1} parent=11 // pred_fallthru
          _
        // Predicated region
        $region45: #{tpu_custom_call.1} parent=11 // pred_check
          %p475 = pneg %p242
        $region46: #{tpu_custom_call.1} parent=11 // pred_check_branch
          %477 = sbr.rel (%p475) target = $region48
        $region47: #{tpu_custom_call.1} parent=11 // pred_region
          _
        $region48: #{tpu_custom_call.1} parent=11 // pred_fallthru
          _
        // Predicated region
        $region49: #{tpu_custom_call.1} parent=11 // pred_check
          %p478 = pneg %p263
        $region50: #{tpu_custom_call.1} parent=11 // pred_check_branch
          %480 = sbr.rel (%p478) target = $region52
        $region51: #{tpu_custom_call.1} parent=11 // pred_region
          _
        $region52: #{tpu_custom_call.1} parent=11 // pred_fallthru
          _
        // Predicated region
        $region53: #{tpu_custom_call.1} parent=11 // pred_check
          %p481 = pneg %p284
        $region54: #{tpu_custom_call.1} parent=11 // pred_check_branch
          %483 = sbr.rel (%p481) target = $region56
        $region55: #{tpu_custom_call.1} parent=11 // pred_region
          _
        $region56: #{tpu_custom_call.1} parent=11 // pred_fallthru
          _
        // Predicated region
        $region57: #{tpu_custom_call.1} parent=11 // pred_check
          %p484 = pneg %p305
        $region58: #{tpu_custom_call.1} parent=11 // pred_check_branch
          %486 = sbr.rel (%p484) target = $region60
        $region59: #{tpu_custom_call.1} parent=11 // pred_region
          _
        $region60: #{tpu_custom_call.1} parent=11 // pred_fallthru
          _
        // Predicated region
        $region61: #{tpu_custom_call.1} parent=11 // pred_check
          %p487 = pneg %p326
        $region62: #{tpu_custom_call.1} parent=11 // pred_check_branch
          %489 = sbr.rel (%p487) target = $region64
        $region63: #{tpu_custom_call.1} parent=11 // pred_region
          _
        $region64: #{tpu_custom_call.1} parent=11 // pred_fallthru
          _
        // Predicated region
        $region65: #{tpu_custom_call.1} parent=11 // pred_check
          %p490 = pneg %p347
        $region66: #{tpu_custom_call.1} parent=11 // pred_check_branch
          %492 = sbr.rel (%p490) target = $region68
        $region67: #{tpu_custom_call.1} parent=11 // pred_region
          _
        $region68: #{tpu_custom_call.1} parent=11 // pred_fallthru
          _
        // Predicated region
        $region69: #{tpu_custom_call.1} parent=11 // pred_check
          %p493 = pneg %p368
        $region70: #{tpu_custom_call.1} parent=11 // pred_check_branch
          %495 = sbr.rel (%p493) target = $region72
        $region71: #{tpu_custom_call.1} parent=11 // pred_region
          _
        $region72: #{tpu_custom_call.1} parent=11 // pred_fallthru
          _
        // Predicated region
        $region73: #{tpu_custom_call.1} parent=11 // pred_check
          %p496 = pneg %p389
        $region74: #{tpu_custom_call.1} parent=11 // pred_check_branch
          %498 = sbr.rel (%p496) target = $region76
        $region75: #{tpu_custom_call.1} parent=11 // pred_region
          _
        $region76: #{tpu_custom_call.1} parent=11 // pred_fallthru
          _
        // Predicated region
        $region77: #{tpu_custom_call.1} parent=11 // pred_check
          %p499 = pneg %p410
        $region78: #{tpu_custom_call.1} parent=11 // pred_check_branch
          %501 = sbr.rel (%p499) target = $region80
        $region79: #{tpu_custom_call.1} parent=11 // pred_region
          _
        $region80: #{tpu_custom_call.1} parent=11 // pred_fallthru
          _
      $region12: #{tpu_custom_call.1} parent=5 // pred_fallthru
        _
      %p502 = scmp.lt.s32.totalorder %s27, 2
      // Predicated region
      $region81: #{tpu_custom_call.1} parent=5 // pred_check
        %p503 = pneg %p502
      $region82: #{tpu_custom_call.1} parent=5 // pred_check_branch
        %505 = sbr.rel (%p503) target = $region84
      $region83: #{tpu_custom_call.1} parent=5 // pred_region
        // Predicated region
        $region85: #{tpu_custom_call.1} parent=83 // pred_check
          %p506 = pneg %p47
        $region86: #{tpu_custom_call.1} parent=83 // pred_check_branch
          %508 = sbr.rel (%p506) target = $region88
        $region87: #{tpu_custom_call.1} parent=83 // pred_region
          %p509 = scmp.lt.s32.totalorder %s27, 1
          %s510 = scalar_select %p509, %s27, 1
          %s511 = smul.addr %s510, 32
          %s512 = smul.addr %s511, 8
          %s513 = scalar_lea.vmem %s0, %s512
        $region88: #{tpu_custom_call.1} parent=83 // pred_fallthru
          _
      $region84: #{tpu_custom_call.1} parent=5 // pred_fallthru
        _
      %p514 = scmp.le.s32.totalorder 1, %s27
      %p515 = scmp.lt.s32.totalorder %s27, 3
      %p516 = pnand %p514, %p515
      %p517 = pneg %p516
      // Predicated region
      $region89: #{tpu_custom_call.1} parent=5 // pred_check
        _
      $region90: #{tpu_custom_call.1} parent=5 // pred_check_branch
        %519 = sbr.rel (%p516) target = $region92
      $region91: #{tpu_custom_call.1} parent=5 // pred_region
        %s520 = ssub.s32 %s27, 1
        %p521 = scmp.lt.s32.totalorder %s32, 1
        %s522 = scalar_select %p521, %s32, 1
        %s523 = smul.addr %s522, 32
        %s524 = smul.addr %s523, 8
        %s525 = scalar_lea.vmem %s0, %s524
        %p526 = pneg %p53
        %p527 = pneg %p50
        %p528 = pneg %p74
        %p529 = pneg %p71
        %p530 = pneg %p95
        %p531 = pneg %p92
        %p532 = pneg %p116
        %p533 = pneg %p113
        %p534 = pneg %p137
        %p535 = pneg %p134
        %p536 = pneg %p158
        %p537 = pneg %p155
        %p538 = pneg %p179
        %p539 = pneg %p176
        %p540 = pneg %p200
        %p541 = pneg %p197
        %p542 = pneg %p221
        %p543 = pneg %p218
        %p544 = pneg %p242
        %p545 = pneg %p239
        %p546 = pneg %p263
        %p547 = pneg %p260
        %p548 = pneg %p284
        %p549 = pneg %p281
        %p550 = pneg %p305
        %p551 = pneg %p302
        %p552 = pneg %p326
        %p553 = pneg %p323
        %p554 = pneg %p347
        %p555 = pneg %p344
        %p556 = pneg %p368
        %p557 = pneg %p365
        %p558 = pneg %p389
        %p559 = pneg %p386
        %p560 = pneg %p410
        %p561 = pneg %p407
        %p562 = pneg %p436
        %p563 = pneg %p433
        %s564 = sand.u32 %s423, 1
        %s565 = scalar_lea.sflag [#allocation3], %s564
        %s566 = sand.u32 %s423, 1
        %s567 = smul.addr %s566, 256
        %s568 = scalar_lea.vmem [#allocation2], %s567
        %p569 = scmp.lt.s32.totalorder %s32, 1
        %s570 = scalar_select %p569, %s32, 1
        %s571 = smul.addr %s570, 32
        %s572 = smul.addr %s571, 8
        %s573 = scalar_lea.vmem %s0, %s572
        %v574 = vld [vmem:[%s573] sm:$0xff]
        %v575 = vld [vmem:[%s573 + $0x8] sm:$0xff]
        %v576 = vld [vmem:[%s573 + $0x10] sm:$0xff]
        %v577 = vld [vmem:[%s573 + $0x18] sm:$0xff]
        %v578 = vld [vmem:[%s573 + $0x20] sm:$0xff]
        %v579 = vld [vmem:[%s573 + $0x28] sm:$0xff]
        %v580 = vld [vmem:[%s573 + $0x30] sm:$0xff]
        %v581 = vld [vmem:[%s573 + $0x38] sm:$0xff]
        %v582 = vld [vmem:[%s573 + $0x40] sm:$0xff]
        %v583 = vld [vmem:[%s573 + $0x48] sm:$0xff]
        %v584 = vld [vmem:[%s573 + $0x50] sm:$0xff]
        %v585 = vld [vmem:[%s573 + $0x58] sm:$0xff]
        %v586 = vld [vmem:[%s573 + $0x60] sm:$0xff]
        %v587 = vld [vmem:[%s573 + $0x68] sm:$0xff]
        %v588 = vld [vmem:[%s573 + $0x70] sm:$0xff]
        %v589 = vld [vmem:[%s573 + $0x78] sm:$0xff]
        %v590 = vld [vmem:[%s573 + $0x80] sm:$0xff]
        %v591 = vld [vmem:[%s573 + $0x88] sm:$0xff]
        %v592 = vld [vmem:[%s573 + $0x90] sm:$0xff]
        %v593 = vld [vmem:[%s573 + $0x98] sm:$0xff]
        %v594 = vld [vmem:[%s573 + $0xa0] sm:$0xff]
        %v595 = vld [vmem:[%s573 + $0xa8] sm:$0xff]
        %v596 = vld [vmem:[%s573 + $0xb0] sm:$0xff]
        %v597 = vld [vmem:[%s573 + $0xb8] sm:$0xff]
        %v598 = vld [vmem:[%s573 + $0xc0] sm:$0xff]
        %v599 = vld [vmem:[%s573 + $0xc8] sm:$0xff]
        %v600 = vld [vmem:[%s573 + $0xd0] sm:$0xff]
        %v601 = vld [vmem:[%s573 + $0xd8] sm:$0xff]
        %v602 = vld [vmem:[%s573 + $0xe0] sm:$0xff]
        %v603 = vld [vmem:[%s573 + $0xe8] sm:$0xff]
        %v604 = vld [vmem:[%s573 + $0xf0] sm:$0xff]
        %v605 = vld [vmem:[%s573 + $0xf8] sm:$0xff]
        %v638 = vrot.slane %v574, 7
        %v639 = vrot.slane %v575, 7
        %v640 = vrot.slane %v576, 7
        %v641 = vrot.slane %v577, 7
        %v642 = vrot.slane %v578, 7
        %v643 = vrot.slane %v579, 7
        %v644 = vrot.slane %v580, 7
        %v645 = vrot.slane %v581, 7
        %v646 = vrot.slane %v582, 7
        %v647 = vrot.slane %v583, 7
        %v648 = vrot.slane %v584, 7
        %v649 = vrot.slane %v585, 7
        %v650 = vrot.slane %v586, 7
        %v651 = vrot.slane %v587, 7
        %v652 = vrot.slane %v588, 7
        %v653 = vrot.slane %v589, 7
        %v654 = vrot.slane %v590, 7
        %v655 = vrot.slane %v591, 7
        %v656 = vrot.slane %v592, 7
        %v657 = vrot.slane %v593, 7
        %v658 = vrot.slane %v594, 7
        %v659 = vrot.slane %v595, 7
        %v660 = vrot.slane %v596, 7
        %v661 = vrot.slane %v597, 7
        %v662 = vrot.slane %v598, 7
        %v663 = vrot.slane %v599, 7
        %v664 = vrot.slane %v600, 7
        %v665 = vrot.slane %v601, 7
        %v666 = vrot.slane %v602, 7
        %v667 = vrot.slane %v603, 7
        %v668 = vrot.slane %v604, 7
        %v669 = vrot.slane %v605, 7
        %vm702 = vcmask 1040384
        %v703 = vsel %vm702, 0.0, %v638
        %v704 = vsel %vm702, 0.0, %v639
        %v705 = vsel %vm702, 0.0, %v640
        %v706 = vsel %vm702, 0.0, %v641
        %v707 = vsel %vm702, 0.0, %v642
        %v708 = vsel %vm702, 0.0, %v643
        %v709 = vsel %vm702, 0.0, %v644
        %v710 = vsel %vm702, 0.0, %v645
        %v711 = vsel %vm702, 0.0, %v646
        %v712 = vsel %vm702, 0.0, %v647
        %v713 = vsel %vm702, 0.0, %v648
        %v714 = vsel %vm702, 0.0, %v649
        %v715 = vsel %vm702, 0.0, %v650
        %v716 = vsel %vm702, 0.0, %v651
        %v717 = vsel %vm702, 0.0, %v652
        %v718 = vsel %vm702, 0.0, %v653
        %v719 = vsel %vm702, 0.0, %v654
        %v720 = vsel %vm702, 0.0, %v655
        %v721 = vsel %vm702, 0.0, %v656
        %v722 = vsel %vm702, 0.0, %v657
        %v723 = vsel %vm702, 0.0, %v658
        %v724 = vsel %vm702, 0.0, %v659
        %v725 = vsel %vm702, 0.0, %v660
        %v726 = vsel %vm702, 0.0, %v661
        %v727 = vsel %vm702, 0.0, %v662
        %v728 = vsel %vm702, 0.0, %v663
        %v729 = vsel %vm702, 0.0, %v664
        %v730 = vsel %vm702, 0.0, %v665
        %v731 = vsel %vm702, 0.0, %v666
        %v732 = vsel %vm702, 0.0, %v667
        %v733 = vsel %vm702, 0.0, %v668
        %v734 = vsel %vm702, 0.0, %v669
        %v735 = vsel %vm702, %v638, 0.0
        %v736 = vsel %vm702, %v639, 0.0
        %v737 = vsel %vm702, %v640, 0.0
        %v738 = vsel %vm702, %v641, 0.0
        %v739 = vsel %vm702, %v642, 0.0
        %v740 = vsel %vm702, %v643, 0.0
        %v741 = vsel %vm702, %v644, 0.0
        %v742 = vsel %vm702, %v645, 0.0
        %v743 = vsel %vm702, %v646, 0.0
        %v744 = vsel %vm702, %v647, 0.0
        %v745 = vsel %vm702, %v648, 0.0
        %v746 = vsel %vm702, %v649, 0.0
        %v747 = vsel %vm702, %v650, 0.0
        %v748 = vsel %vm702, %v651, 0.0
        %v749 = vsel %vm702, %v652, 0.0
        %v750 = vsel %vm702, %v653, 0.0
        %v751 = vsel %vm702, %v654, 0.0
        %v752 = vsel %vm702, %v655, 0.0
        %v753 = vsel %vm702, %v656, 0.0
        %v754 = vsel %vm702, %v657, 0.0
        %v755 = vsel %vm702, %v658, 0.0
        %v756 = vsel %vm702, %v659, 0.0
        %v757 = vsel %vm702, %v660, 0.0
        %v758 = vsel %vm702, %v661, 0.0
        %v759 = vsel %vm702, %v662, 0.0
        %v760 = vsel %vm702, %v663, 0.0
        %v761 = vsel %vm702, %v664, 0.0
        %v762 = vsel %vm702, %v665, 0.0
        %v763 = vsel %vm702, %v666, 0.0
        %v764 = vsel %vm702, %v667, 0.0
        %v765 = vsel %vm702, %v668, 0.0
        %v766 = vsel %vm702, %v669, 0.0
        %vm810 = vcmask 1046528
        %v811 = vrot.slane 0.0, 1
        %v812 = vsel %vm810, %v811, %v811
        %v813 = vrot.slane %v703, 1
        %v814 = vrot.slane %v735, 1
        %v815 = vsel %vm810, %v813, %v814
        %v816 = vrot.slane %v704, 1
        %v817 = vrot.slane %v736, 1
        %v818 = vsel %vm810, %v816, %v817
        %v819 = vrot.slane %v705, 1
        %v820 = vrot.slane %v737, 1
        %v821 = vsel %vm810, %v819, %v820
        %v822 = vrot.slane %v706, 1
        %v823 = vrot.slane %v738, 1
        %v824 = vsel %vm810, %v822, %v823
        %v825 = vrot.slane %v707, 1
        %v826 = vrot.slane %v739, 1
        %v827 = vsel %vm810, %v825, %v826
        %v828 = vrot.slane %v708, 1
        %v829 = vrot.slane %v740, 1
        %v830 = vsel %vm810, %v828, %v829
        %v831 = vrot.slane %v709, 1
        %v832 = vrot.slane %v741, 1
        %v833 = vsel %vm810, %v831, %v832
        %v834 = vrot.slane %v711, 1
        %v835 = vrot.slane %v743, 1
        %v836 = vsel %vm810, %v834, %v835
        %v837 = vrot.slane %v712, 1
        %v838 = vrot.slane %v744, 1
        %v839 = vsel %vm810, %v837, %v838
        %v840 = vrot.slane %v713, 1
        %v841 = vrot.slane %v745, 1
        %v842 = vsel %vm810, %v840, %v841
        %v843 = vrot.slane %v714, 1
        %v844 = vrot.slane %v746, 1
        %v845 = vsel %vm810, %v843, %v844
        %v846 = vrot.slane %v715, 1
        %v847 = vrot.slane %v747, 1
        %v848 = vsel %vm810, %v846, %v847
        %v849 = vrot.slane %v716, 1
        %v850 = vrot.slane %v748, 1
        %v851 = vsel %vm810, %v849, %v850
        %v852 = vrot.slane %v717, 1
        %v853 = vrot.slane %v749, 1
        %v854 = vsel %vm810, %v852, %v853
        %v855 = vrot.slane %v719, 1
        %v856 = vrot.slane %v751, 1
        %v857 = vsel %vm810, %v855, %v856
        %v858 = vrot.slane %v720, 1
        %v859 = vrot.slane %v752, 1
        %v860 = vsel %vm810, %v858, %v859
        %v861 = vrot.slane %v721, 1
        %v862 = vrot.slane %v753, 1
        %v863 = vsel %vm810, %v861, %v862
        %v864 = vrot.slane %v722, 1
        %v865 = vrot.slane %v754, 1
        %v866 = vsel %vm810, %v864, %v865
        %v867 = vrot.slane %v723, 1
        %v868 = vrot.slane %v755, 1
        %v869 = vsel %vm810, %v867, %v868
        %v870 = vrot.slane %v724, 1
        %v871 = vrot.slane %v756, 1
        %v872 = vsel %vm810, %v870, %v871
        %v873 = vrot.slane %v725, 1
        %v874 = vrot.slane %v757, 1
        %v875 = vsel %vm810, %v873, %v874
        %vm876 = vcmask 1045504
        %v877 = vrot.slane 0.0, 2
        %v878 = vsel %vm876, %v877, %v877
        %v879 = vrot.slane %v703, 2
        %v880 = vrot.slane %v735, 2
        %v881 = vsel %vm876, %v879, %v880
        %v882 = vrot.slane %v704, 2
        %v883 = vrot.slane %v736, 2
        %v884 = vsel %vm876, %v882, %v883
        %v885 = vrot.slane %v705, 2
        %v886 = vrot.slane %v737, 2
        %v887 = vsel %vm876, %v885, %v886
        %v888 = vrot.slane %v706, 2
        %v889 = vrot.slane %v738, 2
        %v890 = vsel %vm876, %v888, %v889
        %v891 = vrot.slane %v707, 2
        %v892 = vrot.slane %v739, 2
        %v893 = vsel %vm876, %v891, %v892
        %v894 = vrot.slane %v708, 2
        %v895 = vrot.slane %v740, 2
        %v896 = vsel %vm876, %v894, %v895
        %v897 = vrot.slane %v709, 2
        %v898 = vrot.slane %v741, 2
        %v899 = vsel %vm876, %v897, %v898
        %v900 = vrot.slane %v711, 2
        %v901 = vrot.slane %v743, 2
        %v902 = vsel %vm876, %v900, %v901
        %v903 = vrot.slane %v712, 2
        %v904 = vrot.slane %v744, 2
        %v905 = vsel %vm876, %v903, %v904
        %v906 = vrot.slane %v713, 2
        %v907 = vrot.slane %v745, 2
        %v908 = vsel %vm876, %v906, %v907
        %v909 = vrot.slane %v714, 2
        %v910 = vrot.slane %v746, 2
        %v911 = vsel %vm876, %v909, %v910
        %v912 = vrot.slane %v715, 2
        %v913 = vrot.slane %v747, 2
        %v914 = vsel %vm876, %v912, %v913
        %v915 = vrot.slane %v716, 2
        %v916 = vrot.slane %v748, 2
        %v917 = vsel %vm876, %v915, %v916
        %v918 = vrot.slane %v717, 2
        %v919 = vrot.slane %v749, 2
        %v920 = vsel %vm876, %v918, %v919
        %v921 = vrot.slane %v719, 2
        %v922 = vrot.slane %v751, 2
        %v923 = vsel %vm876, %v921, %v922
        %v924 = vrot.slane %v720, 2
        %v925 = vrot.slane %v752, 2
        %v926 = vsel %vm876, %v924, %v925
        %v927 = vrot.slane %v721, 2
        %v928 = vrot.slane %v753, 2
        %v929 = vsel %vm876, %v927, %v928
        %v930 = vrot.slane %v722, 2
        %v931 = vrot.slane %v754, 2
        %v932 = vsel %vm876, %v930, %v931
        %v933 = vrot.slane %v723, 2
        %v934 = vrot.slane %v755, 2
        %v935 = vsel %vm876, %v933, %v934
        %v936 = vrot.slane %v724, 2
        %v937 = vrot.slane %v756, 2
        %v938 = vsel %vm876, %v936, %v937
        %v939 = vrot.slane %v725, 2
        %v940 = vrot.slane %v757, 2
        %v941 = vsel %vm876, %v939, %v940
        %v948 = vrot.slane %v710, 1
        %v949 = vrot.slane %v742, 1
        %v950 = vsel %vm810, %v948, %v949
        %v951 = vrot.slane %v718, 1
        %v952 = vrot.slane %v750, 1
        %v953 = vsel %vm810, %v951, %v952
        %v954 = vrot.slane %v726, 1
        %v955 = vrot.slane %v758, 1
        %v956 = vsel %vm810, %v954, %v955
        %v957 = vrot.slane %v710, 2
        %v958 = vrot.slane %v742, 2
        %v959 = vsel %vm876, %v957, %v958
        %v960 = vrot.slane %v718, 2
        %v961 = vrot.slane %v750, 2
        %v962 = vsel %vm876, %v960, %v961
        %v963 = vrot.slane %v726, 2
        %v964 = vrot.slane %v758, 2
        %v965 = vsel %vm876, %v963, %v964
        %966 = vrot.lane.b32.xlu0 %v812, 16
        %v967 = vpop.permute.xlu0 %966
        %968 = vrot.lane.b32.xlu0 %v815, 16
        %v969 = vpop.permute.xlu0 %968
        %970 = vrot.lane.b32.xlu0 %v818, 16
        %v971 = vpop.permute.xlu0 %970
        %972 = vrot.lane.b32.xlu0 %v821, 16
        %v973 = vpop.permute.xlu0 %972
        %974 = vrot.lane.b32.xlu0 %v824, 16
        %v975 = vpop.permute.xlu0 %974
        %976 = vrot.lane.b32.xlu0 %v827, 16
        %v977 = vpop.permute.xlu0 %976
        %978 = vrot.lane.b32.xlu0 %v830, 16
        %v979 = vpop.permute.xlu0 %978
        %980 = vrot.lane.b32.xlu0 %v833, 16
        %v981 = vpop.permute.xlu0 %980
        %982 = vrot.lane.b32.xlu0 %v836, 16
        %v983 = vpop.permute.xlu0 %982
        %984 = vrot.lane.b32.xlu0 %v839, 16
        %v985 = vpop.permute.xlu0 %984
        %986 = vrot.lane.b32.xlu0 %v842, 16
        %v987 = vpop.permute.xlu0 %986
        %988 = vrot.lane.b32.xlu0 %v845, 16
        %v989 = vpop.permute.xlu0 %988
        %990 = vrot.lane.b32.xlu0 %v848, 16
        %v991 = vpop.permute.xlu0 %990
        %992 = vrot.lane.b32.xlu0 %v851, 16
        %v993 = vpop.permute.xlu0 %992
        %994 = vrot.lane.b32.xlu0 %v854, 16
        %v995 = vpop.permute.xlu0 %994
        %996 = vrot.lane.b32.xlu0 %v857, 16
        %v997 = vpop.permute.xlu0 %996
        %998 = vrot.lane.b32.xlu0 %v860, 16
        %v999 = vpop.permute.xlu0 %998
        %1000 = vrot.lane.b32.xlu0 %v863, 16
        %v1001 = vpop.permute.xlu0 %1000
        %1002 = vrot.lane.b32.xlu0 %v866, 16
        %v1003 = vpop.permute.xlu0 %1002
        %1004 = vrot.lane.b32.xlu0 %v869, 16
        %v1005 = vpop.permute.xlu0 %1004
        %1006 = vrot.lane.b32.xlu0 %v872, 16
        %v1007 = vpop.permute.xlu0 %1006
        %1008 = vrot.lane.b32.xlu0 %v875, 16
        %v1009 = vpop.permute.xlu0 %1008
        %1032 = vrot.lane.b32.xlu0 %v878, 32
        %v1033 = vpop.permute.xlu0 %1032
        %1034 = vrot.lane.b32.xlu0 %v881, 32
        %v1035 = vpop.permute.xlu0 %1034
        %1036 = vrot.lane.b32.xlu0 %v884, 32
        %v1037 = vpop.permute.xlu0 %1036
        %1038 = vrot.lane.b32.xlu0 %v887, 32
        %v1039 = vpop.permute.xlu0 %1038
        %1040 = vrot.lane.b32.xlu0 %v890, 32
        %v1041 = vpop.permute.xlu0 %1040
        %1042 = vrot.lane.b32.xlu0 %v893, 32
        %v1043 = vpop.permute.xlu0 %1042
        %1044 = vrot.lane.b32.xlu0 %v896, 32
        %v1045 = vpop.permute.xlu0 %1044
        %1046 = vrot.lane.b32.xlu0 %v899, 32
        %v1047 = vpop.permute.xlu0 %1046
        %1048 = vrot.lane.b32.xlu0 %v902, 32
        %v1049 = vpop.permute.xlu0 %1048
        %1050 = vrot.lane.b32.xlu0 %v905, 32
        %v1051 = vpop.permute.xlu0 %1050
        %1052 = vrot.lane.b32.xlu0 %v908, 32
        %v1053 = vpop.permute.xlu0 %1052
        %1054 = vrot.lane.b32.xlu0 %v911, 32
        %v1055 = vpop.permute.xlu0 %1054
        %1056 = vrot.lane.b32.xlu0 %v914, 32
        %v1057 = vpop.permute.xlu0 %1056
        %1058 = vrot.lane.b32.xlu0 %v917, 32
        %v1059 = vpop.permute.xlu0 %1058
        %1060 = vrot.lane.b32.xlu0 %v920, 32
        %v1061 = vpop.permute.xlu0 %1060
        %1062 = vrot.lane.b32.xlu0 %v923, 32
        %v1063 = vpop.permute.xlu0 %1062
        %1064 = vrot.lane.b32.xlu0 %v926, 32
        %v1065 = vpop.permute.xlu0 %1064
        %1066 = vrot.lane.b32.xlu0 %v929, 32
        %v1067 = vpop.permute.xlu0 %1066
        %1068 = vrot.lane.b32.xlu0 %v932, 32
        %v1069 = vpop.permute.xlu0 %1068
        %1070 = vrot.lane.b32.xlu0 %v935, 32
        %v1071 = vpop.permute.xlu0 %1070
        %1072 = vrot.lane.b32.xlu0 %v938, 32
        %v1073 = vpop.permute.xlu0 %1072
        %1074 = vrot.lane.b32.xlu0 %v941, 32
        %v1075 = vpop.permute.xlu0 %1074
        %1098 = vrot.lane.b32.xlu0 0.0, 48
        %v1099 = vpop.permute.xlu0 %1098
        %1100 = vrot.lane.b32.xlu0 %v703, 48
        %v1101 = vpop.permute.xlu0 %1100
        %1102 = vrot.lane.b32.xlu0 %v704, 48
        %v1103 = vpop.permute.xlu0 %1102
        %1104 = vrot.lane.b32.xlu0 %v705, 48
        %v1105 = vpop.permute.xlu0 %1104
        %1106 = vrot.lane.b32.xlu0 %v706, 48
        %v1107 = vpop.permute.xlu0 %1106
        %1108 = vrot.lane.b32.xlu0 %v707, 48
        %v1109 = vpop.permute.xlu0 %1108
        %1110 = vrot.lane.b32.xlu0 %v708, 48
        %v1111 = vpop.permute.xlu0 %1110
        %1112 = vrot.lane.b32.xlu0 %v709, 48
        %v1113 = vpop.permute.xlu0 %1112
        %1114 = vrot.lane.b32.xlu0 %v710, 48
        %v1115 = vpop.permute.xlu0 %1114
        %1116 = vrot.lane.b32.xlu0 %v711, 48
        %v1117 = vpop.permute.xlu0 %1116
        %1118 = vrot.lane.b32.xlu0 %v712, 48
        %v1119 = vpop.permute.xlu0 %1118
        %1120 = vrot.lane.b32.xlu0 %v713, 48
        %v1121 = vpop.permute.xlu0 %1120
        %1122 = vrot.lane.b32.xlu0 %v714, 48
        %v1123 = vpop.permute.xlu0 %1122
        %1124 = vrot.lane.b32.xlu0 %v715, 48
        %v1125 = vpop.permute.xlu0 %1124
        %1126 = vrot.lane.b32.xlu0 %v716, 48
        %v1127 = vpop.permute.xlu0 %1126
        %1128 = vrot.lane.b32.xlu0 %v717, 48
        %v1129 = vpop.permute.xlu0 %1128
        %1130 = vrot.lane.b32.xlu0 %v718, 48
        %v1131 = vpop.permute.xlu0 %1130
        %1132 = vrot.lane.b32.xlu0 %v719, 48
        %v1133 = vpop.permute.xlu0 %1132
        %1134 = vrot.lane.b32.xlu0 %v720, 48
        %v1135 = vpop.permute.xlu0 %1134
        %1136 = vrot.lane.b32.xlu0 %v721, 48
        %v1137 = vpop.permute.xlu0 %1136
        %1138 = vrot.lane.b32.xlu0 %v722, 48
        %v1139 = vpop.permute.xlu0 %1138
        %1140 = vrot.lane.b32.xlu0 %v723, 48
        %v1141 = vpop.permute.xlu0 %1140
        %1142 = vrot.lane.b32.xlu0 %v724, 48
        %v1143 = vpop.permute.xlu0 %1142
        %1144 = vrot.lane.b32.xlu0 %v725, 48
        %v1145 = vpop.permute.xlu0 %1144
        %1146 = vrot.lane.b32.xlu0 %v726, 48
        %v1147 = vpop.permute.xlu0 %1146
        %1173 = vrot.lane.b32.xlu0 %v812, 64
        %v1174 = vpop.permute.xlu0 %1173
        %1175 = vrot.lane.b32.xlu0 %v815, 64
        %v1176 = vpop.permute.xlu0 %1175
        %1177 = vrot.lane.b32.xlu0 %v818, 64
        %v1178 = vpop.permute.xlu0 %1177
        %1179 = vrot.lane.b32.xlu0 %v821, 64
        %v1180 = vpop.permute.xlu0 %1179
        %1181 = vrot.lane.b32.xlu0 %v824, 64
        %v1182 = vpop.permute.xlu0 %1181
        %1183 = vrot.lane.b32.xlu0 %v827, 64
        %v1184 = vpop.permute.xlu0 %1183
        %1185 = vrot.lane.b32.xlu0 %v830, 64
        %v1186 = vpop.permute.xlu0 %1185
        %1187 = vrot.lane.b32.xlu0 %v833, 64
        %v1188 = vpop.permute.xlu0 %1187
        %1189 = vrot.lane.b32.xlu0 %v950, 64
        %v1190 = vpop.permute.xlu0 %1189
        %1191 = vrot.lane.b32.xlu0 %v836, 64
        %v1192 = vpop.permute.xlu0 %1191
        %1193 = vrot.lane.b32.xlu0 %v839, 64
        %v1194 = vpop.permute.xlu0 %1193
        %1195 = vrot.lane.b32.xlu0 %v842, 64
        %v1196 = vpop.permute.xlu0 %1195
        %1197 = vrot.lane.b32.xlu0 %v845, 64
        %v1198 = vpop.permute.xlu0 %1197
        %1199 = vrot.lane.b32.xlu0 %v848, 64
        %v1200 = vpop.permute.xlu0 %1199
        %1201 = vrot.lane.b32.xlu0 %v851, 64
        %v1202 = vpop.permute.xlu0 %1201
        %1203 = vrot.lane.b32.xlu0 %v854, 64
        %v1204 = vpop.permute.xlu0 %1203
        %1205 = vrot.lane.b32.xlu0 %v953, 64
        %v1206 = vpop.permute.xlu0 %1205
        %1207 = vrot.lane.b32.xlu0 %v857, 64
        %v1208 = vpop.permute.xlu0 %1207
        %1209 = vrot.lane.b32.xlu0 %v860, 64
        %v1210 = vpop.permute.xlu0 %1209
        %1211 = vrot.lane.b32.xlu0 %v863, 64
        %v1212 = vpop.permute.xlu0 %1211
        %1213 = vrot.lane.b32.xlu0 %v866, 64
        %v1214 = vpop.permute.xlu0 %1213
        %1215 = vrot.lane.b32.xlu0 %v869, 64
        %v1216 = vpop.permute.xlu0 %1215
        %1217 = vrot.lane.b32.xlu0 %v872, 64
        %v1218 = vpop.permute.xlu0 %1217
        %1219 = vrot.lane.b32.xlu0 %v875, 64
        %v1220 = vpop.permute.xlu0 %1219
        %1221 = vrot.lane.b32.xlu0 %v956, 64
        %v1222 = vpop.permute.xlu0 %1221
        %1248 = vrot.lane.b32.xlu0 %v878, 80
        %v1249 = vpop.permute.xlu0 %1248
        %1250 = vrot.lane.b32.xlu0 %v881, 80
        %v1251 = vpop.permute.xlu0 %1250
        %1252 = vrot.lane.b32.xlu0 %v884, 80
        %v1253 = vpop.permute.xlu0 %1252
        %1254 = vrot.lane.b32.xlu0 %v887, 80
        %v1255 = vpop.permute.xlu0 %1254
        %1256 = vrot.lane.b32.xlu0 %v890, 80
        %v1257 = vpop.permute.xlu0 %1256
        %1258 = vrot.lane.b32.xlu0 %v893, 80
        %v1259 = vpop.permute.xlu0 %1258
        %1260 = vrot.lane.b32.xlu0 %v896, 80
        %v1261 = vpop.permute.xlu0 %1260
        %1262 = vrot.lane.b32.xlu0 %v899, 80
        %v1263 = vpop.permute.xlu0 %1262
        %1264 = vrot.lane.b32.xlu0 %v959, 80
        %v1265 = vpop.permute.xlu0 %1264
        %1266 = vrot.lane.b32.xlu0 %v902, 80
        %v1267 = vpop.permute.xlu0 %1266
        %1268 = vrot.lane.b32.xlu0 %v905, 80
        %v1269 = vpop.permute.xlu0 %1268
        %1270 = vrot.lane.b32.xlu0 %v908, 80
        %v1271 = vpop.permute.xlu0 %1270
        %1272 = vrot.lane.b32.xlu0 %v911, 80
        %v1273 = vpop.permute.xlu0 %1272
        %1274 = vrot.lane.b32.xlu0 %v914, 80
        %v1275 = vpop.permute.xlu0 %1274
        %1276 = vrot.lane.b32.xlu0 %v917, 80
        %v1277 = vpop.permute.xlu0 %1276
        %1278 = vrot.lane.b32.xlu0 %v920, 80
        %v1279 = vpop.permute.xlu0 %1278
        %1280 = vrot.lane.b32.xlu0 %v962, 80
        %v1281 = vpop.permute.xlu0 %1280
        %1282 = vrot.lane.b32.xlu0 %v923, 80
        %v1283 = vpop.permute.xlu0 %1282
        %1284 = vrot.lane.b32.xlu0 %v926, 80
        %v1285 = vpop.permute.xlu0 %1284
        %1286 = vrot.lane.b32.xlu0 %v929, 80
        %v1287 = vpop.permute.xlu0 %1286
        %1288 = vrot.lane.b32.xlu0 %v932, 80
        %v1289 = vpop.permute.xlu0 %1288
        %1290 = vrot.lane.b32.xlu0 %v935, 80
        %v1291 = vpop.permute.xlu0 %1290
        %1292 = vrot.lane.b32.xlu0 %v938, 80
        %v1293 = vpop.permute.xlu0 %1292
        %1294 = vrot.lane.b32.xlu0 %v941, 80
        %v1295 = vpop.permute.xlu0 %1294
        %1296 = vrot.lane.b32.xlu0 %v965, 80
        %v1297 = vpop.permute.xlu0 %1296
        %1323 = vrot.lane.b32.xlu0 0.0, 96
        %v1324 = vpop.permute.xlu0 %1323
        %1325 = vrot.lane.b32.xlu0 %v704, 96
        %v1326 = vpop.permute.xlu0 %1325
        %1327 = vrot.lane.b32.xlu0 %v705, 96
        %v1328 = vpop.permute.xlu0 %1327
        %1329 = vrot.lane.b32.xlu0 %v706, 96
        %v1330 = vpop.permute.xlu0 %1329
        %1331 = vrot.lane.b32.xlu0 %v707, 96
        %v1332 = vpop.permute.xlu0 %1331
        %1333 = vrot.lane.b32.xlu0 %v708, 96
        %v1334 = vpop.permute.xlu0 %1333
        %1335 = vrot.lane.b32.xlu0 %v709, 96
        %v1336 = vpop.permute.xlu0 %1335
        %1337 = vrot.lane.b32.xlu0 %v710, 96
        %v1338 = vpop.permute.xlu0 %1337
        %1339 = vrot.lane.b32.xlu0 %v712, 96
        %v1340 = vpop.permute.xlu0 %1339
        %1341 = vrot.lane.b32.xlu0 %v713, 96
        %v1342 = vpop.permute.xlu0 %1341
        %1343 = vrot.lane.b32.xlu0 %v714, 96
        %v1344 = vpop.permute.xlu0 %1343
        %1345 = vrot.lane.b32.xlu0 %v715, 96
        %v1346 = vpop.permute.xlu0 %1345
        %1347 = vrot.lane.b32.xlu0 %v716, 96
        %v1348 = vpop.permute.xlu0 %1347
        %1349 = vrot.lane.b32.xlu0 %v717, 96
        %v1350 = vpop.permute.xlu0 %1349
        %1351 = vrot.lane.b32.xlu0 %v718, 96
        %v1352 = vpop.permute.xlu0 %1351
        %1353 = vrot.lane.b32.xlu0 %v720, 96
        %v1354 = vpop.permute.xlu0 %1353
        %1355 = vrot.lane.b32.xlu0 %v721, 96
        %v1356 = vpop.permute.xlu0 %1355
        %1357 = vrot.lane.b32.xlu0 %v722, 96
        %v1358 = vpop.permute.xlu0 %1357
        %1359 = vrot.lane.b32.xlu0 %v723, 96
        %v1360 = vpop.permute.xlu0 %1359
        %1361 = vrot.lane.b32.xlu0 %v724, 96
        %v1362 = vpop.permute.xlu0 %1361
        %1363 = vrot.lane.b32.xlu0 %v725, 96
        %v1364 = vpop.permute.xlu0 %1363
        %1365 = vrot.lane.b32.xlu0 %v726, 96
        %v1366 = vpop.permute.xlu0 %1365
        %1389 = vrot.lane.b32.xlu0 %v812, 112
        %v1390 = vpop.permute.xlu0 %1389
        %1391 = vrot.lane.b32.xlu0 %v818, 112
        %v1392 = vpop.permute.xlu0 %1391
        %1393 = vrot.lane.b32.xlu0 %v821, 112
        %v1394 = vpop.permute.xlu0 %1393
        %1395 = vrot.lane.b32.xlu0 %v824, 112
        %v1396 = vpop.permute.xlu0 %1395
        %1397 = vrot.lane.b32.xlu0 %v827, 112
        %v1398 = vpop.permute.xlu0 %1397
        %1399 = vrot.lane.b32.xlu0 %v830, 112
        %v1400 = vpop.permute.xlu0 %1399
        %1401 = vrot.lane.b32.xlu0 %v833, 112
        %v1402 = vpop.permute.xlu0 %1401
        %1403 = vrot.lane.b32.xlu0 %v950, 112
        %v1404 = vpop.permute.xlu0 %1403
        %1405 = vrot.lane.b32.xlu0 %v839, 112
        %v1406 = vpop.permute.xlu0 %1405
        %1407 = vrot.lane.b32.xlu0 %v842, 112
        %v1408 = vpop.permute.xlu0 %1407
        %1409 = vrot.lane.b32.xlu0 %v845, 112
        %v1410 = vpop.permute.xlu0 %1409
        %1411 = vrot.lane.b32.xlu0 %v848, 112
        %v1412 = vpop.permute.xlu0 %1411
        %1413 = vrot.lane.b32.xlu0 %v851, 112
        %v1414 = vpop.permute.xlu0 %1413
        %1415 = vrot.lane.b32.xlu0 %v854, 112
        %v1416 = vpop.permute.xlu0 %1415
        %1417 = vrot.lane.b32.xlu0 %v953, 112
        %v1418 = vpop.permute.xlu0 %1417
        %1419 = vrot.lane.b32.xlu0 %v860, 112
        %v1420 = vpop.permute.xlu0 %1419
        %1421 = vrot.lane.b32.xlu0 %v863, 112
        %v1422 = vpop.permute.xlu0 %1421
        %1423 = vrot.lane.b32.xlu0 %v866, 112
        %v1424 = vpop.permute.xlu0 %1423
        %1425 = vrot.lane.b32.xlu0 %v869, 112
        %v1426 = vpop.permute.xlu0 %1425
        %1427 = vrot.lane.b32.xlu0 %v872, 112
        %v1428 = vpop.permute.xlu0 %1427
        %1429 = vrot.lane.b32.xlu0 %v875, 112
        %v1430 = vpop.permute.xlu0 %1429
        %1431 = vrot.lane.b32.xlu0 %v956, 112
        %v1432 = vpop.permute.xlu0 %1431
        %vm1455 = vcmask 130048
        %v1456 = vsel %vm1455, 0.0, %v967
        %v1457 = vsel %vm1455, %v703, %v969
        %v1458 = vsel %vm1455, %v704, %v971
        %v1459 = vsel %vm1455, %v705, %v973
        %v1460 = vsel %vm1455, %v706, %v975
        %v1461 = vsel %vm1455, %v707, %v977
        %v1462 = vsel %vm1455, %v708, %v979
        %v1463 = vsel %vm1455, %v709, %v981
        %v1464 = vsel %vm1455, %v711, %v983
        %v1465 = vsel %vm1455, %v712, %v985
        %v1466 = vsel %vm1455, %v713, %v987
        %v1467 = vsel %vm1455, %v714, %v989
        %v1468 = vsel %vm1455, %v715, %v991
        %v1469 = vsel %vm1455, %v716, %v993
        %v1470 = vsel %vm1455, %v717, %v995
        %v1471 = vsel %vm1455, %v719, %v997
        %v1472 = vsel %vm1455, %v720, %v999
        %v1473 = vsel %vm1455, %v721, %v1001
        %v1474 = vsel %vm1455, %v722, %v1003
        %v1475 = vsel %vm1455, %v723, %v1005
        %v1476 = vsel %vm1455, %v724, %v1007
        %v1477 = vsel %vm1455, %v725, %v1009
        %vm1478 = vcmask 261120
        %v1479 = vsel %vm1478, %v1456, %v1033
        %v1480 = vsel %vm1478, %v1457, %v1035
        %v1481 = vsel %vm1478, %v1458, %v1037
        %v1482 = vsel %vm1478, %v1459, %v1039
        %v1483 = vsel %vm1478, %v1460, %v1041
        %v1484 = vsel %vm1478, %v1461, %v1043
        %v1485 = vsel %vm1478, %v1462, %v1045
        %v1486 = vsel %vm1478, %v1463, %v1047
        %v1487 = vsel %vm1478, %v1464, %v1049
        %v1488 = vsel %vm1478, %v1465, %v1051
        %v1489 = vsel %vm1478, %v1466, %v1053
        %v1490 = vsel %vm1478, %v1467, %v1055
        %v1491 = vsel %vm1478, %v1468, %v1057
        %v1492 = vsel %vm1478, %v1469, %v1059
        %v1493 = vsel %vm1478, %v1470, %v1061
        %v1494 = vsel %vm1478, %v1471, %v1063
        %v1495 = vsel %vm1478, %v1472, %v1065
        %v1496 = vsel %vm1478, %v1473, %v1067
        %v1497 = vsel %vm1478, %v1474, %v1069
        %v1498 = vsel %vm1478, %v1475, %v1071
        %v1499 = vsel %vm1478, %v1476, %v1073
        %v1500 = vsel %vm1478, %v1477, %v1075
        %vm1501 = vcmask 392192
        %v1502 = vsel %vm1501, %v1479, %v1099
        %v1503 = vsel %vm1501, %v1479, %v1101
        %v1504 = vsel %vm1501, %v1480, %v1103
        %v1505 = vsel %vm1501, %v1481, %v1105
        %v1506 = vsel %vm1501, %v1482, %v1107
        %v1507 = vsel %vm1501, %v1483, %v1109
        %v1508 = vsel %vm1501, %v1484, %v1111
        %v1509 = vsel %vm1501, %v1485, %v1113
        %v1510 = vsel %vm1501, %v1486, %v1115
        %v1511 = vsel %vm1501, %v1479, %v1117
        %v1512 = vsel %vm1501, %v1487, %v1119
        %v1513 = vsel %vm1501, %v1488, %v1121
        %v1514 = vsel %vm1501, %v1489, %v1123
        %v1515 = vsel %vm1501, %v1490, %v1125
        %v1516 = vsel %vm1501, %v1491, %v1127
        %v1517 = vsel %vm1501, %v1492, %v1129
        %v1518 = vsel %vm1501, %v1493, %v1131
        %v1519 = vsel %vm1501, %v1479, %v1133
        %v1520 = vsel %vm1501, %v1494, %v1135
        %v1521 = vsel %vm1501, %v1495, %v1137
        %v1522 = vsel %vm1501, %v1496, %v1139
        %v1523 = vsel %vm1501, %v1497, %v1141
        %v1524 = vsel %vm1501, %v1498, %v1143
        %v1525 = vsel %vm1501, %v1499, %v1145
        %v1526 = vsel %vm1501, %v1500, %v1147
        %vm1527 = vcmask 523264
        %v1528 = vsel %vm1527, %v1502, %v1174
        %v1529 = vsel %vm1527, %v1503, %v1176
        %v1530 = vsel %vm1527, %v1504, %v1178
        %v1531 = vsel %vm1527, %v1505, %v1180
        %v1532 = vsel %vm1527, %v1506, %v1182
        %v1533 = vsel %vm1527, %v1507, %v1184
        %v1534 = vsel %vm1527, %v1508, %v1186
        %v1535 = vsel %vm1527, %v1509, %v1188
        %v1536 = vsel %vm1527, %v1510, %v1190
        %v1537 = vsel %vm1527, %v1511, %v1192
        %v1538 = vsel %vm1527, %v1512, %v1194
        %v1539 = vsel %vm1527, %v1513, %v1196
        %v1540 = vsel %vm1527, %v1514, %v1198
        %v1541 = vsel %vm1527, %v1515, %v1200
        %v1542 = vsel %vm1527, %v1516, %v1202
        %v1543 = vsel %vm1527, %v1517, %v1204
        %v1544 = vsel %vm1527, %v1518, %v1206
        %v1545 = vsel %vm1527, %v1519, %v1208
        %v1546 = vsel %vm1527, %v1520, %v1210
        %v1547 = vsel %vm1527, %v1521, %v1212
        %v1548 = vsel %vm1527, %v1522, %v1214
        %v1549 = vsel %vm1527, %v1523, %v1216
        %v1550 = vsel %vm1527, %v1524, %v1218
        %v1551 = vsel %vm1527, %v1525, %v1220
        %v1552 = vsel %vm1527, %v1526, %v1222
        %vm1553 = vcmask 654336
        %v1554 = vsel %vm1553, %v1528, %v1249
        %v1555 = vsel %vm1553, %v1529, %v1251
        %v1556 = vsel %vm1553, %v1530, %v1253
        %v1557 = vsel %vm1553, %v1531, %v1255
        %v1558 = vsel %vm1553, %v1532, %v1257
        %v1559 = vsel %vm1553, %v1533, %v1259
        %v1560 = vsel %vm1553, %v1534, %v1261
        %v1561 = vsel %vm1553, %v1535, %v1263
        %v1562 = vsel %vm1553, %v1536, %v1265
        %v1563 = vsel %vm1553, %v1537, %v1267
        %v1564 = vsel %vm1553, %v1538, %v1269
        %v1565 = vsel %vm1553, %v1539, %v1271
        %v1566 = vsel %vm1553, %v1540, %v1273
        %v1567 = vsel %vm1553, %v1541, %v1275
        %v1568 = vsel %vm1553, %v1542, %v1277
        %v1569 = vsel %vm1553, %v1543, %v1279
        %v1570 = vsel %vm1553, %v1544, %v1281
        %v1571 = vsel %vm1553, %v1545, %v1283
        %v1572 = vsel %vm1553, %v1546, %v1285
        %v1573 = vsel %vm1553, %v1547, %v1287
        %v1574 = vsel %vm1553, %v1548, %v1289
        %v1575 = vsel %vm1553, %v1549, %v1291
        %v1576 = vsel %vm1553, %v1550, %v1293
        %v1577 = vsel %vm1553, %v1551, %v1295
        %v1578 = vsel %vm1553, %v1552, %v1297
        %vm1579 = vcmask 785408
        %v1580 = vsel %vm1579, %v1554, %v1324
        %v1581 = vsel %vm1579, %v1555, %v1326
        %v1582 = vsel %vm1579, %v1556, %v1328
        %v1583 = vsel %vm1579, %v1557, %v1330
        %v1584 = vsel %vm1579, %v1558, %v1332
        %v1585 = vsel %vm1579, %v1559, %v1334
        %v1586 = vsel %vm1579, %v1560, %v1336
        %v1587 = vsel %vm1579, %v1561, %v1338
        %v1588 = vsel %vm1579, %v1562, %v1324
        %v1589 = vsel %vm1579, %v1563, %v1340
        %v1590 = vsel %vm1579, %v1564, %v1342
        %v1591 = vsel %vm1579, %v1565, %v1344
        %v1592 = vsel %vm1579, %v1566, %v1346
        %v1593 = vsel %vm1579, %v1567, %v1348
        %v1594 = vsel %vm1579, %v1568, %v1350
        %v1595 = vsel %vm1579, %v1569, %v1352
        %v1596 = vsel %vm1579, %v1570, %v1324
        %v1597 = vsel %vm1579, %v1571, %v1354
        %v1598 = vsel %vm1579, %v1572, %v1356
        %v1599 = vsel %vm1579, %v1573, %v1358
        %v1600 = vsel %vm1579, %v1574, %v1360
        %v1601 = vsel %vm1579, %v1575, %v1362
        %v1602 = vsel %vm1579, %v1576, %v1364
        %v1603 = vsel %vm1579, %v1577, %v1366
        %v1604 = vsel %vm1579, %v1578, %v1324
        %vm1605 = vcmask 916480
        %v1606 = vsel %vm1605, %v1580, %v1390
        %v1607 = vsel %vm1605, %v1581, %v1392
        %v1608 = vsel %vm1605, %v1582, %v1394
        %v1609 = vsel %vm1605, %v1583, %v1396
        %v1610 = vsel %vm1605, %v1584, %v1398
        %v1611 = vsel %vm1605, %v1585, %v1400
        %v1612 = vsel %vm1605, %v1586, %v1402
        %v1613 = vsel %vm1605, %v1587, %v1404
        %v1614 = vsel %vm1605, %v1588, %v1390
        %v1615 = vsel %vm1605, %v1589, %v1406
        %v1616 = vsel %vm1605, %v1590, %v1408
        %v1617 = vsel %vm1605, %v1591, %v1410
        %v1618 = vsel %vm1605, %v1592, %v1412
        %v1619 = vsel %vm1605, %v1593, %v1414
        %v1620 = vsel %vm1605, %v1594, %v1416
        %v1621 = vsel %vm1605, %v1595, %v1418
        %v1622 = vsel %vm1605, %v1596, %v1390
        %v1623 = vsel %vm1605, %v1597, %v1420
        %v1624 = vsel %vm1605, %v1598, %v1422
        %v1625 = vsel %vm1605, %v1599, %v1424
        %v1626 = vsel %vm1605, %v1600, %v1426
        %v1627 = vsel %vm1605, %v1601, %v1428
        %v1628 = vsel %vm1605, %v1602, %v1430
        %v1629 = vsel %vm1605, %v1603, %v1432
        %v1630 = vsel %vm1605, %v1604, %v1390
        %v1631 = vld [vmem:[%s1] sm:$0xff]
        %v1632 = vld [vmem:[%s1 + $0x8] sm:$0xff]
        %v1633 = vld [vmem:[%s1 + $0x10] sm:$0xff]
        %v1634 = vld [vmem:[%s1 + $0x18] sm:$0xff]
        %v1635 = vld [vmem:[%s1 + $0x20] sm:$0xff]
        %v1636 = vld [vmem:[%s1 + $0x28] sm:$0xff]
        %v1637 = vld [vmem:[%s1 + $0x30] sm:$0xff]
        %v1638 = vld [vmem:[%s1 + $0x38] sm:$0xff]
        %v1639 = vld [vmem:[%s1 + $0x40] sm:$0xff]
        %v1640 = vld [vmem:[%s1 + $0x48] sm:$0xff]
        %v1641 = vld [vmem:[%s1 + $0x50] sm:$0xff]
        %v1642 = vld [vmem:[%s1 + $0x58] sm:$0xff]
        %v1643 = vld [vmem:[%s1 + $0x60] sm:$0xff]
        %v1644 = vld [vmem:[%s1 + $0x68] sm:$0xff]
        %v1645 = vld [vmem:[%s1 + $0x70] sm:$0xff]
        %v1646 = vld [vmem:[%s1 + $0x78] sm:$0xff]
        %v1647 = vld [vmem:[%s1 + $0x80] sm:$0xff]
        %v1648 = vld [vmem:[%s1 + $0x88] sm:$0xff]
        %v1663 = vrot.slane %v727, 1
        %v1664 = vrot.slane %v759, 1
        %v1665 = vsel %vm810, %v1663, %v1664
        %v1666 = vrot.slane %v728, 1
        %v1667 = vrot.slane %v760, 1
        %v1668 = vsel %vm810, %v1666, %v1667
        %v1669 = vrot.slane %v729, 1
        %v1670 = vrot.slane %v761, 1
        %v1671 = vsel %vm810, %v1669, %v1670
        %v1672 = vrot.slane %v730, 1
        %v1673 = vrot.slane %v762, 1
        %v1674 = vsel %vm810, %v1672, %v1673
        %v1675 = vrot.slane %v731, 1
        %v1676 = vrot.slane %v763, 1
        %v1677 = vsel %vm810, %v1675, %v1676
        %v1678 = vrot.slane %v732, 1
        %v1679 = vrot.slane %v764, 1
        %v1680 = vsel %vm810, %v1678, %v1679
        %v1681 = vrot.slane %v733, 1
        %v1682 = vrot.slane %v765, 1
        %v1683 = vsel %vm810, %v1681, %v1682
        %v1684 = vrot.slane %v727, 2
        %v1685 = vrot.slane %v759, 2
        %v1686 = vsel %vm876, %v1684, %v1685
        %v1687 = vrot.slane %v728, 2
        %v1688 = vrot.slane %v760, 2
        %v1689 = vsel %vm876, %v1687, %v1688
        %v1690 = vrot.slane %v729, 2
        %v1691 = vrot.slane %v761, 2
        %v1692 = vsel %vm876, %v1690, %v1691
        %v1693 = vrot.slane %v730, 2
        %v1694 = vrot.slane %v762, 2
        %v1695 = vsel %vm876, %v1693, %v1694
        %v1696 = vrot.slane %v731, 2
        %v1697 = vrot.slane %v763, 2
        %v1698 = vsel %vm876, %v1696, %v1697
        %v1699 = vrot.slane %v732, 2
        %v1700 = vrot.slane %v764, 2
        %v1701 = vsel %vm876, %v1699, %v1700
        %v1702 = vrot.slane %v733, 2
        %v1703 = vrot.slane %v765, 2
        %v1704 = vsel %vm876, %v1702, %v1703
        %v1707 = vrot.slane %v734, 1
        %v1708 = vrot.slane %v766, 1
        %v1709 = vsel %vm810, %v1707, %v1708
        %v1710 = vrot.slane %v734, 2
        %v1711 = vrot.slane %v766, 2
        %v1712 = vsel %vm876, %v1710, %v1711
        %1713 = vrot.lane.b32.xlu0 %v1665, 16
        %v1714 = vpop.permute.xlu0 %1713
        %1715 = vrot.lane.b32.xlu0 %v1668, 16
        %v1716 = vpop.permute.xlu0 %1715
        %1717 = vrot.lane.b32.xlu0 %v1671, 16
        %v1718 = vpop.permute.xlu0 %1717
        %1719 = vrot.lane.b32.xlu0 %v1674, 16
        %v1720 = vpop.permute.xlu0 %1719
        %1721 = vrot.lane.b32.xlu0 %v1677, 16
        %v1722 = vpop.permute.xlu0 %1721
        %1723 = vrot.lane.b32.xlu0 %v1680, 16
        %v1724 = vpop.permute.xlu0 %1723
        %1725 = vrot.lane.b32.xlu0 %v1683, 16
        %v1726 = vpop.permute.xlu0 %1725
        %1734 = vrot.lane.b32.xlu0 %v1686, 32
        %v1735 = vpop.permute.xlu0 %1734
        %1736 = vrot.lane.b32.xlu0 %v1689, 32
        %v1737 = vpop.permute.xlu0 %1736
        %1738 = vrot.lane.b32.xlu0 %v1692, 32
        %v1739 = vpop.permute.xlu0 %1738
        %1740 = vrot.lane.b32.xlu0 %v1695, 32
        %v1741 = vpop.permute.xlu0 %1740
        %1742 = vrot.lane.b32.xlu0 %v1698, 32
        %v1743 = vpop.permute.xlu0 %1742
        %1744 = vrot.lane.b32.xlu0 %v1701, 32
        %v1745 = vpop.permute.xlu0 %1744
        %1746 = vrot.lane.b32.xlu0 %v1704, 32
        %v1747 = vpop.permute.xlu0 %1746
        %1755 = vrot.lane.b32.xlu0 %v727, 48
        %v1756 = vpop.permute.xlu0 %1755
        %1757 = vrot.lane.b32.xlu0 %v728, 48
        %v1758 = vpop.permute.xlu0 %1757
        %1759 = vrot.lane.b32.xlu0 %v729, 48
        %v1760 = vpop.permute.xlu0 %1759
        %1761 = vrot.lane.b32.xlu0 %v730, 48
        %v1762 = vpop.permute.xlu0 %1761
        %1763 = vrot.lane.b32.xlu0 %v731, 48
        %v1764 = vpop.permute.xlu0 %1763
        %1765 = vrot.lane.b32.xlu0 %v732, 48
        %v1766 = vpop.permute.xlu0 %1765
        %1767 = vrot.lane.b32.xlu0 %v733, 48
        %v1768 = vpop.permute.xlu0 %1767
        %1769 = vrot.lane.b32.xlu0 %v734, 48
        %v1770 = vpop.permute.xlu0 %1769
        %1779 = vrot.lane.b32.xlu0 %v1665, 64
        %v1780 = vpop.permute.xlu0 %1779
        %1781 = vrot.lane.b32.xlu0 %v1668, 64
        %v1782 = vpop.permute.xlu0 %1781
        %1783 = vrot.lane.b32.xlu0 %v1671, 64
        %v1784 = vpop.permute.xlu0 %1783
        %1785 = vrot.lane.b32.xlu0 %v1674, 64
        %v1786 = vpop.permute.xlu0 %1785
        %1787 = vrot.lane.b32.xlu0 %v1677, 64
        %v1788 = vpop.permute.xlu0 %1787
        %1789 = vrot.lane.b32.xlu0 %v1680, 64
        %v1790 = vpop.permute.xlu0 %1789
        %1791 = vrot.lane.b32.xlu0 %v1683, 64
        %v1792 = vpop.permute.xlu0 %1791
        %1793 = vrot.lane.b32.xlu0 %v1709, 64
        %v1794 = vpop.permute.xlu0 %1793
        %1803 = vrot.lane.b32.xlu0 %v1686, 80
        %v1804 = vpop.permute.xlu0 %1803
        %1805 = vrot.lane.b32.xlu0 %v1689, 80
        %v1806 = vpop.permute.xlu0 %1805
        %1807 = vrot.lane.b32.xlu0 %v1692, 80
        %v1808 = vpop.permute.xlu0 %1807
        %1809 = vrot.lane.b32.xlu0 %v1695, 80
        %v1810 = vpop.permute.xlu0 %1809
        %1811 = vrot.lane.b32.xlu0 %v1698, 80
        %v1812 = vpop.permute.xlu0 %1811
        %1813 = vrot.lane.b32.xlu0 %v1701, 80
        %v1814 = vpop.permute.xlu0 %1813
        %1815 = vrot.lane.b32.xlu0 %v1704, 80
        %v1816 = vpop.permute.xlu0 %1815
        %1817 = vrot.lane.b32.xlu0 %v1712, 80
        %v1818 = vpop.permute.xlu0 %1817
        %1827 = vrot.lane.b32.xlu0 %v728, 96
        %v1828 = vpop.permute.xlu0 %1827
        %1829 = vrot.lane.b32.xlu0 %v729, 96
        %v1830 = vpop.permute.xlu0 %1829
        %1831 = vrot.lane.b32.xlu0 %v730, 96
        %v1832 = vpop.permute.xlu0 %1831
        %1833 = vrot.lane.b32.xlu0 %v731, 96
        %v1834 = vpop.permute.xlu0 %1833
        %1835 = vrot.lane.b32.xlu0 %v732, 96
        %v1836 = vpop.permute.xlu0 %1835
        %1837 = vrot.lane.b32.xlu0 %v733, 96
        %v1838 = vpop.permute.xlu0 %1837
        %1839 = vrot.lane.b32.xlu0 %v734, 96
        %v1840 = vpop.permute.xlu0 %1839
        %1848 = vrot.lane.b32.xlu0 %v1668, 112
        %v1849 = vpop.permute.xlu0 %1848
        %1850 = vrot.lane.b32.xlu0 %v1671, 112
        %v1851 = vpop.permute.xlu0 %1850
        %1852 = vrot.lane.b32.xlu0 %v1674, 112
        %v1853 = vpop.permute.xlu0 %1852
        %1854 = vrot.lane.b32.xlu0 %v1677, 112
        %v1855 = vpop.permute.xlu0 %1854
        %1856 = vrot.lane.b32.xlu0 %v1680, 112
        %v1857 = vpop.permute.xlu0 %1856
        %1858 = vrot.lane.b32.xlu0 %v1683, 112
        %v1859 = vpop.permute.xlu0 %1858
        %1860 = vrot.lane.b32.xlu0 %v1709, 112
        %v1861 = vpop.permute.xlu0 %1860
        %v1869 = vsel %vm1455, %v727, %v1714
        %v1870 = vsel %vm1455, %v728, %v1716
        %v1871 = vsel %vm1455, %v729, %v1718
        %v1872 = vsel %vm1455, %v730, %v1720
        %v1873 = vsel %vm1455, %v731, %v1722
        %v1874 = vsel %vm1455, %v732, %v1724
        %v1875 = vsel %vm1455, %v733, %v1726
        %v1876 = vsel %vm1478, %v1869, %v1735
        %v1877 = vsel %vm1478, %v1870, %v1737
        %v1878 = vsel %vm1478, %v1871, %v1739
        %v1879 = vsel %vm1478, %v1872, %v1741
        %v1880 = vsel %vm1478, %v1873, %v1743
        %v1881 = vsel %vm1478, %v1874, %v1745
        %v1882 = vsel %vm1478, %v1875, %v1747
        %v1883 = vsel %vm1501, %v1479, %v1756
        %v1884 = vsel %vm1501, %v1876, %v1758
        %v1885 = vsel %vm1501, %v1877, %v1760
        %v1886 = vsel %vm1501, %v1878, %v1762
        %v1887 = vsel %vm1501, %v1879, %v1764
        %v1888 = vsel %vm1501, %v1880, %v1766
        %v1889 = vsel %vm1501, %v1881, %v1768
        %v1890 = vsel %vm1501, %v1882, %v1770
        %v1891 = vsel %vm1527, %v1883, %v1780
        %v1892 = vsel %vm1527, %v1884, %v1782
        %v1893 = vsel %vm1527, %v1885, %v1784
        %v1894 = vsel %vm1527, %v1886, %v1786
        %v1895 = vsel %vm1527, %v1887, %v1788
        %v1896 = vsel %vm1527, %v1888, %v1790
        %v1897 = vsel %vm1527, %v1889, %v1792
        %v1898 = vsel %vm1527, %v1890, %v1794
        %v1899 = vsel %vm1553, %v1891, %v1804
        %v1900 = vsel %vm1553, %v1892, %v1806
        %v1901 = vsel %vm1553, %v1893, %v1808
        %v1902 = vsel %vm1553, %v1894, %v1810
        %v1903 = vsel %vm1553, %v1895, %v1812
        %v1904 = vsel %vm1553, %v1896, %v1814
        %v1905 = vsel %vm1553, %v1897, %v1816
        %v1906 = vsel %vm1553, %v1898, %v1818
        %v1907 = vsel %vm1579, %v1899, %v1828
        %v1908 = vsel %vm1579, %v1900, %v1830
        %v1909 = vsel %vm1579, %v1901, %v1832
        %v1910 = vsel %vm1579, %v1902, %v1834
        %v1911 = vsel %vm1579, %v1903, %v1836
        %v1912 = vsel %vm1579, %v1904, %v1838
        %v1913 = vsel %vm1579, %v1905, %v1840
        %v1914 = vsel %vm1579, %v1906, %v1324
        %v1915 = vsel %vm1605, %v1907, %v1849
        %v1916 = vsel %vm1605, %v1908, %v1851
        %v1917 = vsel %vm1605, %v1909, %v1853
        %v1918 = vsel %vm1605, %v1910, %v1855
        %v1919 = vsel %vm1605, %v1911, %v1857
        %v1920 = vsel %vm1605, %v1912, %v1859
        %v1921 = vsel %vm1605, %v1913, %v1861
        %v1922 = vsel %vm1605, %v1914, %v1390
        %s1923 = scalar_lea.vmem %s1, 144
        %v1924 = vld [vmem:[%s1923] sm:$0xff]
        %v1925 = vld [vmem:[%s1923 + $0x8] sm:$0xff]
        %v1926 = vld [vmem:[%s1923 + $0x10] sm:$0xff]
        %v1927 = vld [vmem:[%s1923 + $0x18] sm:$0xff]
        %v1928 = vld [vmem:[%s1923 + $0x20] sm:$0xff]
        %v1929 = vld [vmem:[%s1923 + $0x28] sm:$0xff]
        %v1930 = vld [vmem:[%s1923 + $0x30] sm:$0xff]
        %v1931 = vld [vmem:[%s1923 + $0x38] sm:$0xff]
        %v1932 = vld [vmem:[%s1923 + $0x40] sm:$0xff]
        %v1933 = vld [vmem:[%s1923 + $0x48] sm:$0xff]
        %v1934 = vld [vmem:[%s1923 + $0x50] sm:$0xff]
        %v1935 = vld [vmem:[%s1923 + $0x58] sm:$0xff]
        %v1936 = vld [vmem:[%s1923 + $0x60] sm:$0xff]
        %v1937 = vld [vmem:[%s1923 + $0x68] sm:$0xff]
        %v1938 = vld [vmem:[%s1923 + $0x70] sm:$0xff]
        %v1939 = vld [vmem:[%s1923 + $0x78] sm:$0xff]
        %v1940 = vld [vmem:[%s1923 + $0x80] sm:$0xff]
        %v1941 = vld [vmem:[%s1923 + $0x88] sm:$0xff]
        %v1942 = vsel %vm1455, %v884, 0
        %v1944 = vsel %vm1455, %v887, 0
        %v1946 = vsel %vm1455, %v890, 0
        %v1948 = vsel %vm1455, %v893, 0
        %v1950 = vsel %vm1455, %v896, 0
        %v1952 = vsel %vm1455, %v899, 0
        %v1954 = vsel %vm1455, %v959, 0
        %v1956 = vsel %vm1455, %v878, 0
        %v1958 = vsel %vm1455, %v905, 0
        %v1960 = vsel %vm1455, %v908, 0
        %v1962 = vsel %vm1455, %v911, 0
        %v1964 = vsel %vm1455, %v914, 0
        %v1966 = vsel %vm1455, %v917, 0
        %v1968 = vsel %vm1455, %v920, 0
        %v1970 = vsel %vm1455, %v962, 0
        %v1972 = vsel %vm1455, %v926, 0
        %v1974 = vsel %vm1455, %v929, 0
        %v1976 = vsel %vm1455, %v932, 0
        %v1978 = vsel %vm1455, %v935, 0
        %v1980 = vsel %vm1455, %v938, 0
        %v1982 = vsel %vm1455, %v941, 0
        %v1984 = vsel %vm1455, %v965, 0
        %v1986 = vsel %vm1455, %v1689, 0
        %v1988 = vsel %vm1455, %v1692, 0
        %v1990 = vsel %vm1455, %v1695, 0
        %v1992 = vsel %vm1455, %v1698, 0
        %v1994 = vsel %vm1455, %v1701, 0
        %v1996 = vsel %vm1455, %v1704, 0
        %v1998 = vsel %vm1455, %v1712, 0
        %2000 = vmatprep.subr.mxu0 0.0
        %2001 = vmatpush1.msra.mxu0 %v1939
        %2002 = vmatprep.subr.mxu0 0.0
        %2003 = vmatpush1.msra.mxu0 %v1938
        %2004 = vmatprep.subr.mxu0 0.0
        %2005 = vmatpush1.msra.mxu0 %v1937
        %2006 = vmatprep.subr.mxu0 0.0
        %2007 = vmatpush1.msra.mxu0 %v1936
        %2008 = vmatprep.subr.mxu0 0.0
        %2009 = vmatpush1.msra.mxu0 %v1935
        %2010 = vmatprep.subr.mxu0 0.0
        %2011 = vmatpush1.msra.mxu0 %v1934
        %2012 = vmatprep.subr.mxu0 0.0
        %2013 = vmatpush1.msra.mxu0 %v1933
        %2014 = vmatprep.subr.mxu0 0.0
        %2015 = vmatpush1.msra.mxu0 %v1932
        %2016 = vmatprep.subr.mxu0 0.0
        %2017 = vmatpush1.msra.mxu0 %v1931
        %2018 = vmatprep.subr.mxu0 0.0
        %2019 = vmatpush1.msra.mxu0 %v1930
        %2020 = vmatprep.subr.mxu0 0.0
        %2021 = vmatpush1.msra.mxu0 %v1929
        %2022 = vmatprep.subr.mxu0 0.0
        %2023 = vmatpush1.msra.mxu0 %v1928
        %2024 = vmatprep.subr.mxu0 0.0
        %2025 = vmatpush1.msra.mxu0 %v1927
        %2026 = vmatprep.subr.mxu0 0.0
        %2027 = vmatpush1.msra.mxu0 %v1926
        %2028 = vmatprep.subr.mxu0 0.0
        %2029 = vmatpush1.msra.mxu0 %v1925
        %2030 = vmatprep.subr.mxu0 0.0
        %2031 = vmatpush1.msra.mxu0 %v1924
        %2032 = vmatprep.subr.mxu0 0.0
        %2033 = vmatpush2.msra.mxu0 0.0
        %2034 = vmatprep.subr.mxu0 0.0
        %2035 = vmatpush2.msra.mxu0 0.0
        %2036 = vmatprep.subr.mxu0 0.0
        %2037 = vmatpush2.msra.mxu0 0.0
        %2038 = vmatprep.subr.mxu0 0.0
        %2039 = vmatpush2.msra.mxu0 0.0
        %2040 = vmatprep.subr.mxu0 0.0
        %2041 = vmatpush2.msra.mxu0 0.0
        %2042 = vmatprep.subr.mxu0 0.0
        %2043 = vmatpush2.msra.mxu0 0.0
        %2044 = vmatprep.subr.mxu0 0.0
        %2045 = vmatpush2.msra.mxu0 0.0
        %2046 = vmatprep.subr.mxu0 0.0
        %2047 = vmatpush2.msra.mxu0 0.0
        %2048 = vmatprep.subr.mxu0 0.0
        %2049 = vmatpush2.msra.mxu0 0.0
        %2050 = vmatprep.subr.mxu0 0.0
        %2051 = vmatpush2.msra.mxu0 0.0
        %2052 = vmatprep.subr.mxu0 0.0
        %2053 = vmatpush2.msra.mxu0 0.0
        %2054 = vmatprep.subr.mxu0 0.0
        %2055 = vmatpush2.msra.mxu0 0.0
        %2056 = vmatprep.subr.mxu0 0.0
        %2057 = vmatpush2.msra.mxu0 0.0
        %2058 = vmatprep.subr.mxu0 0.0
        %2059 = vmatpush2.msra.mxu0 0.0
        %2060 = vmatprep.subr.mxu0 0.0
        %2061 = vmatpush2.msra.mxu0 %v1941
        %2062 = vmatprep.subr.mxu0 0.0
        %2063 = vmatpush2.msra.mxu0 %v1940
        %2064 = vmatprep.mubr.f32.mxu0 %v1942
        %2065 = vmatmul.mubr.f32.gmra.mxu0 %v1607
        %v2066 = vpop.f32.mrf.mxu0
        %v2067 = vadd.f32 0.0, %v2066
        %v2068 = vpop.f32.mrf.mxu0
        %2069 = vmatprep.mubr.f32.mxu0 %v1944
        %2070 = vmatmul.mubr.f32.gmra.mxu0 %v1608
        %v2071 = vpop.f32.mrf.mxu0
        %v2072 = vadd.f32 0.0, %v2071
        %v2073 = vpop.f32.mrf.mxu0
        %2074 = vmatprep.mubr.f32.mxu0 %v1946
        %2075 = vmatmul.mubr.f32.gmra.mxu0 %v1609
        %v2076 = vpop.f32.mrf.mxu0
        %v2077 = vadd.f32 0.0, %v2076
        %v2078 = vpop.f32.mrf.mxu0
        %2079 = vmatprep.mubr.f32.mxu0 %v1948
        %2080 = vmatmul.mubr.f32.gmra.mxu0 %v1610
        %v2081 = vpop.f32.mrf.mxu0
        %v2082 = vadd.f32 0.0, %v2081
        %v2083 = vpop.f32.mrf.mxu0
        %2084 = vmatprep.mubr.f32.mxu0 %v1950
        %2085 = vmatmul.mubr.f32.gmra.mxu0 %v1611
        %v2086 = vpop.f32.mrf.mxu0
        %v2087 = vadd.f32 0.0, %v2086
        %v2088 = vpop.f32.mrf.mxu0
        %2089 = vmatprep.mubr.f32.mxu0 %v1952
        %2090 = vmatmul.mubr.f32.gmra.mxu0 %v1612
        %v2091 = vpop.f32.mrf.mxu0
        %v2092 = vadd.f32 0.0, %v2091
        %v2093 = vpop.f32.mrf.mxu0
        %2094 = vmatprep.mubr.f32.mxu0 %v1954
        %2095 = vmatmul.mubr.f32.gmra.mxu0 %v1613
        %v2096 = vpop.f32.mrf.mxu0
        %v2097 = vadd.f32 0.0, %v2096
        %v2098 = vpop.f32.mrf.mxu0
        %2099 = vmatprep.mubr.f32.mxu0 %v1956
        %2100 = vmatmul.mubr.f32.gmra.mxu0 %v1614
        %v2101 = vpop.f32.mrf.mxu0
        %v2102 = vadd.f32 0.0, %v2101
        %v2103 = vpop.f32.mrf.mxu0
        %2104 = vmatprep.mubr.f32.mxu0 %v1958
        %2105 = vmatmul.mubr.f32.gmra.mxu0 %v1615
        %v2106 = vpop.f32.mrf.mxu0
        %v2107 = vadd.f32 0.0, %v2106
        %v2108 = vpop.f32.mrf.mxu0
        %2109 = vmatprep.mubr.f32.mxu0 %v1960
        %2110 = vmatmul.mubr.f32.gmra.mxu0 %v1616
        %v2111 = vpop.f32.mrf.mxu0
        %v2112 = vadd.f32 0.0, %v2111
        %v2113 = vpop.f32.mrf.mxu0
        %2114 = vmatprep.mubr.f32.mxu0 %v1962
        %2115 = vmatmul.mubr.f32.gmra.mxu0 %v1617
        %v2116 = vpop.f32.mrf.mxu0
        %v2117 = vadd.f32 0.0, %v2116
        %v2118 = vpop.f32.mrf.mxu0
        %2119 = vmatprep.mubr.f32.mxu0 %v1964
        %2120 = vmatmul.mubr.f32.gmra.mxu0 %v1618
        %v2121 = vpop.f32.mrf.mxu0
        %v2122 = vadd.f32 0.0, %v2121
        %v2123 = vpop.f32.mrf.mxu0
        %2124 = vmatprep.mubr.f32.mxu0 %v1966
        %2125 = vmatmul.mubr.f32.gmra.mxu0 %v1619
        %v2126 = vpop.f32.mrf.mxu0
        %v2127 = vadd.f32 0.0, %v2126
        %v2128 = vpop.f32.mrf.mxu0
        %2129 = vmatprep.mubr.f32.mxu0 %v1968
        %2130 = vmatmul.mubr.f32.gmra.mxu0 %v1620
        %v2131 = vpop.f32.mrf.mxu0
        %v2132 = vadd.f32 0.0, %v2131
        %v2133 = vpop.f32.mrf.mxu0
        %2134 = vmatprep.mubr.f32.mxu0 %v1970
        %2135 = vmatmul.mubr.f32.gmra.mxu0 %v1621
        %v2136 = vpop.f32.mrf.mxu0
        %v2137 = vadd.f32 0.0, %v2136
        %v2138 = vpop.f32.mrf.mxu0
        %2139 = vmatprep.mubr.f32.mxu0 %v1956
        %2140 = vmatmul.mubr.f32.gmra.mxu0 %v1622
        %v2141 = vpop.f32.mrf.mxu0
        %v2142 = vadd.f32 0.0, %v2141
        %v2143 = vpop.f32.mrf.mxu0
        %2144 = vmatprep.mubr.f32.mxu0 %v1972
        %2145 = vmatmul.mubr.f32.gmra.mxu0 %v1623
        %v2146 = vpop.f32.mrf.mxu0
        %v2147 = vadd.f32 0.0, %v2146
        %v2148 = vpop.f32.mrf.mxu0
        %2149 = vmatprep.mubr.f32.mxu0 %v1974
        %2150 = vmatmul.mubr.f32.gmra.mxu0 %v1624
        %v2151 = vpop.f32.mrf.mxu0
        %v2152 = vadd.f32 0.0, %v2151
        %v2153 = vpop.f32.mrf.mxu0
        %2154 = vmatprep.mubr.f32.mxu0 %v1976
        %2155 = vmatmul.mubr.f32.gmra.mxu0 %v1625
        %v2156 = vpop.f32.mrf.mxu0
        %v2157 = vadd.f32 0.0, %v2156
        %v2158 = vpop.f32.mrf.mxu0
        %2159 = vmatprep.mubr.f32.mxu0 %v1978
        %2160 = vmatmul.mubr.f32.gmra.mxu0 %v1626
        %v2161 = vpop.f32.mrf.mxu0
        %v2162 = vadd.f32 0.0, %v2161
        %v2163 = vpop.f32.mrf.mxu0
        %2164 = vmatprep.mubr.f32.mxu0 %v1980
        %2165 = vmatmul.mubr.f32.gmra.mxu0 %v1627
        %v2166 = vpop.f32.mrf.mxu0
        %v2167 = vadd.f32 0.0, %v2166
        %v2168 = vpop.f32.mrf.mxu0
        %2169 = vmatprep.mubr.f32.mxu0 %v1982
        %2170 = vmatmul.mubr.f32.gmra.mxu0 %v1628
        %v2171 = vpop.f32.mrf.mxu0
        %v2172 = vadd.f32 0.0, %v2171
        %v2173 = vpop.f32.mrf.mxu0
        %2174 = vmatprep.mubr.f32.mxu0 %v1984
        %2175 = vmatmul.mubr.f32.gmra.mxu0 %v1629
        %v2176 = vpop.f32.mrf.mxu0
        %v2177 = vadd.f32 0.0, %v2176
        %v2178 = vpop.f32.mrf.mxu0
        %2179 = vmatprep.mubr.f32.mxu0 %v1956
        %2180 = vmatmul.mubr.f32.gmra.mxu0 %v1630
        %v2181 = vpop.f32.mrf.mxu0
        %v2182 = vadd.f32 0.0, %v2181
        %v2183 = vpop.f32.mrf.mxu0
        %2184 = vmatprep.mubr.f32.mxu0 %v1986
        %2185 = vmatmul.mubr.f32.gmra.mxu0 %v1915
        %v2186 = vpop.f32.mrf.mxu0
        %v2187 = vadd.f32 0.0, %v2186
        %v2188 = vpop.f32.mrf.mxu0
        %2189 = vmatprep.mubr.f32.mxu0 %v1988
        %2190 = vmatmul.mubr.f32.gmra.mxu0 %v1916
        %v2191 = vpop.f32.mrf.mxu0
        %v2192 = vadd.f32 0.0, %v2191
        %v2193 = vpop.f32.mrf.mxu0
        %2194 = vmatprep.mubr.f32.mxu0 %v1990
        %2195 = vmatmul.mubr.f32.gmra.mxu0 %v1917
        %v2196 = vpop.f32.mrf.mxu0
        %v2197 = vadd.f32 0.0, %v2196
        %v2198 = vpop.f32.mrf.mxu0
        %2199 = vmatprep.mubr.f32.mxu0 %v1992
        %2200 = vmatmul.mubr.f32.gmra.mxu0 %v1918
        %v2201 = vpop.f32.mrf.mxu0
        %v2202 = vadd.f32 0.0, %v2201
        %v2203 = vpop.f32.mrf.mxu0
        %2204 = vmatprep.mubr.f32.mxu0 %v1994
        %2205 = vmatmul.mubr.f32.gmra.mxu0 %v1919
        %v2206 = vpop.f32.mrf.mxu0
        %v2207 = vadd.f32 0.0, %v2206
        %v2208 = vpop.f32.mrf.mxu0
        %2209 = vmatprep.mubr.f32.mxu0 %v1996
        %2210 = vmatmul.mubr.f32.gmra.mxu0 %v1920
        %v2211 = vpop.f32.mrf.mxu0
        %v2212 = vadd.f32 0.0, %v2211
        %v2213 = vpop.f32.mrf.mxu0
        %2214 = vmatprep.mubr.f32.mxu0 %v1998
        %2215 = vmatmul.mubr.f32.gmra.mxu0 %v1921
        %v2216 = vpop.f32.mrf.mxu0
        %v2217 = vadd.f32 0.0, %v2216
        %v2218 = vpop.f32.mrf.mxu0
        %2219 = vmatprep.mubr.f32.mxu0 %v1956
        %2220 = vmatmul.mubr.f32.gmra.mxu0 %v1922
        %v2221 = vpop.f32.mrf.mxu0
        %v2222 = vadd.f32 0.0, %v2221
        %v2223 = vpop.f32.mrf.mxu0
        %2224 = vdwg.mxu0
        %2225 = vmatprep.subr.mxu0 0.0
        %2226 = vmatpush1.msra.mxu0 %v1646
        %2227 = vmatprep.subr.mxu0 0.0
        %2228 = vmatpush1.msra.mxu0 %v1645
        %2229 = vmatprep.subr.mxu0 0.0
        %2230 = vmatpush1.msra.mxu0 %v1644
        %2231 = vmatprep.subr.mxu0 0.0
        %2232 = vmatpush1.msra.mxu0 %v1643
        %2233 = vmatprep.subr.mxu0 0.0
        %2234 = vmatpush1.msra.mxu0 %v1642
        %2235 = vmatprep.subr.mxu0 0.0
        %2236 = vmatpush1.msra.mxu0 %v1641
        %2237 = vmatprep.subr.mxu0 0.0
        %2238 = vmatpush1.msra.mxu0 %v1640
        %2239 = vmatprep.subr.mxu0 0.0
        %2240 = vmatpush1.msra.mxu0 %v1639
        %2241 = vmatprep.subr.mxu0 0.0
        %2242 = vmatpush1.msra.mxu0 %v1638
        %2243 = vmatprep.subr.mxu0 0.0
        %2244 = vmatpush1.msra.mxu0 %v1637
        %2245 = vmatprep.subr.mxu0 0.0
        %2246 = vmatpush1.msra.mxu0 %v1636
        %2247 = vmatprep.subr.mxu0 0.0
        %2248 = vmatpush1.msra.mxu0 %v1635
        %2249 = vmatprep.subr.mxu0 0.0
        %2250 = vmatpush1.msra.mxu0 %v1634
        %2251 = vmatprep.subr.mxu0 0.0
        %2252 = vmatpush1.msra.mxu0 %v1633
        %2253 = vmatprep.subr.mxu0 0.0
        %2254 = vmatpush1.msra.mxu0 %v1632
        %2255 = vmatprep.subr.mxu0 0.0
        %2256 = vmatpush1.msra.mxu0 %v1631
        %2257 = vmatprep.subr.mxu0 0.0
        %2258 = vmatpush2.msra.mxu0 0.0
        %2259 = vmatprep.subr.mxu0 0.0
        %2260 = vmatpush2.msra.mxu0 0.0
        %2261 = vmatprep.subr.mxu0 0.0
        %2262 = vmatpush2.msra.mxu0 0.0
        %2263 = vmatprep.subr.mxu0 0.0
        %2264 = vmatpush2.msra.mxu0 0.0
        %2265 = vmatprep.subr.mxu0 0.0
        %2266 = vmatpush2.msra.mxu0 0.0
        %2267 = vmatprep.subr.mxu0 0.0
        %2268 = vmatpush2.msra.mxu0 0.0
        %2269 = vmatprep.subr.mxu0 0.0
        %2270 = vmatpush2.msra.mxu0 0.0
        %2271 = vmatprep.subr.mxu0 0.0
        %2272 = vmatpush2.msra.mxu0 0.0
        %2273 = vmatprep.subr.mxu0 0.0
        %2274 = vmatpush2.msra.mxu0 0.0
        %2275 = vmatprep.subr.mxu0 0.0
        %2276 = vmatpush2.msra.mxu0 0.0
        %2277 = vmatprep.subr.mxu0 0.0
        %2278 = vmatpush2.msra.mxu0 0.0
        %2279 = vmatprep.subr.mxu0 0.0
        %2280 = vmatpush2.msra.mxu0 0.0
        %2281 = vmatprep.subr.mxu0 0.0
        %2282 = vmatpush2.msra.mxu0 0.0
        %2283 = vmatprep.subr.mxu0 0.0
        %2284 = vmatpush2.msra.mxu0 0.0
        %2285 = vmatprep.subr.mxu0 0.0
        %2286 = vmatpush2.msra.mxu0 %v1648
        %2287 = vmatprep.subr.mxu0 0.0
        %2288 = vmatpush2.msra.mxu0 %v1647
        %2289 = vmatprep.mubr.f32.mxu0 %v1956
        %2290 = vmatmul.mubr.f32.gmra.mxu0 %v1606
        %v2291 = vpop.f32.mrf.mxu0
        %v2292 = vadd.f32 %v2067, %v2291
        %v2293 = vpop.f32.mrf.mxu0
        %2294 = vmatprep.mubr.f32.mxu0 %v1956
        %2295 = vmatmul.mubr.f32.gmra.mxu0 %v1606
        %v2296 = vpop.f32.mrf.mxu0
        %v2297 = vadd.f32 %v2072, %v2296
        %v2298 = vpop.f32.mrf.mxu0
        %2299 = vmatprep.mubr.f32.mxu0 %v1956
        %2300 = vmatmul.mubr.f32.gmra.mxu0 %v1606
        %v2301 = vpop.f32.mrf.mxu0
        %v2302 = vadd.f32 %v2077, %v2301
        %v2303 = vpop.f32.mrf.mxu0
        %2304 = vmatprep.mubr.f32.mxu0 %v1956
        %2305 = vmatmul.mubr.f32.gmra.mxu0 %v1606
        %v2306 = vpop.f32.mrf.mxu0
        %v2307 = vadd.f32 %v2082, %v2306
        %v2308 = vpop.f32.mrf.mxu0
        %2309 = vmatprep.mubr.f32.mxu0 %v1956
        %2310 = vmatmul.mubr.f32.gmra.mxu0 %v1606
        %v2311 = vpop.f32.mrf.mxu0
        %v2312 = vadd.f32 %v2087, %v2311
        %v2313 = vpop.f32.mrf.mxu0
        %2314 = vmatprep.mubr.f32.mxu0 %v1956
        %2315 = vmatmul.mubr.f32.gmra.mxu0 %v1606
        %v2316 = vpop.f32.mrf.mxu0
        %v2317 = vadd.f32 %v2092, %v2316
        %v2318 = vpop.f32.mrf.mxu0
        %2319 = vmatprep.mubr.f32.mxu0 %v1956
        %2320 = vmatmul.mubr.f32.gmra.mxu0 %v1606
        %v2321 = vpop.f32.mrf.mxu0
        %v2322 = vadd.f32 %v2097, %v2321
        %v2323 = vpop.f32.mrf.mxu0
        %2324 = vmatprep.mubr.f32.mxu0 %v1956
        %2325 = vmatmul.mubr.f32.gmra.mxu0 %v1606
        %v2326 = vpop.f32.mrf.mxu0
        %v2327 = vadd.f32 %v2102, %v2326
        %v2328 = vpop.f32.mrf.mxu0
        %2329 = vmatprep.mubr.f32.mxu0 %v1942
        %2330 = vmatmul.mubr.f32.gmra.mxu0 %v1607
        %v2331 = vpop.f32.mrf.mxu0
        %v2332 = vadd.f32 %v2107, %v2331
        %v2333 = vpop.f32.mrf.mxu0
        %2334 = vmatprep.mubr.f32.mxu0 %v1944
        %2335 = vmatmul.mubr.f32.gmra.mxu0 %v1608
        %v2336 = vpop.f32.mrf.mxu0
        %v2337 = vadd.f32 %v2112, %v2336
        %v2338 = vpop.f32.mrf.mxu0
        %2339 = vmatprep.mubr.f32.mxu0 %v1946
        %2340 = vmatmul.mubr.f32.gmra.mxu0 %v1609
        %v2341 = vpop.f32.mrf.mxu0
        %v2342 = vadd.f32 %v2117, %v2341
        %v2343 = vpop.f32.mrf.mxu0
        %2344 = vmatprep.mubr.f32.mxu0 %v1948
        %2345 = vmatmul.mubr.f32.gmra.mxu0 %v1610
        %v2346 = vpop.f32.mrf.mxu0
        %v2347 = vadd.f32 %v2122, %v2346
        %v2348 = vpop.f32.mrf.mxu0
        %2349 = vmatprep.mubr.f32.mxu0 %v1950
        %2350 = vmatmul.mubr.f32.gmra.mxu0 %v1611
        %v2351 = vpop.f32.mrf.mxu0
        %v2352 = vadd.f32 %v2127, %v2351
        %v2353 = vpop.f32.mrf.mxu0
        %2354 = vmatprep.mubr.f32.mxu0 %v1952
        %2355 = vmatmul.mubr.f32.gmra.mxu0 %v1612
        %v2356 = vpop.f32.mrf.mxu0
        %v2357 = vadd.f32 %v2132, %v2356
        %v2358 = vpop.f32.mrf.mxu0
        %2359 = vmatprep.mubr.f32.mxu0 %v1954
        %2360 = vmatmul.mubr.f32.gmra.mxu0 %v1613
        %v2361 = vpop.f32.mrf.mxu0
        %v2362 = vadd.f32 %v2137, %v2361
        %v2363 = vpop.f32.mrf.mxu0
        %2364 = vmatprep.mubr.f32.mxu0 %v1956
        %2365 = vmatmul.mubr.f32.gmra.mxu0 %v1614
        %v2366 = vpop.f32.mrf.mxu0
        %v2367 = vadd.f32 %v2142, %v2366
        %v2368 = vpop.f32.mrf.mxu0
        %2369 = vmatprep.mubr.f32.mxu0 %v1958
        %2370 = vmatmul.mubr.f32.gmra.mxu0 %v1615
        %v2371 = vpop.f32.mrf.mxu0
        %v2372 = vadd.f32 %v2147, %v2371
        %v2373 = vpop.f32.mrf.mxu0
        %2374 = vmatprep.mubr.f32.mxu0 %v1960
        %2375 = vmatmul.mubr.f32.gmra.mxu0 %v1616
        %v2376 = vpop.f32.mrf.mxu0
        %v2377 = vadd.f32 %v2152, %v2376
        %v2378 = vpop.f32.mrf.mxu0
        %2379 = vmatprep.mubr.f32.mxu0 %v1962
        %2380 = vmatmul.mubr.f32.gmra.mxu0 %v1617
        %v2381 = vpop.f32.mrf.mxu0
        %v2382 = vadd.f32 %v2157, %v2381
        %v2383 = vpop.f32.mrf.mxu0
        %2384 = vmatprep.mubr.f32.mxu0 %v1964
        %2385 = vmatmul.mubr.f32.gmra.mxu0 %v1618
        %v2386 = vpop.f32.mrf.mxu0
        %v2387 = vadd.f32 %v2162, %v2386
        %v2388 = vpop.f32.mrf.mxu0
        %2389 = vmatprep.mubr.f32.mxu0 %v1966
        %2390 = vmatmul.mubr.f32.gmra.mxu0 %v1619
        %v2391 = vpop.f32.mrf.mxu0
        %v2392 = vadd.f32 %v2167, %v2391
        %v2393 = vpop.f32.mrf.mxu0
        %2394 = vmatprep.mubr.f32.mxu0 %v1968
        %2395 = vmatmul.mubr.f32.gmra.mxu0 %v1620
        %v2396 = vpop.f32.mrf.mxu0
        %v2397 = vadd.f32 %v2172, %v2396
        %v2398 = vpop.f32.mrf.mxu0
        %2399 = vmatprep.mubr.f32.mxu0 %v1970
        %2400 = vmatmul.mubr.f32.gmra.mxu0 %v1621
        %v2401 = vpop.f32.mrf.mxu0
        %v2402 = vadd.f32 %v2177, %v2401
        %v2403 = vpop.f32.mrf.mxu0
        %2404 = vmatprep.mubr.f32.mxu0 %v1956
        %2405 = vmatmul.mubr.f32.gmra.mxu0 %v1622
        %v2406 = vpop.f32.mrf.mxu0
        %v2407 = vadd.f32 %v2182, %v2406
        %v2408 = vpop.f32.mrf.mxu0
        %2409 = vmatprep.mubr.f32.mxu0 %v1972
        %2410 = vmatmul.mubr.f32.gmra.mxu0 %v1623
        %v2411 = vpop.f32.mrf.mxu0
        %v2412 = vadd.f32 %v2187, %v2411
        %v2413 = vpop.f32.mrf.mxu0
        %2414 = vmatprep.mubr.f32.mxu0 %v1974
        %2415 = vmatmul.mubr.f32.gmra.mxu0 %v1624
        %v2416 = vpop.f32.mrf.mxu0
        %v2417 = vadd.f32 %v2192, %v2416
        %v2418 = vpop.f32.mrf.mxu0
        %2419 = vmatprep.mubr.f32.mxu0 %v1976
        %2420 = vmatmul.mubr.f32.gmra.mxu0 %v1625
        %v2421 = vpop.f32.mrf.mxu0
        %v2422 = vadd.f32 %v2197, %v2421
        %v2423 = vpop.f32.mrf.mxu0
        %2424 = vmatprep.mubr.f32.mxu0 %v1978
        %2425 = vmatmul.mubr.f32.gmra.mxu0 %v1626
        %v2426 = vpop.f32.mrf.mxu0
        %v2427 = vadd.f32 %v2202, %v2426
        %v2428 = vpop.f32.mrf.mxu0
        %2429 = vmatprep.mubr.f32.mxu0 %v1980
        %2430 = vmatmul.mubr.f32.gmra.mxu0 %v1627
        %v2431 = vpop.f32.mrf.mxu0
        %v2432 = vadd.f32 %v2207, %v2431
        %v2433 = vpop.f32.mrf.mxu0
        %2434 = vmatprep.mubr.f32.mxu0 %v1982
        %2435 = vmatmul.mubr.f32.gmra.mxu0 %v1628
        %v2436 = vpop.f32.mrf.mxu0
        %v2437 = vadd.f32 %v2212, %v2436
        %v2438 = vpop.f32.mrf.mxu0
        %2439 = vmatprep.mubr.f32.mxu0 %v1984
        %2440 = vmatmul.mubr.f32.gmra.mxu0 %v1629
        %v2441 = vpop.f32.mrf.mxu0
        %v2442 = vadd.f32 %v2217, %v2441
        %v2443 = vpop.f32.mrf.mxu0
        %2444 = vmatprep.mubr.f32.mxu0 %v1956
        %2445 = vmatmul.mubr.f32.gmra.mxu0 %v1630
        %v2446 = vpop.f32.mrf.mxu0
        %v2447 = vadd.f32 %v2222, %v2446
        %v2448 = vpop.f32.mrf.mxu0
        %2449 = vdwg.mxu0
        %s2450 = scalar_lea.vmem %s1, 288
        %v2451 = vld [vmem:[%s2450] sm:$0xff]
        %v2452 = vld [vmem:[%s2450 + $0x8] sm:$0xff]
        %v2453 = vld [vmem:[%s2450 + $0x10] sm:$0xff]
        %v2454 = vld [vmem:[%s2450 + $0x18] sm:$0xff]
        %v2455 = vld [vmem:[%s2450 + $0x20] sm:$0xff]
        %v2456 = vld [vmem:[%s2450 + $0x28] sm:$0xff]
        %v2457 = vld [vmem:[%s2450 + $0x30] sm:$0xff]
        %v2458 = vld [vmem:[%s2450 + $0x38] sm:$0xff]
        %v2459 = vld [vmem:[%s2450 + $0x40] sm:$0xff]
        %v2460 = vld [vmem:[%s2450 + $0x48] sm:$0xff]
        %v2461 = vld [vmem:[%s2450 + $0x50] sm:$0xff]
        %v2462 = vld [vmem:[%s2450 + $0x58] sm:$0xff]
        %v2463 = vld [vmem:[%s2450 + $0x60] sm:$0xff]
        %v2464 = vld [vmem:[%s2450 + $0x68] sm:$0xff]
        %v2465 = vld [vmem:[%s2450 + $0x70] sm:$0xff]
        %v2466 = vld [vmem:[%s2450 + $0x78] sm:$0xff]
        %v2467 = vld [vmem:[%s2450 + $0x80] sm:$0xff]
        %v2468 = vld [vmem:[%s2450 + $0x88] sm:$0xff]
        %2469 = vmatprep.subr.mxu0 0.0
        %2470 = vmatpush1.msra.mxu0 %v2466
        %2471 = vmatprep.subr.mxu0 0.0
        %2472 = vmatpush1.msra.mxu0 %v2465
        %2473 = vmatprep.subr.mxu0 0.0
        %2474 = vmatpush1.msra.mxu0 %v2464
        %2475 = vmatprep.subr.mxu0 0.0
        %2476 = vmatpush1.msra.mxu0 %v2463
        %2477 = vmatprep.subr.mxu0 0.0
        %2478 = vmatpush1.msra.mxu0 %v2462
        %2479 = vmatprep.subr.mxu0 0.0
        %2480 = vmatpush1.msra.mxu0 %v2461
        %2481 = vmatprep.subr.mxu0 0.0
        %2482 = vmatpush1.msra.mxu0 %v2460
        %2483 = vmatprep.subr.mxu0 0.0
        %2484 = vmatpush1.msra.mxu0 %v2459
        %2485 = vmatprep.subr.mxu0 0.0
        %2486 = vmatpush1.msra.mxu0 %v2458
        %2487 = vmatprep.subr.mxu0 0.0
        %2488 = vmatpush1.msra.mxu0 %v2457
        %2489 = vmatprep.subr.mxu0 0.0
        %2490 = vmatpush1.msra.mxu0 %v2456
        %2491 = vmatprep.subr.mxu0 0.0
        %2492 = vmatpush1.msra.mxu0 %v2455
        %2493 = vmatprep.subr.mxu0 0.0
        %2494 = vmatpush1.msra.mxu0 %v2454
        %2495 = vmatprep.subr.mxu0 0.0
        %2496 = vmatpush1.msra.mxu0 %v2453
        %2497 = vmatprep.subr.mxu0 0.0
        %2498 = vmatpush1.msra.mxu0 %v2452
        %2499 = vmatprep.subr.mxu0 0.0
        %2500 = vmatpush1.msra.mxu0 %v2451
        %2501 = vmatprep.subr.mxu0 0.0
        %2502 = vmatpush2.msra.mxu0 0.0
        %2503 = vmatprep.subr.mxu0 0.0
        %2504 = vmatpush2.msra.mxu0 0.0
        %2505 = vmatprep.subr.mxu0 0.0
        %2506 = vmatpush2.msra.mxu0 0.0
        %2507 = vmatprep.subr.mxu0 0.0
        %2508 = vmatpush2.msra.mxu0 0.0
        %2509 = vmatprep.subr.mxu0 0.0
        %2510 = vmatpush2.msra.mxu0 0.0
        %2511 = vmatprep.subr.mxu0 0.0
        %2512 = vmatpush2.msra.mxu0 0.0
        %2513 = vmatprep.subr.mxu0 0.0
        %2514 = vmatpush2.msra.mxu0 0.0
        %2515 = vmatprep.subr.mxu0 0.0
        %2516 = vmatpush2.msra.mxu0 0.0
        %2517 = vmatprep.subr.mxu0 0.0
        %2518 = vmatpush2.msra.mxu0 0.0
        %2519 = vmatprep.subr.mxu0 0.0
        %2520 = vmatpush2.msra.mxu0 0.0
        %2521 = vmatprep.subr.mxu0 0.0
        %2522 = vmatpush2.msra.mxu0 0.0
        %2523 = vmatprep.subr.mxu0 0.0
        %2524 = vmatpush2.msra.mxu0 0.0
        %2525 = vmatprep.subr.mxu0 0.0
        %2526 = vmatpush2.msra.mxu0 0.0
        %2527 = vmatprep.subr.mxu0 0.0
        %2528 = vmatpush2.msra.mxu0 0.0
        %2529 = vmatprep.subr.mxu0 0.0
        %2530 = vmatpush2.msra.mxu0 %v2468
        %2531 = vmatprep.subr.mxu0 0.0
        %2532 = vmatpush2.msra.mxu0 %v2467
        %2533 = vmatprep.mubr.f32.mxu0 %v1958
        %2534 = vmatmul.mubr.f32.gmra.mxu0 %v1615
        %v2535 = vpop.f32.mrf.mxu0
        %v2536 = vadd.f32 0.0, %v2535
        %v2537 = vpop.f32.mrf.mxu0
        %2538 = vmatprep.mubr.f32.mxu0 %v1960
        %2539 = vmatmul.mubr.f32.gmra.mxu0 %v1616
        %v2540 = vpop.f32.mrf.mxu0
        %v2541 = vadd.f32 0.0, %v2540
        %v2542 = vpop.f32.mrf.mxu0
        %2543 = vmatprep.mubr.f32.mxu0 %v1962
        %2544 = vmatmul.mubr.f32.gmra.mxu0 %v1617
        %v2545 = vpop.f32.mrf.mxu0
        %v2546 = vadd.f32 0.0, %v2545
        %v2547 = vpop.f32.mrf.mxu0
        %2548 = vmatprep.mubr.f32.mxu0 %v1964
        %2549 = vmatmul.mubr.f32.gmra.mxu0 %v1618
        %v2550 = vpop.f32.mrf.mxu0
        %v2551 = vadd.f32 0.0, %v2550
        %v2552 = vpop.f32.mrf.mxu0
        %2553 = vmatprep.mubr.f32.mxu0 %v1966
        %2554 = vmatmul.mubr.f32.gmra.mxu0 %v1619
        %v2555 = vpop.f32.mrf.mxu0
        %v2556 = vadd.f32 0.0, %v2555
        %v2557 = vpop.f32.mrf.mxu0
        %2558 = vmatprep.mubr.f32.mxu0 %v1968
        %2559 = vmatmul.mubr.f32.gmra.mxu0 %v1620
        %v2560 = vpop.f32.mrf.mxu0
        %v2561 = vadd.f32 0.0, %v2560
        %v2562 = vpop.f32.mrf.mxu0
        %2563 = vmatprep.mubr.f32.mxu0 %v1970
        %2564 = vmatmul.mubr.f32.gmra.mxu0 %v1621
        %v2565 = vpop.f32.mrf.mxu0
        %v2566 = vadd.f32 0.0, %v2565
        %v2567 = vpop.f32.mrf.mxu0
        %2568 = vmatprep.mubr.f32.mxu0 %v1956
        %2569 = vmatmul.mubr.f32.gmra.mxu0 %v1622
        %v2570 = vpop.f32.mrf.mxu0
        %v2571 = vadd.f32 0.0, %v2570
        %v2572 = vpop.f32.mrf.mxu0
        %2573 = vmatprep.mubr.f32.mxu0 %v1972
        %2574 = vmatmul.mubr.f32.gmra.mxu0 %v1623
        %v2575 = vpop.f32.mrf.mxu0
        %v2576 = vadd.f32 0.0, %v2575
        %v2577 = vpop.f32.mrf.mxu0
        %2578 = vmatprep.mubr.f32.mxu0 %v1974
        %2579 = vmatmul.mubr.f32.gmra.mxu0 %v1624
        %v2580 = vpop.f32.mrf.mxu0
        %v2581 = vadd.f32 0.0, %v2580
        %v2582 = vpop.f32.mrf.mxu0
        %2583 = vmatprep.mubr.f32.mxu0 %v1976
        %2584 = vmatmul.mubr.f32.gmra.mxu0 %v1625
        %v2585 = vpop.f32.mrf.mxu0
        %v2586 = vadd.f32 0.0, %v2585
        %v2587 = vpop.f32.mrf.mxu0
        %2588 = vmatprep.mubr.f32.mxu0 %v1978
        %2589 = vmatmul.mubr.f32.gmra.mxu0 %v1626
        %v2590 = vpop.f32.mrf.mxu0
        %v2591 = vadd.f32 0.0, %v2590
        %v2592 = vpop.f32.mrf.mxu0
        %2593 = vmatprep.mubr.f32.mxu0 %v1980
        %2594 = vmatmul.mubr.f32.gmra.mxu0 %v1627
        %v2595 = vpop.f32.mrf.mxu0
        %v2596 = vadd.f32 0.0, %v2595
        %v2597 = vpop.f32.mrf.mxu0
        %2598 = vmatprep.mubr.f32.mxu0 %v1982
        %2599 = vmatmul.mubr.f32.gmra.mxu0 %v1628
        %v2600 = vpop.f32.mrf.mxu0
        %v2601 = vadd.f32 0.0, %v2600
        %v2602 = vpop.f32.mrf.mxu0
        %2603 = vmatprep.mubr.f32.mxu0 %v1984
        %2604 = vmatmul.mubr.f32.gmra.mxu0 %v1629
        %v2605 = vpop.f32.mrf.mxu0
        %v2606 = vadd.f32 0.0, %v2605
        %v2607 = vpop.f32.mrf.mxu0
        %2608 = vmatprep.mubr.f32.mxu0 %v1956
        %2609 = vmatmul.mubr.f32.gmra.mxu0 %v1630
        %v2610 = vpop.f32.mrf.mxu0
        %v2611 = vadd.f32 0.0, %v2610
        %v2612 = vpop.f32.mrf.mxu0
        %2613 = vmatprep.mubr.f32.mxu0 %v1986
        %2614 = vmatmul.mubr.f32.gmra.mxu0 %v1915
        %v2615 = vpop.f32.mrf.mxu0
        %v2616 = vadd.f32 0.0, %v2615
        %v2617 = vpop.f32.mrf.mxu0
        %2618 = vmatprep.mubr.f32.mxu0 %v1988
        %2619 = vmatmul.mubr.f32.gmra.mxu0 %v1916
        %v2620 = vpop.f32.mrf.mxu0
        %v2621 = vadd.f32 0.0, %v2620
        %v2622 = vpop.f32.mrf.mxu0
        %2623 = vmatprep.mubr.f32.mxu0 %v1990
        %2624 = vmatmul.mubr.f32.gmra.mxu0 %v1917
        %v2625 = vpop.f32.mrf.mxu0
        %v2626 = vadd.f32 0.0, %v2625
        %v2627 = vpop.f32.mrf.mxu0
        %2628 = vmatprep.mubr.f32.mxu0 %v1992
        %2629 = vmatmul.mubr.f32.gmra.mxu0 %v1918
        %v2630 = vpop.f32.mrf.mxu0
        %v2631 = vadd.f32 0.0, %v2630
        %v2632 = vpop.f32.mrf.mxu0
        %2633 = vmatprep.mubr.f32.mxu0 %v1994
        %2634 = vmatmul.mubr.f32.gmra.mxu0 %v1919
        %v2635 = vpop.f32.mrf.mxu0
        %v2636 = vadd.f32 0.0, %v2635
        %v2637 = vpop.f32.mrf.mxu0
        %2638 = vmatprep.mubr.f32.mxu0 %v1996
        %2639 = vmatmul.mubr.f32.gmra.mxu0 %v1920
        %v2640 = vpop.f32.mrf.mxu0
        %v2641 = vadd.f32 0.0, %v2640
        %v2642 = vpop.f32.mrf.mxu0
        %2643 = vmatprep.mubr.f32.mxu0 %v1998
        %2644 = vmatmul.mubr.f32.gmra.mxu0 %v1921
        %v2645 = vpop.f32.mrf.mxu0
        %v2646 = vadd.f32 0.0, %v2645
        %v2647 = vpop.f32.mrf.mxu0
        %2648 = vmatprep.mubr.f32.mxu0 %v1956
        %2649 = vmatmul.mubr.f32.gmra.mxu0 %v1922
        %v2650 = vpop.f32.mrf.mxu0
        %v2651 = vadd.f32 0.0, %v2650
        %v2652 = vpop.f32.mrf.mxu0
        %2653 = vmatprep.mubr.f32.mxu0 %v1956
        %2654 = vmatmul.mubr.f32.gmra.mxu0 %v1606
        %v2655 = vpop.f32.mrf.mxu0
        %v2656 = vadd.f32 0.0, %v2655
        %v2657 = vpop.f32.mrf.mxu0
        %2658 = vmatprep.mubr.f32.mxu0 %v1956
        %2659 = vmatmul.mubr.f32.gmra.mxu0 %v1606
        %v2660 = vpop.f32.mrf.mxu0
        %v2661 = vadd.f32 0.0, %v2660
        %v2662 = vpop.f32.mrf.mxu0
        %2663 = vmatprep.mubr.f32.mxu0 %v1956
        %2664 = vmatmul.mubr.f32.gmra.mxu0 %v1606
        %v2665 = vpop.f32.mrf.mxu0
        %v2666 = vadd.f32 0.0, %v2665
        %v2667 = vpop.f32.mrf.mxu0
        %2668 = vmatprep.mubr.f32.mxu0 %v1956
        %2669 = vmatmul.mubr.f32.gmra.mxu0 %v1606
        %v2670 = vpop.f32.mrf.mxu0
        %v2671 = vadd.f32 0.0, %v2670
        %v2672 = vpop.f32.mrf.mxu0
        %2673 = vmatprep.mubr.f32.mxu0 %v1956
        %2674 = vmatmul.mubr.f32.gmra.mxu0 %v1606
        %v2675 = vpop.f32.mrf.mxu0
        %v2676 = vadd.f32 0.0, %v2675
        %v2677 = vpop.f32.mrf.mxu0
        %2678 = vmatprep.mubr.f32.mxu0 %v1956
        %2679 = vmatmul.mubr.f32.gmra.mxu0 %v1606
        %v2680 = vpop.f32.mrf.mxu0
        %v2681 = vadd.f32 0.0, %v2680
        %v2682 = vpop.f32.mrf.mxu0
        %2683 = vmatprep.mubr.f32.mxu0 %v1956
        %2684 = vmatmul.mubr.f32.gmra.mxu0 %v1606
        %v2685 = vpop.f32.mrf.mxu0
        %v2686 = vadd.f32 0.0, %v2685
        %v2687 = vpop.f32.mrf.mxu0
        %2688 = vmatprep.mubr.f32.mxu0 %v1956
        %2689 = vmatmul.mubr.f32.gmra.mxu0 %v1606
        %v2690 = vpop.f32.mrf.mxu0
        %v2691 = vadd.f32 0.0, %v2690
        %v2692 = vpop.f32.mrf.mxu0
        %2693 = vdwg.mxu0
        %v2694 = vadd.f32 %v2292, %v2536
        %v2695 = vadd.f32 %v2297, %v2541
        %v2696 = vadd.f32 %v2302, %v2546
        %v2697 = vadd.f32 %v2307, %v2551
        %v2698 = vadd.f32 %v2312, %v2556
        %v2699 = vadd.f32 %v2317, %v2561
        %v2700 = vadd.f32 %v2322, %v2566
        %v2701 = vadd.f32 %v2327, %v2571
        %v2702 = vadd.f32 %v2332, %v2576
        %v2703 = vadd.f32 %v2337, %v2581
        %v2704 = vadd.f32 %v2342, %v2586
        %v2705 = vadd.f32 %v2347, %v2591
        %v2706 = vadd.f32 %v2352, %v2596
        %v2707 = vadd.f32 %v2357, %v2601
        %v2708 = vadd.f32 %v2362, %v2606
        %v2709 = vadd.f32 %v2367, %v2611
        %v2710 = vadd.f32 %v2372, %v2616
        %v2711 = vadd.f32 %v2377, %v2621
        %v2712 = vadd.f32 %v2382, %v2626
        %v2713 = vadd.f32 %v2387, %v2631
        %v2714 = vadd.f32 %v2392, %v2636
        %v2715 = vadd.f32 %v2397, %v2641
        %v2716 = vadd.f32 %v2402, %v2646
        %v2717 = vadd.f32 %v2407, %v2651
        %v2718 = vadd.f32 %v2412, %v2656
        %v2719 = vadd.f32 %v2417, %v2661
        %v2720 = vadd.f32 %v2422, %v2666
        %v2721 = vadd.f32 %v2427, %v2671
        %v2722 = vadd.f32 %v2432, %v2676
        %v2723 = vadd.f32 %v2437, %v2681
        %v2724 = vadd.f32 %v2442, %v2686
        %v2725 = vadd.f32 %v2447, %v2691
        %v2726 = vld [vmem:[%s2] sm:$0x1]
        %v2728 = vlaneseq
        %v2729 = vshrl.u32 %v2728, 7
        %v2730 = vsub.s32 0, %v2729
        %v2731 = vrot.slane %v2726, %v2730
        %v2733 = vadd.f32 %v2694, %v2731
        %v2734 = vadd.f32 %v2695, %v2731
        %v2735 = vadd.f32 %v2696, %v2731
        %v2736 = vadd.f32 %v2697, %v2731
        %v2737 = vadd.f32 %v2698, %v2731
        %v2738 = vadd.f32 %v2699, %v2731
        %v2739 = vadd.f32 %v2700, %v2731
        %v2740 = vadd.f32 %v2701, %v2731
        %v2741 = vadd.f32 %v2702, %v2731
        %v2742 = vadd.f32 %v2703, %v2731
        %v2743 = vadd.f32 %v2704, %v2731
        %v2744 = vadd.f32 %v2705, %v2731
        %v2745 = vadd.f32 %v2706, %v2731
        %v2746 = vadd.f32 %v2707, %v2731
        %v2747 = vadd.f32 %v2708, %v2731
        %v2748 = vadd.f32 %v2709, %v2731
        %v2749 = vadd.f32 %v2710, %v2731
        %v2750 = vadd.f32 %v2711, %v2731
        %v2751 = vadd.f32 %v2712, %v2731
        %v2752 = vadd.f32 %v2713, %v2731
        %v2753 = vadd.f32 %v2714, %v2731
        %v2754 = vadd.f32 %v2715, %v2731
        %v2755 = vadd.f32 %v2716, %v2731
        %v2756 = vadd.f32 %v2717, %v2731
        %v2757 = vadd.f32 %v2718, %v2731
        %v2758 = vadd.f32 %v2719, %v2731
        %v2759 = vadd.f32 %v2720, %v2731
        %v2760 = vadd.f32 %v2721, %v2731
        %v2761 = vadd.f32 %v2722, %v2731
        %v2762 = vadd.f32 %v2723, %v2731
        %v2763 = vadd.f32 %v2724, %v2731
        %v2764 = vadd.f32 %v2725, %v2731
        %v2765 = vmax.f32 %v2733, 0.0
        %v2766 = vmax.f32 %v2734, 0.0
        %v2767 = vmax.f32 %v2735, 0.0
        %v2768 = vmax.f32 %v2736, 0.0
        %v2769 = vmax.f32 %v2737, 0.0
        %v2770 = vmax.f32 %v2738, 0.0
        %v2771 = vmax.f32 %v2739, 0.0
        %v2772 = vmax.f32 %v2740, 0.0
        %v2773 = vmax.f32 %v2741, 0.0
        %v2774 = vmax.f32 %v2742, 0.0
        %v2775 = vmax.f32 %v2743, 0.0
        %v2776 = vmax.f32 %v2744, 0.0
        %v2777 = vmax.f32 %v2745, 0.0
        %v2778 = vmax.f32 %v2746, 0.0
        %v2779 = vmax.f32 %v2747, 0.0
        %v2780 = vmax.f32 %v2748, 0.0
        %v2781 = vmax.f32 %v2749, 0.0
        %v2782 = vmax.f32 %v2750, 0.0
        %v2783 = vmax.f32 %v2751, 0.0
        %v2784 = vmax.f32 %v2752, 0.0
        %v2785 = vmax.f32 %v2753, 0.0
        %v2786 = vmax.f32 %v2754, 0.0
        %v2787 = vmax.f32 %v2755, 0.0
        %v2788 = vmax.f32 %v2756, 0.0
        %v2789 = vmax.f32 %v2757, 0.0
        %v2790 = vmax.f32 %v2758, 0.0
        %v2791 = vmax.f32 %v2759, 0.0
        %v2792 = vmax.f32 %v2760, 0.0
        %v2793 = vmax.f32 %v2761, 0.0
        %v2794 = vmax.f32 %v2762, 0.0
        %v2795 = vmax.f32 %v2763, 0.0
        %v2796 = vmax.f32 %v2764, 0.0
        %2829 = vrot.lane.b32.xlu0 %v2765, 16
        %v2830 = vpop.permute.xlu0 %2829
        %2831 = vrot.lane.b32.xlu0 %v2766, 16
        %v2832 = vpop.permute.xlu0 %2831
        %2833 = vrot.lane.b32.xlu0 %v2767, 16
        %v2834 = vpop.permute.xlu0 %2833
        %2835 = vrot.lane.b32.xlu0 %v2768, 16
        %v2836 = vpop.permute.xlu0 %2835
        %2837 = vrot.lane.b32.xlu0 %v2769, 16
        %v2838 = vpop.permute.xlu0 %2837
        %2839 = vrot.lane.b32.xlu0 %v2770, 16
        %v2840 = vpop.permute.xlu0 %2839
        %2841 = vrot.lane.b32.xlu0 %v2771, 16
        %v2842 = vpop.permute.xlu0 %2841
        %2843 = vrot.lane.b32.xlu0 %v2772, 16
        %v2844 = vpop.permute.xlu0 %2843
        %2845 = vrot.lane.b32.xlu0 %v2773, 16
        %v2846 = vpop.permute.xlu0 %2845
        %2847 = vrot.lane.b32.xlu0 %v2774, 16
        %v2848 = vpop.permute.xlu0 %2847
        %2849 = vrot.lane.b32.xlu0 %v2775, 16
        %v2850 = vpop.permute.xlu0 %2849
        %2851 = vrot.lane.b32.xlu0 %v2776, 16
        %v2852 = vpop.permute.xlu0 %2851
        %2853 = vrot.lane.b32.xlu0 %v2777, 16
        %v2854 = vpop.permute.xlu0 %2853
        %2855 = vrot.lane.b32.xlu0 %v2778, 16
        %v2856 = vpop.permute.xlu0 %2855
        %2857 = vrot.lane.b32.xlu0 %v2779, 16
        %v2858 = vpop.permute.xlu0 %2857
        %2859 = vrot.lane.b32.xlu0 %v2780, 16
        %v2860 = vpop.permute.xlu0 %2859
        %2861 = vrot.lane.b32.xlu0 %v2781, 16
        %v2862 = vpop.permute.xlu0 %2861
        %2863 = vrot.lane.b32.xlu0 %v2782, 16
        %v2864 = vpop.permute.xlu0 %2863
        %2865 = vrot.lane.b32.xlu0 %v2783, 16
        %v2866 = vpop.permute.xlu0 %2865
        %2867 = vrot.lane.b32.xlu0 %v2784, 16
        %v2868 = vpop.permute.xlu0 %2867
        %2869 = vrot.lane.b32.xlu0 %v2785, 16
        %v2870 = vpop.permute.xlu0 %2869
        %2871 = vrot.lane.b32.xlu0 %v2786, 16
        %v2872 = vpop.permute.xlu0 %2871
        %2873 = vrot.lane.b32.xlu0 %v2787, 16
        %v2874 = vpop.permute.xlu0 %2873
        %2875 = vrot.lane.b32.xlu0 %v2788, 16
        %v2876 = vpop.permute.xlu0 %2875
        %2877 = vrot.lane.b32.xlu0 %v2789, 16
        %v2878 = vpop.permute.xlu0 %2877
        %2879 = vrot.lane.b32.xlu0 %v2790, 16
        %v2880 = vpop.permute.xlu0 %2879
        %2881 = vrot.lane.b32.xlu0 %v2791, 16
        %v2882 = vpop.permute.xlu0 %2881
        %2883 = vrot.lane.b32.xlu0 %v2792, 16
        %v2884 = vpop.permute.xlu0 %2883
        %2885 = vrot.lane.b32.xlu0 %v2793, 16
        %v2886 = vpop.permute.xlu0 %2885
        %2887 = vrot.lane.b32.xlu0 %v2794, 16
        %v2888 = vpop.permute.xlu0 %2887
        %2889 = vrot.lane.b32.xlu0 %v2795, 16
        %v2890 = vpop.permute.xlu0 %2889
        %2891 = vrot.lane.b32.xlu0 %v2796, 16
        %v2892 = vpop.permute.xlu0 %2891
        %v2925 = vsel %vm1455, %v574, %v2830
        %v2926 = vsel %vm1455, %v575, %v2832
        %v2927 = vsel %vm1455, %v576, %v2834
        %v2928 = vsel %vm1455, %v577, %v2836
        %v2929 = vsel %vm1455, %v578, %v2838
        %v2930 = vsel %vm1455, %v579, %v2840
        %v2931 = vsel %vm1455, %v580, %v2842
        %v2932 = vsel %vm1455, %v581, %v2844
        %v2933 = vsel %vm1455, %v582, %v2846
        %v2934 = vsel %vm1455, %v583, %v2848
        %v2935 = vsel %vm1455, %v584, %v2850
        %v2936 = vsel %vm1455, %v585, %v2852
        %v2937 = vsel %vm1455, %v586, %v2854
        %v2938 = vsel %vm1455, %v587, %v2856
        %v2939 = vsel %vm1455, %v588, %v2858
        %v2940 = vsel %vm1455, %v589, %v2860
        %v2941 = vsel %vm1455, %v590, %v2862
        %v2942 = vsel %vm1455, %v591, %v2864
        %v2943 = vsel %vm1455, %v592, %v2866
        %v2944 = vsel %vm1455, %v593, %v2868
        %v2945 = vsel %vm1455, %v594, %v2870
        %v2946 = vsel %vm1455, %v595, %v2872
        %v2947 = vsel %vm1455, %v596, %v2874
        %v2948 = vsel %vm1455, %v597, %v2876
        %v2949 = vsel %vm1455, %v598, %v2878
        %v2950 = vsel %vm1455, %v599, %v2880
        %v2951 = vsel %vm1455, %v600, %v2882
        %v2952 = vsel %vm1455, %v601, %v2884
        %v2953 = vsel %vm1455, %v602, %v2886
        %v2954 = vsel %vm1455, %v603, %v2888
        %v2955 = vsel %vm1455, %v604, %v2890
        %v2956 = vsel %vm1455, %v605, %v2892
        %v2957 = vld [vmem:[%s3] sm:$0xff]
        %v2958 = vld [vmem:[%s3 + $0x8] sm:$0xff]
        %v2959 = vld [vmem:[%s3 + $0x10] sm:$0xff]
        %v2960 = vld [vmem:[%s3 + $0x18] sm:$0xff]
        %v2961 = vld [vmem:[%s3 + $0x20] sm:$0xff]
        %v2962 = vld [vmem:[%s3 + $0x28] sm:$0xff]
        %v2963 = vld [vmem:[%s3 + $0x30] sm:$0xff]
        %v2964 = vld [vmem:[%s3 + $0x38] sm:$0xff]
        %v2965 = vld [vmem:[%s3 + $0x40] sm:$0xff]
        %v2966 = vld [vmem:[%s3 + $0x48] sm:$0xff]
        %v2967 = vld [vmem:[%s3 + $0x50] sm:$0xff]
        %v2968 = vld [vmem:[%s3 + $0x58] sm:$0xff]
        %v2969 = vld [vmem:[%s4] sm:$0x1]
        %3002 = vrot.lane.b32.xlu0 %v2925, 32
        %v3003 = vpop.permute.xlu0 %3002
        %3004 = vrot.lane.b32.xlu0 %v2926, 32
        %v3005 = vpop.permute.xlu0 %3004
        %3006 = vrot.lane.b32.xlu0 %v2927, 32
        %v3007 = vpop.permute.xlu0 %3006
        %3008 = vrot.lane.b32.xlu0 %v2928, 32
        %v3009 = vpop.permute.xlu0 %3008
        %3010 = vrot.lane.b32.xlu0 %v2929, 32
        %v3011 = vpop.permute.xlu0 %3010
        %3012 = vrot.lane.b32.xlu0 %v2930, 32
        %v3013 = vpop.permute.xlu0 %3012
        %3014 = vrot.lane.b32.xlu0 %v2931, 32
        %v3015 = vpop.permute.xlu0 %3014
        %3016 = vrot.lane.b32.xlu0 %v2932, 32
        %v3017 = vpop.permute.xlu0 %3016
        %3018 = vrot.lane.b32.xlu0 %v2933, 32
        %v3019 = vpop.permute.xlu0 %3018
        %3020 = vrot.lane.b32.xlu0 %v2934, 32
        %v3021 = vpop.permute.xlu0 %3020
        %3022 = vrot.lane.b32.xlu0 %v2935, 32
        %v3023 = vpop.permute.xlu0 %3022
        %3024 = vrot.lane.b32.xlu0 %v2936, 32
        %v3025 = vpop.permute.xlu0 %3024
        %3026 = vrot.lane.b32.xlu0 %v2937, 32
        %v3027 = vpop.permute.xlu0 %3026
        %3028 = vrot.lane.b32.xlu0 %v2938, 32
        %v3029 = vpop.permute.xlu0 %3028
        %3030 = vrot.lane.b32.xlu0 %v2939, 32
        %v3031 = vpop.permute.xlu0 %3030
        %3032 = vrot.lane.b32.xlu0 %v2940, 32
        %v3033 = vpop.permute.xlu0 %3032
        %3034 = vrot.lane.b32.xlu0 %v2941, 32
        %v3035 = vpop.permute.xlu0 %3034
        %3036 = vrot.lane.b32.xlu0 %v2942, 32
        %v3037 = vpop.permute.xlu0 %3036
        %3038 = vrot.lane.b32.xlu0 %v2943, 32
        %v3039 = vpop.permute.xlu0 %3038
        %3040 = vrot.lane.b32.xlu0 %v2944, 32
        %v3041 = vpop.permute.xlu0 %3040
        %3042 = vrot.lane.b32.xlu0 %v2945, 32
        %v3043 = vpop.permute.xlu0 %3042
        %3044 = vrot.lane.b32.xlu0 %v2946, 32
        %v3045 = vpop.permute.xlu0 %3044
        %3046 = vrot.lane.b32.xlu0 %v2947, 32
        %v3047 = vpop.permute.xlu0 %3046
        %3048 = vrot.lane.b32.xlu0 %v2948, 32
        %v3049 = vpop.permute.xlu0 %3048
        %3050 = vrot.lane.b32.xlu0 %v2949, 32
        %v3051 = vpop.permute.xlu0 %3050
        %3052 = vrot.lane.b32.xlu0 %v2950, 32
        %v3053 = vpop.permute.xlu0 %3052
        %3054 = vrot.lane.b32.xlu0 %v2951, 32
        %v3055 = vpop.permute.xlu0 %3054
        %3056 = vrot.lane.b32.xlu0 %v2952, 32
        %v3057 = vpop.permute.xlu0 %3056
        %3058 = vrot.lane.b32.xlu0 %v2953, 32
        %v3059 = vpop.permute.xlu0 %3058
        %3060 = vrot.lane.b32.xlu0 %v2954, 32
        %v3061 = vpop.permute.xlu0 %3060
        %3062 = vrot.lane.b32.xlu0 %v2955, 32
        %v3063 = vpop.permute.xlu0 %3062
        %3064 = vrot.lane.b32.xlu0 %v2956, 32
        %v3065 = vpop.permute.xlu0 %3064
        %3098 = vrot.lane.b32.xlu0 %v2933, 64
        %v3099 = vpop.permute.xlu0 %3098
        %3100 = vrot.lane.b32.xlu0 %v2934, 64
        %v3101 = vpop.permute.xlu0 %3100
        %3102 = vrot.lane.b32.xlu0 %v2935, 64
        %v3103 = vpop.permute.xlu0 %3102
        %3104 = vrot.lane.b32.xlu0 %v2936, 64
        %v3105 = vpop.permute.xlu0 %3104
        %3106 = vrot.lane.b32.xlu0 %v2937, 64
        %v3107 = vpop.permute.xlu0 %3106
        %3108 = vrot.lane.b32.xlu0 %v2938, 64
        %v3109 = vpop.permute.xlu0 %3108
        %3110 = vrot.lane.b32.xlu0 %v2939, 64
        %v3111 = vpop.permute.xlu0 %3110
        %3112 = vrot.lane.b32.xlu0 %v2940, 64
        %v3113 = vpop.permute.xlu0 %3112
        %3114 = vrot.lane.b32.xlu0 %v2941, 64
        %v3115 = vpop.permute.xlu0 %3114
        %3116 = vrot.lane.b32.xlu0 %v2942, 64
        %v3117 = vpop.permute.xlu0 %3116
        %3118 = vrot.lane.b32.xlu0 %v2943, 64
        %v3119 = vpop.permute.xlu0 %3118
        %3120 = vrot.lane.b32.xlu0 %v2944, 64
        %v3121 = vpop.permute.xlu0 %3120
        %3122 = vrot.lane.b32.xlu0 %v2945, 64
        %v3123 = vpop.permute.xlu0 %3122
        %3124 = vrot.lane.b32.xlu0 %v2946, 64
        %v3125 = vpop.permute.xlu0 %3124
        %3126 = vrot.lane.b32.xlu0 %v2947, 64
        %v3127 = vpop.permute.xlu0 %3126
        %3128 = vrot.lane.b32.xlu0 %v2948, 64
        %v3129 = vpop.permute.xlu0 %3128
        %3130 = vrot.lane.b32.xlu0 %v2949, 64
        %v3131 = vpop.permute.xlu0 %3130
        %3132 = vrot.lane.b32.xlu0 %v2950, 64
        %v3133 = vpop.permute.xlu0 %3132
        %3134 = vrot.lane.b32.xlu0 %v2951, 64
        %v3135 = vpop.permute.xlu0 %3134
        %3136 = vrot.lane.b32.xlu0 %v2952, 64
        %v3137 = vpop.permute.xlu0 %3136
        %3138 = vrot.lane.b32.xlu0 %v2953, 64
        %v3139 = vpop.permute.xlu0 %3138
        %3140 = vrot.lane.b32.xlu0 %v2954, 64
        %v3141 = vpop.permute.xlu0 %3140
        %3142 = vrot.lane.b32.xlu0 %v2955, 64
        %v3143 = vpop.permute.xlu0 %3142
        %3144 = vrot.lane.b32.xlu0 %v2956, 64
        %v3145 = vpop.permute.xlu0 %3144
        %3146 = vrot.lane.b32.xlu0 0.0, 64
        %v3147 = vpop.permute.xlu0 %3146
        %v3173 = vsel %vm1478, 0.0, %v3003
        %v3174 = vsel %vm1478, 0.0, %v3005
        %v3175 = vsel %vm1478, 0.0, %v3007
        %v3176 = vsel %vm1478, 0.0, %v3009
        %v3177 = vsel %vm1478, 0.0, %v3011
        %v3178 = vsel %vm1478, 0.0, %v3013
        %v3179 = vsel %vm1478, 0.0, %v3015
        %v3180 = vsel %vm1478, 0.0, %v3017
        %v3181 = vsel %vm1478, %v2925, %v3019
        %v3182 = vsel %vm1478, %v2926, %v3021
        %v3183 = vsel %vm1478, %v2927, %v3023
        %v3184 = vsel %vm1478, %v2928, %v3025
        %v3185 = vsel %vm1478, %v2929, %v3027
        %v3186 = vsel %vm1478, %v2930, %v3029
        %v3187 = vsel %vm1478, %v2931, %v3031
        %v3188 = vsel %vm1478, %v2932, %v3033
        %v3189 = vsel %vm1478, %v2933, %v3035
        %v3190 = vsel %vm1478, %v2934, %v3037
        %v3191 = vsel %vm1478, %v2935, %v3039
        %v3192 = vsel %vm1478, %v2936, %v3041
        %v3193 = vsel %vm1478, %v2937, %v3043
        %v3194 = vsel %vm1478, %v2938, %v3045
        %v3195 = vsel %vm1478, %v2939, %v3047
        %v3196 = vsel %vm1478, %v2940, %v3049
        %v3197 = vsel %vm1478, %v2941, %v3051
        %v3198 = vsel %vm1478, %v2942, %v3053
        %v3199 = vsel %vm1478, %v2943, %v3055
        %v3200 = vsel %vm1478, %v2944, %v3057
        %v3201 = vsel %vm1478, %v2945, %v3059
        %v3202 = vsel %vm1478, %v2946, %v3061
        %v3203 = vsel %vm1478, %v2947, %v3063
        %v3204 = vsel %vm1478, %v2948, %v3065
        %v3205 = vsel %vm1527, %v3173, %v3099
        %v3206 = vsel %vm1527, %v3174, %v3101
        %v3207 = vsel %vm1527, %v3175, %v3103
        %v3208 = vsel %vm1527, %v3176, %v3105
        %v3209 = vsel %vm1527, %v3177, %v3107
        %v3210 = vsel %vm1527, %v3178, %v3109
        %v3211 = vsel %vm1527, %v3179, %v3111
        %v3212 = vsel %vm1527, %v3180, %v3113
        %v3213 = vsel %vm1527, %v3181, %v3115
        %v3214 = vsel %vm1527, %v3182, %v3117
        %v3215 = vsel %vm1527, %v3183, %v3119
        %v3216 = vsel %vm1527, %v3184, %v3121
        %v3217 = vsel %vm1527, %v3185, %v3123
        %v3218 = vsel %vm1527, %v3186, %v3125
        %v3219 = vsel %vm1527, %v3187, %v3127
        %v3220 = vsel %vm1527, %v3188, %v3129
        %v3221 = vsel %vm1527, %v3189, %v3131
        %v3222 = vsel %vm1527, %v3190, %v3133
        %v3223 = vsel %vm1527, %v3191, %v3135
        %v3224 = vsel %vm1527, %v3192, %v3137
        %v3225 = vsel %vm1527, %v3193, %v3139
        %v3226 = vsel %vm1527, %v3194, %v3141
        %v3227 = vsel %vm1527, %v3195, %v3143
        %v3228 = vsel %vm1527, %v3196, %v3145
        %v3229 = vsel %vm1527, %v3197, %v3147
        %v3230 = vsel %vm1527, %v3198, %v3147
        %v3231 = vsel %vm1527, %v3199, %v3147
        %v3232 = vsel %vm1527, %v3200, %v3147
        %v3233 = vsel %vm1527, %v3201, %v3147
        %v3234 = vsel %vm1527, %v3202, %v3147
        %v3235 = vsel %vm1527, %v3203, %v3147
        %v3236 = vsel %vm1527, %v3204, %v3147
        %v3238 = vlaneseq
        %v3239 = vshrl.u32 %v3238, 7
        %v3240 = vsub.s32 0, %v3239
        %v3241 = vrot.slane %v2969, %v3240
        %v3244 = vsel %vm1579, %v3205, 0
        %v3247 = vsel %vm1579, %v3206, 0
        %v3250 = vsel %vm1579, %v3207, 0
        %v3253 = vsel %vm1579, %v3208, 0
        %v3256 = vsel %vm1579, %v3209, 0
        %v3259 = vsel %vm1579, %v3210, 0
        %v3262 = vsel %vm1579, %v3211, 0
        %v3265 = vsel %vm1579, %v3212, 0
        %v3268 = vsel %vm1579, %v3213, 0
        %v3271 = vsel %vm1579, %v3214, 0
        %v3274 = vsel %vm1579, %v3215, 0
        %v3277 = vsel %vm1579, %v3216, 0
        %v3280 = vsel %vm1579, %v3217, 0
        %v3283 = vsel %vm1579, %v3218, 0
        %v3286 = vsel %vm1579, %v3219, 0
        %v3289 = vsel %vm1579, %v3220, 0
        %v3292 = vsel %vm1579, %v3221, 0
        %v3295 = vsel %vm1579, %v3222, 0
        %v3298 = vsel %vm1579, %v3223, 0
        %v3301 = vsel %vm1579, %v3224, 0
        %v3304 = vsel %vm1579, %v3225, 0
        %v3307 = vsel %vm1579, %v3226, 0
        %v3310 = vsel %vm1579, %v3227, 0
        %v3313 = vsel %vm1579, %v3228, 0
        %v3316 = vsel %vm1579, %v3229, 0
        %v3319 = vsel %vm1579, %v3230, 0
        %v3322 = vsel %vm1579, %v3231, 0
        %v3325 = vsel %vm1579, %v3232, 0
        %v3328 = vsel %vm1579, %v3233, 0
        %v3331 = vsel %vm1579, %v3234, 0
        %v3334 = vsel %vm1579, %v3235, 0
        %v3337 = vsel %vm1579, %v3236, 0
        %3339 = vmatprep.subr.mxu0 0.0
        %3340 = vmatpush1.msra.mxu0 0.0
        %3341 = vmatprep.subr.mxu0 0.0
        %3342 = vmatpush1.msra.mxu0 0.0
        %3343 = vmatprep.subr.mxu0 0.0
        %3344 = vmatpush1.msra.mxu0 0.0
        %3345 = vmatprep.subr.mxu0 0.0
        %3346 = vmatpush1.msra.mxu0 0.0
        %3347 = vmatprep.subr.mxu0 0.0
        %3348 = vmatpush1.msra.mxu0 %v2968
        %3349 = vmatprep.subr.mxu0 0.0
        %3350 = vmatpush1.msra.mxu0 %v2967
        %3351 = vmatprep.subr.mxu0 0.0
        %3352 = vmatpush1.msra.mxu0 %v2966
        %3353 = vmatprep.subr.mxu0 0.0
        %3354 = vmatpush1.msra.mxu0 %v2965
        %3355 = vmatprep.subr.mxu0 0.0
        %3356 = vmatpush1.msra.mxu0 %v2964
        %3357 = vmatprep.subr.mxu0 0.0
        %3358 = vmatpush1.msra.mxu0 %v2963
        %3359 = vmatprep.subr.mxu0 0.0
        %3360 = vmatpush1.msra.mxu0 %v2962
        %3361 = vmatprep.subr.mxu0 0.0
        %3362 = vmatpush1.msra.mxu0 %v2961
        %3363 = vmatprep.subr.mxu0 0.0
        %3364 = vmatpush1.msra.mxu0 %v2960
        %3365 = vmatprep.subr.mxu0 0.0
        %3366 = vmatpush1.msra.mxu0 %v2959
        %3367 = vmatprep.subr.mxu0 0.0
        %3368 = vmatpush1.msra.mxu0 %v2958
        %3369 = vmatprep.subr.mxu0 0.0
        %3370 = vmatpush1.msra.mxu0 %v2957
        %3371 = vmatprep.subr.mxu0 0.0
        %3372 = vmatpush2.msra.mxu0 0.0
        %3373 = vmatprep.subr.mxu0 0.0
        %3374 = vmatpush2.msra.mxu0 0.0
        %3375 = vmatprep.subr.mxu0 0.0
        %3376 = vmatpush2.msra.mxu0 0.0
        %3377 = vmatprep.subr.mxu0 0.0
        %3378 = vmatpush2.msra.mxu0 0.0
        %3379 = vmatprep.subr.mxu0 0.0
        %3380 = vmatpush2.msra.mxu0 0.0
        %3381 = vmatprep.subr.mxu0 0.0
        %3382 = vmatpush2.msra.mxu0 0.0
        %3383 = vmatprep.subr.mxu0 0.0
        %3384 = vmatpush2.msra.mxu0 0.0
        %3385 = vmatprep.subr.mxu0 0.0
        %3386 = vmatpush2.msra.mxu0 0.0
        %3387 = vmatprep.subr.mxu0 0.0
        %3388 = vmatpush2.msra.mxu0 0.0
        %3389 = vmatprep.subr.mxu0 0.0
        %3390 = vmatpush2.msra.mxu0 0.0
        %3391 = vmatprep.subr.mxu0 0.0
        %3392 = vmatpush2.msra.mxu0 0.0
        %3393 = vmatprep.subr.mxu0 0.0
        %3394 = vmatpush2.msra.mxu0 0.0
        %3395 = vmatprep.subr.mxu0 0.0
        %3396 = vmatpush2.msra.mxu0 0.0
        %3397 = vmatprep.subr.mxu0 0.0
        %3398 = vmatpush2.msra.mxu0 0.0
        %3399 = vmatprep.subr.mxu0 0.0
        %3400 = vmatpush2.msra.mxu0 0.0
        %3401 = vmatprep.subr.mxu0 0.0
        %3402 = vmatpush2.msra.mxu0 0.0
        %3403 = vmatprep.mubr.f32.mxu0 0.0
        %3404 = vmatmul.mubr.f32.gmra.mxu0 %v3244
        %v3405 = vpop.f32.mrf.mxu0
        %v3406 = vadd.f32 %v3241, %v3405
        %v3407 = vpop.f32.mrf.mxu0
        %3408 = vmatprep.mubr.f32.mxu0 0.0
        %3409 = vmatmul.mubr.f32.gmra.mxu0 %v3247
        %v3410 = vpop.f32.mrf.mxu0
        %v3411 = vadd.f32 %v3241, %v3410
        %v3412 = vpop.f32.mrf.mxu0
        %3413 = vmatprep.mubr.f32.mxu0 0.0
        %3414 = vmatmul.mubr.f32.gmra.mxu0 %v3250
        %v3415 = vpop.f32.mrf.mxu0
        %v3416 = vadd.f32 %v3241, %v3415
        %v3417 = vpop.f32.mrf.mxu0
        %3418 = vmatprep.mubr.f32.mxu0 0.0
        %3419 = vmatmul.mubr.f32.gmra.mxu0 %v3253
        %v3420 = vpop.f32.mrf.mxu0
        %v3421 = vadd.f32 %v3241, %v3420
        %v3422 = vpop.f32.mrf.mxu0
        %3423 = vmatprep.mubr.f32.mxu0 0.0
        %3424 = vmatmul.mubr.f32.gmra.mxu0 %v3256
        %v3425 = vpop.f32.mrf.mxu0
        %v3426 = vadd.f32 %v3241, %v3425
        %v3427 = vpop.f32.mrf.mxu0
        %3428 = vmatprep.mubr.f32.mxu0 0.0
        %3429 = vmatmul.mubr.f32.gmra.mxu0 %v3259
        %v3430 = vpop.f32.mrf.mxu0
        %v3431 = vadd.f32 %v3241, %v3430
        %v3432 = vpop.f32.mrf.mxu0
        %3433 = vmatprep.mubr.f32.mxu0 0.0
        %3434 = vmatmul.mubr.f32.gmra.mxu0 %v3262
        %v3435 = vpop.f32.mrf.mxu0
        %v3436 = vadd.f32 %v3241, %v3435
        %v3437 = vpop.f32.mrf.mxu0
        %3438 = vmatprep.mubr.f32.mxu0 0.0
        %3439 = vmatmul.mubr.f32.gmra.mxu0 %v3265
        %v3440 = vpop.f32.mrf.mxu0
        %v3441 = vadd.f32 %v3241, %v3440
        %v3442 = vpop.f32.mrf.mxu0
        %3443 = vmatprep.mubr.f32.mxu0 0.0
        %3444 = vmatmul.mubr.f32.gmra.mxu0 %v3268
        %v3445 = vpop.f32.mrf.mxu0
        %v3446 = vadd.f32 %v3241, %v3445
        %v3447 = vpop.f32.mrf.mxu0
        %3448 = vmatprep.mubr.f32.mxu0 0.0
        %3449 = vmatmul.mubr.f32.gmra.mxu0 %v3271
        %v3450 = vpop.f32.mrf.mxu0
        %v3451 = vadd.f32 %v3241, %v3450
        %v3452 = vpop.f32.mrf.mxu0
        %3453 = vmatprep.mubr.f32.mxu0 0.0
        %3454 = vmatmul.mubr.f32.gmra.mxu0 %v3274
        %v3455 = vpop.f32.mrf.mxu0
        %v3456 = vadd.f32 %v3241, %v3455
        %v3457 = vpop.f32.mrf.mxu0
        %3458 = vmatprep.mubr.f32.mxu0 0.0
        %3459 = vmatmul.mubr.f32.gmra.mxu0 %v3277
        %v3460 = vpop.f32.mrf.mxu0
        %v3461 = vadd.f32 %v3241, %v3460
        %v3462 = vpop.f32.mrf.mxu0
        %3463 = vmatprep.mubr.f32.mxu0 0.0
        %3464 = vmatmul.mubr.f32.gmra.mxu0 %v3280
        %v3465 = vpop.f32.mrf.mxu0
        %v3466 = vadd.f32 %v3241, %v3465
        %v3467 = vpop.f32.mrf.mxu0
        %3468 = vmatprep.mubr.f32.mxu0 0.0
        %3469 = vmatmul.mubr.f32.gmra.mxu0 %v3283
        %v3470 = vpop.f32.mrf.mxu0
        %v3471 = vadd.f32 %v3241, %v3470
        %v3472 = vpop.f32.mrf.mxu0
        %3473 = vmatprep.mubr.f32.mxu0 0.0
        %3474 = vmatmul.mubr.f32.gmra.mxu0 %v3286
        %v3475 = vpop.f32.mrf.mxu0
        %v3476 = vadd.f32 %v3241, %v3475
        %v3477 = vpop.f32.mrf.mxu0
        %3478 = vmatprep.mubr.f32.mxu0 0.0
        %3479 = vmatmul.mubr.f32.gmra.mxu0 %v3289
        %v3480 = vpop.f32.mrf.mxu0
        %v3481 = vadd.f32 %v3241, %v3480
        %v3482 = vpop.f32.mrf.mxu0
        %3483 = vmatprep.mubr.f32.mxu0 0.0
        %3484 = vmatmul.mubr.f32.gmra.mxu0 %v3292
        %v3485 = vpop.f32.mrf.mxu0
        %v3486 = vadd.f32 %v3241, %v3485
        %v3487 = vpop.f32.mrf.mxu0
        %3488 = vmatprep.mubr.f32.mxu0 0.0
        %3489 = vmatmul.mubr.f32.gmra.mxu0 %v3295
        %v3490 = vpop.f32.mrf.mxu0
        %v3491 = vadd.f32 %v3241, %v3490
        %v3492 = vpop.f32.mrf.mxu0
        %3493 = vmatprep.mubr.f32.mxu0 0.0
        %3494 = vmatmul.mubr.f32.gmra.mxu0 %v3298
        %v3495 = vpop.f32.mrf.mxu0
        %v3496 = vadd.f32 %v3241, %v3495
        %v3497 = vpop.f32.mrf.mxu0
        %3498 = vmatprep.mubr.f32.mxu0 0.0
        %3499 = vmatmul.mubr.f32.gmra.mxu0 %v3301
        %v3500 = vpop.f32.mrf.mxu0
        %v3501 = vadd.f32 %v3241, %v3500
        %v3502 = vpop.f32.mrf.mxu0
        %3503 = vmatprep.mubr.f32.mxu0 0.0
        %3504 = vmatmul.mubr.f32.gmra.mxu0 %v3304
        %v3505 = vpop.f32.mrf.mxu0
        %v3506 = vadd.f32 %v3241, %v3505
        %v3507 = vpop.f32.mrf.mxu0
        %3508 = vmatprep.mubr.f32.mxu0 0.0
        %3509 = vmatmul.mubr.f32.gmra.mxu0 %v3307
        %v3510 = vpop.f32.mrf.mxu0
        %v3511 = vadd.f32 %v3241, %v3510
        %v3512 = vpop.f32.mrf.mxu0
        %3513 = vmatprep.mubr.f32.mxu0 0.0
        %3514 = vmatmul.mubr.f32.gmra.mxu0 %v3310
        %v3515 = vpop.f32.mrf.mxu0
        %v3516 = vadd.f32 %v3241, %v3515
        %v3517 = vpop.f32.mrf.mxu0
        %3518 = vmatprep.mubr.f32.mxu0 0.0
        %3519 = vmatmul.mubr.f32.gmra.mxu0 %v3313
        %v3520 = vpop.f32.mrf.mxu0
        %v3521 = vadd.f32 %v3241, %v3520
        %v3522 = vpop.f32.mrf.mxu0
        %3523 = vmatprep.mubr.f32.mxu0 0.0
        %3524 = vmatmul.mubr.f32.gmra.mxu0 %v3316
        %v3525 = vpop.f32.mrf.mxu0
        %v3526 = vadd.f32 %v3241, %v3525
        %v3527 = vpop.f32.mrf.mxu0
        %3528 = vmatprep.mubr.f32.mxu0 0.0
        %3529 = vmatmul.mubr.f32.gmra.mxu0 %v3319
        %v3530 = vpop.f32.mrf.mxu0
        %v3531 = vadd.f32 %v3241, %v3530
        %v3532 = vpop.f32.mrf.mxu0
        %3533 = vmatprep.mubr.f32.mxu0 0.0
        %3534 = vmatmul.mubr.f32.gmra.mxu0 %v3322
        %v3535 = vpop.f32.mrf.mxu0
        %v3536 = vadd.f32 %v3241, %v3535
        %v3537 = vpop.f32.mrf.mxu0
        %3538 = vmatprep.mubr.f32.mxu0 0.0
        %3539 = vmatmul.mubr.f32.gmra.mxu0 %v3325
        %v3540 = vpop.f32.mrf.mxu0
        %v3541 = vadd.f32 %v3241, %v3540
        %v3542 = vpop.f32.mrf.mxu0
        %3543 = vmatprep.mubr.f32.mxu0 0.0
        %3544 = vmatmul.mubr.f32.gmra.mxu0 %v3328
        %v3545 = vpop.f32.mrf.mxu0
        %v3546 = vadd.f32 %v3241, %v3545
        %v3547 = vpop.f32.mrf.mxu0
        %3548 = vmatprep.mubr.f32.mxu0 0.0
        %3549 = vmatmul.mubr.f32.gmra.mxu0 %v3331
        %v3550 = vpop.f32.mrf.mxu0
        %v3551 = vadd.f32 %v3241, %v3550
        %v3552 = vpop.f32.mrf.mxu0
        %3553 = vmatprep.mubr.f32.mxu0 0.0
        %3554 = vmatmul.mubr.f32.gmra.mxu0 %v3334
        %v3555 = vpop.f32.mrf.mxu0
        %v3556 = vadd.f32 %v3241, %v3555
        %v3557 = vpop.f32.mrf.mxu0
        %3558 = vmatprep.mubr.f32.mxu0 0.0
        %3559 = vmatmul.mubr.f32.gmra.mxu0 %v3337
        %v3560 = vpop.f32.mrf.mxu0
        %v3561 = vadd.f32 %v3241, %v3560
        %v3562 = vpop.f32.mrf.mxu0
        %3563 = vdwg.mxu0
        %v3564 = vmax.f32 %v3406, 0.0
        %v3565 = vmax.f32 %v3411, 0.0
        %v3566 = vmax.f32 %v3416, 0.0
        %v3567 = vmax.f32 %v3421, 0.0
        %v3568 = vmax.f32 %v3426, 0.0
        %v3569 = vmax.f32 %v3431, 0.0
        %v3570 = vmax.f32 %v3436, 0.0
        %v3571 = vmax.f32 %v3441, 0.0
        %v3572 = vmax.f32 %v3446, 0.0
        %v3573 = vmax.f32 %v3451, 0.0
        %v3574 = vmax.f32 %v3456, 0.0
        %v3575 = vmax.f32 %v3461, 0.0
        %v3576 = vmax.f32 %v3466, 0.0
        %v3577 = vmax.f32 %v3471, 0.0
        %v3578 = vmax.f32 %v3476, 0.0
        %v3579 = vmax.f32 %v3481, 0.0
        %v3580 = vmax.f32 %v3486, 0.0
        %v3581 = vmax.f32 %v3491, 0.0
        %v3582 = vmax.f32 %v3496, 0.0
        %v3583 = vmax.f32 %v3501, 0.0
        %v3584 = vmax.f32 %v3506, 0.0
        %v3585 = vmax.f32 %v3511, 0.0
        %v3586 = vmax.f32 %v3516, 0.0
        %v3587 = vmax.f32 %v3521, 0.0
        %v3588 = vmax.f32 %v3526, 0.0
        %v3589 = vmax.f32 %v3531, 0.0
        %v3590 = vmax.f32 %v3536, 0.0
        %v3591 = vmax.f32 %v3541, 0.0
        %v3592 = vmax.f32 %v3546, 0.0
        %v3593 = vmax.f32 %v3551, 0.0
        %v3594 = vmax.f32 %v3556, 0.0
        %v3595 = vmax.f32 %v3561, 0.0
        %v3596 = vld [vmem:[%s5] sm:$0xff]
        %v3597 = vld [vmem:[%s5 + $0x8] sm:$0xff]
        %v3598 = vld [vmem:[%s5 + $0x10] sm:$0xff]
        %v3599 = vld [vmem:[%s6] sm:$0x1]
        %3632 = vrot.lane.b32.xlu0 %v3564, 8
        %v3633 = vpop.permute.xlu0 %3632
        %3634 = vrot.lane.b32.xlu0 %v3565, 8
        %v3635 = vpop.permute.xlu0 %3634
        %3636 = vrot.lane.b32.xlu0 %v3566, 8
        %v3637 = vpop.permute.xlu0 %3636
        %3638 = vrot.lane.b32.xlu0 %v3567, 8
        %v3639 = vpop.permute.xlu0 %3638
        %3640 = vrot.lane.b32.xlu0 %v3568, 8
        %v3641 = vpop.permute.xlu0 %3640
        %3642 = vrot.lane.b32.xlu0 %v3569, 8
        %v3643 = vpop.permute.xlu0 %3642
        %3644 = vrot.lane.b32.xlu0 %v3570, 8
        %v3645 = vpop.permute.xlu0 %3644
        %3646 = vrot.lane.b32.xlu0 %v3571, 8
        %v3647 = vpop.permute.xlu0 %3646
        %3648 = vrot.lane.b32.xlu0 %v3572, 8
        %v3649 = vpop.permute.xlu0 %3648
        %3650 = vrot.lane.b32.xlu0 %v3573, 8
        %v3651 = vpop.permute.xlu0 %3650
        %3652 = vrot.lane.b32.xlu0 %v3574, 8
        %v3653 = vpop.permute.xlu0 %3652
        %3654 = vrot.lane.b32.xlu0 %v3575, 8
        %v3655 = vpop.permute.xlu0 %3654
        %3656 = vrot.lane.b32.xlu0 %v3576, 8
        %v3657 = vpop.permute.xlu0 %3656
        %3658 = vrot.lane.b32.xlu0 %v3577, 8
        %v3659 = vpop.permute.xlu0 %3658
        %3660 = vrot.lane.b32.xlu0 %v3578, 8
        %v3661 = vpop.permute.xlu0 %3660
        %3662 = vrot.lane.b32.xlu0 %v3579, 8
        %v3663 = vpop.permute.xlu0 %3662
        %3664 = vrot.lane.b32.xlu0 %v3580, 8
        %v3665 = vpop.permute.xlu0 %3664
        %3666 = vrot.lane.b32.xlu0 %v3581, 8
        %v3667 = vpop.permute.xlu0 %3666
        %3668 = vrot.lane.b32.xlu0 %v3582, 8
        %v3669 = vpop.permute.xlu0 %3668
        %3670 = vrot.lane.b32.xlu0 %v3583, 8
        %v3671 = vpop.permute.xlu0 %3670
        %3672 = vrot.lane.b32.xlu0 %v3584, 8
        %v3673 = vpop.permute.xlu0 %3672
        %3674 = vrot.lane.b32.xlu0 %v3585, 8
        %v3675 = vpop.permute.xlu0 %3674
        %3676 = vrot.lane.b32.xlu0 %v3586, 8
        %v3677 = vpop.permute.xlu0 %3676
        %3678 = vrot.lane.b32.xlu0 %v3587, 8
        %v3679 = vpop.permute.xlu0 %3678
        %3680 = vrot.lane.b32.xlu0 %v3588, 8
        %v3681 = vpop.permute.xlu0 %3680
        %3682 = vrot.lane.b32.xlu0 %v3589, 8
        %v3683 = vpop.permute.xlu0 %3682
        %3684 = vrot.lane.b32.xlu0 %v3590, 8
        %v3685 = vpop.permute.xlu0 %3684
        %3686 = vrot.lane.b32.xlu0 %v3591, 8
        %v3687 = vpop.permute.xlu0 %3686
        %3688 = vrot.lane.b32.xlu0 %v3592, 8
        %v3689 = vpop.permute.xlu0 %3688
        %3690 = vrot.lane.b32.xlu0 %v3593, 8
        %v3691 = vpop.permute.xlu0 %3690
        %3692 = vrot.lane.b32.xlu0 %v3594, 8
        %v3693 = vpop.permute.xlu0 %3692
        %3694 = vrot.lane.b32.xlu0 %v3595, 8
        %v3695 = vpop.permute.xlu0 %3694
        %3728 = vrot.lane.b32.xlu0 %v3572, 16
        %v3729 = vpop.permute.xlu0 %3728
        %3730 = vrot.lane.b32.xlu0 %v3573, 16
        %v3731 = vpop.permute.xlu0 %3730
        %3732 = vrot.lane.b32.xlu0 %v3574, 16
        %v3733 = vpop.permute.xlu0 %3732
        %3734 = vrot.lane.b32.xlu0 %v3575, 16
        %v3735 = vpop.permute.xlu0 %3734
        %3736 = vrot.lane.b32.xlu0 %v3576, 16
        %v3737 = vpop.permute.xlu0 %3736
        %3738 = vrot.lane.b32.xlu0 %v3577, 16
        %v3739 = vpop.permute.xlu0 %3738
        %3740 = vrot.lane.b32.xlu0 %v3578, 16
        %v3741 = vpop.permute.xlu0 %3740
        %3742 = vrot.lane.b32.xlu0 %v3579, 16
        %v3743 = vpop.permute.xlu0 %3742
        %3744 = vrot.lane.b32.xlu0 %v3580, 16
        %v3745 = vpop.permute.xlu0 %3744
        %3746 = vrot.lane.b32.xlu0 %v3581, 16
        %v3747 = vpop.permute.xlu0 %3746
        %3748 = vrot.lane.b32.xlu0 %v3582, 16
        %v3749 = vpop.permute.xlu0 %3748
        %3750 = vrot.lane.b32.xlu0 %v3583, 16
        %v3751 = vpop.permute.xlu0 %3750
        %3752 = vrot.lane.b32.xlu0 %v3584, 16
        %v3753 = vpop.permute.xlu0 %3752
        %3754 = vrot.lane.b32.xlu0 %v3585, 16
        %v3755 = vpop.permute.xlu0 %3754
        %3756 = vrot.lane.b32.xlu0 %v3586, 16
        %v3757 = vpop.permute.xlu0 %3756
        %3758 = vrot.lane.b32.xlu0 %v3587, 16
        %v3759 = vpop.permute.xlu0 %3758
        %3760 = vrot.lane.b32.xlu0 %v3588, 16
        %v3761 = vpop.permute.xlu0 %3760
        %3762 = vrot.lane.b32.xlu0 %v3589, 16
        %v3763 = vpop.permute.xlu0 %3762
        %3764 = vrot.lane.b32.xlu0 %v3590, 16
        %v3765 = vpop.permute.xlu0 %3764
        %3766 = vrot.lane.b32.xlu0 %v3591, 16
        %v3767 = vpop.permute.xlu0 %3766
        %3768 = vrot.lane.b32.xlu0 %v3592, 16
        %v3769 = vpop.permute.xlu0 %3768
        %3770 = vrot.lane.b32.xlu0 %v3593, 16
        %v3771 = vpop.permute.xlu0 %3770
        %3772 = vrot.lane.b32.xlu0 %v3594, 16
        %v3773 = vpop.permute.xlu0 %3772
        %3774 = vrot.lane.b32.xlu0 %v3595, 16
        %v3775 = vpop.permute.xlu0 %3774
        %3776 = vrot.lane.b32.xlu0 0.0, 16
        %v3777 = vpop.permute.xlu0 %3776
        %vm3803 = vcmask 64512
        %v3804 = vsel %vm3803, 0.0, %v3633
        %v3805 = vsel %vm3803, 0.0, %v3635
        %v3806 = vsel %vm3803, 0.0, %v3637
        %v3807 = vsel %vm3803, 0.0, %v3639
        %v3808 = vsel %vm3803, 0.0, %v3641
        %v3809 = vsel %vm3803, 0.0, %v3643
        %v3810 = vsel %vm3803, 0.0, %v3645
        %v3811 = vsel %vm3803, 0.0, %v3647
        %v3812 = vsel %vm3803, %v3564, %v3649
        %v3813 = vsel %vm3803, %v3565, %v3651
        %v3814 = vsel %vm3803, %v3566, %v3653
        %v3815 = vsel %vm3803, %v3567, %v3655
        %v3816 = vsel %vm3803, %v3568, %v3657
        %v3817 = vsel %vm3803, %v3569, %v3659
        %v3818 = vsel %vm3803, %v3570, %v3661
        %v3819 = vsel %vm3803, %v3571, %v3663
        %v3820 = vsel %vm3803, %v3572, %v3665
        %v3821 = vsel %vm3803, %v3573, %v3667
        %v3822 = vsel %vm3803, %v3574, %v3669
        %v3823 = vsel %vm3803, %v3575, %v3671
        %v3824 = vsel %vm3803, %v3576, %v3673
        %v3825 = vsel %vm3803, %v3577, %v3675
        %v3826 = vsel %vm3803, %v3578, %v3677
        %v3827 = vsel %vm3803, %v3579, %v3679
        %v3828 = vsel %vm3803, %v3580, %v3681
        %v3829 = vsel %vm3803, %v3581, %v3683
        %v3830 = vsel %vm3803, %v3582, %v3685
        %v3831 = vsel %vm3803, %v3583, %v3687
        %v3832 = vsel %vm3803, %v3584, %v3689
        %v3833 = vsel %vm3803, %v3585, %v3691
        %v3834 = vsel %vm3803, %v3586, %v3693
        %v3835 = vsel %vm3803, %v3587, %v3695
        %v3836 = vsel %vm1455, %v3804, %v3729
        %v3837 = vsel %vm1455, %v3805, %v3731
        %v3838 = vsel %vm1455, %v3806, %v3733
        %v3839 = vsel %vm1455, %v3807, %v3735
        %v3840 = vsel %vm1455, %v3808, %v3737
        %v3841 = vsel %vm1455, %v3809, %v3739
        %v3842 = vsel %vm1455, %v3810, %v3741
        %v3843 = vsel %vm1455, %v3811, %v3743
        %v3844 = vsel %vm1455, %v3812, %v3745
        %v3845 = vsel %vm1455, %v3813, %v3747
        %v3846 = vsel %vm1455, %v3814, %v3749
        %v3847 = vsel %vm1455, %v3815, %v3751
        %v3848 = vsel %vm1455, %v3816, %v3753
        %v3849 = vsel %vm1455, %v3817, %v3755
        %v3850 = vsel %vm1455, %v3818, %v3757
        %v3851 = vsel %vm1455, %v3819, %v3759
        %v3852 = vsel %vm1455, %v3820, %v3761
        %v3853 = vsel %vm1455, %v3821, %v3763
        %v3854 = vsel %vm1455, %v3822, %v3765
        %v3855 = vsel %vm1455, %v3823, %v3767
        %v3856 = vsel %vm1455, %v3824, %v3769
        %v3857 = vsel %vm1455, %v3825, %v3771
        %v3858 = vsel %vm1455, %v3826, %v3773
        %v3859 = vsel %vm1455, %v3827, %v3775
        %v3860 = vsel %vm1455, %v3828, %v3777
        %v3861 = vsel %vm1455, %v3829, %v3777
        %v3862 = vsel %vm1455, %v3830, %v3777
        %v3863 = vsel %vm1455, %v3831, %v3777
        %v3864 = vsel %vm1455, %v3832, %v3777
        %v3865 = vsel %vm1455, %v3833, %v3777
        %v3866 = vsel %vm1455, %v3834, %v3777
        %v3867 = vsel %vm1455, %v3835, %v3777
        %v3869 = vlaneseq
        %v3870 = vshrl.u32 %v3869, 7
        %v3871 = vsub.s32 0, %v3870
        %v3872 = vrot.slane %v3599, %v3871
        %vm3874 = vcmask 195584
        %v3876 = vsel %vm3874, %v3836, 0
        %v3879 = vsel %vm3874, %v3837, 0
        %v3882 = vsel %vm3874, %v3838, 0
        %v3885 = vsel %vm3874, %v3839, 0
        %v3888 = vsel %vm3874, %v3840, 0
        %v3891 = vsel %vm3874, %v3841, 0
        %v3894 = vsel %vm3874, %v3842, 0
        %v3897 = vsel %vm3874, %v3843, 0
        %v3900 = vsel %vm3874, %v3844, 0
        %v3903 = vsel %vm3874, %v3845, 0
        %v3906 = vsel %vm3874, %v3846, 0
        %v3909 = vsel %vm3874, %v3847, 0
        %v3912 = vsel %vm3874, %v3848, 0
        %v3915 = vsel %vm3874, %v3849, 0
        %v3918 = vsel %vm3874, %v3850, 0
        %v3921 = vsel %vm3874, %v3851, 0
        %v3924 = vsel %vm3874, %v3852, 0
        %v3927 = vsel %vm3874, %v3853, 0
        %v3930 = vsel %vm3874, %v3854, 0
        %v3933 = vsel %vm3874, %v3855, 0
        %v3936 = vsel %vm3874, %v3856, 0
        %v3939 = vsel %vm3874, %v3857, 0
        %v3942 = vsel %vm3874, %v3858, 0
        %v3945 = vsel %vm3874, %v3859, 0
        %v3948 = vsel %vm3874, %v3860, 0
        %v3951 = vsel %vm3874, %v3861, 0
        %v3954 = vsel %vm3874, %v3862, 0
        %v3957 = vsel %vm3874, %v3863, 0
        %v3960 = vsel %vm3874, %v3864, 0
        %v3963 = vsel %vm3874, %v3865, 0
        %v3966 = vsel %vm3874, %v3866, 0
        %v3969 = vsel %vm3874, %v3867, 0
        %3971 = vmatprep.subr.mxu0 0.0
        %3972 = vmatpush1.msra.mxu0 0.0
        %3973 = vmatprep.subr.mxu0 0.0
        %3974 = vmatpush1.msra.mxu0 0.0
        %3975 = vmatprep.subr.mxu0 0.0
        %3976 = vmatpush1.msra.mxu0 0.0
        %3977 = vmatprep.subr.mxu0 0.0
        %3978 = vmatpush1.msra.mxu0 0.0
        %3979 = vmatprep.subr.mxu0 0.0
        %3980 = vmatpush1.msra.mxu0 0.0
        %3981 = vmatprep.subr.mxu0 0.0
        %3982 = vmatpush1.msra.mxu0 0.0
        %3983 = vmatprep.subr.mxu0 0.0
        %3984 = vmatpush1.msra.mxu0 0.0
        %3985 = vmatprep.subr.mxu0 0.0
        %3986 = vmatpush1.msra.mxu0 0.0
        %3987 = vmatprep.subr.mxu0 0.0
        %3988 = vmatpush1.msra.mxu0 0.0
        %3989 = vmatprep.subr.mxu0 0.0
        %3990 = vmatpush1.msra.mxu0 0.0
        %3991 = vmatprep.subr.mxu0 0.0
        %3992 = vmatpush1.msra.mxu0 0.0
        %3993 = vmatprep.subr.mxu0 0.0
        %3994 = vmatpush1.msra.mxu0 0.0
        %3995 = vmatprep.subr.mxu0 0.0
        %3996 = vmatpush1.msra.mxu0 0.0
        %3997 = vmatprep.subr.mxu0 0.0
        %3998 = vmatpush1.msra.mxu0 %v3598
        %3999 = vmatprep.subr.mxu0 0.0
        %4000 = vmatpush1.msra.mxu0 %v3597
        %4001 = vmatprep.subr.mxu0 0.0
        %4002 = vmatpush1.msra.mxu0 %v3596
        %4003 = vmatprep.subr.mxu0 0.0
        %4004 = vmatpush2.msra.mxu0 0.0
        %4005 = vmatprep.subr.mxu0 0.0
        %4006 = vmatpush2.msra.mxu0 0.0
        %4007 = vmatprep.subr.mxu0 0.0
        %4008 = vmatpush2.msra.mxu0 0.0
        %4009 = vmatprep.subr.mxu0 0.0
        %4010 = vmatpush2.msra.mxu0 0.0
        %4011 = vmatprep.subr.mxu0 0.0
        %4012 = vmatpush2.msra.mxu0 0.0
        %4013 = vmatprep.subr.mxu0 0.0
        %4014 = vmatpush2.msra.mxu0 0.0
        %4015 = vmatprep.subr.mxu0 0.0
        %4016 = vmatpush2.msra.mxu0 0.0
        %4017 = vmatprep.subr.mxu0 0.0
        %4018 = vmatpush2.msra.mxu0 0.0
        %4019 = vmatprep.subr.mxu0 0.0
        %4020 = vmatpush2.msra.mxu0 0.0
        %4021 = vmatprep.subr.mxu0 0.0
        %4022 = vmatpush2.msra.mxu0 0.0
        %4023 = vmatprep.subr.mxu0 0.0
        %4024 = vmatpush2.msra.mxu0 0.0
        %4025 = vmatprep.subr.mxu0 0.0
        %4026 = vmatpush2.msra.mxu0 0.0
        %4027 = vmatprep.subr.mxu0 0.0
        %4028 = vmatpush2.msra.mxu0 0.0
        %4029 = vmatprep.subr.mxu0 0.0
        %4030 = vmatpush2.msra.mxu0 0.0
        %4031 = vmatprep.subr.mxu0 0.0
        %4032 = vmatpush2.msra.mxu0 0.0
        %4033 = vmatprep.subr.mxu0 0.0
        %4034 = vmatpush2.msra.mxu0 0.0
        %4035 = vmatprep.mubr.f32.mxu0 0.0
        %4036 = vmatmul.mubr.f32.gmra.mxu0 %v3876
        %v4037 = vpop.f32.mrf.mxu0
        %v4038 = vadd.f32 %v3872, %v4037
        %v4039 = vpop.f32.mrf.mxu0
        %4040 = vmatprep.mubr.f32.mxu0 0.0
        %4041 = vmatmul.mubr.f32.gmra.mxu0 %v3879
        %v4042 = vpop.f32.mrf.mxu0
        %v4043 = vadd.f32 %v3872, %v4042
        %v4044 = vpop.f32.mrf.mxu0
        %4045 = vmatprep.mubr.f32.mxu0 0.0
        %4046 = vmatmul.mubr.f32.gmra.mxu0 %v3882
        %v4047 = vpop.f32.mrf.mxu0
        %v4048 = vadd.f32 %v3872, %v4047
        %v4049 = vpop.f32.mrf.mxu0
        %4050 = vmatprep.mubr.f32.mxu0 0.0
        %4051 = vmatmul.mubr.f32.gmra.mxu0 %v3885
        %v4052 = vpop.f32.mrf.mxu0
        %v4053 = vadd.f32 %v3872, %v4052
        %v4054 = vpop.f32.mrf.mxu0
        %4055 = vmatprep.mubr.f32.mxu0 0.0
        %4056 = vmatmul.mubr.f32.gmra.mxu0 %v3888
        %v4057 = vpop.f32.mrf.mxu0
        %v4058 = vadd.f32 %v3872, %v4057
        %v4059 = vpop.f32.mrf.mxu0
        %4060 = vmatprep.mubr.f32.mxu0 0.0
        %4061 = vmatmul.mubr.f32.gmra.mxu0 %v3891
        %v4062 = vpop.f32.mrf.mxu0
        %v4063 = vadd.f32 %v3872, %v4062
        %v4064 = vpop.f32.mrf.mxu0
        %4065 = vmatprep.mubr.f32.mxu0 0.0
        %4066 = vmatmul.mubr.f32.gmra.mxu0 %v3894
        %v4067 = vpop.f32.mrf.mxu0
        %v4068 = vadd.f32 %v3872, %v4067
        %v4069 = vpop.f32.mrf.mxu0
        %4070 = vmatprep.mubr.f32.mxu0 0.0
        %4071 = vmatmul.mubr.f32.gmra.mxu0 %v3897
        %v4072 = vpop.f32.mrf.mxu0
        %v4073 = vadd.f32 %v3872, %v4072
        %v4074 = vpop.f32.mrf.mxu0
        %4075 = vmatprep.mubr.f32.mxu0 0.0
        %4076 = vmatmul.mubr.f32.gmra.mxu0 %v3900
        %v4077 = vpop.f32.mrf.mxu0
        %v4078 = vadd.f32 %v3872, %v4077
        %v4079 = vpop.f32.mrf.mxu0
        %4080 = vmatprep.mubr.f32.mxu0 0.0
        %4081 = vmatmul.mubr.f32.gmra.mxu0 %v3903
        %v4082 = vpop.f32.mrf.mxu0
        %v4083 = vadd.f32 %v3872, %v4082
        %v4084 = vpop.f32.mrf.mxu0
        %4085 = vmatprep.mubr.f32.mxu0 0.0
        %4086 = vmatmul.mubr.f32.gmra.mxu0 %v3906
        %v4087 = vpop.f32.mrf.mxu0
        %v4088 = vadd.f32 %v3872, %v4087
        %v4089 = vpop.f32.mrf.mxu0
        %4090 = vmatprep.mubr.f32.mxu0 0.0
        %4091 = vmatmul.mubr.f32.gmra.mxu0 %v3909
        %v4092 = vpop.f32.mrf.mxu0
        %v4093 = vadd.f32 %v3872, %v4092
        %v4094 = vpop.f32.mrf.mxu0
        %4095 = vmatprep.mubr.f32.mxu0 0.0
        %4096 = vmatmul.mubr.f32.gmra.mxu0 %v3912
        %v4097 = vpop.f32.mrf.mxu0
        %v4098 = vadd.f32 %v3872, %v4097
        %v4099 = vpop.f32.mrf.mxu0
        %4100 = vmatprep.mubr.f32.mxu0 0.0
        %4101 = vmatmul.mubr.f32.gmra.mxu0 %v3915
        %v4102 = vpop.f32.mrf.mxu0
        %v4103 = vadd.f32 %v3872, %v4102
        %v4104 = vpop.f32.mrf.mxu0
        %4105 = vmatprep.mubr.f32.mxu0 0.0
        %4106 = vmatmul.mubr.f32.gmra.mxu0 %v3918
        %v4107 = vpop.f32.mrf.mxu0
        %v4108 = vadd.f32 %v3872, %v4107
        %v4109 = vpop.f32.mrf.mxu0
        %4110 = vmatprep.mubr.f32.mxu0 0.0
        %4111 = vmatmul.mubr.f32.gmra.mxu0 %v3921
        %v4112 = vpop.f32.mrf.mxu0
        %v4113 = vadd.f32 %v3872, %v4112
        %v4114 = vpop.f32.mrf.mxu0
        %4115 = vmatprep.mubr.f32.mxu0 0.0
        %4116 = vmatmul.mubr.f32.gmra.mxu0 %v3924
        %v4117 = vpop.f32.mrf.mxu0
        %v4118 = vadd.f32 %v3872, %v4117
        %v4119 = vpop.f32.mrf.mxu0
        %4120 = vmatprep.mubr.f32.mxu0 0.0
        %4121 = vmatmul.mubr.f32.gmra.mxu0 %v3927
        %v4122 = vpop.f32.mrf.mxu0
        %v4123 = vadd.f32 %v3872, %v4122
        %v4124 = vpop.f32.mrf.mxu0
        %4125 = vmatprep.mubr.f32.mxu0 0.0
        %4126 = vmatmul.mubr.f32.gmra.mxu0 %v3930
        %v4127 = vpop.f32.mrf.mxu0
        %v4128 = vadd.f32 %v3872, %v4127
        %v4129 = vpop.f32.mrf.mxu0
        %4130 = vmatprep.mubr.f32.mxu0 0.0
        %4131 = vmatmul.mubr.f32.gmra.mxu0 %v3933
        %v4132 = vpop.f32.mrf.mxu0
        %v4133 = vadd.f32 %v3872, %v4132
        %v4134 = vpop.f32.mrf.mxu0
        %4135 = vmatprep.mubr.f32.mxu0 0.0
        %4136 = vmatmul.mubr.f32.gmra.mxu0 %v3936
        %v4137 = vpop.f32.mrf.mxu0
        %v4138 = vadd.f32 %v3872, %v4137
        %v4139 = vpop.f32.mrf.mxu0
        %4140 = vmatprep.mubr.f32.mxu0 0.0
        %4141 = vmatmul.mubr.f32.gmra.mxu0 %v3939
        %v4142 = vpop.f32.mrf.mxu0
        %v4143 = vadd.f32 %v3872, %v4142
        %v4144 = vpop.f32.mrf.mxu0
        %4145 = vmatprep.mubr.f32.mxu0 0.0
        %4146 = vmatmul.mubr.f32.gmra.mxu0 %v3942
        %v4147 = vpop.f32.mrf.mxu0
        %v4148 = vadd.f32 %v3872, %v4147
        %v4149 = vpop.f32.mrf.mxu0
        %4150 = vmatprep.mubr.f32.mxu0 0.0
        %4151 = vmatmul.mubr.f32.gmra.mxu0 %v3945
        %v4152 = vpop.f32.mrf.mxu0
        %v4153 = vadd.f32 %v3872, %v4152
        %v4154 = vpop.f32.mrf.mxu0
        %4155 = vmatprep.mubr.f32.mxu0 0.0
        %4156 = vmatmul.mubr.f32.gmra.mxu0 %v3948
        %v4157 = vpop.f32.mrf.mxu0
        %v4158 = vadd.f32 %v3872, %v4157
        %v4159 = vpop.f32.mrf.mxu0
        %4160 = vmatprep.mubr.f32.mxu0 0.0
        %4161 = vmatmul.mubr.f32.gmra.mxu0 %v3951
        %v4162 = vpop.f32.mrf.mxu0
        %v4163 = vadd.f32 %v3872, %v4162
        %v4164 = vpop.f32.mrf.mxu0
        %4165 = vmatprep.mubr.f32.mxu0 0.0
        %4166 = vmatmul.mubr.f32.gmra.mxu0 %v3954
        %v4167 = vpop.f32.mrf.mxu0
        %v4168 = vadd.f32 %v3872, %v4167
        %v4169 = vpop.f32.mrf.mxu0
        %4170 = vmatprep.mubr.f32.mxu0 0.0
        %4171 = vmatmul.mubr.f32.gmra.mxu0 %v3957
        %v4172 = vpop.f32.mrf.mxu0
        %v4173 = vadd.f32 %v3872, %v4172
        %v4174 = vpop.f32.mrf.mxu0
        %4175 = vmatprep.mubr.f32.mxu0 0.0
        %4176 = vmatmul.mubr.f32.gmra.mxu0 %v3960
        %v4177 = vpop.f32.mrf.mxu0
        %v4178 = vadd.f32 %v3872, %v4177
        %v4179 = vpop.f32.mrf.mxu0
        %4180 = vmatprep.mubr.f32.mxu0 0.0
        %4181 = vmatmul.mubr.f32.gmra.mxu0 %v3963
        %v4182 = vpop.f32.mrf.mxu0
        %v4183 = vadd.f32 %v3872, %v4182
        %v4184 = vpop.f32.mrf.mxu0
        %4185 = vmatprep.mubr.f32.mxu0 0.0
        %4186 = vmatmul.mubr.f32.gmra.mxu0 %v3966
        %v4187 = vpop.f32.mrf.mxu0
        %v4188 = vadd.f32 %v3872, %v4187
        %v4189 = vpop.f32.mrf.mxu0
        %4190 = vmatprep.mubr.f32.mxu0 0.0
        %4191 = vmatmul.mubr.f32.gmra.mxu0 %v3969
        %v4192 = vpop.f32.mrf.mxu0
        %v4193 = vadd.f32 %v3872, %v4192
        %v4194 = vpop.f32.mrf.mxu0
        %4195 = vdwg.mxu0
        %vm4196 = vcmask 146432
        %v4197 = vsel %vm4196, %v4038, 0.0
        %v4198 = vsel %vm4196, %v4043, 0.0
        %v4199 = vadd.f32 %v4197, %v4198
        %v4200 = vsel %vm4196, %v4048, 0.0
        %v4201 = vadd.f32 %v4199, %v4200
        %v4202 = vsel %vm4196, %v4053, 0.0
        %v4203 = vadd.f32 %v4201, %v4202
        %v4204 = vsel %vm4196, %v4058, 0.0
        %v4205 = vadd.f32 %v4203, %v4204
        %v4206 = vsel %vm4196, %v4063, 0.0
        %v4207 = vadd.f32 %v4205, %v4206
        %v4208 = vsel %vm4196, %v4068, 0.0
        %v4209 = vadd.f32 %v4207, %v4208
        %v4210 = vsel %vm4196, %v4073, 0.0
        %v4211 = vadd.f32 %v4209, %v4210
        %v4212 = vsel %vm4196, %v4078, 0.0
        %v4213 = vadd.f32 %v4211, %v4212
        %v4214 = vsel %vm4196, %v4083, 0.0
        %v4215 = vadd.f32 %v4213, %v4214
        %v4216 = vsel %vm4196, %v4088, 0.0
        %v4217 = vadd.f32 %v4215, %v4216
        %v4218 = vsel %vm4196, %v4093, 0.0
        %v4219 = vadd.f32 %v4217, %v4218
        %v4220 = vsel %vm4196, %v4098, 0.0
        %v4221 = vadd.f32 %v4219, %v4220
        %v4222 = vsel %vm4196, %v4103, 0.0
        %v4223 = vadd.f32 %v4221, %v4222
        %v4224 = vsel %vm4196, %v4108, 0.0
        %v4225 = vadd.f32 %v4223, %v4224
        %v4226 = vsel %vm4196, %v4113, 0.0
        %v4227 = vadd.f32 %v4225, %v4226
        %v4228 = vsel %vm4196, %v4118, 0.0
        %v4229 = vadd.f32 %v4227, %v4228
        %v4230 = vsel %vm4196, %v4123, 0.0
        %v4231 = vadd.f32 %v4229, %v4230
        %v4232 = vsel %vm4196, %v4128, 0.0
        %v4233 = vadd.f32 %v4231, %v4232
        %v4234 = vsel %vm4196, %v4133, 0.0
        %v4235 = vadd.f32 %v4233, %v4234
        %v4236 = vsel %vm4196, %v4138, 0.0
        %v4237 = vadd.f32 %v4235, %v4236
        %v4238 = vsel %vm4196, %v4143, 0.0
        %v4239 = vadd.f32 %v4237, %v4238
        %v4240 = vsel %vm4196, %v4148, 0.0
        %v4241 = vadd.f32 %v4239, %v4240
        %v4242 = vsel %vm4196, %v4153, 0.0
        %v4243 = vadd.f32 %v4241, %v4242
        %v4244 = vsel %vm4196, %v4158, 0.0
        %v4245 = vadd.f32 %v4243, %v4244
        %v4246 = vsel %vm4196, %v4163, 0.0
        %v4247 = vadd.f32 %v4245, %v4246
        %v4248 = vsel %vm4196, %v4168, 0.0
        %v4249 = vadd.f32 %v4247, %v4248
        %v4250 = vsel %vm4196, %v4173, 0.0
        %v4251 = vadd.f32 %v4249, %v4250
        %v4252 = vsel %vm4196, %v4178, 0.0
        %v4253 = vadd.f32 %v4251, %v4252
        %v4254 = vsel %vm4196, %v4183, 0.0
        %v4255 = vadd.f32 %v4253, %v4254
        %v4256 = vsel %vm4196, %v4188, 0.0
        %v4257 = vadd.f32 %v4255, %v4256
        %v4258 = vsel %vm4196, %v4193, 0.0
        %v4259 = vadd.f32 %v4257, %v4258
        %v4260 = vrot.slane %v4259, 4
        %v4261 = vadd.f32 %v4259, %v4260
        %v4262 = vrot.slane %v4261, 2
        %v4263 = vadd.f32 %v4261, %v4262
        %v4264 = vrot.slane %v4263, 1
        %v4265 = vadd.f32 %v4263, %v4264
        %v4266 = vld [vmem:[%s9] sm:$0xff]
        %v4267 = vld [vmem:[%s9 + $0x8] sm:$0xff]
        %v4268 = vld [vmem:[%s9 + $0x10] sm:$0x3]
        %v4270 = vsel %vm4196, %v4265, 0
        %vm4272 = vcmask 1041408
        %v4274 = vsel %vm4272, %v4268, 0
        %4276 = vmatprep.subr.mxu0 0.0
        %4277 = vmatpush1.msra.mxu0 0.0
        %4278 = vmatprep.subr.mxu0 0.0
        %4279 = vmatpush1.msra.mxu0 0.0
        %4280 = vmatprep.subr.mxu0 0.0
        %4281 = vmatpush1.msra.mxu0 0.0
        %4282 = vmatprep.subr.mxu0 0.0
        %4283 = vmatpush1.msra.mxu0 0.0
        %4284 = vmatprep.subr.mxu0 0.0
        %4285 = vmatpush1.msra.mxu0 0.0
        %4286 = vmatprep.subr.mxu0 0.0
        %4287 = vmatpush1.msra.mxu0 0.0
        %4288 = vmatprep.subr.mxu0 0.0
        %4289 = vmatpush1.msra.mxu0 0.0
        %4290 = vmatprep.subr.mxu0 0.0
        %4291 = vmatpush1.msra.mxu0 0.0
        %4292 = vmatprep.subr.mxu0 0.0
        %4293 = vmatpush1.msra.mxu0 0.0
        %4294 = vmatprep.subr.mxu0 0.0
        %4295 = vmatpush1.msra.mxu0 0.0
        %4296 = vmatprep.subr.mxu0 0.0
        %4297 = vmatpush1.msra.mxu0 0.0
        %4298 = vmatprep.subr.mxu0 0.0
        %4299 = vmatpush1.msra.mxu0 0.0
        %4300 = vmatprep.subr.mxu0 0.0
        %4301 = vmatpush1.msra.mxu0 0.0
        %4302 = vmatprep.subr.mxu0 0.0
        %4303 = vmatpush1.msra.mxu0 %v4274
        %4304 = vmatprep.subr.mxu0 0.0
        %4305 = vmatpush1.msra.mxu0 %v4267
        %4306 = vmatprep.subr.mxu0 0.0
        %4307 = vmatpush1.msra.mxu0 %v4266
        %4308 = vmatprep.subr.mxu0 0.0
        %4309 = vmatpush2.msra.mxu0 0.0
        %4310 = vmatprep.subr.mxu0 0.0
        %4311 = vmatpush2.msra.mxu0 0.0
        %4312 = vmatprep.subr.mxu0 0.0
        %4313 = vmatpush2.msra.mxu0 0.0
        %4314 = vmatprep.subr.mxu0 0.0
        %4315 = vmatpush2.msra.mxu0 0.0
        %4316 = vmatprep.subr.mxu0 0.0
        %4317 = vmatpush2.msra.mxu0 0.0
        %4318 = vmatprep.subr.mxu0 0.0
        %4319 = vmatpush2.msra.mxu0 0.0
        %4320 = vmatprep.subr.mxu0 0.0
        %4321 = vmatpush2.msra.mxu0 0.0
        %4322 = vmatprep.subr.mxu0 0.0
        %4323 = vmatpush2.msra.mxu0 0.0
        %4324 = vmatprep.subr.mxu0 0.0
        %4325 = vmatpush2.msra.mxu0 0.0
        %4326 = vmatprep.subr.mxu0 0.0
        %4327 = vmatpush2.msra.mxu0 0.0
        %4328 = vmatprep.subr.mxu0 0.0
        %4329 = vmatpush2.msra.mxu0 0.0
        %4330 = vmatprep.subr.mxu0 0.0
        %4331 = vmatpush2.msra.mxu0 0.0
        %4332 = vmatprep.subr.mxu0 0.0
        %4333 = vmatpush2.msra.mxu0 0.0
        %4334 = vmatprep.subr.mxu0 0.0
        %4335 = vmatpush2.msra.mxu0 0.0
        %4336 = vmatprep.subr.mxu0 0.0
        %4337 = vmatpush2.msra.mxu0 0.0
        %4338 = vmatprep.subr.mxu0 0.0
        %4339 = vmatpush2.msra.mxu0 0.0
        %4340 = vmatprep.mubr.f32.mxu0 0.0
        %4341 = vmatmul.mubr.f32.gmra.mxu0 %v4270
        %v4342 = vpop.f32.mrf.mxu0
        %v4343 = vadd.f32 0.0, %v4342
        %v4344 = vpop.f32.mrf.mxu0
        %4345 = vdwg.mxu0
        %v4346 = vrcp.pop 2304.0
        %v4347 = vmul.f32 %v4343, %v4346
        %4349 = vrot.lane.b32.xlu0 %v4347, 2
        %v4350 = vpop.permute.xlu0 %4349
        %4352 = vrot.lane.b32.xlu0 %v4347, 4
        %v4353 = vpop.permute.xlu0 %4352
        %4355 = vrot.lane.b32.xlu0 %v4347, 6
        %v4356 = vpop.permute.xlu0 %4355
        %4358 = vrot.lane.b32.xlu0 %v4347, 8
        %v4359 = vpop.permute.xlu0 %4358
        %4361 = vrot.lane.b32.xlu0 %v4347, 10
        %v4362 = vpop.permute.xlu0 %4361
        %4364 = vrot.lane.b32.xlu0 %v4347, 12
        %v4365 = vpop.permute.xlu0 %4364
        %4367 = vrot.lane.b32.xlu0 %v4347, 14
        %v4368 = vpop.permute.xlu0 %4367
        %4370 = vrot.lane.b32.xlu0 %v4347, 16
        %v4371 = vpop.permute.xlu0 %4370
        %vm4373 = vcmask 15360
        %v4374 = vsel %vm4373, %v4347, %v4350
        %vm4375 = vcmask 31744
        %v4376 = vsel %vm4375, %v4374, %v4353
        %vm4377 = vcmask 48128
        %v4378 = vsel %vm4377, %v4376, %v4356
        %v4379 = vsel %vm3803, %v4378, %v4359
        %vm4380 = vcmask 80896
        %v4381 = vsel %vm4380, %v4379, %v4362
        %vm4382 = vcmask 97280
        %v4383 = vsel %vm4382, %v4381, %v4365
        %vm4384 = vcmask 113664
        %v4385 = vsel %vm4384, %v4383, %v4368
        %v4386 = vsel %vm1455, %v4385, %v4371
        %v4387 = vlaneseq
        %v4388 = vshrl.u32 %v4387, 7
        %v4389 = vsub.s32 0, %v4388
        %v4390 = vrot.slane %v4386, %v4389
        %v4391 = vsub.f32 %v4038, %v4390
        %v4392 = vsub.f32 %v4043, %v4390
        %v4393 = vsub.f32 %v4048, %v4390
        %v4394 = vsub.f32 %v4053, %v4390
        %v4395 = vsub.f32 %v4058, %v4390
        %v4396 = vsub.f32 %v4063, %v4390
        %v4397 = vsub.f32 %v4068, %v4390
        %v4398 = vsub.f32 %v4073, %v4390
        %v4399 = vsub.f32 %v4078, %v4390
        %v4400 = vsub.f32 %v4083, %v4390
        %v4401 = vsub.f32 %v4088, %v4390
        %v4402 = vsub.f32 %v4093, %v4390
        %v4403 = vsub.f32 %v4098, %v4390
        %v4404 = vsub.f32 %v4103, %v4390
        %v4405 = vsub.f32 %v4108, %v4390
        %v4406 = vsub.f32 %v4113, %v4390
        %v4407 = vsub.f32 %v4118, %v4390
        %v4408 = vsub.f32 %v4123, %v4390
        %v4409 = vsub.f32 %v4128, %v4390
        %v4410 = vsub.f32 %v4133, %v4390
        %v4411 = vsub.f32 %v4138, %v4390
        %v4412 = vsub.f32 %v4143, %v4390
        %v4413 = vsub.f32 %v4148, %v4390
        %v4414 = vsub.f32 %v4153, %v4390
        %v4415 = vsub.f32 %v4158, %v4390
        %v4416 = vsub.f32 %v4163, %v4390
        %v4417 = vsub.f32 %v4168, %v4390
        %v4418 = vsub.f32 %v4173, %v4390
        %v4419 = vsub.f32 %v4178, %v4390
        %v4420 = vsub.f32 %v4183, %v4390
        %v4421 = vsub.f32 %v4188, %v4390
        %v4422 = vsub.f32 %v4193, %v4390
        %v4423 = vmul.f32 %v4391, %v4391
        %v4424 = vmul.f32 %v4392, %v4392
        %v4425 = vmul.f32 %v4393, %v4393
        %v4426 = vmul.f32 %v4394, %v4394
        %v4427 = vmul.f32 %v4395, %v4395
        %v4428 = vmul.f32 %v4396, %v4396
        %v4429 = vmul.f32 %v4397, %v4397
        %v4430 = vmul.f32 %v4398, %v4398
        %v4431 = vmul.f32 %v4399, %v4399
        %v4432 = vmul.f32 %v4400, %v4400
        %v4433 = vmul.f32 %v4401, %v4401
        %v4434 = vmul.f32 %v4402, %v4402
        %v4435 = vmul.f32 %v4403, %v4403
        %v4436 = vmul.f32 %v4404, %v4404
        %v4437 = vmul.f32 %v4405, %v4405
        %v4438 = vmul.f32 %v4406, %v4406
        %v4439 = vmul.f32 %v4407, %v4407
        %v4440 = vmul.f32 %v4408, %v4408
        %v4441 = vmul.f32 %v4409, %v4409
        %v4442 = vmul.f32 %v4410, %v4410
        %v4443 = vmul.f32 %v4411, %v4411
        %v4444 = vmul.f32 %v4412, %v4412
        %v4445 = vmul.f32 %v4413, %v4413
        %v4446 = vmul.f32 %v4414, %v4414
        %v4447 = vmul.f32 %v4415, %v4415
        %v4448 = vmul.f32 %v4416, %v4416
        %v4449 = vmul.f32 %v4417, %v4417
        %v4450 = vmul.f32 %v4418, %v4418
        %v4451 = vmul.f32 %v4419, %v4419
        %v4452 = vmul.f32 %v4420, %v4420
        %v4453 = vmul.f32 %v4421, %v4421
        %v4454 = vmul.f32 %v4422, %v4422
        %v4455 = vsel %vm4196, %v4423, 0.0
        %v4456 = vsel %vm4196, %v4424, 0.0
        %v4457 = vadd.f32 %v4455, %v4456
        %v4458 = vsel %vm4196, %v4425, 0.0
        %v4459 = vadd.f32 %v4457, %v4458
        %v4460 = vsel %vm4196, %v4426, 0.0
        %v4461 = vadd.f32 %v4459, %v4460
        %v4462 = vsel %vm4196, %v4427, 0.0
        %v4463 = vadd.f32 %v4461, %v4462
        %v4464 = vsel %vm4196, %v4428, 0.0
        %v4465 = vadd.f32 %v4463, %v4464
        %v4466 = vsel %vm4196, %v4429, 0.0
        %v4467 = vadd.f32 %v4465, %v4466
        %v4468 = vsel %vm4196, %v4430, 0.0
        %v4469 = vadd.f32 %v4467, %v4468
        %v4470 = vsel %vm4196, %v4431, 0.0
        %v4471 = vadd.f32 %v4469, %v4470
        %v4472 = vsel %vm4196, %v4432, 0.0
        %v4473 = vadd.f32 %v4471, %v4472
        %v4474 = vsel %vm4196, %v4433, 0.0
        %v4475 = vadd.f32 %v4473, %v4474
        %v4476 = vsel %vm4196, %v4434, 0.0
        %v4477 = vadd.f32 %v4475, %v4476
        %v4478 = vsel %vm4196, %v4435, 0.0
        %v4479 = vadd.f32 %v4477, %v4478
        %v4480 = vsel %vm4196, %v4436, 0.0
        %v4481 = vadd.f32 %v4479, %v4480
        %v4482 = vsel %vm4196, %v4437, 0.0
        %v4483 = vadd.f32 %v4481, %v4482
        %v4484 = vsel %vm4196, %v4438, 0.0
        %v4485 = vadd.f32 %v4483, %v4484
        %v4486 = vsel %vm4196, %v4439, 0.0
        %v4487 = vadd.f32 %v4485, %v4486
        %v4488 = vsel %vm4196, %v4440, 0.0
        %v4489 = vadd.f32 %v4487, %v4488
        %v4490 = vsel %vm4196, %v4441, 0.0
        %v4491 = vadd.f32 %v4489, %v4490
        %v4492 = vsel %vm4196, %v4442, 0.0
        %v4493 = vadd.f32 %v4491, %v4492
        %v4494 = vsel %vm4196, %v4443, 0.0
        %v4495 = vadd.f32 %v4493, %v4494
        %v4496 = vsel %vm4196, %v4444, 0.0
        %v4497 = vadd.f32 %v4495, %v4496
        %v4498 = vsel %vm4196, %v4445, 0.0
        %v4499 = vadd.f32 %v4497, %v4498
        %v4500 = vsel %vm4196, %v4446, 0.0
        %v4501 = vadd.f32 %v4499, %v4500
        %v4502 = vsel %vm4196, %v4447, 0.0
        %v4503 = vadd.f32 %v4501, %v4502
        %v4504 = vsel %vm4196, %v4448, 0.0
        %v4505 = vadd.f32 %v4503, %v4504
        %v4506 = vsel %vm4196, %v4449, 0.0
        %v4507 = vadd.f32 %v4505, %v4506
        %v4508 = vsel %vm4196, %v4450, 0.0
        %v4509 = vadd.f32 %v4507, %v4508
        %v4510 = vsel %vm4196, %v4451, 0.0
        %v4511 = vadd.f32 %v4509, %v4510
        %v4512 = vsel %vm4196, %v4452, 0.0
        %v4513 = vadd.f32 %v4511, %v4512
        %v4514 = vsel %vm4196, %v4453, 0.0
        %v4515 = vadd.f32 %v4513, %v4514
        %v4516 = vsel %vm4196, %v4454, 0.0
        %v4517 = vadd.f32 %v4515, %v4516
        %v4518 = vrot.slane %v4517, 4
        %v4519 = vadd.f32 %v4517, %v4518
        %v4520 = vrot.slane %v4519, 2
        %v4521 = vadd.f32 %v4519, %v4520
        %v4522 = vrot.slane %v4521, 1
        %v4523 = vadd.f32 %v4521, %v4522
        %v4525 = vsel %vm4196, %v4523, 0
        %4527 = vmatprep.subr.mxu0 0.0
        %4528 = vmatpush1.msra.mxu0 0.0
        %4529 = vmatprep.subr.mxu0 0.0
        %4530 = vmatpush1.msra.mxu0 0.0
        %4531 = vmatprep.subr.mxu0 0.0
        %4532 = vmatpush1.msra.mxu0 0.0
        %4533 = vmatprep.subr.mxu0 0.0
        %4534 = vmatpush1.msra.mxu0 0.0
        %4535 = vmatprep.subr.mxu0 0.0
        %4536 = vmatpush1.msra.mxu0 0.0
        %4537 = vmatprep.subr.mxu0 0.0
        %4538 = vmatpush1.msra.mxu0 0.0
        %4539 = vmatprep.subr.mxu0 0.0
        %4540 = vmatpush1.msra.mxu0 0.0
        %4541 = vmatprep.subr.mxu0 0.0
        %4542 = vmatpush1.msra.mxu0 0.0
        %4543 = vmatprep.subr.mxu0 0.0
        %4544 = vmatpush1.msra.mxu0 0.0
        %4545 = vmatprep.subr.mxu0 0.0
        %4546 = vmatpush1.msra.mxu0 0.0
        %4547 = vmatprep.subr.mxu0 0.0
        %4548 = vmatpush1.msra.mxu0 0.0
        %4549 = vmatprep.subr.mxu0 0.0
        %4550 = vmatpush1.msra.mxu0 0.0
        %4551 = vmatprep.subr.mxu0 0.0
        %4552 = vmatpush1.msra.mxu0 0.0
        %4553 = vmatprep.subr.mxu0 0.0
        %4554 = vmatpush1.msra.mxu0 %v4274
        %4555 = vmatprep.subr.mxu0 0.0
        %4556 = vmatpush1.msra.mxu0 %v4267
        %4557 = vmatprep.subr.mxu0 0.0
        %4558 = vmatpush1.msra.mxu0 %v4266
        %4559 = vmatprep.subr.mxu0 0.0
        %4560 = vmatpush2.msra.mxu0 0.0
        %4561 = vmatprep.subr.mxu0 0.0
        %4562 = vmatpush2.msra.mxu0 0.0
        %4563 = vmatprep.subr.mxu0 0.0
        %4564 = vmatpush2.msra.mxu0 0.0
        %4565 = vmatprep.subr.mxu0 0.0
        %4566 = vmatpush2.msra.mxu0 0.0
        %4567 = vmatprep.subr.mxu0 0.0
        %4568 = vmatpush2.msra.mxu0 0.0
        %4569 = vmatprep.subr.mxu0 0.0
        %4570 = vmatpush2.msra.mxu0 0.0
        %4571 = vmatprep.subr.mxu0 0.0
        %4572 = vmatpush2.msra.mxu0 0.0
        %4573 = vmatprep.subr.mxu0 0.0
        %4574 = vmatpush2.msra.mxu0 0.0
        %4575 = vmatprep.subr.mxu0 0.0
        %4576 = vmatpush2.msra.mxu0 0.0
        %4577 = vmatprep.subr.mxu0 0.0
        %4578 = vmatpush2.msra.mxu0 0.0
        %4579 = vmatprep.subr.mxu0 0.0
        %4580 = vmatpush2.msra.mxu0 0.0
        %4581 = vmatprep.subr.mxu0 0.0
        %4582 = vmatpush2.msra.mxu0 0.0
        %4583 = vmatprep.subr.mxu0 0.0
        %4584 = vmatpush2.msra.mxu0 0.0
        %4585 = vmatprep.subr.mxu0 0.0
        %4586 = vmatpush2.msra.mxu0 0.0
        %4587 = vmatprep.subr.mxu0 0.0
        %4588 = vmatpush2.msra.mxu0 0.0
        %4589 = vmatprep.subr.mxu0 0.0
        %4590 = vmatpush2.msra.mxu0 0.0
        %4591 = vmatprep.mubr.f32.mxu0 0.0
        %4592 = vmatmul.mubr.f32.gmra.mxu0 %v4525
        %v4593 = vpop.f32.mrf.mxu0
        %v4594 = vadd.f32 0.0, %v4593
        %v4595 = vpop.f32.mrf.mxu0
        %4596 = vdwg.mxu0
        %v4597 = vmul.f32 %v4594, %v4346
        %v4598 = vadd.f32 %v4597, 1e-05
        %v4599 = vrsqrt.pop %v4598
        %4601 = vrot.lane.b32.xlu0 %v4599, 2
        %v4602 = vpop.permute.xlu0 %4601
        %4604 = vrot.lane.b32.xlu0 %v4599, 4
        %v4605 = vpop.permute.xlu0 %4604
        %4607 = vrot.lane.b32.xlu0 %v4599, 6
        %v4608 = vpop.permute.xlu0 %4607
        %4610 = vrot.lane.b32.xlu0 %v4599, 8
        %v4611 = vpop.permute.xlu0 %4610
        %4613 = vrot.lane.b32.xlu0 %v4599, 10
        %v4614 = vpop.permute.xlu0 %4613
        %4616 = vrot.lane.b32.xlu0 %v4599, 12
        %v4617 = vpop.permute.xlu0 %4616
        %4619 = vrot.lane.b32.xlu0 %v4599, 14
        %v4620 = vpop.permute.xlu0 %4619
        %4622 = vrot.lane.b32.xlu0 %v4599, 16
        %v4623 = vpop.permute.xlu0 %4622
        %v4625 = vsel %vm4373, %v4599, %v4602
        %v4626 = vsel %vm4375, %v4625, %v4605
        %v4627 = vsel %vm4377, %v4626, %v4608
        %v4628 = vsel %vm3803, %v4627, %v4611
        %v4629 = vsel %vm4380, %v4628, %v4614
        %v4630 = vsel %vm4382, %v4629, %v4617
        %v4631 = vsel %vm4384, %v4630, %v4620
        %v4632 = vsel %vm1455, %v4631, %v4623
        %v4633 = vlaneseq
        %v4634 = vshrl.u32 %v4633, 7
        %v4635 = vsub.s32 0, %v4634
        %v4636 = vrot.slane %v4632, %v4635
        %v4637 = vmul.f32 %v4391, %v4636
        %v4638 = vmul.f32 %v4392, %v4636
        %v4639 = vmul.f32 %v4393, %v4636
        %v4640 = vmul.f32 %v4394, %v4636
        %v4641 = vmul.f32 %v4395, %v4636
        %v4642 = vmul.f32 %v4396, %v4636
        %v4643 = vmul.f32 %v4397, %v4636
        %v4644 = vmul.f32 %v4398, %v4636
        %v4645 = vmul.f32 %v4399, %v4636
        %v4646 = vmul.f32 %v4400, %v4636
        %v4647 = vmul.f32 %v4401, %v4636
        %v4648 = vmul.f32 %v4402, %v4636
        %v4649 = vmul.f32 %v4403, %v4636
        %v4650 = vmul.f32 %v4404, %v4636
        %v4651 = vmul.f32 %v4405, %v4636
        %v4652 = vmul.f32 %v4406, %v4636
        %v4653 = vmul.f32 %v4407, %v4636
        %v4654 = vmul.f32 %v4408, %v4636
        %v4655 = vmul.f32 %v4409, %v4636
        %v4656 = vmul.f32 %v4410, %v4636
        %v4657 = vmul.f32 %v4411, %v4636
        %v4658 = vmul.f32 %v4412, %v4636
        %v4659 = vmul.f32 %v4413, %v4636
        %v4660 = vmul.f32 %v4414, %v4636
        %v4661 = vmul.f32 %v4415, %v4636
        %v4662 = vmul.f32 %v4416, %v4636
        %v4663 = vmul.f32 %v4417, %v4636
        %v4664 = vmul.f32 %v4418, %v4636
        %v4665 = vmul.f32 %v4419, %v4636
        %v4666 = vmul.f32 %v4420, %v4636
        %v4667 = vmul.f32 %v4421, %v4636
        %v4668 = vmul.f32 %v4422, %v4636
        %v4669 = vld [vmem:[%s7] sm:$0x1]
        %v4671 = vlaneseq
        %v4672 = vshrl.u32 %v4671, 7
        %v4673 = vsub.s32 0, %v4672
        %v4674 = vrot.slane %v4669, %v4673
        %v4676 = vmul.f32 %v4637, %v4674
        %v4677 = vmul.f32 %v4638, %v4674
        %v4678 = vmul.f32 %v4639, %v4674
        %v4679 = vmul.f32 %v4640, %v4674
        %v4680 = vmul.f32 %v4641, %v4674
        %v4681 = vmul.f32 %v4642, %v4674
        %v4682 = vmul.f32 %v4643, %v4674
        %v4683 = vmul.f32 %v4644, %v4674
        %v4684 = vmul.f32 %v4645, %v4674
        %v4685 = vmul.f32 %v4646, %v4674
        %v4686 = vmul.f32 %v4647, %v4674
        %v4687 = vmul.f32 %v4648, %v4674
        %v4688 = vmul.f32 %v4649, %v4674
        %v4689 = vmul.f32 %v4650, %v4674
        %v4690 = vmul.f32 %v4651, %v4674
        %v4691 = vmul.f32 %v4652, %v4674
        %v4692 = vmul.f32 %v4653, %v4674
        %v4693 = vmul.f32 %v4654, %v4674
        %v4694 = vmul.f32 %v4655, %v4674
        %v4695 = vmul.f32 %v4656, %v4674
        %v4696 = vmul.f32 %v4657, %v4674
        %v4697 = vmul.f32 %v4658, %v4674
        %v4698 = vmul.f32 %v4659, %v4674
        %v4699 = vmul.f32 %v4660, %v4674
        %v4700 = vmul.f32 %v4661, %v4674
        %v4701 = vmul.f32 %v4662, %v4674
        %v4702 = vmul.f32 %v4663, %v4674
        %v4703 = vmul.f32 %v4664, %v4674
        %v4704 = vmul.f32 %v4665, %v4674
        %v4705 = vmul.f32 %v4666, %v4674
        %v4706 = vmul.f32 %v4667, %v4674
        %v4707 = vmul.f32 %v4668, %v4674
        %v4708 = vld [vmem:[%s8] sm:$0x1]
        %v4710 = vlaneseq
        %v4711 = vshrl.u32 %v4710, 7
        %v4712 = vsub.s32 0, %v4711
        %v4713 = vrot.slane %v4708, %v4712
        %v4715 = vadd.f32 %v4676, %v4713
        %v4716 = vadd.f32 %v4677, %v4713
        %v4717 = vadd.f32 %v4678, %v4713
        %v4718 = vadd.f32 %v4679, %v4713
        %v4719 = vadd.f32 %v4680, %v4713
        %v4720 = vadd.f32 %v4681, %v4713
        %v4721 = vadd.f32 %v4682, %v4713
        %v4722 = vadd.f32 %v4683, %v4713
        %v4723 = vadd.f32 %v4684, %v4713
        %v4724 = vadd.f32 %v4685, %v4713
        %v4725 = vadd.f32 %v4686, %v4713
        %v4726 = vadd.f32 %v4687, %v4713
        %v4727 = vadd.f32 %v4688, %v4713
        %v4728 = vadd.f32 %v4689, %v4713
        %v4729 = vadd.f32 %v4690, %v4713
        %v4730 = vadd.f32 %v4691, %v4713
        %v4731 = vadd.f32 %v4692, %v4713
        %v4732 = vadd.f32 %v4693, %v4713
        %v4733 = vadd.f32 %v4694, %v4713
        %v4734 = vadd.f32 %v4695, %v4713
        %v4735 = vadd.f32 %v4696, %v4713
        %v4736 = vadd.f32 %v4697, %v4713
        %v4737 = vadd.f32 %v4698, %v4713
        %v4738 = vadd.f32 %v4699, %v4713
        %v4739 = vadd.f32 %v4700, %v4713
        %v4740 = vadd.f32 %v4701, %v4713
        %v4741 = vadd.f32 %v4702, %v4713
        %v4742 = vadd.f32 %v4703, %v4713
        %v4743 = vadd.f32 %v4704, %v4713
        %v4744 = vadd.f32 %v4705, %v4713
        %v4745 = vadd.f32 %v4706, %v4713
        %v4746 = vadd.f32 %v4707, %v4713
        %v4747 = vld [vmem:[%s10] sm:$0xff]
        %v4748 = vld [vmem:[%s10 + $0x8] sm:$0xff]
        %v4749 = vld [vmem:[%s10 + $0x10] sm:$0xff]
        %v4750 = vld [vmem:[%s10 + $0x18] sm:$0xff]
        %v4751 = vld [vmem:[%s10 + $0x20] sm:$0xff]
        %v4752 = vld [vmem:[%s10 + $0x28] sm:$0xff]
        %v4753 = vld [vmem:[%s11] sm:$0x1]
        %4754 = vrot.lane.b32.xlu0 %v574, 16
        %v4755 = vpop.permute.xlu0 %4754
        %4756 = vrot.lane.b32.xlu0 %v575, 16
        %v4757 = vpop.permute.xlu0 %4756
        %4758 = vrot.lane.b32.xlu0 %v576, 16
        %v4759 = vpop.permute.xlu0 %4758
        %4760 = vrot.lane.b32.xlu0 %v577, 16
        %v4761 = vpop.permute.xlu0 %4760
        %4762 = vrot.lane.b32.xlu0 %v578, 16
        %v4763 = vpop.permute.xlu0 %4762
        %4764 = vrot.lane.b32.xlu0 %v579, 16
        %v4765 = vpop.permute.xlu0 %4764
        %4766 = vrot.lane.b32.xlu0 %v580, 16
        %v4767 = vpop.permute.xlu0 %4766
        %4768 = vrot.lane.b32.xlu0 %v581, 16
        %v4769 = vpop.permute.xlu0 %4768
        %4770 = vrot.lane.b32.xlu0 %v582, 16
        %v4771 = vpop.permute.xlu0 %4770
        %4772 = vrot.lane.b32.xlu0 %v583, 16
        %v4773 = vpop.permute.xlu0 %4772
        %4774 = vrot.lane.b32.xlu0 %v584, 16
        %v4775 = vpop.permute.xlu0 %4774
        %4776 = vrot.lane.b32.xlu0 %v585, 16
        %v4777 = vpop.permute.xlu0 %4776
        %4778 = vrot.lane.b32.xlu0 %v586, 16
        %v4779 = vpop.permute.xlu0 %4778
        %4780 = vrot.lane.b32.xlu0 %v587, 16
        %v4781 = vpop.permute.xlu0 %4780
        %4782 = vrot.lane.b32.xlu0 %v588, 16
        %v4783 = vpop.permute.xlu0 %4782
        %4784 = vrot.lane.b32.xlu0 %v589, 16
        %v4785 = vpop.permute.xlu0 %4784
        %4786 = vrot.lane.b32.xlu0 %v590, 16
        %v4787 = vpop.permute.xlu0 %4786
        %4788 = vrot.lane.b32.xlu0 %v591, 16
        %v4789 = vpop.permute.xlu0 %4788
        %4790 = vrot.lane.b32.xlu0 %v592, 16
        %v4791 = vpop.permute.xlu0 %4790
        %4792 = vrot.lane.b32.xlu0 %v593, 16
        %v4793 = vpop.permute.xlu0 %4792
        %4794 = vrot.lane.b32.xlu0 %v594, 16
        %v4795 = vpop.permute.xlu0 %4794
        %4796 = vrot.lane.b32.xlu0 %v595, 16
        %v4797 = vpop.permute.xlu0 %4796
        %4798 = vrot.lane.b32.xlu0 %v596, 16
        %v4799 = vpop.permute.xlu0 %4798
        %4800 = vrot.lane.b32.xlu0 %v597, 16
        %v4801 = vpop.permute.xlu0 %4800
        %4802 = vrot.lane.b32.xlu0 %v598, 16
        %v4803 = vpop.permute.xlu0 %4802
        %4804 = vrot.lane.b32.xlu0 %v599, 16
        %v4805 = vpop.permute.xlu0 %4804
        %4806 = vrot.lane.b32.xlu0 %v600, 16
        %v4807 = vpop.permute.xlu0 %4806
        %4808 = vrot.lane.b32.xlu0 %v601, 16
        %v4809 = vpop.permute.xlu0 %4808
        %4810 = vrot.lane.b32.xlu0 %v602, 16
        %v4811 = vpop.permute.xlu0 %4810
        %4812 = vrot.lane.b32.xlu0 %v603, 16
        %v4813 = vpop.permute.xlu0 %4812
        %4814 = vrot.lane.b32.xlu0 %v604, 16
        %v4815 = vpop.permute.xlu0 %4814
        %4816 = vrot.lane.b32.xlu0 %v605, 16
        %v4817 = vpop.permute.xlu0 %4816
        %4850 = vrot.lane.b32.xlu0 %v582, 32
        %v4851 = vpop.permute.xlu0 %4850
        %4852 = vrot.lane.b32.xlu0 %v583, 32
        %v4853 = vpop.permute.xlu0 %4852
        %4854 = vrot.lane.b32.xlu0 %v584, 32
        %v4855 = vpop.permute.xlu0 %4854
        %4856 = vrot.lane.b32.xlu0 %v585, 32
        %v4857 = vpop.permute.xlu0 %4856
        %4858 = vrot.lane.b32.xlu0 %v586, 32
        %v4859 = vpop.permute.xlu0 %4858
        %4860 = vrot.lane.b32.xlu0 %v587, 32
        %v4861 = vpop.permute.xlu0 %4860
        %4862 = vrot.lane.b32.xlu0 %v588, 32
        %v4863 = vpop.permute.xlu0 %4862
        %4864 = vrot.lane.b32.xlu0 %v589, 32
        %v4865 = vpop.permute.xlu0 %4864
        %4866 = vrot.lane.b32.xlu0 %v590, 32
        %v4867 = vpop.permute.xlu0 %4866
        %4868 = vrot.lane.b32.xlu0 %v591, 32
        %v4869 = vpop.permute.xlu0 %4868
        %4870 = vrot.lane.b32.xlu0 %v592, 32
        %v4871 = vpop.permute.xlu0 %4870
        %4872 = vrot.lane.b32.xlu0 %v593, 32
        %v4873 = vpop.permute.xlu0 %4872
        %4874 = vrot.lane.b32.xlu0 %v594, 32
        %v4875 = vpop.permute.xlu0 %4874
        %4876 = vrot.lane.b32.xlu0 %v595, 32
        %v4877 = vpop.permute.xlu0 %4876
        %4878 = vrot.lane.b32.xlu0 %v596, 32
        %v4879 = vpop.permute.xlu0 %4878
        %4880 = vrot.lane.b32.xlu0 %v597, 32
        %v4881 = vpop.permute.xlu0 %4880
        %4882 = vrot.lane.b32.xlu0 %v598, 32
        %v4883 = vpop.permute.xlu0 %4882
        %4884 = vrot.lane.b32.xlu0 %v599, 32
        %v4885 = vpop.permute.xlu0 %4884
        %4886 = vrot.lane.b32.xlu0 %v600, 32
        %v4887 = vpop.permute.xlu0 %4886
        %4888 = vrot.lane.b32.xlu0 %v601, 32
        %v4889 = vpop.permute.xlu0 %4888
        %4890 = vrot.lane.b32.xlu0 %v602, 32
        %v4891 = vpop.permute.xlu0 %4890
        %4892 = vrot.lane.b32.xlu0 %v603, 32
        %v4893 = vpop.permute.xlu0 %4892
        %4894 = vrot.lane.b32.xlu0 %v604, 32
        %v4895 = vpop.permute.xlu0 %4894
        %4896 = vrot.lane.b32.xlu0 %v605, 32
        %v4897 = vpop.permute.xlu0 %4896
        %4898 = vrot.lane.b32.xlu0 0.0, 32
        %v4899 = vpop.permute.xlu0 %4898
        %v4925 = vsel %vm1455, 0.0, %v4755
        %v4926 = vsel %vm1455, 0.0, %v4757
        %v4927 = vsel %vm1455, 0.0, %v4759
        %v4928 = vsel %vm1455, 0.0, %v4761
        %v4929 = vsel %vm1455, 0.0, %v4763
        %v4930 = vsel %vm1455, 0.0, %v4765
        %v4931 = vsel %vm1455, 0.0, %v4767
        %v4932 = vsel %vm1455, 0.0, %v4769
        %v4933 = vsel %vm1455, %v574, %v4771
        %v4934 = vsel %vm1455, %v575, %v4773
        %v4935 = vsel %vm1455, %v576, %v4775
        %v4936 = vsel %vm1455, %v577, %v4777
        %v4937 = vsel %vm1455, %v578, %v4779
        %v4938 = vsel %vm1455, %v579, %v4781
        %v4939 = vsel %vm1455, %v580, %v4783
        %v4940 = vsel %vm1455, %v581, %v4785
        %v4941 = vsel %vm1455, %v582, %v4787
        %v4942 = vsel %vm1455, %v583, %v4789
        %v4943 = vsel %vm1455, %v584, %v4791
        %v4944 = vsel %vm1455, %v585, %v4793
        %v4945 = vsel %vm1455, %v586, %v4795
        %v4946 = vsel %vm1455, %v587, %v4797
        %v4947 = vsel %vm1455, %v588, %v4799
        %v4948 = vsel %vm1455, %v589, %v4801
        %v4949 = vsel %vm1455, %v590, %v4803
        %v4950 = vsel %vm1455, %v591, %v4805
        %v4951 = vsel %vm1455, %v592, %v4807
        %v4952 = vsel %vm1455, %v593, %v4809
        %v4953 = vsel %vm1455, %v594, %v4811
        %v4954 = vsel %vm1455, %v595, %v4813
        %v4955 = vsel %vm1455, %v596, %v4815
        %v4956 = vsel %vm1455, %v597, %v4817
        %v4957 = vsel %vm1478, %v4925, %v4851
        %v4958 = vsel %vm1478, %v4926, %v4853
        %v4959 = vsel %vm1478, %v4927, %v4855
        %v4960 = vsel %vm1478, %v4928, %v4857
        %v4961 = vsel %vm1478, %v4929, %v4859
        %v4962 = vsel %vm1478, %v4930, %v4861
        %v4963 = vsel %vm1478, %v4931, %v4863
        %v4964 = vsel %vm1478, %v4932, %v4865
        %v4965 = vsel %vm1478, %v4933, %v4867
        %v4966 = vsel %vm1478, %v4934, %v4869
        %v4967 = vsel %vm1478, %v4935, %v4871
        %v4968 = vsel %vm1478, %v4936, %v4873
        %v4969 = vsel %vm1478, %v4937, %v4875
        %v4970 = vsel %vm1478, %v4938, %v4877
        %v4971 = vsel %vm1478, %v4939, %v4879
        %v4972 = vsel %vm1478, %v4940, %v4881
        %v4973 = vsel %vm1478, %v4941, %v4883
        %v4974 = vsel %vm1478, %v4942, %v4885
        %v4975 = vsel %vm1478, %v4943, %v4887
        %v4976 = vsel %vm1478, %v4944, %v4889
        %v4977 = vsel %vm1478, %v4945, %v4891
        %v4978 = vsel %vm1478, %v4946, %v4893
        %v4979 = vsel %vm1478, %v4947, %v4895
        %v4980 = vsel %vm1478, %v4948, %v4897
        %v4981 = vsel %vm1478, %v4949, %v4899
        %v4982 = vsel %vm1478, %v4950, %v4899
        %v4983 = vsel %vm1478, %v4951, %v4899
        %v4984 = vsel %vm1478, %v4952, %v4899
        %v4985 = vsel %vm1478, %v4953, %v4899
        %v4986 = vsel %vm1478, %v4954, %v4899
        %v4987 = vsel %vm1478, %v4955, %v4899
        %v4988 = vsel %vm1478, %v4956, %v4899
        %v4990 = vlaneseq
        %v4991 = vshrl.u32 %v4990, 7
        %v4992 = vsub.s32 0, %v4991
        %v4993 = vrot.slane %v4753, %v4992
        %v4996 = vsel %vm1501, %v4957, 0
        %v4999 = vsel %vm1501, %v4958, 0
        %v5002 = vsel %vm1501, %v4959, 0
        %v5005 = vsel %vm1501, %v4960, 0
        %v5008 = vsel %vm1501, %v4961, 0
        %v5011 = vsel %vm1501, %v4962, 0
        %v5014 = vsel %vm1501, %v4963, 0
        %v5017 = vsel %vm1501, %v4964, 0
        %v5020 = vsel %vm1501, %v4965, 0
        %v5023 = vsel %vm1501, %v4966, 0
        %v5026 = vsel %vm1501, %v4967, 0
        %v5029 = vsel %vm1501, %v4968, 0
        %v5032 = vsel %vm1501, %v4969, 0
        %v5035 = vsel %vm1501, %v4970, 0
        %v5038 = vsel %vm1501, %v4971, 0
        %v5041 = vsel %vm1501, %v4972, 0
        %v5044 = vsel %vm1501, %v4973, 0
        %v5047 = vsel %vm1501, %v4974, 0
        %v5050 = vsel %vm1501, %v4975, 0
        %v5053 = vsel %vm1501, %v4976, 0
        %v5056 = vsel %vm1501, %v4977, 0
        %v5059 = vsel %vm1501, %v4978, 0
        %v5062 = vsel %vm1501, %v4979, 0
        %v5065 = vsel %vm1501, %v4980, 0
        %v5068 = vsel %vm1501, %v4981, 0
        %v5071 = vsel %vm1501, %v4982, 0
        %v5074 = vsel %vm1501, %v4983, 0
        %v5077 = vsel %vm1501, %v4984, 0
        %v5080 = vsel %vm1501, %v4985, 0
        %v5083 = vsel %vm1501, %v4986, 0
        %v5086 = vsel %vm1501, %v4987, 0
        %v5089 = vsel %vm1501, %v4988, 0
        %5091 = vmatprep.subr.mxu0 0.0
        %5092 = vmatpush1.msra.mxu0 0.0
        %5093 = vmatprep.subr.mxu0 0.0
        %5094 = vmatpush1.msra.mxu0 0.0
        %5095 = vmatprep.subr.mxu0 0.0
        %5096 = vmatpush1.msra.mxu0 0.0
        %5097 = vmatprep.subr.mxu0 0.0
        %5098 = vmatpush1.msra.mxu0 0.0
        %5099 = vmatprep.subr.mxu0 0.0
        %5100 = vmatpush1.msra.mxu0 0.0
        %5101 = vmatprep.subr.mxu0 0.0
        %5102 = vmatpush1.msra.mxu0 0.0
        %5103 = vmatprep.subr.mxu0 0.0
        %5104 = vmatpush1.msra.mxu0 0.0
        %5105 = vmatprep.subr.mxu0 0.0
        %5106 = vmatpush1.msra.mxu0 0.0
        %5107 = vmatprep.subr.mxu0 0.0
        %5108 = vmatpush1.msra.mxu0 0.0
        %5109 = vmatprep.subr.mxu0 0.0
        %5110 = vmatpush1.msra.mxu0 0.0
        %5111 = vmatprep.subr.mxu0 0.0
        %5112 = vmatpush1.msra.mxu0 %v4752
        %5113 = vmatprep.subr.mxu0 0.0
        %5114 = vmatpush1.msra.mxu0 %v4751
        %5115 = vmatprep.subr.mxu0 0.0
        %5116 = vmatpush1.msra.mxu0 %v4750
        %5117 = vmatprep.subr.mxu0 0.0
        %5118 = vmatpush1.msra.mxu0 %v4749
        %5119 = vmatprep.subr.mxu0 0.0
        %5120 = vmatpush1.msra.mxu0 %v4748
        %5121 = vmatprep.subr.mxu0 0.0
        %5122 = vmatpush1.msra.mxu0 %v4747
        %5123 = vmatprep.subr.mxu0 0.0
        %5124 = vmatpush2.msra.mxu0 0.0
        %5125 = vmatprep.subr.mxu0 0.0
        %5126 = vmatpush2.msra.mxu0 0.0
        %5127 = vmatprep.subr.mxu0 0.0
        %5128 = vmatpush2.msra.mxu0 0.0
        %5129 = vmatprep.subr.mxu0 0.0
        %5130 = vmatpush2.msra.mxu0 0.0
        %5131 = vmatprep.subr.mxu0 0.0
        %5132 = vmatpush2.msra.mxu0 0.0
        %5133 = vmatprep.subr.mxu0 0.0
        %5134 = vmatpush2.msra.mxu0 0.0
        %5135 = vmatprep.subr.mxu0 0.0
        %5136 = vmatpush2.msra.mxu0 0.0
        %5137 = vmatprep.subr.mxu0 0.0
        %5138 = vmatpush2.msra.mxu0 0.0
        %5139 = vmatprep.subr.mxu0 0.0
        %5140 = vmatpush2.msra.mxu0 0.0
        %5141 = vmatprep.subr.mxu0 0.0
        %5142 = vmatpush2.msra.mxu0 0.0
        %5143 = vmatprep.subr.mxu0 0.0
        %5144 = vmatpush2.msra.mxu0 0.0
        %5145 = vmatprep.subr.mxu0 0.0
        %5146 = vmatpush2.msra.mxu0 0.0
        %5147 = vmatprep.subr.mxu0 0.0
        %5148 = vmatpush2.msra.mxu0 0.0
        %5149 = vmatprep.subr.mxu0 0.0
        %5150 = vmatpush2.msra.mxu0 0.0
        %5151 = vmatprep.subr.mxu0 0.0
        %5152 = vmatpush2.msra.mxu0 0.0
        %5153 = vmatprep.subr.mxu0 0.0
        %5154 = vmatpush2.msra.mxu0 0.0
        %5155 = vmatprep.mubr.f32.mxu0 0.0
        %5156 = vmatmul.mubr.f32.gmra.mxu0 %v4996
        %v5157 = vpop.f32.mrf.mxu0
        %v5158 = vadd.f32 %v4993, %v5157
        %v5159 = vpop.f32.mrf.mxu0
        %5160 = vmatprep.mubr.f32.mxu0 0.0
        %5161 = vmatmul.mubr.f32.gmra.mxu0 %v4999
        %v5162 = vpop.f32.mrf.mxu0
        %v5163 = vadd.f32 %v4993, %v5162
        %v5164 = vpop.f32.mrf.mxu0
        %5165 = vmatprep.mubr.f32.mxu0 0.0
        %5166 = vmatmul.mubr.f32.gmra.mxu0 %v5002
        %v5167 = vpop.f32.mrf.mxu0
        %v5168 = vadd.f32 %v4993, %v5167
        %v5169 = vpop.f32.mrf.mxu0
        %5170 = vmatprep.mubr.f32.mxu0 0.0
        %5171 = vmatmul.mubr.f32.gmra.mxu0 %v5005
        %v5172 = vpop.f32.mrf.mxu0
        %v5173 = vadd.f32 %v4993, %v5172
        %v5174 = vpop.f32.mrf.mxu0
        %5175 = vmatprep.mubr.f32.mxu0 0.0
        %5176 = vmatmul.mubr.f32.gmra.mxu0 %v5008
        %v5177 = vpop.f32.mrf.mxu0
        %v5178 = vadd.f32 %v4993, %v5177
        %v5179 = vpop.f32.mrf.mxu0
        %5180 = vmatprep.mubr.f32.mxu0 0.0
        %5181 = vmatmul.mubr.f32.gmra.mxu0 %v5011
        %v5182 = vpop.f32.mrf.mxu0
        %v5183 = vadd.f32 %v4993, %v5182
        %v5184 = vpop.f32.mrf.mxu0
        %5185 = vmatprep.mubr.f32.mxu0 0.0
        %5186 = vmatmul.mubr.f32.gmra.mxu0 %v5014
        %v5187 = vpop.f32.mrf.mxu0
        %v5188 = vadd.f32 %v4993, %v5187
        %v5189 = vpop.f32.mrf.mxu0
        %5190 = vmatprep.mubr.f32.mxu0 0.0
        %5191 = vmatmul.mubr.f32.gmra.mxu0 %v5017
        %v5192 = vpop.f32.mrf.mxu0
        %v5193 = vadd.f32 %v4993, %v5192
        %v5194 = vpop.f32.mrf.mxu0
        %5195 = vmatprep.mubr.f32.mxu0 0.0
        %5196 = vmatmul.mubr.f32.gmra.mxu0 %v5020
        %v5197 = vpop.f32.mrf.mxu0
        %v5198 = vadd.f32 %v4993, %v5197
        %v5199 = vpop.f32.mrf.mxu0
        %5200 = vmatprep.mubr.f32.mxu0 0.0
        %5201 = vmatmul.mubr.f32.gmra.mxu0 %v5023
        %v5202 = vpop.f32.mrf.mxu0
        %v5203 = vadd.f32 %v4993, %v5202
        %v5204 = vpop.f32.mrf.mxu0
        %5205 = vmatprep.mubr.f32.mxu0 0.0
        %5206 = vmatmul.mubr.f32.gmra.mxu0 %v5026
        %v5207 = vpop.f32.mrf.mxu0
        %v5208 = vadd.f32 %v4993, %v5207
        %v5209 = vpop.f32.mrf.mxu0
        %5210 = vmatprep.mubr.f32.mxu0 0.0
        %5211 = vmatmul.mubr.f32.gmra.mxu0 %v5029
        %v5212 = vpop.f32.mrf.mxu0
        %v5213 = vadd.f32 %v4993, %v5212
        %v5214 = vpop.f32.mrf.mxu0
        %5215 = vmatprep.mubr.f32.mxu0 0.0
        %5216 = vmatmul.mubr.f32.gmra.mxu0 %v5032
        %v5217 = vpop.f32.mrf.mxu0
        %v5218 = vadd.f32 %v4993, %v5217
        %v5219 = vpop.f32.mrf.mxu0
        %5220 = vmatprep.mubr.f32.mxu0 0.0
        %5221 = vmatmul.mubr.f32.gmra.mxu0 %v5035
        %v5222 = vpop.f32.mrf.mxu0
        %v5223 = vadd.f32 %v4993, %v5222
        %v5224 = vpop.f32.mrf.mxu0
        %5225 = vmatprep.mubr.f32.mxu0 0.0
        %5226 = vmatmul.mubr.f32.gmra.mxu0 %v5038
        %v5227 = vpop.f32.mrf.mxu0
        %v5228 = vadd.f32 %v4993, %v5227
        %v5229 = vpop.f32.mrf.mxu0
        %5230 = vmatprep.mubr.f32.mxu0 0.0
        %5231 = vmatmul.mubr.f32.gmra.mxu0 %v5041
        %v5232 = vpop.f32.mrf.mxu0
        %v5233 = vadd.f32 %v4993, %v5232
        %v5234 = vpop.f32.mrf.mxu0
        %5235 = vmatprep.mubr.f32.mxu0 0.0
        %5236 = vmatmul.mubr.f32.gmra.mxu0 %v5044
        %v5237 = vpop.f32.mrf.mxu0
        %v5238 = vadd.f32 %v4993, %v5237
        %v5239 = vpop.f32.mrf.mxu0
        %5240 = vmatprep.mubr.f32.mxu0 0.0
        %5241 = vmatmul.mubr.f32.gmra.mxu0 %v5047
        %v5242 = vpop.f32.mrf.mxu0
        %v5243 = vadd.f32 %v4993, %v5242
        %v5244 = vpop.f32.mrf.mxu0
        %5245 = vmatprep.mubr.f32.mxu0 0.0
        %5246 = vmatmul.mubr.f32.gmra.mxu0 %v5050
        %v5247 = vpop.f32.mrf.mxu0
        %v5248 = vadd.f32 %v4993, %v5247
        %v5249 = vpop.f32.mrf.mxu0
        %5250 = vmatprep.mubr.f32.mxu0 0.0
        %5251 = vmatmul.mubr.f32.gmra.mxu0 %v5053
        %v5252 = vpop.f32.mrf.mxu0
        %v5253 = vadd.f32 %v4993, %v5252
        %v5254 = vpop.f32.mrf.mxu0
        %5255 = vmatprep.mubr.f32.mxu0 0.0
        %5256 = vmatmul.mubr.f32.gmra.mxu0 %v5056
        %v5257 = vpop.f32.mrf.mxu0
        %v5258 = vadd.f32 %v4993, %v5257
        %v5259 = vpop.f32.mrf.mxu0
        %5260 = vmatprep.mubr.f32.mxu0 0.0
        %5261 = vmatmul.mubr.f32.gmra.mxu0 %v5059
        %v5262 = vpop.f32.mrf.mxu0
        %v5263 = vadd.f32 %v4993, %v5262
        %v5264 = vpop.f32.mrf.mxu0
        %5265 = vmatprep.mubr.f32.mxu0 0.0
        %5266 = vmatmul.mubr.f32.gmra.mxu0 %v5062
        %v5267 = vpop.f32.mrf.mxu0
        %v5268 = vadd.f32 %v4993, %v5267
        %v5269 = vpop.f32.mrf.mxu0
        %5270 = vmatprep.mubr.f32.mxu0 0.0
        %5271 = vmatmul.mubr.f32.gmra.mxu0 %v5065
        %v5272 = vpop.f32.mrf.mxu0
        %v5273 = vadd.f32 %v4993, %v5272
        %v5274 = vpop.f32.mrf.mxu0
        %5275 = vmatprep.mubr.f32.mxu0 0.0
        %5276 = vmatmul.mubr.f32.gmra.mxu0 %v5068
        %v5277 = vpop.f32.mrf.mxu0
        %v5278 = vadd.f32 %v4993, %v5277
        %v5279 = vpop.f32.mrf.mxu0
        %5280 = vmatprep.mubr.f32.mxu0 0.0
        %5281 = vmatmul.mubr.f32.gmra.mxu0 %v5071
        %v5282 = vpop.f32.mrf.mxu0
        %v5283 = vadd.f32 %v4993, %v5282
        %v5284 = vpop.f32.mrf.mxu0
        %5285 = vmatprep.mubr.f32.mxu0 0.0
        %5286 = vmatmul.mubr.f32.gmra.mxu0 %v5074
        %v5287 = vpop.f32.mrf.mxu0
        %v5288 = vadd.f32 %v4993, %v5287
        %v5289 = vpop.f32.mrf.mxu0
        %5290 = vmatprep.mubr.f32.mxu0 0.0
        %5291 = vmatmul.mubr.f32.gmra.mxu0 %v5077
        %v5292 = vpop.f32.mrf.mxu0
        %v5293 = vadd.f32 %v4993, %v5292
        %v5294 = vpop.f32.mrf.mxu0
        %5295 = vmatprep.mubr.f32.mxu0 0.0
        %5296 = vmatmul.mubr.f32.gmra.mxu0 %v5080
        %v5297 = vpop.f32.mrf.mxu0
        %v5298 = vadd.f32 %v4993, %v5297
        %v5299 = vpop.f32.mrf.mxu0
        %5300 = vmatprep.mubr.f32.mxu0 0.0
        %5301 = vmatmul.mubr.f32.gmra.mxu0 %v5083
        %v5302 = vpop.f32.mrf.mxu0
        %v5303 = vadd.f32 %v4993, %v5302
        %v5304 = vpop.f32.mrf.mxu0
        %5305 = vmatprep.mubr.f32.mxu0 0.0
        %5306 = vmatmul.mubr.f32.gmra.mxu0 %v5086
        %v5307 = vpop.f32.mrf.mxu0
        %v5308 = vadd.f32 %v4993, %v5307
        %v5309 = vpop.f32.mrf.mxu0
        %5310 = vmatprep.mubr.f32.mxu0 0.0
        %5311 = vmatmul.mubr.f32.gmra.mxu0 %v5089
        %v5312 = vpop.f32.mrf.mxu0
        %v5313 = vadd.f32 %v4993, %v5312
        %v5314 = vpop.f32.mrf.mxu0
        %5315 = vdwg.mxu0
        %v5348 = vrot.slane %v5158, 7
        %v5349 = vrot.slane %v5163, 7
        %v5350 = vrot.slane %v5168, 7
        %v5351 = vrot.slane %v5173, 7
        %v5352 = vrot.slane %v5178, 7
        %v5353 = vrot.slane %v5183, 7
        %v5354 = vrot.slane %v5188, 7
        %v5355 = vrot.slane %v5193, 7
        %v5356 = vrot.slane %v5198, 7
        %v5357 = vrot.slane %v5203, 7
        %v5358 = vrot.slane %v5208, 7
        %v5359 = vrot.slane %v5213, 7
        %v5360 = vrot.slane %v5218, 7
        %v5361 = vrot.slane %v5223, 7
        %v5362 = vrot.slane %v5228, 7
        %v5363 = vrot.slane %v5233, 7
        %v5364 = vrot.slane %v5238, 7
        %v5365 = vrot.slane %v5243, 7
        %v5366 = vrot.slane %v5248, 7
        %v5367 = vrot.slane %v5253, 7
        %v5368 = vrot.slane %v5258, 7
        %v5369 = vrot.slane %v5263, 7
        %v5370 = vrot.slane %v5268, 7
        %v5371 = vrot.slane %v5273, 7
        %v5372 = vrot.slane %v5278, 7
        %v5373 = vrot.slane %v5283, 7
        %v5374 = vrot.slane %v5288, 7
        %v5375 = vrot.slane %v5293, 7
        %v5376 = vrot.slane %v5298, 7
        %v5377 = vrot.slane %v5303, 7
        %v5378 = vrot.slane %v5308, 7
        %v5379 = vrot.slane %v5313, 7
        %v5412 = vsel %vm702, 0.0, %v5348
        %v5413 = vsel %vm702, 0.0, %v5349
        %v5414 = vsel %vm702, 0.0, %v5350
        %v5415 = vsel %vm702, 0.0, %v5351
        %v5416 = vsel %vm702, 0.0, %v5352
        %v5417 = vsel %vm702, 0.0, %v5353
        %v5418 = vsel %vm702, 0.0, %v5354
        %v5419 = vsel %vm702, 0.0, %v5355
        %v5420 = vsel %vm702, 0.0, %v5356
        %v5421 = vsel %vm702, 0.0, %v5357
        %v5422 = vsel %vm702, 0.0, %v5358
        %v5423 = vsel %vm702, 0.0, %v5359
        %v5424 = vsel %vm702, 0.0, %v5360
        %v5425 = vsel %vm702, 0.0, %v5361
        %v5426 = vsel %vm702, 0.0, %v5362
        %v5427 = vsel %vm702, 0.0, %v5363
        %v5428 = vsel %vm702, 0.0, %v5364
        %v5429 = vsel %vm702, 0.0, %v5365
        %v5430 = vsel %vm702, 0.0, %v5366
        %v5431 = vsel %vm702, 0.0, %v5367
        %v5432 = vsel %vm702, 0.0, %v5368
        %v5433 = vsel %vm702, 0.0, %v5369
        %v5434 = vsel %vm702, 0.0, %v5370
        %v5435 = vsel %vm702, 0.0, %v5371
        %v5436 = vsel %vm702, 0.0, %v5372
        %v5437 = vsel %vm702, 0.0, %v5373
        %v5438 = vsel %vm702, 0.0, %v5374
        %v5439 = vsel %vm702, 0.0, %v5375
        %v5440 = vsel %vm702, 0.0, %v5376
        %v5441 = vsel %vm702, 0.0, %v5377
        %v5442 = vsel %vm702, 0.0, %v5378
        %v5443 = vsel %vm702, 0.0, %v5379
        %v5444 = vsel %vm702, %v5348, 0.0
        %v5445 = vsel %vm702, %v5349, 0.0
        %v5446 = vsel %vm702, %v5350, 0.0
        %v5447 = vsel %vm702, %v5351, 0.0
        %v5448 = vsel %vm702, %v5352, 0.0
        %v5449 = vsel %vm702, %v5353, 0.0
        %v5450 = vsel %vm702, %v5354, 0.0
        %v5451 = vsel %vm702, %v5355, 0.0
        %v5452 = vsel %vm702, %v5356, 0.0
        %v5453 = vsel %vm702, %v5357, 0.0
        %v5454 = vsel %vm702, %v5358, 0.0
        %v5455 = vsel %vm702, %v5359, 0.0
        %v5456 = vsel %vm702, %v5360, 0.0
        %v5457 = vsel %vm702, %v5361, 0.0
        %v5458 = vsel %vm702, %v5362, 0.0
        %v5459 = vsel %vm702, %v5363, 0.0
        %v5460 = vsel %vm702, %v5364, 0.0
        %v5461 = vsel %vm702, %v5365, 0.0
        %v5462 = vsel %vm702, %v5366, 0.0
        %v5463 = vsel %vm702, %v5367, 0.0
        %v5464 = vsel %vm702, %v5368, 0.0
        %v5465 = vsel %vm702, %v5369, 0.0
        %v5466 = vsel %vm702, %v5370, 0.0
        %v5467 = vsel %vm702, %v5371, 0.0
        %v5468 = vsel %vm702, %v5372, 0.0
        %v5469 = vsel %vm702, %v5373, 0.0
        %v5470 = vsel %vm702, %v5374, 0.0
        %v5471 = vsel %vm702, %v5375, 0.0
        %v5472 = vsel %vm702, %v5376, 0.0
        %v5473 = vsel %vm702, %v5377, 0.0
        %v5474 = vsel %vm702, %v5378, 0.0
        %v5475 = vsel %vm702, %v5379, 0.0
        %5508 = vrot.lane.b32.xlu0 %v4715, 2
        %v5509 = vpop.permute.xlu0 %5508
        %5510 = vrot.lane.b32.xlu0 %v4716, 2
        %v5511 = vpop.permute.xlu0 %5510
        %5512 = vrot.lane.b32.xlu0 %v4717, 2
        %v5513 = vpop.permute.xlu0 %5512
        %5514 = vrot.lane.b32.xlu0 %v4718, 2
        %v5515 = vpop.permute.xlu0 %5514
        %5516 = vrot.lane.b32.xlu0 %v4719, 2
        %v5517 = vpop.permute.xlu0 %5516
        %5518 = vrot.lane.b32.xlu0 %v4720, 2
        %v5519 = vpop.permute.xlu0 %5518
        %5520 = vrot.lane.b32.xlu0 %v4721, 2
        %v5521 = vpop.permute.xlu0 %5520
        %5522 = vrot.lane.b32.xlu0 %v4722, 2
        %v5523 = vpop.permute.xlu0 %5522
        %5524 = vrot.lane.b32.xlu0 %v4723, 2
        %v5525 = vpop.permute.xlu0 %5524
        %5526 = vrot.lane.b32.xlu0 %v4724, 2
        %v5527 = vpop.permute.xlu0 %5526
        %5528 = vrot.lane.b32.xlu0 %v4725, 2
        %v5529 = vpop.permute.xlu0 %5528
        %5530 = vrot.lane.b32.xlu0 %v4726, 2
        %v5531 = vpop.permute.xlu0 %5530
        %5532 = vrot.lane.b32.xlu0 %v4727, 2
        %v5533 = vpop.permute.xlu0 %5532
        %5534 = vrot.lane.b32.xlu0 %v4728, 2
        %v5535 = vpop.permute.xlu0 %5534
        %5536 = vrot.lane.b32.xlu0 %v4729, 2
        %v5537 = vpop.permute.xlu0 %5536
        %5538 = vrot.lane.b32.xlu0 %v4730, 2
        %v5539 = vpop.permute.xlu0 %5538
        %5540 = vrot.lane.b32.xlu0 %v4731, 2
        %v5541 = vpop.permute.xlu0 %5540
        %5542 = vrot.lane.b32.xlu0 %v4732, 2
        %v5543 = vpop.permute.xlu0 %5542
        %5544 = vrot.lane.b32.xlu0 %v4733, 2
        %v5545 = vpop.permute.xlu0 %5544
        %5546 = vrot.lane.b32.xlu0 %v4734, 2
        %v5547 = vpop.permute.xlu0 %5546
        %5548 = vrot.lane.b32.xlu0 %v4735, 2
        %v5549 = vpop.permute.xlu0 %5548
        %5550 = vrot.lane.b32.xlu0 %v4736, 2
        %v5551 = vpop.permute.xlu0 %5550
        %5552 = vrot.lane.b32.xlu0 %v4737, 2
        %v5553 = vpop.permute.xlu0 %5552
        %5554 = vrot.lane.b32.xlu0 %v4738, 2
        %v5555 = vpop.permute.xlu0 %5554
        %5556 = vrot.lane.b32.xlu0 %v4739, 2
        %v5557 = vpop.permute.xlu0 %5556
        %5558 = vrot.lane.b32.xlu0 %v4740, 2
        %v5559 = vpop.permute.xlu0 %5558
        %5560 = vrot.lane.b32.xlu0 %v4741, 2
        %v5561 = vpop.permute.xlu0 %5560
        %5562 = vrot.lane.b32.xlu0 %v4742, 2
        %v5563 = vpop.permute.xlu0 %5562
        %5564 = vrot.lane.b32.xlu0 %v4743, 2
        %v5565 = vpop.permute.xlu0 %5564
        %5566 = vrot.lane.b32.xlu0 %v4744, 2
        %v5567 = vpop.permute.xlu0 %5566
        %5568 = vrot.lane.b32.xlu0 %v4745, 2
        %v5569 = vpop.permute.xlu0 %5568
        %5570 = vrot.lane.b32.xlu0 %v4746, 2
        %v5571 = vpop.permute.xlu0 %5570
        %5604 = vrot.lane.b32.xlu0 %v4715, 4
        %v5605 = vpop.permute.xlu0 %5604
        %5606 = vrot.lane.b32.xlu0 %v4716, 4
        %v5607 = vpop.permute.xlu0 %5606
        %5608 = vrot.lane.b32.xlu0 %v4717, 4
        %v5609 = vpop.permute.xlu0 %5608
        %5610 = vrot.lane.b32.xlu0 %v4718, 4
        %v5611 = vpop.permute.xlu0 %5610
        %5612 = vrot.lane.b32.xlu0 %v4719, 4
        %v5613 = vpop.permute.xlu0 %5612
        %5614 = vrot.lane.b32.xlu0 %v4720, 4
        %v5615 = vpop.permute.xlu0 %5614
        %5616 = vrot.lane.b32.xlu0 %v4721, 4
        %v5617 = vpop.permute.xlu0 %5616
        %5618 = vrot.lane.b32.xlu0 %v4722, 4
        %v5619 = vpop.permute.xlu0 %5618
        %5620 = vrot.lane.b32.xlu0 %v4723, 4
        %v5621 = vpop.permute.xlu0 %5620
        %5622 = vrot.lane.b32.xlu0 %v4724, 4
        %v5623 = vpop.permute.xlu0 %5622
        %5624 = vrot.lane.b32.xlu0 %v4725, 4
        %v5625 = vpop.permute.xlu0 %5624
        %5626 = vrot.lane.b32.xlu0 %v4726, 4
        %v5627 = vpop.permute.xlu0 %5626
        %5628 = vrot.lane.b32.xlu0 %v4727, 4
        %v5629 = vpop.permute.xlu0 %5628
        %5630 = vrot.lane.b32.xlu0 %v4728, 4
        %v5631 = vpop.permute.xlu0 %5630
        %5632 = vrot.lane.b32.xlu0 %v4729, 4
        %v5633 = vpop.permute.xlu0 %5632
        %5634 = vrot.lane.b32.xlu0 %v4730, 4
        %v5635 = vpop.permute.xlu0 %5634
        %5636 = vrot.lane.b32.xlu0 %v4731, 4
        %v5637 = vpop.permute.xlu0 %5636
        %5638 = vrot.lane.b32.xlu0 %v4732, 4
        %v5639 = vpop.permute.xlu0 %5638
        %5640 = vrot.lane.b32.xlu0 %v4733, 4
        %v5641 = vpop.permute.xlu0 %5640
        %5642 = vrot.lane.b32.xlu0 %v4734, 4
        %v5643 = vpop.permute.xlu0 %5642
        %5644 = vrot.lane.b32.xlu0 %v4735, 4
        %v5645 = vpop.permute.xlu0 %5644
        %5646 = vrot.lane.b32.xlu0 %v4736, 4
        %v5647 = vpop.permute.xlu0 %5646
        %5648 = vrot.lane.b32.xlu0 %v4737, 4
        %v5649 = vpop.permute.xlu0 %5648
        %5650 = vrot.lane.b32.xlu0 %v4738, 4
        %v5651 = vpop.permute.xlu0 %5650
        %5652 = vrot.lane.b32.xlu0 %v4739, 4
        %v5653 = vpop.permute.xlu0 %5652
        %5654 = vrot.lane.b32.xlu0 %v4740, 4
        %v5655 = vpop.permute.xlu0 %5654
        %5656 = vrot.lane.b32.xlu0 %v4741, 4
        %v5657 = vpop.permute.xlu0 %5656
        %5658 = vrot.lane.b32.xlu0 %v4742, 4
        %v5659 = vpop.permute.xlu0 %5658
        %5660 = vrot.lane.b32.xlu0 %v4743, 4
        %v5661 = vpop.permute.xlu0 %5660
        %5662 = vrot.lane.b32.xlu0 %v4744, 4
        %v5663 = vpop.permute.xlu0 %5662
        %5664 = vrot.lane.b32.xlu0 %v4745, 4
        %v5665 = vpop.permute.xlu0 %5664
        %5666 = vrot.lane.b32.xlu0 %v4746, 4
        %v5667 = vpop.permute.xlu0 %5666
        %5700 = vrot.lane.b32.xlu0 %v4715, 6
        %v5701 = vpop.permute.xlu0 %5700
        %5702 = vrot.lane.b32.xlu0 %v4716, 6
        %v5703 = vpop.permute.xlu0 %5702
        %5704 = vrot.lane.b32.xlu0 %v4717, 6
        %v5705 = vpop.permute.xlu0 %5704
        %5706 = vrot.lane.b32.xlu0 %v4718, 6
        %v5707 = vpop.permute.xlu0 %5706
        %5708 = vrot.lane.b32.xlu0 %v4719, 6
        %v5709 = vpop.permute.xlu0 %5708
        %5710 = vrot.lane.b32.xlu0 %v4720, 6
        %v5711 = vpop.permute.xlu0 %5710
        %5712 = vrot.lane.b32.xlu0 %v4721, 6
        %v5713 = vpop.permute.xlu0 %5712
        %5714 = vrot.lane.b32.xlu0 %v4722, 6
        %v5715 = vpop.permute.xlu0 %5714
        %5716 = vrot.lane.b32.xlu0 %v4723, 6
        %v5717 = vpop.permute.xlu0 %5716
        %5718 = vrot.lane.b32.xlu0 %v4724, 6
        %v5719 = vpop.permute.xlu0 %5718
        %5720 = vrot.lane.b32.xlu0 %v4725, 6
        %v5721 = vpop.permute.xlu0 %5720
        %5722 = vrot.lane.b32.xlu0 %v4726, 6
        %v5723 = vpop.permute.xlu0 %5722
        %5724 = vrot.lane.b32.xlu0 %v4727, 6
        %v5725 = vpop.permute.xlu0 %5724
        %5726 = vrot.lane.b32.xlu0 %v4728, 6
        %v5727 = vpop.permute.xlu0 %5726
        %5728 = vrot.lane.b32.xlu0 %v4729, 6
        %v5729 = vpop.permute.xlu0 %5728
        %5730 = vrot.lane.b32.xlu0 %v4730, 6
        %v5731 = vpop.permute.xlu0 %5730
        %5732 = vrot.lane.b32.xlu0 %v4731, 6
        %v5733 = vpop.permute.xlu0 %5732
        %5734 = vrot.lane.b32.xlu0 %v4732, 6
        %v5735 = vpop.permute.xlu0 %5734
        %5736 = vrot.lane.b32.xlu0 %v4733, 6
        %v5737 = vpop.permute.xlu0 %5736
        %5738 = vrot.lane.b32.xlu0 %v4734, 6
        %v5739 = vpop.permute.xlu0 %5738
        %5740 = vrot.lane.b32.xlu0 %v4735, 6
        %v5741 = vpop.permute.xlu0 %5740
        %5742 = vrot.lane.b32.xlu0 %v4736, 6
        %v5743 = vpop.permute.xlu0 %5742
        %5744 = vrot.lane.b32.xlu0 %v4737, 6
        %v5745 = vpop.permute.xlu0 %5744
        %5746 = vrot.lane.b32.xlu0 %v4738, 6
        %v5747 = vpop.permute.xlu0 %5746
        %5748 = vrot.lane.b32.xlu0 %v4739, 6
        %v5749 = vpop.permute.xlu0 %5748
        %5750 = vrot.lane.b32.xlu0 %v4740, 6
        %v5751 = vpop.permute.xlu0 %5750
        %5752 = vrot.lane.b32.xlu0 %v4741, 6
        %v5753 = vpop.permute.xlu0 %5752
        %5754 = vrot.lane.b32.xlu0 %v4742, 6
        %v5755 = vpop.permute.xlu0 %5754
        %5756 = vrot.lane.b32.xlu0 %v4743, 6
        %v5757 = vpop.permute.xlu0 %5756
        %5758 = vrot.lane.b32.xlu0 %v4744, 6
        %v5759 = vpop.permute.xlu0 %5758
        %5760 = vrot.lane.b32.xlu0 %v4745, 6
        %v5761 = vpop.permute.xlu0 %5760
        %5762 = vrot.lane.b32.xlu0 %v4746, 6
        %v5763 = vpop.permute.xlu0 %5762
        %5796 = vrot.lane.b32.xlu0 %v4715, 8
        %v5797 = vpop.permute.xlu0 %5796
        %5798 = vrot.lane.b32.xlu0 %v4716, 8
        %v5799 = vpop.permute.xlu0 %5798
        %5800 = vrot.lane.b32.xlu0 %v4717, 8
        %v5801 = vpop.permute.xlu0 %5800
        %5802 = vrot.lane.b32.xlu0 %v4718, 8
        %v5803 = vpop.permute.xlu0 %5802
        %5804 = vrot.lane.b32.xlu0 %v4719, 8
        %v5805 = vpop.permute.xlu0 %5804
        %5806 = vrot.lane.b32.xlu0 %v4720, 8
        %v5807 = vpop.permute.xlu0 %5806
        %5808 = vrot.lane.b32.xlu0 %v4721, 8
        %v5809 = vpop.permute.xlu0 %5808
        %5810 = vrot.lane.b32.xlu0 %v4722, 8
        %v5811 = vpop.permute.xlu0 %5810
        %5812 = vrot.lane.b32.xlu0 %v4723, 8
        %v5813 = vpop.permute.xlu0 %5812
        %5814 = vrot.lane.b32.xlu0 %v4724, 8
        %v5815 = vpop.permute.xlu0 %5814
        %5816 = vrot.lane.b32.xlu0 %v4725, 8
        %v5817 = vpop.permute.xlu0 %5816
        %5818 = vrot.lane.b32.xlu0 %v4726, 8
        %v5819 = vpop.permute.xlu0 %5818
        %5820 = vrot.lane.b32.xlu0 %v4727, 8
        %v5821 = vpop.permute.xlu0 %5820
        %5822 = vrot.lane.b32.xlu0 %v4728, 8
        %v5823 = vpop.permute.xlu0 %5822
        %5824 = vrot.lane.b32.xlu0 %v4729, 8
        %v5825 = vpop.permute.xlu0 %5824
        %5826 = vrot.lane.b32.xlu0 %v4730, 8
        %v5827 = vpop.permute.xlu0 %5826
        %5828 = vrot.lane.b32.xlu0 %v4731, 8
        %v5829 = vpop.permute.xlu0 %5828
        %5830 = vrot.lane.b32.xlu0 %v4732, 8
        %v5831 = vpop.permute.xlu0 %5830
        %5832 = vrot.lane.b32.xlu0 %v4733, 8
        %v5833 = vpop.permute.xlu0 %5832
        %5834 = vrot.lane.b32.xlu0 %v4734, 8
        %v5835 = vpop.permute.xlu0 %5834
        %5836 = vrot.lane.b32.xlu0 %v4735, 8
        %v5837 = vpop.permute.xlu0 %5836
        %5838 = vrot.lane.b32.xlu0 %v4736, 8
        %v5839 = vpop.permute.xlu0 %5838
        %5840 = vrot.lane.b32.xlu0 %v4737, 8
        %v5841 = vpop.permute.xlu0 %5840
        %5842 = vrot.lane.b32.xlu0 %v4738, 8
        %v5843 = vpop.permute.xlu0 %5842
        %5844 = vrot.lane.b32.xlu0 %v4739, 8
        %v5845 = vpop.permute.xlu0 %5844
        %5846 = vrot.lane.b32.xlu0 %v4740, 8
        %v5847 = vpop.permute.xlu0 %5846
        %5848 = vrot.lane.b32.xlu0 %v4741, 8
        %v5849 = vpop.permute.xlu0 %5848
        %5850 = vrot.lane.b32.xlu0 %v4742, 8
        %v5851 = vpop.permute.xlu0 %5850
        %5852 = vrot.lane.b32.xlu0 %v4743, 8
        %v5853 = vpop.permute.xlu0 %5852
        %5854 = vrot.lane.b32.xlu0 %v4744, 8
        %v5855 = vpop.permute.xlu0 %5854
        %5856 = vrot.lane.b32.xlu0 %v4745, 8
        %v5857 = vpop.permute.xlu0 %5856
        %5858 = vrot.lane.b32.xlu0 %v4746, 8
        %v5859 = vpop.permute.xlu0 %5858
        %5892 = vrot.lane.b32.xlu0 %v4715, 10
        %v5893 = vpop.permute.xlu0 %5892
        %5894 = vrot.lane.b32.xlu0 %v4716, 10
        %v5895 = vpop.permute.xlu0 %5894
        %5896 = vrot.lane.b32.xlu0 %v4717, 10
        %v5897 = vpop.permute.xlu0 %5896
        %5898 = vrot.lane.b32.xlu0 %v4718, 10
        %v5899 = vpop.permute.xlu0 %5898
        %5900 = vrot.lane.b32.xlu0 %v4719, 10
        %v5901 = vpop.permute.xlu0 %5900
        %5902 = vrot.lane.b32.xlu0 %v4720, 10
        %v5903 = vpop.permute.xlu0 %5902
        %5904 = vrot.lane.b32.xlu0 %v4721, 10
        %v5905 = vpop.permute.xlu0 %5904
        %5906 = vrot.lane.b32.xlu0 %v4722, 10
        %v5907 = vpop.permute.xlu0 %5906
        %5908 = vrot.lane.b32.xlu0 %v4723, 10
        %v5909 = vpop.permute.xlu0 %5908
        %5910 = vrot.lane.b32.xlu0 %v4724, 10
        %v5911 = vpop.permute.xlu0 %5910
        %5912 = vrot.lane.b32.xlu0 %v4725, 10
        %v5913 = vpop.permute.xlu0 %5912
        %5914 = vrot.lane.b32.xlu0 %v4726, 10
        %v5915 = vpop.permute.xlu0 %5914
        %5916 = vrot.lane.b32.xlu0 %v4727, 10
        %v5917 = vpop.permute.xlu0 %5916
        %5918 = vrot.lane.b32.xlu0 %v4728, 10
        %v5919 = vpop.permute.xlu0 %5918
        %5920 = vrot.lane.b32.xlu0 %v4729, 10
        %v5921 = vpop.permute.xlu0 %5920
        %5922 = vrot.lane.b32.xlu0 %v4730, 10
        %v5923 = vpop.permute.xlu0 %5922
        %5924 = vrot.lane.b32.xlu0 %v4731, 10
        %v5925 = vpop.permute.xlu0 %5924
        %5926 = vrot.lane.b32.xlu0 %v4732, 10
        %v5927 = vpop.permute.xlu0 %5926
        %5928 = vrot.lane.b32.xlu0 %v4733, 10
        %v5929 = vpop.permute.xlu0 %5928
        %5930 = vrot.lane.b32.xlu0 %v4734, 10
        %v5931 = vpop.permute.xlu0 %5930
        %5932 = vrot.lane.b32.xlu0 %v4735, 10
        %v5933 = vpop.permute.xlu0 %5932
        %5934 = vrot.lane.b32.xlu0 %v4736, 10
        %v5935 = vpop.permute.xlu0 %5934
        %5936 = vrot.lane.b32.xlu0 %v4737, 10
        %v5937 = vpop.permute.xlu0 %5936
        %5938 = vrot.lane.b32.xlu0 %v4738, 10
        %v5939 = vpop.permute.xlu0 %5938
        %5940 = vrot.lane.b32.xlu0 %v4739, 10
        %v5941 = vpop.permute.xlu0 %5940
        %5942 = vrot.lane.b32.xlu0 %v4740, 10
        %v5943 = vpop.permute.xlu0 %5942
        %5944 = vrot.lane.b32.xlu0 %v4741, 10
        %v5945 = vpop.permute.xlu0 %5944
        %5946 = vrot.lane.b32.xlu0 %v4742, 10
        %v5947 = vpop.permute.xlu0 %5946
        %5948 = vrot.lane.b32.xlu0 %v4743, 10
        %v5949 = vpop.permute.xlu0 %5948
        %5950 = vrot.lane.b32.xlu0 %v4744, 10
        %v5951 = vpop.permute.xlu0 %5950
        %5952 = vrot.lane.b32.xlu0 %v4745, 10
        %v5953 = vpop.permute.xlu0 %5952
        %5954 = vrot.lane.b32.xlu0 %v4746, 10
        %v5955 = vpop.permute.xlu0 %5954
        %5988 = vrot.lane.b32.xlu0 %v4715, 12
        %v5989 = vpop.permute.xlu0 %5988
        %5990 = vrot.lane.b32.xlu0 %v4716, 12
        %v5991 = vpop.permute.xlu0 %5990
        %5992 = vrot.lane.b32.xlu0 %v4717, 12
        %v5993 = vpop.permute.xlu0 %5992
        %5994 = vrot.lane.b32.xlu0 %v4718, 12
        %v5995 = vpop.permute.xlu0 %5994
        %5996 = vrot.lane.b32.xlu0 %v4719, 12
        %v5997 = vpop.permute.xlu0 %5996
        %5998 = vrot.lane.b32.xlu0 %v4720, 12
        %v5999 = vpop.permute.xlu0 %5998
        %6000 = vrot.lane.b32.xlu0 %v4721, 12
        %v6001 = vpop.permute.xlu0 %6000
        %6002 = vrot.lane.b32.xlu0 %v4722, 12
        %v6003 = vpop.permute.xlu0 %6002
        %6004 = vrot.lane.b32.xlu0 %v4723, 12
        %v6005 = vpop.permute.xlu0 %6004
        %6006 = vrot.lane.b32.xlu0 %v4724, 12
        %v6007 = vpop.permute.xlu0 %6006
        %6008 = vrot.lane.b32.xlu0 %v4725, 12
        %v6009 = vpop.permute.xlu0 %6008
        %6010 = vrot.lane.b32.xlu0 %v4726, 12
        %v6011 = vpop.permute.xlu0 %6010
        %6012 = vrot.lane.b32.xlu0 %v4727, 12
        %v6013 = vpop.permute.xlu0 %6012
        %6014 = vrot.lane.b32.xlu0 %v4728, 12
        %v6015 = vpop.permute.xlu0 %6014
        %6016 = vrot.lane.b32.xlu0 %v4729, 12
        %v6017 = vpop.permute.xlu0 %6016
        %6018 = vrot.lane.b32.xlu0 %v4730, 12
        %v6019 = vpop.permute.xlu0 %6018
        %6020 = vrot.lane.b32.xlu0 %v4731, 12
        %v6021 = vpop.permute.xlu0 %6020
        %6022 = vrot.lane.b32.xlu0 %v4732, 12
        %v6023 = vpop.permute.xlu0 %6022
        %6024 = vrot.lane.b32.xlu0 %v4733, 12
        %v6025 = vpop.permute.xlu0 %6024
        %6026 = vrot.lane.b32.xlu0 %v4734, 12
        %v6027 = vpop.permute.xlu0 %6026
        %6028 = vrot.lane.b32.xlu0 %v4735, 12
        %v6029 = vpop.permute.xlu0 %6028
        %6030 = vrot.lane.b32.xlu0 %v4736, 12
        %v6031 = vpop.permute.xlu0 %6030
        %6032 = vrot.lane.b32.xlu0 %v4737, 12
        %v6033 = vpop.permute.xlu0 %6032
        %6034 = vrot.lane.b32.xlu0 %v4738, 12
        %v6035 = vpop.permute.xlu0 %6034
        %6036 = vrot.lane.b32.xlu0 %v4739, 12
        %v6037 = vpop.permute.xlu0 %6036
        %6038 = vrot.lane.b32.xlu0 %v4740, 12
        %v6039 = vpop.permute.xlu0 %6038
        %6040 = vrot.lane.b32.xlu0 %v4741, 12
        %v6041 = vpop.permute.xlu0 %6040
        %6042 = vrot.lane.b32.xlu0 %v4742, 12
        %v6043 = vpop.permute.xlu0 %6042
        %6044 = vrot.lane.b32.xlu0 %v4743, 12
        %v6045 = vpop.permute.xlu0 %6044
        %6046 = vrot.lane.b32.xlu0 %v4744, 12
        %v6047 = vpop.permute.xlu0 %6046
        %6048 = vrot.lane.b32.xlu0 %v4745, 12
        %v6049 = vpop.permute.xlu0 %6048
        %6050 = vrot.lane.b32.xlu0 %v4746, 12
        %v6051 = vpop.permute.xlu0 %6050
        %6084 = vrot.lane.b32.xlu0 %v4715, 14
        %v6085 = vpop.permute.xlu0 %6084
        %6086 = vrot.lane.b32.xlu0 %v4716, 14
        %v6087 = vpop.permute.xlu0 %6086
        %6088 = vrot.lane.b32.xlu0 %v4717, 14
        %v6089 = vpop.permute.xlu0 %6088
        %6090 = vrot.lane.b32.xlu0 %v4718, 14
        %v6091 = vpop.permute.xlu0 %6090
        %6092 = vrot.lane.b32.xlu0 %v4719, 14
        %v6093 = vpop.permute.xlu0 %6092
        %6094 = vrot.lane.b32.xlu0 %v4720, 14
        %v6095 = vpop.permute.xlu0 %6094
        %6096 = vrot.lane.b32.xlu0 %v4721, 14
        %v6097 = vpop.permute.xlu0 %6096
        %6098 = vrot.lane.b32.xlu0 %v4722, 14
        %v6099 = vpop.permute.xlu0 %6098
        %6100 = vrot.lane.b32.xlu0 %v4723, 14
        %v6101 = vpop.permute.xlu0 %6100
        %6102 = vrot.lane.b32.xlu0 %v4724, 14
        %v6103 = vpop.permute.xlu0 %6102
        %6104 = vrot.lane.b32.xlu0 %v4725, 14
        %v6105 = vpop.permute.xlu0 %6104
        %6106 = vrot.lane.b32.xlu0 %v4726, 14
        %v6107 = vpop.permute.xlu0 %6106
        %6108 = vrot.lane.b32.xlu0 %v4727, 14
        %v6109 = vpop.permute.xlu0 %6108
        %6110 = vrot.lane.b32.xlu0 %v4728, 14
        %v6111 = vpop.permute.xlu0 %6110
        %6112 = vrot.lane.b32.xlu0 %v4729, 14
        %v6113 = vpop.permute.xlu0 %6112
        %6114 = vrot.lane.b32.xlu0 %v4730, 14
        %v6115 = vpop.permute.xlu0 %6114
        %6116 = vrot.lane.b32.xlu0 %v4731, 14
        %v6117 = vpop.permute.xlu0 %6116
        %6118 = vrot.lane.b32.xlu0 %v4732, 14
        %v6119 = vpop.permute.xlu0 %6118
        %6120 = vrot.lane.b32.xlu0 %v4733, 14
        %v6121 = vpop.permute.xlu0 %6120
        %6122 = vrot.lane.b32.xlu0 %v4734, 14
        %v6123 = vpop.permute.xlu0 %6122
        %6124 = vrot.lane.b32.xlu0 %v4735, 14
        %v6125 = vpop.permute.xlu0 %6124
        %6126 = vrot.lane.b32.xlu0 %v4736, 14
        %v6127 = vpop.permute.xlu0 %6126
        %6128 = vrot.lane.b32.xlu0 %v4737, 14
        %v6129 = vpop.permute.xlu0 %6128
        %6130 = vrot.lane.b32.xlu0 %v4738, 14
        %v6131 = vpop.permute.xlu0 %6130
        %6132 = vrot.lane.b32.xlu0 %v4739, 14
        %v6133 = vpop.permute.xlu0 %6132
        %6134 = vrot.lane.b32.xlu0 %v4740, 14
        %v6135 = vpop.permute.xlu0 %6134
        %6136 = vrot.lane.b32.xlu0 %v4741, 14
        %v6137 = vpop.permute.xlu0 %6136
        %6138 = vrot.lane.b32.xlu0 %v4742, 14
        %v6139 = vpop.permute.xlu0 %6138
        %6140 = vrot.lane.b32.xlu0 %v4743, 14
        %v6141 = vpop.permute.xlu0 %6140
        %6142 = vrot.lane.b32.xlu0 %v4744, 14
        %v6143 = vpop.permute.xlu0 %6142
        %6144 = vrot.lane.b32.xlu0 %v4745, 14
        %v6145 = vpop.permute.xlu0 %6144
        %6146 = vrot.lane.b32.xlu0 %v4746, 14
        %v6147 = vpop.permute.xlu0 %6146
        %v6180 = vsel %vm4373, %v4715, %v5509
        %v6181 = vsel %vm4373, %v4716, %v5511
        %v6182 = vsel %vm4373, %v4717, %v5513
        %v6183 = vsel %vm4373, %v4718, %v5515
        %v6184 = vsel %vm4373, %v4719, %v5517
        %v6185 = vsel %vm4373, %v4720, %v5519
        %v6186 = vsel %vm4373, %v4721, %v5521
        %v6187 = vsel %vm4373, %v4722, %v5523
        %v6188 = vsel %vm4373, %v4723, %v5525
        %v6189 = vsel %vm4373, %v4724, %v5527
        %v6190 = vsel %vm4373, %v4725, %v5529
        %v6191 = vsel %vm4373, %v4726, %v5531
        %v6192 = vsel %vm4373, %v4727, %v5533
        %v6193 = vsel %vm4373, %v4728, %v5535
        %v6194 = vsel %vm4373, %v4729, %v5537
        %v6195 = vsel %vm4373, %v4730, %v5539
        %v6196 = vsel %vm4373, %v4731, %v5541
        %v6197 = vsel %vm4373, %v4732, %v5543
        %v6198 = vsel %vm4373, %v4733, %v5545
        %v6199 = vsel %vm4373, %v4734, %v5547
        %v6200 = vsel %vm4373, %v4735, %v5549
        %v6201 = vsel %vm4373, %v4736, %v5551
        %v6202 = vsel %vm4373, %v4737, %v5553
        %v6203 = vsel %vm4373, %v4738, %v5555
        %v6204 = vsel %vm4373, %v4739, %v5557
        %v6205 = vsel %vm4373, %v4740, %v5559
        %v6206 = vsel %vm4373, %v4741, %v5561
        %v6207 = vsel %vm4373, %v4742, %v5563
        %v6208 = vsel %vm4373, %v4743, %v5565
        %v6209 = vsel %vm4373, %v4744, %v5567
        %v6210 = vsel %vm4373, %v4745, %v5569
        %v6211 = vsel %vm4373, %v4746, %v5571
        %v6212 = vsel %vm4375, %v6180, %v5605
        %v6213 = vsel %vm4375, %v6181, %v5607
        %v6214 = vsel %vm4375, %v6182, %v5609
        %v6215 = vsel %vm4375, %v6183, %v5611
        %v6216 = vsel %vm4375, %v6184, %v5613
        %v6217 = vsel %vm4375, %v6185, %v5615
        %v6218 = vsel %vm4375, %v6186, %v5617
        %v6219 = vsel %vm4375, %v6187, %v5619
        %v6220 = vsel %vm4375, %v6188, %v5621
        %v6221 = vsel %vm4375, %v6189, %v5623
        %v6222 = vsel %vm4375, %v6190, %v5625
        %v6223 = vsel %vm4375, %v6191, %v5627
        %v6224 = vsel %vm4375, %v6192, %v5629
        %v6225 = vsel %vm4375, %v6193, %v5631
        %v6226 = vsel %vm4375, %v6194, %v5633
        %v6227 = vsel %vm4375, %v6195, %v5635
        %v6228 = vsel %vm4375, %v6196, %v5637
        %v6229 = vsel %vm4375, %v6197, %v5639
        %v6230 = vsel %vm4375, %v6198, %v5641
        %v6231 = vsel %vm4375, %v6199, %v5643
        %v6232 = vsel %vm4375, %v6200, %v5645
        %v6233 = vsel %vm4375, %v6201, %v5647
        %v6234 = vsel %vm4375, %v6202, %v5649
        %v6235 = vsel %vm4375, %v6203, %v5651
        %v6236 = vsel %vm4375, %v6204, %v5653
        %v6237 = vsel %vm4375, %v6205, %v5655
        %v6238 = vsel %vm4375, %v6206, %v5657
        %v6239 = vsel %vm4375, %v6207, %v5659
        %v6240 = vsel %vm4375, %v6208, %v5661
        %v6241 = vsel %vm4375, %v6209, %v5663
        %v6242 = vsel %vm4375, %v6210, %v5665
        %v6243 = vsel %vm4375, %v6211, %v5667
        %v6244 = vsel %vm4377, %v6212, %v5701
        %v6245 = vsel %vm4377, %v6213, %v5703
        %v6246 = vsel %vm4377, %v6214, %v5705
        %v6247 = vsel %vm4377, %v6215, %v5707
        %v6248 = vsel %vm4377, %v6216, %v5709
        %v6249 = vsel %vm4377, %v6217, %v5711
        %v6250 = vsel %vm4377, %v6218, %v5713
        %v6251 = vsel %vm4377, %v6219, %v5715
        %v6252 = vsel %vm4377, %v6220, %v5717
        %v6253 = vsel %vm4377, %v6221, %v5719
        %v6254 = vsel %vm4377, %v6222, %v5721
        %v6255 = vsel %vm4377, %v6223, %v5723
        %v6256 = vsel %vm4377, %v6224, %v5725
        %v6257 = vsel %vm4377, %v6225, %v5727
        %v6258 = vsel %vm4377, %v6226, %v5729
        %v6259 = vsel %vm4377, %v6227, %v5731
        %v6260 = vsel %vm4377, %v6228, %v5733
        %v6261 = vsel %vm4377, %v6229, %v5735
        %v6262 = vsel %vm4377, %v6230, %v5737
        %v6263 = vsel %vm4377, %v6231, %v5739
        %v6264 = vsel %vm4377, %v6232, %v5741
        %v6265 = vsel %vm4377, %v6233, %v5743
        %v6266 = vsel %vm4377, %v6234, %v5745
        %v6267 = vsel %vm4377, %v6235, %v5747
        %v6268 = vsel %vm4377, %v6236, %v5749
        %v6269 = vsel %vm4377, %v6237, %v5751
        %v6270 = vsel %vm4377, %v6238, %v5753
        %v6271 = vsel %vm4377, %v6239, %v5755
        %v6272 = vsel %vm4377, %v6240, %v5757
        %v6273 = vsel %vm4377, %v6241, %v5759
        %v6274 = vsel %vm4377, %v6242, %v5761
        %v6275 = vsel %vm4377, %v6243, %v5763
        %v6276 = vsel %vm3803, %v6244, %v5797
        %v6277 = vsel %vm3803, %v6245, %v5799
        %v6278 = vsel %vm3803, %v6246, %v5801
        %v6279 = vsel %vm3803, %v6247, %v5803
        %v6280 = vsel %vm3803, %v6248, %v5805
        %v6281 = vsel %vm3803, %v6249, %v5807
        %v6282 = vsel %vm3803, %v6250, %v5809
        %v6283 = vsel %vm3803, %v6251, %v5811
        %v6284 = vsel %vm3803, %v6252, %v5813
        %v6285 = vsel %vm3803, %v6253, %v5815
        %v6286 = vsel %vm3803, %v6254, %v5817
        %v6287 = vsel %vm3803, %v6255, %v5819
        %v6288 = vsel %vm3803, %v6256, %v5821
        %v6289 = vsel %vm3803, %v6257, %v5823
        %v6290 = vsel %vm3803, %v6258, %v5825
        %v6291 = vsel %vm3803, %v6259, %v5827
        %v6292 = vsel %vm3803, %v6260, %v5829
        %v6293 = vsel %vm3803, %v6261, %v5831
        %v6294 = vsel %vm3803, %v6262, %v5833
        %v6295 = vsel %vm3803, %v6263, %v5835
        %v6296 = vsel %vm3803, %v6264, %v5837
        %v6297 = vsel %vm3803, %v6265, %v5839
        %v6298 = vsel %vm3803, %v6266, %v5841
        %v6299 = vsel %vm3803, %v6267, %v5843
        %v6300 = vsel %vm3803, %v6268, %v5845
        %v6301 = vsel %vm3803, %v6269, %v5847
        %v6302 = vsel %vm3803, %v6270, %v5849
        %v6303 = vsel %vm3803, %v6271, %v5851
        %v6304 = vsel %vm3803, %v6272, %v5853
        %v6305 = vsel %vm3803, %v6273, %v5855
        %v6306 = vsel %vm3803, %v6274, %v5857
        %v6307 = vsel %vm3803, %v6275, %v5859
        %v6308 = vsel %vm4380, %v6276, %v5893
        %v6309 = vsel %vm4380, %v6277, %v5895
        %v6310 = vsel %vm4380, %v6278, %v5897
        %v6311 = vsel %vm4380, %v6279, %v5899
        %v6312 = vsel %vm4380, %v6280, %v5901
        %v6313 = vsel %vm4380, %v6281, %v5903
        %v6314 = vsel %vm4380, %v6282, %v5905
        %v6315 = vsel %vm4380, %v6283, %v5907
        %v6316 = vsel %vm4380, %v6284, %v5909
        %v6317 = vsel %vm4380, %v6285, %v5911
        %v6318 = vsel %vm4380, %v6286, %v5913
        %v6319 = vsel %vm4380, %v6287, %v5915
        %v6320 = vsel %vm4380, %v6288, %v5917
        %v6321 = vsel %vm4380, %v6289, %v5919
        %v6322 = vsel %vm4380, %v6290, %v5921
        %v6323 = vsel %vm4380, %v6291, %v5923
        %v6324 = vsel %vm4380, %v6292, %v5925
        %v6325 = vsel %vm4380, %v6293, %v5927
        %v6326 = vsel %vm4380, %v6294, %v5929
        %v6327 = vsel %vm4380, %v6295, %v5931
        %v6328 = vsel %vm4380, %v6296, %v5933
        %v6329 = vsel %vm4380, %v6297, %v5935
        %v6330 = vsel %vm4380, %v6298, %v5937
        %v6331 = vsel %vm4380, %v6299, %v5939
        %v6332 = vsel %vm4380, %v6300, %v5941
        %v6333 = vsel %vm4380, %v6301, %v5943
        %v6334 = vsel %vm4380, %v6302, %v5945
        %v6335 = vsel %vm4380, %v6303, %v5947
        %v6336 = vsel %vm4380, %v6304, %v5949
        %v6337 = vsel %vm4380, %v6305, %v5951
        %v6338 = vsel %vm4380, %v6306, %v5953
        %v6339 = vsel %vm4380, %v6307, %v5955
        %v6340 = vsel %vm4382, %v6308, %v5989
        %v6341 = vsel %vm4382, %v6309, %v5991
        %v6342 = vsel %vm4382, %v6310, %v5993
        %v6343 = vsel %vm4382, %v6311, %v5995
        %v6344 = vsel %vm4382, %v6312, %v5997
        %v6345 = vsel %vm4382, %v6313, %v5999
        %v6346 = vsel %vm4382, %v6314, %v6001
        %v6347 = vsel %vm4382, %v6315, %v6003
        %v6348 = vsel %vm4382, %v6316, %v6005
        %v6349 = vsel %vm4382, %v6317, %v6007
        %v6350 = vsel %vm4382, %v6318, %v6009
        %v6351 = vsel %vm4382, %v6319, %v6011
        %v6352 = vsel %vm4382, %v6320, %v6013
        %v6353 = vsel %vm4382, %v6321, %v6015
        %v6354 = vsel %vm4382, %v6322, %v6017
        %v6355 = vsel %vm4382, %v6323, %v6019
        %v6356 = vsel %vm4382, %v6324, %v6021
        %v6357 = vsel %vm4382, %v6325, %v6023
        %v6358 = vsel %vm4382, %v6326, %v6025
        %v6359 = vsel %vm4382, %v6327, %v6027
        %v6360 = vsel %vm4382, %v6328, %v6029
        %v6361 = vsel %vm4382, %v6329, %v6031
        %v6362 = vsel %vm4382, %v6330, %v6033
        %v6363 = vsel %vm4382, %v6331, %v6035
        %v6364 = vsel %vm4382, %v6332, %v6037
        %v6365 = vsel %vm4382, %v6333, %v6039
        %v6366 = vsel %vm4382, %v6334, %v6041
        %v6367 = vsel %vm4382, %v6335, %v6043
        %v6368 = vsel %vm4382, %v6336, %v6045
        %v6369 = vsel %vm4382, %v6337, %v6047
        %v6370 = vsel %vm4382, %v6338, %v6049
        %v6371 = vsel %vm4382, %v6339, %v6051
        %v6372 = vsel %vm4384, %v6340, %v6085
        %v6373 = vsel %vm4384, %v6341, %v6087
        %v6374 = vsel %vm4384, %v6342, %v6089
        %v6375 = vsel %vm4384, %v6343, %v6091
        %v6376 = vsel %vm4384, %v6344, %v6093
        %v6377 = vsel %vm4384, %v6345, %v6095
        %v6378 = vsel %vm4384, %v6346, %v6097
        %v6379 = vsel %vm4384, %v6347, %v6099
        %v6380 = vsel %vm4384, %v6348, %v6101
        %v6381 = vsel %vm4384, %v6349, %v6103
        %v6382 = vsel %vm4384, %v6350, %v6105
        %v6383 = vsel %vm4384, %v6351, %v6107
        %v6384 = vsel %vm4384, %v6352, %v6109
        %v6385 = vsel %vm4384, %v6353, %v6111
        %v6386 = vsel %vm4384, %v6354, %v6113
        %v6387 = vsel %vm4384, %v6355, %v6115
        %v6388 = vsel %vm4384, %v6356, %v6117
        %v6389 = vsel %vm4384, %v6357, %v6119
        %v6390 = vsel %vm4384, %v6358, %v6121
        %v6391 = vsel %vm4384, %v6359, %v6123
        %v6392 = vsel %vm4384, %v6360, %v6125
        %v6393 = vsel %vm4384, %v6361, %v6127
        %v6394 = vsel %vm4384, %v6362, %v6129
        %v6395 = vsel %vm4384, %v6363, %v6131
        %v6396 = vsel %vm4384, %v6364, %v6133
        %v6397 = vsel %vm4384, %v6365, %v6135
        %v6398 = vsel %vm4384, %v6366, %v6137
        %v6399 = vsel %vm4384, %v6367, %v6139
        %v6400 = vsel %vm4384, %v6368, %v6141
        %v6401 = vsel %vm4384, %v6369, %v6143
        %v6402 = vsel %vm4384, %v6370, %v6145
        %v6403 = vsel %vm4384, %v6371, %v6147
        %v6404 = vmul.f32 %v6372, 0.0
        %v6405 = vmul.f32 %v5412, %v6373
        %v6406 = vmul.f32 %v5413, %v6374
        %v6407 = vmul.f32 %v5414, %v6375
        %v6408 = vmul.f32 %v5415, %v6376
        %v6409 = vmul.f32 %v5416, %v6377
        %v6410 = vmul.f32 %v5417, %v6378
        %v6411 = vmul.f32 %v5418, %v6379
        %v6412 = vmul.f32 %v6380, 0.0
        %v6413 = vmul.f32 %v5420, %v6381
        %v6414 = vmul.f32 %v5421, %v6382
        %v6415 = vmul.f32 %v5422, %v6383
        %v6416 = vmul.f32 %v5423, %v6384
        %v6417 = vmul.f32 %v5424, %v6385
        %v6418 = vmul.f32 %v5425, %v6386
        %v6419 = vmul.f32 %v5426, %v6387
        %v6420 = vmul.f32 %v6388, 0.0
        %v6421 = vmul.f32 %v5428, %v6389
        %v6422 = vmul.f32 %v5429, %v6390
        %v6423 = vmul.f32 %v5430, %v6391
        %v6424 = vmul.f32 %v5431, %v6392
        %v6425 = vmul.f32 %v5432, %v6393
        %v6426 = vmul.f32 %v5433, %v6394
        %v6427 = vmul.f32 %v5434, %v6395
        %v6428 = vmul.f32 %v6396, 0.0
        %v6429 = vmul.f32 %v5436, %v6397
        %v6430 = vmul.f32 %v5437, %v6398
        %v6431 = vmul.f32 %v5438, %v6399
        %v6432 = vmul.f32 %v5439, %v6400
        %v6433 = vmul.f32 %v5440, %v6401
        %v6434 = vmul.f32 %v5441, %v6402
        %v6435 = vmul.f32 %v5442, %v6403
        %v6436 = vadd.f32 %v6404, 0.0
        %v6437 = vadd.f32 %v6405, 0.0
        %v6438 = vadd.f32 %v6406, 0.0
        %v6439 = vadd.f32 %v6407, 0.0
        %v6440 = vadd.f32 %v6408, 0.0
        %v6441 = vadd.f32 %v6409, 0.0
        %v6442 = vadd.f32 %v6410, 0.0
        %v6443 = vadd.f32 %v6411, 0.0
        %v6444 = vadd.f32 %v6412, 0.0
        %v6445 = vadd.f32 %v6413, 0.0
        %v6446 = vadd.f32 %v6414, 0.0
        %v6447 = vadd.f32 %v6415, 0.0
        %v6448 = vadd.f32 %v6416, 0.0
        %v6449 = vadd.f32 %v6417, 0.0
        %v6450 = vadd.f32 %v6418, 0.0
        %v6451 = vadd.f32 %v6419, 0.0
        %v6452 = vadd.f32 %v6420, 0.0
        %v6453 = vadd.f32 %v6421, 0.0
        %v6454 = vadd.f32 %v6422, 0.0
        %v6455 = vadd.f32 %v6423, 0.0
        %v6456 = vadd.f32 %v6424, 0.0
        %v6457 = vadd.f32 %v6425, 0.0
        %v6458 = vadd.f32 %v6426, 0.0
        %v6459 = vadd.f32 %v6427, 0.0
        %v6460 = vadd.f32 %v6428, 0.0
        %v6461 = vadd.f32 %v6429, 0.0
        %v6462 = vadd.f32 %v6430, 0.0
        %v6463 = vadd.f32 %v6431, 0.0
        %v6464 = vadd.f32 %v6432, 0.0
        %v6465 = vadd.f32 %v6433, 0.0
        %v6466 = vadd.f32 %v6434, 0.0
        %v6467 = vadd.f32 %v6435, 0.0
        %6468 = vrot.lane.b32.xlu0 %v4715, 126
        %v6469 = vpop.permute.xlu0 %6468
        %6470 = vrot.lane.b32.xlu0 %v4716, 126
        %v6471 = vpop.permute.xlu0 %6470
        %6472 = vrot.lane.b32.xlu0 %v4717, 126
        %v6473 = vpop.permute.xlu0 %6472
        %6474 = vrot.lane.b32.xlu0 %v4718, 126
        %v6475 = vpop.permute.xlu0 %6474
        %6476 = vrot.lane.b32.xlu0 %v4719, 126
        %v6477 = vpop.permute.xlu0 %6476
        %6478 = vrot.lane.b32.xlu0 %v4720, 126
        %v6479 = vpop.permute.xlu0 %6478
        %6480 = vrot.lane.b32.xlu0 %v4721, 126
        %v6481 = vpop.permute.xlu0 %6480
        %6482 = vrot.lane.b32.xlu0 %v4722, 126
        %v6483 = vpop.permute.xlu0 %6482
        %6484 = vrot.lane.b32.xlu0 %v4723, 126
        %v6485 = vpop.permute.xlu0 %6484
        %6486 = vrot.lane.b32.xlu0 %v4724, 126
        %v6487 = vpop.permute.xlu0 %6486
        %6488 = vrot.lane.b32.xlu0 %v4725, 126
        %v6489 = vpop.permute.xlu0 %6488
        %6490 = vrot.lane.b32.xlu0 %v4726, 126
        %v6491 = vpop.permute.xlu0 %6490
        %6492 = vrot.lane.b32.xlu0 %v4727, 126
        %v6493 = vpop.permute.xlu0 %6492
        %6494 = vrot.lane.b32.xlu0 %v4728, 126
        %v6495 = vpop.permute.xlu0 %6494
        %6496 = vrot.lane.b32.xlu0 %v4729, 126
        %v6497 = vpop.permute.xlu0 %6496
        %6498 = vrot.lane.b32.xlu0 %v4730, 126
        %v6499 = vpop.permute.xlu0 %6498
        %6500 = vrot.lane.b32.xlu0 %v4731, 126
        %v6501 = vpop.permute.xlu0 %6500
        %6502 = vrot.lane.b32.xlu0 %v4732, 126
        %v6503 = vpop.permute.xlu0 %6502
        %6504 = vrot.lane.b32.xlu0 %v4733, 126
        %v6505 = vpop.permute.xlu0 %6504
        %6506 = vrot.lane.b32.xlu0 %v4734, 126
        %v6507 = vpop.permute.xlu0 %6506
        %6508 = vrot.lane.b32.xlu0 %v4735, 126
        %v6509 = vpop.permute.xlu0 %6508
        %6510 = vrot.lane.b32.xlu0 %v4736, 126
        %v6511 = vpop.permute.xlu0 %6510
        %6512 = vrot.lane.b32.xlu0 %v4737, 126
        %v6513 = vpop.permute.xlu0 %6512
        %6514 = vrot.lane.b32.xlu0 %v4738, 126
        %v6515 = vpop.permute.xlu0 %6514
        %6516 = vrot.lane.b32.xlu0 %v4739, 126
        %v6517 = vpop.permute.xlu0 %6516
        %6518 = vrot.lane.b32.xlu0 %v4740, 126
        %v6519 = vpop.permute.xlu0 %6518
        %6520 = vrot.lane.b32.xlu0 %v4741, 126
        %v6521 = vpop.permute.xlu0 %6520
        %6522 = vrot.lane.b32.xlu0 %v4742, 126
        %v6523 = vpop.permute.xlu0 %6522
        %6524 = vrot.lane.b32.xlu0 %v4743, 126
        %v6525 = vpop.permute.xlu0 %6524
        %6526 = vrot.lane.b32.xlu0 %v4744, 126
        %v6527 = vpop.permute.xlu0 %6526
        %6528 = vrot.lane.b32.xlu0 %v4745, 126
        %v6529 = vpop.permute.xlu0 %6528
        %6530 = vrot.lane.b32.xlu0 %v4746, 126
        %v6531 = vpop.permute.xlu0 %6530
        %v6564 = vsel %vm4373, %v6469, %v4715
        %v6565 = vsel %vm4373, %v6471, %v4716
        %v6566 = vsel %vm4373, %v6473, %v4717
        %v6567 = vsel %vm4373, %v6475, %v4718
        %v6568 = vsel %vm4373, %v6477, %v4719
        %v6569 = vsel %vm4373, %v6479, %v4720
        %v6570 = vsel %vm4373, %v6481, %v4721
        %v6571 = vsel %vm4373, %v6483, %v4722
        %v6572 = vsel %vm4373, %v6485, %v4723
        %v6573 = vsel %vm4373, %v6487, %v4724
        %v6574 = vsel %vm4373, %v6489, %v4725
        %v6575 = vsel %vm4373, %v6491, %v4726
        %v6576 = vsel %vm4373, %v6493, %v4727
        %v6577 = vsel %vm4373, %v6495, %v4728
        %v6578 = vsel %vm4373, %v6497, %v4729
        %v6579 = vsel %vm4373, %v6499, %v4730
        %v6580 = vsel %vm4373, %v6501, %v4731
        %v6581 = vsel %vm4373, %v6503, %v4732
        %v6582 = vsel %vm4373, %v6505, %v4733
        %v6583 = vsel %vm4373, %v6507, %v4734
        %v6584 = vsel %vm4373, %v6509, %v4735
        %v6585 = vsel %vm4373, %v6511, %v4736
        %v6586 = vsel %vm4373, %v6513, %v4737
        %v6587 = vsel %vm4373, %v6515, %v4738
        %v6588 = vsel %vm4373, %v6517, %v4739
        %v6589 = vsel %vm4373, %v6519, %v4740
        %v6590 = vsel %vm4373, %v6521, %v4741
        %v6591 = vsel %vm4373, %v6523, %v4742
        %v6592 = vsel %vm4373, %v6525, %v4743
        %v6593 = vsel %vm4373, %v6527, %v4744
        %v6594 = vsel %vm4373, %v6529, %v4745
        %v6595 = vsel %vm4373, %v6531, %v4746
        %v6596 = vsel %vm4375, %v6564, %v5509
        %v6597 = vsel %vm4375, %v6565, %v5511
        %v6598 = vsel %vm4375, %v6566, %v5513
        %v6599 = vsel %vm4375, %v6567, %v5515
        %v6600 = vsel %vm4375, %v6568, %v5517
        %v6601 = vsel %vm4375, %v6569, %v5519
        %v6602 = vsel %vm4375, %v6570, %v5521
        %v6603 = vsel %vm4375, %v6571, %v5523
        %v6604 = vsel %vm4375, %v6572, %v5525
        %v6605 = vsel %vm4375, %v6573, %v5527
        %v6606 = vsel %vm4375, %v6574, %v5529
        %v6607 = vsel %vm4375, %v6575, %v5531
        %v6608 = vsel %vm4375, %v6576, %v5533
        %v6609 = vsel %vm4375, %v6577, %v5535
        %v6610 = vsel %vm4375, %v6578, %v5537
        %v6611 = vsel %vm4375, %v6579, %v5539
        %v6612 = vsel %vm4375, %v6580, %v5541
        %v6613 = vsel %vm4375, %v6581, %v5543
        %v6614 = vsel %vm4375, %v6582, %v5545
        %v6615 = vsel %vm4375, %v6583, %v5547
        %v6616 = vsel %vm4375, %v6584, %v5549
        %v6617 = vsel %vm4375, %v6585, %v5551
        %v6618 = vsel %vm4375, %v6586, %v5553
        %v6619 = vsel %vm4375, %v6587, %v5555
        %v6620 = vsel %vm4375, %v6588, %v5557
        %v6621 = vsel %vm4375, %v6589, %v5559
        %v6622 = vsel %vm4375, %v6590, %v5561
        %v6623 = vsel %vm4375, %v6591, %v5563
        %v6624 = vsel %vm4375, %v6592, %v5565
        %v6625 = vsel %vm4375, %v6593, %v5567
        %v6626 = vsel %vm4375, %v6594, %v5569
        %v6627 = vsel %vm4375, %v6595, %v5571
        %v6628 = vsel %vm4377, %v6596, %v5605
        %v6629 = vsel %vm4377, %v6597, %v5607
        %v6630 = vsel %vm4377, %v6598, %v5609
        %v6631 = vsel %vm4377, %v6599, %v5611
        %v6632 = vsel %vm4377, %v6600, %v5613
        %v6633 = vsel %vm4377, %v6601, %v5615
        %v6634 = vsel %vm4377, %v6602, %v5617
        %v6635 = vsel %vm4377, %v6603, %v5619
        %v6636 = vsel %vm4377, %v6604, %v5621
        %v6637 = vsel %vm4377, %v6605, %v5623
        %v6638 = vsel %vm4377, %v6606, %v5625
        %v6639 = vsel %vm4377, %v6607, %v5627
        %v6640 = vsel %vm4377, %v6608, %v5629
        %v6641 = vsel %vm4377, %v6609, %v5631
        %v6642 = vsel %vm4377, %v6610, %v5633
        %v6643 = vsel %vm4377, %v6611, %v5635
        %v6644 = vsel %vm4377, %v6612, %v5637
        %v6645 = vsel %vm4377, %v6613, %v5639
        %v6646 = vsel %vm4377, %v6614, %v5641
        %v6647 = vsel %vm4377, %v6615, %v5643
        %v6648 = vsel %vm4377, %v6616, %v5645
        %v6649 = vsel %vm4377, %v6617, %v5647
        %v6650 = vsel %vm4377, %v6618, %v5649
        %v6651 = vsel %vm4377, %v6619, %v5651
        %v6652 = vsel %vm4377, %v6620, %v5653
        %v6653 = vsel %vm4377, %v6621, %v5655
        %v6654 = vsel %vm4377, %v6622, %v5657
        %v6655 = vsel %vm4377, %v6623, %v5659
        %v6656 = vsel %vm4377, %v6624, %v5661
        %v6657 = vsel %vm4377, %v6625, %v5663
        %v6658 = vsel %vm4377, %v6626, %v5665
        %v6659 = vsel %vm4377, %v6627, %v5667
        %v6660 = vsel %vm3803, %v6628, %v5701
        %v6661 = vsel %vm3803, %v6629, %v5703
        %v6662 = vsel %vm3803, %v6630, %v5705
        %v6663 = vsel %vm3803, %v6631, %v5707
        %v6664 = vsel %vm3803, %v6632, %v5709
        %v6665 = vsel %vm3803, %v6633, %v5711
        %v6666 = vsel %vm3803, %v6634, %v5713
        %v6667 = vsel %vm3803, %v6635, %v5715
        %v6668 = vsel %vm3803, %v6636, %v5717
        %v6669 = vsel %vm3803, %v6637, %v5719
        %v6670 = vsel %vm3803, %v6638, %v5721
        %v6671 = vsel %vm3803, %v6639, %v5723
        %v6672 = vsel %vm3803, %v6640, %v5725
        %v6673 = vsel %vm3803, %v6641, %v5727
        %v6674 = vsel %vm3803, %v6642, %v5729
        %v6675 = vsel %vm3803, %v6643, %v5731
        %v6676 = vsel %vm3803, %v6644, %v5733
        %v6677 = vsel %vm3803, %v6645, %v5735
        %v6678 = vsel %vm3803, %v6646, %v5737
        %v6679 = vsel %vm3803, %v6647, %v5739
        %v6680 = vsel %vm3803, %v6648, %v5741
        %v6681 = vsel %vm3803, %v6649, %v5743
        %v6682 = vsel %vm3803, %v6650, %v5745
        %v6683 = vsel %vm3803, %v6651, %v5747
        %v6684 = vsel %vm3803, %v6652, %v5749
        %v6685 = vsel %vm3803, %v6653, %v5751
        %v6686 = vsel %vm3803, %v6654, %v5753
        %v6687 = vsel %vm3803, %v6655, %v5755
        %v6688 = vsel %vm3803, %v6656, %v5757
        %v6689 = vsel %vm3803, %v6657, %v5759
        %v6690 = vsel %vm3803, %v6658, %v5761
        %v6691 = vsel %vm3803, %v6659, %v5763
        %v6692 = vsel %vm4380, %v6660, %v5797
        %v6693 = vsel %vm4380, %v6661, %v5799
        %v6694 = vsel %vm4380, %v6662, %v5801
        %v6695 = vsel %vm4380, %v6663, %v5803
        %v6696 = vsel %vm4380, %v6664, %v5805
        %v6697 = vsel %vm4380, %v6665, %v5807
        %v6698 = vsel %vm4380, %v6666, %v5809
        %v6699 = vsel %vm4380, %v6667, %v5811
        %v6700 = vsel %vm4380, %v6668, %v5813
        %v6701 = vsel %vm4380, %v6669, %v5815
        %v6702 = vsel %vm4380, %v6670, %v5817
        %v6703 = vsel %vm4380, %v6671, %v5819
        %v6704 = vsel %vm4380, %v6672, %v5821
        %v6705 = vsel %vm4380, %v6673, %v5823
        %v6706 = vsel %vm4380, %v6674, %v5825
        %v6707 = vsel %vm4380, %v6675, %v5827
        %v6708 = vsel %vm4380, %v6676, %v5829
        %v6709 = vsel %vm4380, %v6677, %v5831
        %v6710 = vsel %vm4380, %v6678, %v5833
        %v6711 = vsel %vm4380, %v6679, %v5835
        %v6712 = vsel %vm4380, %v6680, %v5837
        %v6713 = vsel %vm4380, %v6681, %v5839
        %v6714 = vsel %vm4380, %v6682, %v5841
        %v6715 = vsel %vm4380, %v6683, %v5843
        %v6716 = vsel %vm4380, %v6684, %v5845
        %v6717 = vsel %vm4380, %v6685, %v5847
        %v6718 = vsel %vm4380, %v6686, %v5849
        %v6719 = vsel %vm4380, %v6687, %v5851
        %v6720 = vsel %vm4380, %v6688, %v5853
        %v6721 = vsel %vm4380, %v6689, %v5855
        %v6722 = vsel %vm4380, %v6690, %v5857
        %v6723 = vsel %vm4380, %v6691, %v5859
        %v6724 = vsel %vm4382, %v6692, %v5893
        %v6725 = vsel %vm4382, %v6693, %v5895
        %v6726 = vsel %vm4382, %v6694, %v5897
        %v6727 = vsel %vm4382, %v6695, %v5899
        %v6728 = vsel %vm4382, %v6696, %v5901
        %v6729 = vsel %vm4382, %v6697, %v5903
        %v6730 = vsel %vm4382, %v6698, %v5905
        %v6731 = vsel %vm4382, %v6699, %v5907
        %v6732 = vsel %vm4382, %v6700, %v5909
        %v6733 = vsel %vm4382, %v6701, %v5911
        %v6734 = vsel %vm4382, %v6702, %v5913
        %v6735 = vsel %vm4382, %v6703, %v5915
        %v6736 = vsel %vm4382, %v6704, %v5917
        %v6737 = vsel %vm4382, %v6705, %v5919
        %v6738 = vsel %vm4382, %v6706, %v5921
        %v6739 = vsel %vm4382, %v6707, %v5923
        %v6740 = vsel %vm4382, %v6708, %v5925
        %v6741 = vsel %vm4382, %v6709, %v5927
        %v6742 = vsel %vm4382, %v6710, %v5929
        %v6743 = vsel %vm4382, %v6711, %v5931
        %v6744 = vsel %vm4382, %v6712, %v5933
        %v6745 = vsel %vm4382, %v6713, %v5935
        %v6746 = vsel %vm4382, %v6714, %v5937
        %v6747 = vsel %vm4382, %v6715, %v5939
        %v6748 = vsel %vm4382, %v6716, %v5941
        %v6749 = vsel %vm4382, %v6717, %v5943
        %v6750 = vsel %vm4382, %v6718, %v5945
        %v6751 = vsel %vm4382, %v6719, %v5947
        %v6752 = vsel %vm4382, %v6720, %v5949
        %v6753 = vsel %vm4382, %v6721, %v5951
        %v6754 = vsel %vm4382, %v6722, %v5953
        %v6755 = vsel %vm4382, %v6723, %v5955
        %v6756 = vsel %vm4384, %v6724, %v5989
        %v6757 = vsel %vm4384, %v6725, %v5991
        %v6758 = vsel %vm4384, %v6726, %v5993
        %v6759 = vsel %vm4384, %v6727, %v5995
        %v6760 = vsel %vm4384, %v6728, %v5997
        %v6761 = vsel %vm4384, %v6729, %v5999
        %v6762 = vsel %vm4384, %v6730, %v6001
        %v6763 = vsel %vm4384, %v6731, %v6003
        %v6764 = vsel %vm4384, %v6732, %v6005
        %v6765 = vsel %vm4384, %v6733, %v6007
        %v6766 = vsel %vm4384, %v6734, %v6009
        %v6767 = vsel %vm4384, %v6735, %v6011
        %v6768 = vsel %vm4384, %v6736, %v6013
        %v6769 = vsel %vm4384, %v6737, %v6015
        %v6770 = vsel %vm4384, %v6738, %v6017
        %v6771 = vsel %vm4384, %v6739, %v6019
        %v6772 = vsel %vm4384, %v6740, %v6021
        %v6773 = vsel %vm4384, %v6741, %v6023
        %v6774 = vsel %vm4384, %v6742, %v6025
        %v6775 = vsel %vm4384, %v6743, %v6027
        %v6776 = vsel %vm4384, %v6744, %v6029
        %v6777 = vsel %vm4384, %v6745, %v6031
        %v6778 = vsel %vm4384, %v6746, %v6033
        %v6779 = vsel %vm4384, %v6747, %v6035
        %v6780 = vsel %vm4384, %v6748, %v6037
        %v6781 = vsel %vm4384, %v6749, %v6039
        %v6782 = vsel %vm4384, %v6750, %v6041
        %v6783 = vsel %vm4384, %v6751, %v6043
        %v6784 = vsel %vm4384, %v6752, %v6045
        %v6785 = vsel %vm4384, %v6753, %v6047
        %v6786 = vsel %vm4384, %v6754, %v6049
        %v6787 = vsel %vm4384, %v6755, %v6051
        %v6844 = vrot.slane %v5412, 1
        %v6845 = vrot.slane %v5444, 1
        %v6846 = vsel %vm810, %v6844, %v6845
        %v6847 = vrot.slane %v5413, 1
        %v6848 = vrot.slane %v5445, 1
        %v6849 = vsel %vm810, %v6847, %v6848
        %v6850 = vrot.slane %v5414, 1
        %v6851 = vrot.slane %v5446, 1
        %v6852 = vsel %vm810, %v6850, %v6851
        %v6853 = vrot.slane %v5415, 1
        %v6854 = vrot.slane %v5447, 1
        %v6855 = vsel %vm810, %v6853, %v6854
        %v6856 = vrot.slane %v5416, 1
        %v6857 = vrot.slane %v5448, 1
        %v6858 = vsel %vm810, %v6856, %v6857
        %v6859 = vrot.slane %v5417, 1
        %v6860 = vrot.slane %v5449, 1
        %v6861 = vsel %vm810, %v6859, %v6860
        %v6862 = vrot.slane %v5418, 1
        %v6863 = vrot.slane %v5450, 1
        %v6864 = vsel %vm810, %v6862, %v6863
        %v6865 = vrot.slane %v5420, 1
        %v6866 = vrot.slane %v5452, 1
        %v6867 = vsel %vm810, %v6865, %v6866
        %v6868 = vrot.slane %v5421, 1
        %v6869 = vrot.slane %v5453, 1
        %v6870 = vsel %vm810, %v6868, %v6869
        %v6871 = vrot.slane %v5422, 1
        %v6872 = vrot.slane %v5454, 1
        %v6873 = vsel %vm810, %v6871, %v6872
        %v6874 = vrot.slane %v5423, 1
        %v6875 = vrot.slane %v5455, 1
        %v6876 = vsel %vm810, %v6874, %v6875
        %v6877 = vrot.slane %v5424, 1
        %v6878 = vrot.slane %v5456, 1
        %v6879 = vsel %vm810, %v6877, %v6878
        %v6880 = vrot.slane %v5425, 1
        %v6881 = vrot.slane %v5457, 1
        %v6882 = vsel %vm810, %v6880, %v6881
        %v6883 = vrot.slane %v5426, 1
        %v6884 = vrot.slane %v5458, 1
        %v6885 = vsel %vm810, %v6883, %v6884
        %v6886 = vrot.slane %v5428, 1
        %v6887 = vrot.slane %v5460, 1
        %v6888 = vsel %vm810, %v6886, %v6887
        %v6889 = vrot.slane %v5429, 1
        %v6890 = vrot.slane %v5461, 1
        %v6891 = vsel %vm810, %v6889, %v6890
        %v6892 = vrot.slane %v5430, 1
        %v6893 = vrot.slane %v5462, 1
        %v6894 = vsel %vm810, %v6892, %v6893
        %v6895 = vrot.slane %v5431, 1
        %v6896 = vrot.slane %v5463, 1
        %v6897 = vsel %vm810, %v6895, %v6896
        %v6898 = vrot.slane %v5432, 1
        %v6899 = vrot.slane %v5464, 1
        %v6900 = vsel %vm810, %v6898, %v6899
        %v6901 = vrot.slane %v5433, 1
        %v6902 = vrot.slane %v5465, 1
        %v6903 = vsel %vm810, %v6901, %v6902
        %v6904 = vrot.slane %v5434, 1
        %v6905 = vrot.slane %v5466, 1
        %v6906 = vsel %vm810, %v6904, %v6905
        %v6907 = vrot.slane %v5436, 1
        %v6908 = vrot.slane %v5468, 1
        %v6909 = vsel %vm810, %v6907, %v6908
        %v6910 = vrot.slane %v5437, 1
        %v6911 = vrot.slane %v5469, 1
        %v6912 = vsel %vm810, %v6910, %v6911
        %v6913 = vrot.slane %v5438, 1
        %v6914 = vrot.slane %v5470, 1
        %v6915 = vsel %vm810, %v6913, %v6914
        %v6916 = vrot.slane %v5439, 1
        %v6917 = vrot.slane %v5471, 1
        %v6918 = vsel %vm810, %v6916, %v6917
        %v6919 = vrot.slane %v5440, 1
        %v6920 = vrot.slane %v5472, 1
        %v6921 = vsel %vm810, %v6919, %v6920
        %v6922 = vrot.slane %v5441, 1
        %v6923 = vrot.slane %v5473, 1
        %v6924 = vsel %vm810, %v6922, %v6923
        %v6925 = vrot.slane %v5442, 1
        %v6926 = vrot.slane %v5474, 1
        %v6927 = vsel %vm810, %v6925, %v6926
        %v6957 = vmul.f32 %v812, %v6756
        %v6958 = vmul.f32 %v6846, %v6757
        %v6959 = vmul.f32 %v6849, %v6758
        %v6960 = vmul.f32 %v6852, %v6759
        %v6961 = vmul.f32 %v6855, %v6760
        %v6962 = vmul.f32 %v6858, %v6761
        %v6963 = vmul.f32 %v6861, %v6762
        %v6964 = vmul.f32 %v6864, %v6763
        %v6965 = vmul.f32 %v812, %v6764
        %v6966 = vmul.f32 %v6867, %v6765
        %v6967 = vmul.f32 %v6870, %v6766
        %v6968 = vmul.f32 %v6873, %v6767
        %v6969 = vmul.f32 %v6876, %v6768
        %v6970 = vmul.f32 %v6879, %v6769
        %v6971 = vmul.f32 %v6882, %v6770
        %v6972 = vmul.f32 %v6885, %v6771
        %v6973 = vmul.f32 %v812, %v6772
        %v6974 = vmul.f32 %v6888, %v6773
        %v6975 = vmul.f32 %v6891, %v6774
        %v6976 = vmul.f32 %v6894, %v6775
        %v6977 = vmul.f32 %v6897, %v6776
        %v6978 = vmul.f32 %v6900, %v6777
        %v6979 = vmul.f32 %v6903, %v6778
        %v6980 = vmul.f32 %v6906, %v6779
        %v6981 = vmul.f32 %v812, %v6780
        %v6982 = vmul.f32 %v6909, %v6781
        %v6983 = vmul.f32 %v6912, %v6782
        %v6984 = vmul.f32 %v6915, %v6783
        %v6985 = vmul.f32 %v6918, %v6784
        %v6986 = vmul.f32 %v6921, %v6785
        %v6987 = vmul.f32 %v6924, %v6786
        %v6988 = vmul.f32 %v6927, %v6787
        %v6989 = vadd.f32 %v6436, %v6957
        %v6990 = vadd.f32 %v6437, %v6958
        %v6991 = vadd.f32 %v6438, %v6959
        %v6992 = vadd.f32 %v6439, %v6960
        %v6993 = vadd.f32 %v6440, %v6961
        %v6994 = vadd.f32 %v6441, %v6962
        %v6995 = vadd.f32 %v6442, %v6963
        %v6996 = vadd.f32 %v6443, %v6964
        %v6997 = vadd.f32 %v6444, %v6965
        %v6998 = vadd.f32 %v6445, %v6966
        %v6999 = vadd.f32 %v6446, %v6967
        %v7000 = vadd.f32 %v6447, %v6968
        %v7001 = vadd.f32 %v6448, %v6969
        %v7002 = vadd.f32 %v6449, %v6970
        %v7003 = vadd.f32 %v6450, %v6971
        %v7004 = vadd.f32 %v6451, %v6972
        %v7005 = vadd.f32 %v6452, %v6973
        %v7006 = vadd.f32 %v6453, %v6974
        %v7007 = vadd.f32 %v6454, %v6975
        %v7008 = vadd.f32 %v6455, %v6976
        %v7009 = vadd.f32 %v6456, %v6977
        %v7010 = vadd.f32 %v6457, %v6978
        %v7011 = vadd.f32 %v6458, %v6979
        %v7012 = vadd.f32 %v6459, %v6980
        %v7013 = vadd.f32 %v6460, %v6981
        %v7014 = vadd.f32 %v6461, %v6982
        %v7015 = vadd.f32 %v6462, %v6983
        %v7016 = vadd.f32 %v6463, %v6984
        %v7017 = vadd.f32 %v6464, %v6985
        %v7018 = vadd.f32 %v6465, %v6986
        %v7019 = vadd.f32 %v6466, %v6987
        %v7020 = vadd.f32 %v6467, %v6988
        %7021 = vrot.lane.b32.xlu0 %v4715, 124
        %v7022 = vpop.permute.xlu0 %7021
        %7023 = vrot.lane.b32.xlu0 %v4716, 124
        %v7024 = vpop.permute.xlu0 %7023
        %7025 = vrot.lane.b32.xlu0 %v4717, 124
        %v7026 = vpop.permute.xlu0 %7025
        %7027 = vrot.lane.b32.xlu0 %v4718, 124
        %v7028 = vpop.permute.xlu0 %7027
        %7029 = vrot.lane.b32.xlu0 %v4719, 124
        %v7030 = vpop.permute.xlu0 %7029
        %7031 = vrot.lane.b32.xlu0 %v4720, 124
        %v7032 = vpop.permute.xlu0 %7031
        %7033 = vrot.lane.b32.xlu0 %v4721, 124
        %v7034 = vpop.permute.xlu0 %7033
        %7035 = vrot.lane.b32.xlu0 %v4722, 124
        %v7036 = vpop.permute.xlu0 %7035
        %7037 = vrot.lane.b32.xlu0 %v4723, 124
        %v7038 = vpop.permute.xlu0 %7037
        %7039 = vrot.lane.b32.xlu0 %v4724, 124
        %v7040 = vpop.permute.xlu0 %7039
        %7041 = vrot.lane.b32.xlu0 %v4725, 124
        %v7042 = vpop.permute.xlu0 %7041
        %7043 = vrot.lane.b32.xlu0 %v4726, 124
        %v7044 = vpop.permute.xlu0 %7043
        %7045 = vrot.lane.b32.xlu0 %v4727, 124
        %v7046 = vpop.permute.xlu0 %7045
        %7047 = vrot.lane.b32.xlu0 %v4728, 124
        %v7048 = vpop.permute.xlu0 %7047
        %7049 = vrot.lane.b32.xlu0 %v4729, 124
        %v7050 = vpop.permute.xlu0 %7049
        %7051 = vrot.lane.b32.xlu0 %v4730, 124
        %v7052 = vpop.permute.xlu0 %7051
        %7053 = vrot.lane.b32.xlu0 %v4731, 124
        %v7054 = vpop.permute.xlu0 %7053
        %7055 = vrot.lane.b32.xlu0 %v4732, 124
        %v7056 = vpop.permute.xlu0 %7055
        %7057 = vrot.lane.b32.xlu0 %v4733, 124
        %v7058 = vpop.permute.xlu0 %7057
        %7059 = vrot.lane.b32.xlu0 %v4734, 124
        %v7060 = vpop.permute.xlu0 %7059
        %7061 = vrot.lane.b32.xlu0 %v4735, 124
        %v7062 = vpop.permute.xlu0 %7061
        %7063 = vrot.lane.b32.xlu0 %v4736, 124
        %v7064 = vpop.permute.xlu0 %7063
        %7065 = vrot.lane.b32.xlu0 %v4737, 124
        %v7066 = vpop.permute.xlu0 %7065
        %7067 = vrot.lane.b32.xlu0 %v4738, 124
        %v7068 = vpop.permute.xlu0 %7067
        %7069 = vrot.lane.b32.xlu0 %v4739, 124
        %v7070 = vpop.permute.xlu0 %7069
        %7071 = vrot.lane.b32.xlu0 %v4740, 124
        %v7072 = vpop.permute.xlu0 %7071
        %7073 = vrot.lane.b32.xlu0 %v4741, 124
        %v7074 = vpop.permute.xlu0 %7073
        %7075 = vrot.lane.b32.xlu0 %v4742, 124
        %v7076 = vpop.permute.xlu0 %7075
        %7077 = vrot.lane.b32.xlu0 %v4743, 124
        %v7078 = vpop.permute.xlu0 %7077
        %7079 = vrot.lane.b32.xlu0 %v4744, 124
        %v7080 = vpop.permute.xlu0 %7079
        %7081 = vrot.lane.b32.xlu0 %v4745, 124
        %v7082 = vpop.permute.xlu0 %7081
        %7083 = vrot.lane.b32.xlu0 %v4746, 124
        %v7084 = vpop.permute.xlu0 %7083
        %v7117 = vsel %vm4373, %v7022, %v6469
        %v7118 = vsel %vm4373, %v7024, %v6471
        %v7119 = vsel %vm4373, %v7026, %v6473
        %v7120 = vsel %vm4373, %v7028, %v6475
        %v7121 = vsel %vm4373, %v7030, %v6477
        %v7122 = vsel %vm4373, %v7032, %v6479
        %v7123 = vsel %vm4373, %v7034, %v6481
        %v7124 = vsel %vm4373, %v7036, %v6483
        %v7125 = vsel %vm4373, %v7038, %v6485
        %v7126 = vsel %vm4373, %v7040, %v6487
        %v7127 = vsel %vm4373, %v7042, %v6489
        %v7128 = vsel %vm4373, %v7044, %v6491
        %v7129 = vsel %vm4373, %v7046, %v6493
        %v7130 = vsel %vm4373, %v7048, %v6495
        %v7131 = vsel %vm4373, %v7050, %v6497
        %v7132 = vsel %vm4373, %v7052, %v6499
        %v7133 = vsel %vm4373, %v7054, %v6501
        %v7134 = vsel %vm4373, %v7056, %v6503
        %v7135 = vsel %vm4373, %v7058, %v6505
        %v7136 = vsel %vm4373, %v7060, %v6507
        %v7137 = vsel %vm4373, %v7062, %v6509
        %v7138 = vsel %vm4373, %v7064, %v6511
        %v7139 = vsel %vm4373, %v7066, %v6513
        %v7140 = vsel %vm4373, %v7068, %v6515
        %v7141 = vsel %vm4373, %v7070, %v6517
        %v7142 = vsel %vm4373, %v7072, %v6519
        %v7143 = vsel %vm4373, %v7074, %v6521
        %v7144 = vsel %vm4373, %v7076, %v6523
        %v7145 = vsel %vm4373, %v7078, %v6525
        %v7146 = vsel %vm4373, %v7080, %v6527
        %v7147 = vsel %vm4373, %v7082, %v6529
        %v7148 = vsel %vm4373, %v7084, %v6531
        %v7149 = vsel %vm4375, %v7117, %v4715
        %v7150 = vsel %vm4375, %v7118, %v4716
        %v7151 = vsel %vm4375, %v7119, %v4717
        %v7152 = vsel %vm4375, %v7120, %v4718
        %v7153 = vsel %vm4375, %v7121, %v4719
        %v7154 = vsel %vm4375, %v7122, %v4720
        %v7155 = vsel %vm4375, %v7123, %v4721
        %v7156 = vsel %vm4375, %v7124, %v4722
        %v7157 = vsel %vm4375, %v7125, %v4723
        %v7158 = vsel %vm4375, %v7126, %v4724
        %v7159 = vsel %vm4375, %v7127, %v4725
        %v7160 = vsel %vm4375, %v7128, %v4726
        %v7161 = vsel %vm4375, %v7129, %v4727
        %v7162 = vsel %vm4375, %v7130, %v4728
        %v7163 = vsel %vm4375, %v7131, %v4729
        %v7164 = vsel %vm4375, %v7132, %v4730
        %v7165 = vsel %vm4375, %v7133, %v4731
        %v7166 = vsel %vm4375, %v7134, %v4732
        %v7167 = vsel %vm4375, %v7135, %v4733
        %v7168 = vsel %vm4375, %v7136, %v4734
        %v7169 = vsel %vm4375, %v7137, %v4735
        %v7170 = vsel %vm4375, %v7138, %v4736
        %v7171 = vsel %vm4375, %v7139, %v4737
        %v7172 = vsel %vm4375, %v7140, %v4738
        %v7173 = vsel %vm4375, %v7141, %v4739
        %v7174 = vsel %vm4375, %v7142, %v4740
        %v7175 = vsel %vm4375, %v7143, %v4741
        %v7176 = vsel %vm4375, %v7144, %v4742
        %v7177 = vsel %vm4375, %v7145, %v4743
        %v7178 = vsel %vm4375, %v7146, %v4744
        %v7179 = vsel %vm4375, %v7147, %v4745
        %v7180 = vsel %vm4375, %v7148, %v4746
        %v7181 = vsel %vm4377, %v7149, %v5509
        %v7182 = vsel %vm4377, %v7150, %v5511
        %v7183 = vsel %vm4377, %v7151, %v5513
        %v7184 = vsel %vm4377, %v7152, %v5515
        %v7185 = vsel %vm4377, %v7153, %v5517
        %v7186 = vsel %vm4377, %v7154, %v5519
        %v7187 = vsel %vm4377, %v7155, %v5521
        %v7188 = vsel %vm4377, %v7156, %v5523
        %v7189 = vsel %vm4377, %v7157, %v5525
        %v7190 = vsel %vm4377, %v7158, %v5527
        %v7191 = vsel %vm4377, %v7159, %v5529
        %v7192 = vsel %vm4377, %v7160, %v5531
        %v7193 = vsel %vm4377, %v7161, %v5533
        %v7194 = vsel %vm4377, %v7162, %v5535
        %v7195 = vsel %vm4377, %v7163, %v5537
        %v7196 = vsel %vm4377, %v7164, %v5539
        %v7197 = vsel %vm4377, %v7165, %v5541
        %v7198 = vsel %vm4377, %v7166, %v5543
        %v7199 = vsel %vm4377, %v7167, %v5545
        %v7200 = vsel %vm4377, %v7168, %v5547
        %v7201 = vsel %vm4377, %v7169, %v5549
        %v7202 = vsel %vm4377, %v7170, %v5551
        %v7203 = vsel %vm4377, %v7171, %v5553
        %v7204 = vsel %vm4377, %v7172, %v5555
        %v7205 = vsel %vm4377, %v7173, %v5557
        %v7206 = vsel %vm4377, %v7174, %v5559
        %v7207 = vsel %vm4377, %v7175, %v5561
        %v7208 = vsel %vm4377, %v7176, %v5563
        %v7209 = vsel %vm4377, %v7177, %v5565
        %v7210 = vsel %vm4377, %v7178, %v5567
        %v7211 = vsel %vm4377, %v7179, %v5569
        %v7212 = vsel %vm4377, %v7180, %v5571
        %v7213 = vsel %vm3803, %v7181, %v5605
        %v7214 = vsel %vm3803, %v7182, %v5607
        %v7215 = vsel %vm3803, %v7183, %v5609
        %v7216 = vsel %vm3803, %v7184, %v5611
        %v7217 = vsel %vm3803, %v7185, %v5613
        %v7218 = vsel %vm3803, %v7186, %v5615
        %v7219 = vsel %vm3803, %v7187, %v5617
        %v7220 = vsel %vm3803, %v7188, %v5619
        %v7221 = vsel %vm3803, %v7189, %v5621
        %v7222 = vsel %vm3803, %v7190, %v5623
        %v7223 = vsel %vm3803, %v7191, %v5625
        %v7224 = vsel %vm3803, %v7192, %v5627
        %v7225 = vsel %vm3803, %v7193, %v5629
        %v7226 = vsel %vm3803, %v7194, %v5631
        %v7227 = vsel %vm3803, %v7195, %v5633
        %v7228 = vsel %vm3803, %v7196, %v5635
        %v7229 = vsel %vm3803, %v7197, %v5637
        %v7230 = vsel %vm3803, %v7198, %v5639
        %v7231 = vsel %vm3803, %v7199, %v5641
        %v7232 = vsel %vm3803, %v7200, %v5643
        %v7233 = vsel %vm3803, %v7201, %v5645
        %v7234 = vsel %vm3803, %v7202, %v5647
        %v7235 = vsel %vm3803, %v7203, %v5649
        %v7236 = vsel %vm3803, %v7204, %v5651
        %v7237 = vsel %vm3803, %v7205, %v5653
        %v7238 = vsel %vm3803, %v7206, %v5655
        %v7239 = vsel %vm3803, %v7207, %v5657
        %v7240 = vsel %vm3803, %v7208, %v5659
        %v7241 = vsel %vm3803, %v7209, %v5661
        %v7242 = vsel %vm3803, %v7210, %v5663
        %v7243 = vsel %vm3803, %v7211, %v5665
        %v7244 = vsel %vm3803, %v7212, %v5667
        %v7245 = vsel %vm4380, %v7213, %v5701
        %v7246 = vsel %vm4380, %v7214, %v5703
        %v7247 = vsel %vm4380, %v7215, %v5705
        %v7248 = vsel %vm4380, %v7216, %v5707
        %v7249 = vsel %vm4380, %v7217, %v5709
        %v7250 = vsel %vm4380, %v7218, %v5711
        %v7251 = vsel %vm4380, %v7219, %v5713
        %v7252 = vsel %vm4380, %v7220, %v5715
        %v7253 = vsel %vm4380, %v7221, %v5717
        %v7254 = vsel %vm4380, %v7222, %v5719
        %v7255 = vsel %vm4380, %v7223, %v5721
        %v7256 = vsel %vm4380, %v7224, %v5723
        %v7257 = vsel %vm4380, %v7225, %v5725
        %v7258 = vsel %vm4380, %v7226, %v5727
        %v7259 = vsel %vm4380, %v7227, %v5729
        %v7260 = vsel %vm4380, %v7228, %v5731
        %v7261 = vsel %vm4380, %v7229, %v5733
        %v7262 = vsel %vm4380, %v7230, %v5735
        %v7263 = vsel %vm4380, %v7231, %v5737
        %v7264 = vsel %vm4380, %v7232, %v5739
        %v7265 = vsel %vm4380, %v7233, %v5741
        %v7266 = vsel %vm4380, %v7234, %v5743
        %v7267 = vsel %vm4380, %v7235, %v5745
        %v7268 = vsel %vm4380, %v7236, %v5747
        %v7269 = vsel %vm4380, %v7237, %v5749
        %v7270 = vsel %vm4380, %v7238, %v5751
        %v7271 = vsel %vm4380, %v7239, %v5753
        %v7272 = vsel %vm4380, %v7240, %v5755
        %v7273 = vsel %vm4380, %v7241, %v5757
        %v7274 = vsel %vm4380, %v7242, %v5759
        %v7275 = vsel %vm4380, %v7243, %v5761
        %v7276 = vsel %vm4380, %v7244, %v5763
        %v7277 = vsel %vm4382, %v7245, %v5797
        %v7278 = vsel %vm4382, %v7246, %v5799
        %v7279 = vsel %vm4382, %v7247, %v5801
        %v7280 = vsel %vm4382, %v7248, %v5803
        %v7281 = vsel %vm4382, %v7249, %v5805
        %v7282 = vsel %vm4382, %v7250, %v5807
        %v7283 = vsel %vm4382, %v7251, %v5809
        %v7284 = vsel %vm4382, %v7252, %v5811
        %v7285 = vsel %vm4382, %v7253, %v5813
        %v7286 = vsel %vm4382, %v7254, %v5815
        %v7287 = vsel %vm4382, %v7255, %v5817
        %v7288 = vsel %vm4382, %v7256, %v5819
        %v7289 = vsel %vm4382, %v7257, %v5821
        %v7290 = vsel %vm4382, %v7258, %v5823
        %v7291 = vsel %vm4382, %v7259, %v5825
        %v7292 = vsel %vm4382, %v7260, %v5827
        %v7293 = vsel %vm4382, %v7261, %v5829
        %v7294 = vsel %vm4382, %v7262, %v5831
        %v7295 = vsel %vm4382, %v7263, %v5833
        %v7296 = vsel %vm4382, %v7264, %v5835
        %v7297 = vsel %vm4382, %v7265, %v5837
        %v7298 = vsel %vm4382, %v7266, %v5839
        %v7299 = vsel %vm4382, %v7267, %v5841
        %v7300 = vsel %vm4382, %v7268, %v5843
        %v7301 = vsel %vm4382, %v7269, %v5845
        %v7302 = vsel %vm4382, %v7270, %v5847
        %v7303 = vsel %vm4382, %v7271, %v5849
        %v7304 = vsel %vm4382, %v7272, %v5851
        %v7305 = vsel %vm4382, %v7273, %v5853
        %v7306 = vsel %vm4382, %v7274, %v5855
        %v7307 = vsel %vm4382, %v7275, %v5857
        %v7308 = vsel %vm4382, %v7276, %v5859
        %v7309 = vsel %vm4384, %v7277, %v5893
        %v7310 = vsel %vm4384, %v7278, %v5895
        %v7311 = vsel %vm4384, %v7279, %v5897
        %v7312 = vsel %vm4384, %v7280, %v5899
        %v7313 = vsel %vm4384, %v7281, %v5901
        %v7314 = vsel %vm4384, %v7282, %v5903
        %v7315 = vsel %vm4384, %v7283, %v5905
        %v7316 = vsel %vm4384, %v7284, %v5907
        %v7317 = vsel %vm4384, %v7285, %v5909
        %v7318 = vsel %vm4384, %v7286, %v5911
        %v7319 = vsel %vm4384, %v7287, %v5913
        %v7320 = vsel %vm4384, %v7288, %v5915
        %v7321 = vsel %vm4384, %v7289, %v5917
        %v7322 = vsel %vm4384, %v7290, %v5919
        %v7323 = vsel %vm4384, %v7291, %v5921
        %v7324 = vsel %vm4384, %v7292, %v5923
        %v7325 = vsel %vm4384, %v7293, %v5925
        %v7326 = vsel %vm4384, %v7294, %v5927
        %v7327 = vsel %vm4384, %v7295, %v5929
        %v7328 = vsel %vm4384, %v7296, %v5931
        %v7329 = vsel %vm4384, %v7297, %v5933
        %v7330 = vsel %vm4384, %v7298, %v5935
        %v7331 = vsel %vm4384, %v7299, %v5937
        %v7332 = vsel %vm4384, %v7300, %v5939
        %v7333 = vsel %vm4384, %v7301, %v5941
        %v7334 = vsel %vm4384, %v7302, %v5943
        %v7335 = vsel %vm4384, %v7303, %v5945
        %v7336 = vsel %vm4384, %v7304, %v5947
        %v7337 = vsel %vm4384, %v7305, %v5949
        %v7338 = vsel %vm4384, %v7306, %v5951
        %v7339 = vsel %vm4384, %v7307, %v5953
        %v7340 = vsel %vm4384, %v7308, %v5955
        %v7341 = vrot.slane %v5412, 2
        %v7342 = vrot.slane %v5444, 2
        %v7343 = vsel %vm876, %v7341, %v7342
        %v7344 = vrot.slane %v5413, 2
        %v7345 = vrot.slane %v5445, 2
        %v7346 = vsel %vm876, %v7344, %v7345
        %v7347 = vrot.slane %v5414, 2
        %v7348 = vrot.slane %v5446, 2
        %v7349 = vsel %vm876, %v7347, %v7348
        %v7350 = vrot.slane %v5415, 2
        %v7351 = vrot.slane %v5447, 2
        %v7352 = vsel %vm876, %v7350, %v7351
        %v7353 = vrot.slane %v5416, 2
        %v7354 = vrot.slane %v5448, 2
        %v7355 = vsel %vm876, %v7353, %v7354
        %v7356 = vrot.slane %v5417, 2
        %v7357 = vrot.slane %v5449, 2
        %v7358 = vsel %vm876, %v7356, %v7357
        %v7359 = vrot.slane %v5418, 2
        %v7360 = vrot.slane %v5450, 2
        %v7361 = vsel %vm876, %v7359, %v7360
        %v7362 = vrot.slane %v5420, 2
        %v7363 = vrot.slane %v5452, 2
        %v7364 = vsel %vm876, %v7362, %v7363
        %v7365 = vrot.slane %v5421, 2
        %v7366 = vrot.slane %v5453, 2
        %v7367 = vsel %vm876, %v7365, %v7366
        %v7368 = vrot.slane %v5422, 2
        %v7369 = vrot.slane %v5454, 2
        %v7370 = vsel %vm876, %v7368, %v7369
        %v7371 = vrot.slane %v5423, 2
        %v7372 = vrot.slane %v5455, 2
        %v7373 = vsel %vm876, %v7371, %v7372
        %v7374 = vrot.slane %v5424, 2
        %v7375 = vrot.slane %v5456, 2
        %v7376 = vsel %vm876, %v7374, %v7375
        %v7377 = vrot.slane %v5425, 2
        %v7378 = vrot.slane %v5457, 2
        %v7379 = vsel %vm876, %v7377, %v7378
        %v7380 = vrot.slane %v5426, 2
        %v7381 = vrot.slane %v5458, 2
        %v7382 = vsel %vm876, %v7380, %v7381
        %v7383 = vrot.slane %v5428, 2
        %v7384 = vrot.slane %v5460, 2
        %v7385 = vsel %vm876, %v7383, %v7384
        %v7386 = vrot.slane %v5429, 2
        %v7387 = vrot.slane %v5461, 2
        %v7388 = vsel %vm876, %v7386, %v7387
        %v7389 = vrot.slane %v5430, 2
        %v7390 = vrot.slane %v5462, 2
        %v7391 = vsel %vm876, %v7389, %v7390
        %v7392 = vrot.slane %v5431, 2
        %v7393 = vrot.slane %v5463, 2
        %v7394 = vsel %vm876, %v7392, %v7393
        %v7395 = vrot.slane %v5432, 2
        %v7396 = vrot.slane %v5464, 2
        %v7397 = vsel %vm876, %v7395, %v7396
        %v7398 = vrot.slane %v5433, 2
        %v7399 = vrot.slane %v5465, 2
        %v7400 = vsel %vm876, %v7398, %v7399
        %v7401 = vrot.slane %v5434, 2
        %v7402 = vrot.slane %v5466, 2
        %v7403 = vsel %vm876, %v7401, %v7402
        %v7404 = vrot.slane %v5436, 2
        %v7405 = vrot.slane %v5468, 2
        %v7406 = vsel %vm876, %v7404, %v7405
        %v7407 = vrot.slane %v5437, 2
        %v7408 = vrot.slane %v5469, 2
        %v7409 = vsel %vm876, %v7407, %v7408
        %v7410 = vrot.slane %v5438, 2
        %v7411 = vrot.slane %v5470, 2
        %v7412 = vsel %vm876, %v7410, %v7411
        %v7413 = vrot.slane %v5439, 2
        %v7414 = vrot.slane %v5471, 2
        %v7415 = vsel %vm876, %v7413, %v7414
        %v7416 = vrot.slane %v5440, 2
        %v7417 = vrot.slane %v5472, 2
        %v7418 = vsel %vm876, %v7416, %v7417
        %v7419 = vrot.slane %v5441, 2
        %v7420 = vrot.slane %v5473, 2
        %v7421 = vsel %vm876, %v7419, %v7420
        %v7422 = vrot.slane %v5442, 2
        %v7423 = vrot.slane %v5474, 2
        %v7424 = vsel %vm876, %v7422, %v7423
        %v7454 = vmul.f32 %v878, %v7309
        %v7455 = vmul.f32 %v7343, %v7310
        %v7456 = vmul.f32 %v7346, %v7311
        %v7457 = vmul.f32 %v7349, %v7312
        %v7458 = vmul.f32 %v7352, %v7313
        %v7459 = vmul.f32 %v7355, %v7314
        %v7460 = vmul.f32 %v7358, %v7315
        %v7461 = vmul.f32 %v7361, %v7316
        %v7462 = vmul.f32 %v878, %v7317
        %v7463 = vmul.f32 %v7364, %v7318
        %v7464 = vmul.f32 %v7367, %v7319
        %v7465 = vmul.f32 %v7370, %v7320
        %v7466 = vmul.f32 %v7373, %v7321
        %v7467 = vmul.f32 %v7376, %v7322
        %v7468 = vmul.f32 %v7379, %v7323
        %v7469 = vmul.f32 %v7382, %v7324
        %v7470 = vmul.f32 %v878, %v7325
        %v7471 = vmul.f32 %v7385, %v7326
        %v7472 = vmul.f32 %v7388, %v7327
        %v7473 = vmul.f32 %v7391, %v7328
        %v7474 = vmul.f32 %v7394, %v7329
        %v7475 = vmul.f32 %v7397, %v7330
        %v7476 = vmul.f32 %v7400, %v7331
        %v7477 = vmul.f32 %v7403, %v7332
        %v7478 = vmul.f32 %v878, %v7333
        %v7479 = vmul.f32 %v7406, %v7334
        %v7480 = vmul.f32 %v7409, %v7335
        %v7481 = vmul.f32 %v7412, %v7336
        %v7482 = vmul.f32 %v7415, %v7337
        %v7483 = vmul.f32 %v7418, %v7338
        %v7484 = vmul.f32 %v7421, %v7339
        %v7485 = vmul.f32 %v7424, %v7340
        %v7486 = vadd.f32 %v6989, %v7454
        %v7487 = vadd.f32 %v6990, %v7455
        %v7488 = vadd.f32 %v6991, %v7456
        %v7489 = vadd.f32 %v6992, %v7457
        %v7490 = vadd.f32 %v6993, %v7458
        %v7491 = vadd.f32 %v6994, %v7459
        %v7492 = vadd.f32 %v6995, %v7460
        %v7493 = vadd.f32 %v6996, %v7461
        %v7494 = vadd.f32 %v6997, %v7462
        %v7495 = vadd.f32 %v6998, %v7463
        %v7496 = vadd.f32 %v6999, %v7464
        %v7497 = vadd.f32 %v7000, %v7465
        %v7498 = vadd.f32 %v7001, %v7466
        %v7499 = vadd.f32 %v7002, %v7467
        %v7500 = vadd.f32 %v7003, %v7468
        %v7501 = vadd.f32 %v7004, %v7469
        %v7502 = vadd.f32 %v7005, %v7470
        %v7503 = vadd.f32 %v7006, %v7471
        %v7504 = vadd.f32 %v7007, %v7472
        %v7505 = vadd.f32 %v7008, %v7473
        %v7506 = vadd.f32 %v7009, %v7474
        %v7507 = vadd.f32 %v7010, %v7475
        %v7508 = vadd.f32 %v7011, %v7476
        %v7509 = vadd.f32 %v7012, %v7477
        %v7510 = vadd.f32 %v7013, %v7478
        %v7511 = vadd.f32 %v7014, %v7479
        %v7512 = vadd.f32 %v7015, %v7480
        %v7513 = vadd.f32 %v7016, %v7481
        %v7514 = vadd.f32 %v7017, %v7482
        %v7515 = vadd.f32 %v7018, %v7483
        %v7516 = vadd.f32 %v7019, %v7484
        %v7517 = vadd.f32 %v7020, %v7485
        %7518 = vrot.lane.b32.xlu0 %v4715, 122
        %v7519 = vpop.permute.xlu0 %7518
        %7520 = vrot.lane.b32.xlu0 %v4716, 122
        %v7521 = vpop.permute.xlu0 %7520
        %7522 = vrot.lane.b32.xlu0 %v4717, 122
        %v7523 = vpop.permute.xlu0 %7522
        %7524 = vrot.lane.b32.xlu0 %v4718, 122
        %v7525 = vpop.permute.xlu0 %7524
        %7526 = vrot.lane.b32.xlu0 %v4719, 122
        %v7527 = vpop.permute.xlu0 %7526
        %7528 = vrot.lane.b32.xlu0 %v4720, 122
        %v7529 = vpop.permute.xlu0 %7528
        %7530 = vrot.lane.b32.xlu0 %v4721, 122
        %v7531 = vpop.permute.xlu0 %7530
        %7532 = vrot.lane.b32.xlu0 %v4722, 122
        %v7533 = vpop.permute.xlu0 %7532
        %7534 = vrot.lane.b32.xlu0 %v4723, 122
        %v7535 = vpop.permute.xlu0 %7534
        %7536 = vrot.lane.b32.xlu0 %v4724, 122
        %v7537 = vpop.permute.xlu0 %7536
        %7538 = vrot.lane.b32.xlu0 %v4725, 122
        %v7539 = vpop.permute.xlu0 %7538
        %7540 = vrot.lane.b32.xlu0 %v4726, 122
        %v7541 = vpop.permute.xlu0 %7540
        %7542 = vrot.lane.b32.xlu0 %v4727, 122
        %v7543 = vpop.permute.xlu0 %7542
        %7544 = vrot.lane.b32.xlu0 %v4728, 122
        %v7545 = vpop.permute.xlu0 %7544
        %7546 = vrot.lane.b32.xlu0 %v4729, 122
        %v7547 = vpop.permute.xlu0 %7546
        %7548 = vrot.lane.b32.xlu0 %v4730, 122
        %v7549 = vpop.permute.xlu0 %7548
        %7550 = vrot.lane.b32.xlu0 %v4731, 122
        %v7551 = vpop.permute.xlu0 %7550
        %7552 = vrot.lane.b32.xlu0 %v4732, 122
        %v7553 = vpop.permute.xlu0 %7552
        %7554 = vrot.lane.b32.xlu0 %v4733, 122
        %v7555 = vpop.permute.xlu0 %7554
        %7556 = vrot.lane.b32.xlu0 %v4734, 122
        %v7557 = vpop.permute.xlu0 %7556
        %7558 = vrot.lane.b32.xlu0 %v4735, 122
        %v7559 = vpop.permute.xlu0 %7558
        %7560 = vrot.lane.b32.xlu0 %v4736, 122
        %v7561 = vpop.permute.xlu0 %7560
        %7562 = vrot.lane.b32.xlu0 %v4737, 122
        %v7563 = vpop.permute.xlu0 %7562
        %7564 = vrot.lane.b32.xlu0 %v4738, 122
        %v7565 = vpop.permute.xlu0 %7564
        %7566 = vrot.lane.b32.xlu0 %v4739, 122
        %v7567 = vpop.permute.xlu0 %7566
        %7568 = vrot.lane.b32.xlu0 %v4740, 122
        %v7569 = vpop.permute.xlu0 %7568
        %7570 = vrot.lane.b32.xlu0 %v4741, 122
        %v7571 = vpop.permute.xlu0 %7570
        %7572 = vrot.lane.b32.xlu0 %v4742, 122
        %v7573 = vpop.permute.xlu0 %7572
        %7574 = vrot.lane.b32.xlu0 %v4743, 122
        %v7575 = vpop.permute.xlu0 %7574
        %7576 = vrot.lane.b32.xlu0 %v4744, 122
        %v7577 = vpop.permute.xlu0 %7576
        %7578 = vrot.lane.b32.xlu0 %v4745, 122
        %v7579 = vpop.permute.xlu0 %7578
        %7580 = vrot.lane.b32.xlu0 %v4746, 122
        %v7581 = vpop.permute.xlu0 %7580
        %v7614 = vsel %vm4373, %v7519, %v7022
        %v7615 = vsel %vm4373, %v7521, %v7024
        %v7616 = vsel %vm4373, %v7523, %v7026
        %v7617 = vsel %vm4373, %v7525, %v7028
        %v7618 = vsel %vm4373, %v7527, %v7030
        %v7619 = vsel %vm4373, %v7529, %v7032
        %v7620 = vsel %vm4373, %v7531, %v7034
        %v7621 = vsel %vm4373, %v7533, %v7036
        %v7622 = vsel %vm4373, %v7535, %v7038
        %v7623 = vsel %vm4373, %v7537, %v7040
        %v7624 = vsel %vm4373, %v7539, %v7042
        %v7625 = vsel %vm4373, %v7541, %v7044
        %v7626 = vsel %vm4373, %v7543, %v7046
        %v7627 = vsel %vm4373, %v7545, %v7048
        %v7628 = vsel %vm4373, %v7547, %v7050
        %v7629 = vsel %vm4373, %v7549, %v7052
        %v7630 = vsel %vm4373, %v7551, %v7054
        %v7631 = vsel %vm4373, %v7553, %v7056
        %v7632 = vsel %vm4373, %v7555, %v7058
        %v7633 = vsel %vm4373, %v7557, %v7060
        %v7634 = vsel %vm4373, %v7559, %v7062
        %v7635 = vsel %vm4373, %v7561, %v7064
        %v7636 = vsel %vm4373, %v7563, %v7066
        %v7637 = vsel %vm4373, %v7565, %v7068
        %v7638 = vsel %vm4373, %v7567, %v7070
        %v7639 = vsel %vm4373, %v7569, %v7072
        %v7640 = vsel %vm4373, %v7571, %v7074
        %v7641 = vsel %vm4373, %v7573, %v7076
        %v7642 = vsel %vm4373, %v7575, %v7078
        %v7643 = vsel %vm4373, %v7577, %v7080
        %v7644 = vsel %vm4373, %v7579, %v7082
        %v7645 = vsel %vm4373, %v7581, %v7084
        %v7646 = vsel %vm4375, %v7614, %v6469
        %v7647 = vsel %vm4375, %v7615, %v6471
        %v7648 = vsel %vm4375, %v7616, %v6473
        %v7649 = vsel %vm4375, %v7617, %v6475
        %v7650 = vsel %vm4375, %v7618, %v6477
        %v7651 = vsel %vm4375, %v7619, %v6479
        %v7652 = vsel %vm4375, %v7620, %v6481
        %v7653 = vsel %vm4375, %v7621, %v6483
        %v7654 = vsel %vm4375, %v7622, %v6485
        %v7655 = vsel %vm4375, %v7623, %v6487
        %v7656 = vsel %vm4375, %v7624, %v6489
        %v7657 = vsel %vm4375, %v7625, %v6491
        %v7658 = vsel %vm4375, %v7626, %v6493
        %v7659 = vsel %vm4375, %v7627, %v6495
        %v7660 = vsel %vm4375, %v7628, %v6497
        %v7661 = vsel %vm4375, %v7629, %v6499
        %v7662 = vsel %vm4375, %v7630, %v6501
        %v7663 = vsel %vm4375, %v7631, %v6503
        %v7664 = vsel %vm4375, %v7632, %v6505
        %v7665 = vsel %vm4375, %v7633, %v6507
        %v7666 = vsel %vm4375, %v7634, %v6509
        %v7667 = vsel %vm4375, %v7635, %v6511
        %v7668 = vsel %vm4375, %v7636, %v6513
        %v7669 = vsel %vm4375, %v7637, %v6515
        %v7670 = vsel %vm4375, %v7638, %v6517
        %v7671 = vsel %vm4375, %v7639, %v6519
        %v7672 = vsel %vm4375, %v7640, %v6521
        %v7673 = vsel %vm4375, %v7641, %v6523
        %v7674 = vsel %vm4375, %v7642, %v6525
        %v7675 = vsel %vm4375, %v7643, %v6527
        %v7676 = vsel %vm4375, %v7644, %v6529
        %v7677 = vsel %vm4375, %v7645, %v6531
        %v7678 = vsel %vm4377, %v7646, %v4715
        %v7679 = vsel %vm4377, %v7647, %v4716
        %v7680 = vsel %vm4377, %v7648, %v4717
        %v7681 = vsel %vm4377, %v7649, %v4718
        %v7682 = vsel %vm4377, %v7650, %v4719
        %v7683 = vsel %vm4377, %v7651, %v4720
        %v7684 = vsel %vm4377, %v7652, %v4721
        %v7685 = vsel %vm4377, %v7653, %v4722
        %v7686 = vsel %vm4377, %v7654, %v4723
        %v7687 = vsel %vm4377, %v7655, %v4724
        %v7688 = vsel %vm4377, %v7656, %v4725
        %v7689 = vsel %vm4377, %v7657, %v4726
        %v7690 = vsel %vm4377, %v7658, %v4727
        %v7691 = vsel %vm4377, %v7659, %v4728
        %v7692 = vsel %vm4377, %v7660, %v4729
        %v7693 = vsel %vm4377, %v7661, %v4730
        %v7694 = vsel %vm4377, %v7662, %v4731
        %v7695 = vsel %vm4377, %v7663, %v4732
        %v7696 = vsel %vm4377, %v7664, %v4733
        %v7697 = vsel %vm4377, %v7665, %v4734
        %v7698 = vsel %vm4377, %v7666, %v4735
        %v7699 = vsel %vm4377, %v7667, %v4736
        %v7700 = vsel %vm4377, %v7668, %v4737
        %v7701 = vsel %vm4377, %v7669, %v4738
        %v7702 = vsel %vm4377, %v7670, %v4739
        %v7703 = vsel %vm4377, %v7671, %v4740
        %v7704 = vsel %vm4377, %v7672, %v4741
        %v7705 = vsel %vm4377, %v7673, %v4742
        %v7706 = vsel %vm4377, %v7674, %v4743
        %v7707 = vsel %vm4377, %v7675, %v4744
        %v7708 = vsel %vm4377, %v7676, %v4745
        %v7709 = vsel %vm4377, %v7677, %v4746
        %v7710 = vsel %vm3803, %v7678, %v5509
        %v7711 = vsel %vm3803, %v7679, %v5511
        %v7712 = vsel %vm3803, %v7680, %v5513
        %v7713 = vsel %vm3803, %v7681, %v5515
        %v7714 = vsel %vm3803, %v7682, %v5517
        %v7715 = vsel %vm3803, %v7683, %v5519
        %v7716 = vsel %vm3803, %v7684, %v5521
        %v7717 = vsel %vm3803, %v7685, %v5523
        %v7718 = vsel %vm3803, %v7686, %v5525
        %v7719 = vsel %vm3803, %v7687, %v5527
        %v7720 = vsel %vm3803, %v7688, %v5529
        %v7721 = vsel %vm3803, %v7689, %v5531
        %v7722 = vsel %vm3803, %v7690, %v5533
        %v7723 = vsel %vm3803, %v7691, %v5535
        %v7724 = vsel %vm3803, %v7692, %v5537
        %v7725 = vsel %vm3803, %v7693, %v5539
        %v7726 = vsel %vm3803, %v7694, %v5541
        %v7727 = vsel %vm3803, %v7695, %v5543
        %v7728 = vsel %vm3803, %v7696, %v5545
        %v7729 = vsel %vm3803, %v7697, %v5547
        %v7730 = vsel %vm3803, %v7698, %v5549
        %v7731 = vsel %vm3803, %v7699, %v5551
        %v7732 = vsel %vm3803, %v7700, %v5553
        %v7733 = vsel %vm3803, %v7701, %v5555
        %v7734 = vsel %vm3803, %v7702, %v5557
        %v7735 = vsel %vm3803, %v7703, %v5559
        %v7736 = vsel %vm3803, %v7704, %v5561
        %v7737 = vsel %vm3803, %v7705, %v5563
        %v7738 = vsel %vm3803, %v7706, %v5565
        %v7739 = vsel %vm3803, %v7707, %v5567
        %v7740 = vsel %vm3803, %v7708, %v5569
        %v7741 = vsel %vm3803, %v7709, %v5571
        %v7742 = vsel %vm4380, %v7710, %v5605
        %v7743 = vsel %vm4380, %v7711, %v5607
        %v7744 = vsel %vm4380, %v7712, %v5609
        %v7745 = vsel %vm4380, %v7713, %v5611
        %v7746 = vsel %vm4380, %v7714, %v5613
        %v7747 = vsel %vm4380, %v7715, %v5615
        %v7748 = vsel %vm4380, %v7716, %v5617
        %v7749 = vsel %vm4380, %v7717, %v5619
        %v7750 = vsel %vm4380, %v7718, %v5621
        %v7751 = vsel %vm4380, %v7719, %v5623
        %v7752 = vsel %vm4380, %v7720, %v5625
        %v7753 = vsel %vm4380, %v7721, %v5627
        %v7754 = vsel %vm4380, %v7722, %v5629
        %v7755 = vsel %vm4380, %v7723, %v5631
        %v7756 = vsel %vm4380, %v7724, %v5633
        %v7757 = vsel %vm4380, %v7725, %v5635
        %v7758 = vsel %vm4380, %v7726, %v5637
        %v7759 = vsel %vm4380, %v7727, %v5639
        %v7760 = vsel %vm4380, %v7728, %v5641
        %v7761 = vsel %vm4380, %v7729, %v5643
        %v7762 = vsel %vm4380, %v7730, %v5645
        %v7763 = vsel %vm4380, %v7731, %v5647
        %v7764 = vsel %vm4380, %v7732, %v5649
        %v7765 = vsel %vm4380, %v7733, %v5651
        %v7766 = vsel %vm4380, %v7734, %v5653
        %v7767 = vsel %vm4380, %v7735, %v5655
        %v7768 = vsel %vm4380, %v7736, %v5657
        %v7769 = vsel %vm4380, %v7737, %v5659
        %v7770 = vsel %vm4380, %v7738, %v5661
        %v7771 = vsel %vm4380, %v7739, %v5663
        %v7772 = vsel %vm4380, %v7740, %v5665
        %v7773 = vsel %vm4380, %v7741, %v5667
        %v7774 = vsel %vm4382, %v7742, %v5701
        %v7775 = vsel %vm4382, %v7743, %v5703
        %v7776 = vsel %vm4382, %v7744, %v5705
        %v7777 = vsel %vm4382, %v7745, %v5707
        %v7778 = vsel %vm4382, %v7746, %v5709
        %v7779 = vsel %vm4382, %v7747, %v5711
        %v7780 = vsel %vm4382, %v7748, %v5713
        %v7781 = vsel %vm4382, %v7749, %v5715
        %v7782 = vsel %vm4382, %v7750, %v5717
        %v7783 = vsel %vm4382, %v7751, %v5719
        %v7784 = vsel %vm4382, %v7752, %v5721
        %v7785 = vsel %vm4382, %v7753, %v5723
        %v7786 = vsel %vm4382, %v7754, %v5725
        %v7787 = vsel %vm4382, %v7755, %v5727
        %v7788 = vsel %vm4382, %v7756, %v5729
        %v7789 = vsel %vm4382, %v7757, %v5731
        %v7790 = vsel %vm4382, %v7758, %v5733
        %v7791 = vsel %vm4382, %v7759, %v5735
        %v7792 = vsel %vm4382, %v7760, %v5737
        %v7793 = vsel %vm4382, %v7761, %v5739
        %v7794 = vsel %vm4382, %v7762, %v5741
        %v7795 = vsel %vm4382, %v7763, %v5743
        %v7796 = vsel %vm4382, %v7764, %v5745
        %v7797 = vsel %vm4382, %v7765, %v5747
        %v7798 = vsel %vm4382, %v7766, %v5749
        %v7799 = vsel %vm4382, %v7767, %v5751
        %v7800 = vsel %vm4382, %v7768, %v5753
        %v7801 = vsel %vm4382, %v7769, %v5755
        %v7802 = vsel %vm4382, %v7770, %v5757
        %v7803 = vsel %vm4382, %v7771, %v5759
        %v7804 = vsel %vm4382, %v7772, %v5761
        %v7805 = vsel %vm4382, %v7773, %v5763
        %v7806 = vsel %vm4384, %v7774, %v5797
        %v7807 = vsel %vm4384, %v7775, %v5799
        %v7808 = vsel %vm4384, %v7776, %v5801
        %v7809 = vsel %vm4384, %v7777, %v5803
        %v7810 = vsel %vm4384, %v7778, %v5805
        %v7811 = vsel %vm4384, %v7779, %v5807
        %v7812 = vsel %vm4384, %v7780, %v5809
        %v7813 = vsel %vm4384, %v7781, %v5811
        %v7814 = vsel %vm4384, %v7782, %v5813
        %v7815 = vsel %vm4384, %v7783, %v5815
        %v7816 = vsel %vm4384, %v7784, %v5817
        %v7817 = vsel %vm4384, %v7785, %v5819
        %v7818 = vsel %vm4384, %v7786, %v5821
        %v7819 = vsel %vm4384, %v7787, %v5823
        %v7820 = vsel %vm4384, %v7788, %v5825
        %v7821 = vsel %vm4384, %v7789, %v5827
        %v7822 = vsel %vm4384, %v7790, %v5829
        %v7823 = vsel %vm4384, %v7791, %v5831
        %v7824 = vsel %vm4384, %v7792, %v5833
        %v7825 = vsel %vm4384, %v7793, %v5835
        %v7826 = vsel %vm4384, %v7794, %v5837
        %v7827 = vsel %vm4384, %v7795, %v5839
        %v7828 = vsel %vm4384, %v7796, %v5841
        %v7829 = vsel %vm4384, %v7797, %v5843
        %v7830 = vsel %vm4384, %v7798, %v5845
        %v7831 = vsel %vm4384, %v7799, %v5847
        %v7832 = vsel %vm4384, %v7800, %v5849
        %v7833 = vsel %vm4384, %v7801, %v5851
        %v7834 = vsel %vm4384, %v7802, %v5853
        %v7835 = vsel %vm4384, %v7803, %v5855
        %v7836 = vsel %vm4384, %v7804, %v5857
        %v7837 = vsel %vm4384, %v7805, %v5859
        %v7838 = vmul.f32 %v5412, %v7806
        %v7839 = vmul.f32 %v5413, %v7807
        %v7840 = vmul.f32 %v5414, %v7808
        %v7841 = vmul.f32 %v5415, %v7809
        %v7842 = vmul.f32 %v5416, %v7810
        %v7843 = vmul.f32 %v5417, %v7811
        %v7844 = vmul.f32 %v5418, %v7812
        %v7845 = vmul.f32 %v5419, %v7813
        %v7846 = vmul.f32 %v5420, %v7814
        %v7847 = vmul.f32 %v5421, %v7815
        %v7848 = vmul.f32 %v5422, %v7816
        %v7849 = vmul.f32 %v5423, %v7817
        %v7850 = vmul.f32 %v5424, %v7818
        %v7851 = vmul.f32 %v5425, %v7819
        %v7852 = vmul.f32 %v5426, %v7820
        %v7853 = vmul.f32 %v5427, %v7821
        %v7854 = vmul.f32 %v5428, %v7822
        %v7855 = vmul.f32 %v5429, %v7823
        %v7856 = vmul.f32 %v5430, %v7824
        %v7857 = vmul.f32 %v5431, %v7825
        %v7858 = vmul.f32 %v5432, %v7826
        %v7859 = vmul.f32 %v5433, %v7827
        %v7860 = vmul.f32 %v5434, %v7828
        %v7861 = vmul.f32 %v5435, %v7829
        %v7862 = vmul.f32 %v5436, %v7830
        %v7863 = vmul.f32 %v5437, %v7831
        %v7864 = vmul.f32 %v5438, %v7832
        %v7865 = vmul.f32 %v5439, %v7833
        %v7866 = vmul.f32 %v5440, %v7834
        %v7867 = vmul.f32 %v5441, %v7835
        %v7868 = vmul.f32 %v5442, %v7836
        %v7869 = vmul.f32 %v5443, %v7837
        %v7870 = vadd.f32 %v7486, %v7838
        %v7871 = vadd.f32 %v7487, %v7839
        %v7872 = vadd.f32 %v7488, %v7840
        %v7873 = vadd.f32 %v7489, %v7841
        %v7874 = vadd.f32 %v7490, %v7842
        %v7875 = vadd.f32 %v7491, %v7843
        %v7876 = vadd.f32 %v7492, %v7844
        %v7877 = vadd.f32 %v7493, %v7845
        %v7878 = vadd.f32 %v7494, %v7846
        %v7879 = vadd.f32 %v7495, %v7847
        %v7880 = vadd.f32 %v7496, %v7848
        %v7881 = vadd.f32 %v7497, %v7849
        %v7882 = vadd.f32 %v7498, %v7850
        %v7883 = vadd.f32 %v7499, %v7851
        %v7884 = vadd.f32 %v7500, %v7852
        %v7885 = vadd.f32 %v7501, %v7853
        %v7886 = vadd.f32 %v7502, %v7854
        %v7887 = vadd.f32 %v7503, %v7855
        %v7888 = vadd.f32 %v7504, %v7856
        %v7889 = vadd.f32 %v7505, %v7857
        %v7890 = vadd.f32 %v7506, %v7858
        %v7891 = vadd.f32 %v7507, %v7859
        %v7892 = vadd.f32 %v7508, %v7860
        %v7893 = vadd.f32 %v7509, %v7861
        %v7894 = vadd.f32 %v7510, %v7862
        %v7895 = vadd.f32 %v7511, %v7863
        %v7896 = vadd.f32 %v7512, %v7864
        %v7897 = vadd.f32 %v7513, %v7865
        %v7898 = vadd.f32 %v7514, %v7866
        %v7899 = vadd.f32 %v7515, %v7867
        %v7900 = vadd.f32 %v7516, %v7868
        %v7901 = vadd.f32 %v7517, %v7869
        %7902 = vrot.lane.b32.xlu0 %v4715, 120
        %v7903 = vpop.permute.xlu0 %7902
        %7904 = vrot.lane.b32.xlu0 %v4716, 120
        %v7905 = vpop.permute.xlu0 %7904
        %7906 = vrot.lane.b32.xlu0 %v4717, 120
        %v7907 = vpop.permute.xlu0 %7906
        %7908 = vrot.lane.b32.xlu0 %v4718, 120
        %v7909 = vpop.permute.xlu0 %7908
        %7910 = vrot.lane.b32.xlu0 %v4719, 120
        %v7911 = vpop.permute.xlu0 %7910
        %7912 = vrot.lane.b32.xlu0 %v4720, 120
        %v7913 = vpop.permute.xlu0 %7912
        %7914 = vrot.lane.b32.xlu0 %v4721, 120
        %v7915 = vpop.permute.xlu0 %7914
        %7916 = vrot.lane.b32.xlu0 %v4722, 120
        %v7917 = vpop.permute.xlu0 %7916
        %7918 = vrot.lane.b32.xlu0 %v4723, 120
        %v7919 = vpop.permute.xlu0 %7918
        %7920 = vrot.lane.b32.xlu0 %v4724, 120
        %v7921 = vpop.permute.xlu0 %7920
        %7922 = vrot.lane.b32.xlu0 %v4725, 120
        %v7923 = vpop.permute.xlu0 %7922
        %7924 = vrot.lane.b32.xlu0 %v4726, 120
        %v7925 = vpop.permute.xlu0 %7924
        %7926 = vrot.lane.b32.xlu0 %v4727, 120
        %v7927 = vpop.permute.xlu0 %7926
        %7928 = vrot.lane.b32.xlu0 %v4728, 120
        %v7929 = vpop.permute.xlu0 %7928
        %7930 = vrot.lane.b32.xlu0 %v4729, 120
        %v7931 = vpop.permute.xlu0 %7930
        %7932 = vrot.lane.b32.xlu0 %v4730, 120
        %v7933 = vpop.permute.xlu0 %7932
        %7934 = vrot.lane.b32.xlu0 %v4731, 120
        %v7935 = vpop.permute.xlu0 %7934
        %7936 = vrot.lane.b32.xlu0 %v4732, 120
        %v7937 = vpop.permute.xlu0 %7936
        %7938 = vrot.lane.b32.xlu0 %v4733, 120
        %v7939 = vpop.permute.xlu0 %7938
        %7940 = vrot.lane.b32.xlu0 %v4734, 120
        %v7941 = vpop.permute.xlu0 %7940
        %7942 = vrot.lane.b32.xlu0 %v4735, 120
        %v7943 = vpop.permute.xlu0 %7942
        %7944 = vrot.lane.b32.xlu0 %v4736, 120
        %v7945 = vpop.permute.xlu0 %7944
        %7946 = vrot.lane.b32.xlu0 %v4737, 120
        %v7947 = vpop.permute.xlu0 %7946
        %7948 = vrot.lane.b32.xlu0 %v4738, 120
        %v7949 = vpop.permute.xlu0 %7948
        %7950 = vrot.lane.b32.xlu0 %v4739, 120
        %v7951 = vpop.permute.xlu0 %7950
        %7952 = vrot.lane.b32.xlu0 %v4740, 120
        %v7953 = vpop.permute.xlu0 %7952
        %7954 = vrot.lane.b32.xlu0 %v4741, 120
        %v7955 = vpop.permute.xlu0 %7954
        %7956 = vrot.lane.b32.xlu0 %v4742, 120
        %v7957 = vpop.permute.xlu0 %7956
        %7958 = vrot.lane.b32.xlu0 %v4743, 120
        %v7959 = vpop.permute.xlu0 %7958
        %7960 = vrot.lane.b32.xlu0 %v4744, 120
        %v7961 = vpop.permute.xlu0 %7960
        %7962 = vrot.lane.b32.xlu0 %v4745, 120
        %v7963 = vpop.permute.xlu0 %7962
        %7964 = vrot.lane.b32.xlu0 %v4746, 120
        %v7965 = vpop.permute.xlu0 %7964
        %v7998 = vsel %vm4373, %v7903, %v7519
        %v7999 = vsel %vm4373, %v7905, %v7521
        %v8000 = vsel %vm4373, %v7907, %v7523
        %v8001 = vsel %vm4373, %v7909, %v7525
        %v8002 = vsel %vm4373, %v7911, %v7527
        %v8003 = vsel %vm4373, %v7913, %v7529
        %v8004 = vsel %vm4373, %v7915, %v7531
        %v8005 = vsel %vm4373, %v7917, %v7533
        %v8006 = vsel %vm4373, %v7919, %v7535
        %v8007 = vsel %vm4373, %v7921, %v7537
        %v8008 = vsel %vm4373, %v7923, %v7539
        %v8009 = vsel %vm4373, %v7925, %v7541
        %v8010 = vsel %vm4373, %v7927, %v7543
        %v8011 = vsel %vm4373, %v7929, %v7545
        %v8012 = vsel %vm4373, %v7931, %v7547
        %v8013 = vsel %vm4373, %v7933, %v7549
        %v8014 = vsel %vm4373, %v7935, %v7551
        %v8015 = vsel %vm4373, %v7937, %v7553
        %v8016 = vsel %vm4373, %v7939, %v7555
        %v8017 = vsel %vm4373, %v7941, %v7557
        %v8018 = vsel %vm4373, %v7943, %v7559
        %v8019 = vsel %vm4373, %v7945, %v7561
        %v8020 = vsel %vm4373, %v7947, %v7563
        %v8021 = vsel %vm4373, %v7949, %v7565
        %v8022 = vsel %vm4373, %v7951, %v7567
        %v8023 = vsel %vm4373, %v7953, %v7569
        %v8024 = vsel %vm4373, %v7955, %v7571
        %v8025 = vsel %vm4373, %v7957, %v7573
        %v8026 = vsel %vm4373, %v7959, %v7575
        %v8027 = vsel %vm4373, %v7961, %v7577
        %v8028 = vsel %vm4373, %v7963, %v7579
        %v8029 = vsel %vm4373, %v7965, %v7581
        %v8030 = vsel %vm4375, %v7998, %v7022
        %v8031 = vsel %vm4375, %v7999, %v7024
        %v8032 = vsel %vm4375, %v8000, %v7026
        %v8033 = vsel %vm4375, %v8001, %v7028
        %v8034 = vsel %vm4375, %v8002, %v7030
        %v8035 = vsel %vm4375, %v8003, %v7032
        %v8036 = vsel %vm4375, %v8004, %v7034
        %v8037 = vsel %vm4375, %v8005, %v7036
        %v8038 = vsel %vm4375, %v8006, %v7038
        %v8039 = vsel %vm4375, %v8007, %v7040
        %v8040 = vsel %vm4375, %v8008, %v7042
        %v8041 = vsel %vm4375, %v8009, %v7044
        %v8042 = vsel %vm4375, %v8010, %v7046
        %v8043 = vsel %vm4375, %v8011, %v7048
        %v8044 = vsel %vm4375, %v8012, %v7050
        %v8045 = vsel %vm4375, %v8013, %v7052
        %v8046 = vsel %vm4375, %v8014, %v7054
        %v8047 = vsel %vm4375, %v8015, %v7056
        %v8048 = vsel %vm4375, %v8016, %v7058
        %v8049 = vsel %vm4375, %v8017, %v7060
        %v8050 = vsel %vm4375, %v8018, %v7062
        %v8051 = vsel %vm4375, %v8019, %v7064
        %v8052 = vsel %vm4375, %v8020, %v7066
        %v8053 = vsel %vm4375, %v8021, %v7068
        %v8054 = vsel %vm4375, %v8022, %v7070
        %v8055 = vsel %vm4375, %v8023, %v7072
        %v8056 = vsel %vm4375, %v8024, %v7074
        %v8057 = vsel %vm4375, %v8025, %v7076
        %v8058 = vsel %vm4375, %v8026, %v7078
        %v8059 = vsel %vm4375, %v8027, %v7080
        %v8060 = vsel %vm4375, %v8028, %v7082
        %v8061 = vsel %vm4375, %v8029, %v7084
        %v8062 = vsel %vm4377, %v8030, %v6469
        %v8063 = vsel %vm4377, %v8031, %v6471
        %v8064 = vsel %vm4377, %v8032, %v6473
        %v8065 = vsel %vm4377, %v8033, %v6475
        %v8066 = vsel %vm4377, %v8034, %v6477
        %v8067 = vsel %vm4377, %v8035, %v6479
        %v8068 = vsel %vm4377, %v8036, %v6481
        %v8069 = vsel %vm4377, %v8037, %v6483
        %v8070 = vsel %vm4377, %v8038, %v6485
        %v8071 = vsel %vm4377, %v8039, %v6487
        %v8072 = vsel %vm4377, %v8040, %v6489
        %v8073 = vsel %vm4377, %v8041, %v6491
        %v8074 = vsel %vm4377, %v8042, %v6493
        %v8075 = vsel %vm4377, %v8043, %v6495
        %v8076 = vsel %vm4377, %v8044, %v6497
        %v8077 = vsel %vm4377, %v8045, %v6499
        %v8078 = vsel %vm4377, %v8046, %v6501
        %v8079 = vsel %vm4377, %v8047, %v6503
        %v8080 = vsel %vm4377, %v8048, %v6505
        %v8081 = vsel %vm4377, %v8049, %v6507
        %v8082 = vsel %vm4377, %v8050, %v6509
        %v8083 = vsel %vm4377, %v8051, %v6511
        %v8084 = vsel %vm4377, %v8052, %v6513
        %v8085 = vsel %vm4377, %v8053, %v6515
        %v8086 = vsel %vm4377, %v8054, %v6517
        %v8087 = vsel %vm4377, %v8055, %v6519
        %v8088 = vsel %vm4377, %v8056, %v6521
        %v8089 = vsel %vm4377, %v8057, %v6523
        %v8090 = vsel %vm4377, %v8058, %v6525
        %v8091 = vsel %vm4377, %v8059, %v6527
        %v8092 = vsel %vm4377, %v8060, %v6529
        %v8093 = vsel %vm4377, %v8061, %v6531
        %v8094 = vsel %vm3803, %v8062, %v4715
        %v8095 = vsel %vm3803, %v8063, %v4716
        %v8096 = vsel %vm3803, %v8064, %v4717
        %v8097 = vsel %vm3803, %v8065, %v4718
        %v8098 = vsel %vm3803, %v8066, %v4719
        %v8099 = vsel %vm3803, %v8067, %v4720
        %v8100 = vsel %vm3803, %v8068, %v4721
        %v8101 = vsel %vm3803, %v8069, %v4722
        %v8102 = vsel %vm3803, %v8070, %v4723
        %v8103 = vsel %vm3803, %v8071, %v4724
        %v8104 = vsel %vm3803, %v8072, %v4725
        %v8105 = vsel %vm3803, %v8073, %v4726
        %v8106 = vsel %vm3803, %v8074, %v4727
        %v8107 = vsel %vm3803, %v8075, %v4728
        %v8108 = vsel %vm3803, %v8076, %v4729
        %v8109 = vsel %vm3803, %v8077, %v4730
        %v8110 = vsel %vm3803, %v8078, %v4731
        %v8111 = vsel %vm3803, %v8079, %v4732
        %v8112 = vsel %vm3803, %v8080, %v4733
        %v8113 = vsel %vm3803, %v8081, %v4734
        %v8114 = vsel %vm3803, %v8082, %v4735
        %v8115 = vsel %vm3803, %v8083, %v4736
        %v8116 = vsel %vm3803, %v8084, %v4737
        %v8117 = vsel %vm3803, %v8085, %v4738
        %v8118 = vsel %vm3803, %v8086, %v4739
        %v8119 = vsel %vm3803, %v8087, %v4740
        %v8120 = vsel %vm3803, %v8088, %v4741
        %v8121 = vsel %vm3803, %v8089, %v4742
        %v8122 = vsel %vm3803, %v8090, %v4743
        %v8123 = vsel %vm3803, %v8091, %v4744
        %v8124 = vsel %vm3803, %v8092, %v4745
        %v8125 = vsel %vm3803, %v8093, %v4746
        %v8126 = vsel %vm4380, %v8094, %v5509
        %v8127 = vsel %vm4380, %v8095, %v5511
        %v8128 = vsel %vm4380, %v8096, %v5513
        %v8129 = vsel %vm4380, %v8097, %v5515
        %v8130 = vsel %vm4380, %v8098, %v5517
        %v8131 = vsel %vm4380, %v8099, %v5519
        %v8132 = vsel %vm4380, %v8100, %v5521
        %v8133 = vsel %vm4380, %v8101, %v5523
        %v8134 = vsel %vm4380, %v8102, %v5525
        %v8135 = vsel %vm4380, %v8103, %v5527
        %v8136 = vsel %vm4380, %v8104, %v5529
        %v8137 = vsel %vm4380, %v8105, %v5531
        %v8138 = vsel %vm4380, %v8106, %v5533
        %v8139 = vsel %vm4380, %v8107, %v5535
        %v8140 = vsel %vm4380, %v8108, %v5537
        %v8141 = vsel %vm4380, %v8109, %v5539
        %v8142 = vsel %vm4380, %v8110, %v5541
        %v8143 = vsel %vm4380, %v8111, %v5543
        %v8144 = vsel %vm4380, %v8112, %v5545
        %v8145 = vsel %vm4380, %v8113, %v5547
        %v8146 = vsel %vm4380, %v8114, %v5549
        %v8147 = vsel %vm4380, %v8115, %v5551
        %v8148 = vsel %vm4380, %v8116, %v5553
        %v8149 = vsel %vm4380, %v8117, %v5555
        %v8150 = vsel %vm4380, %v8118, %v5557
        %v8151 = vsel %vm4380, %v8119, %v5559
        %v8152 = vsel %vm4380, %v8120, %v5561
        %v8153 = vsel %vm4380, %v8121, %v5563
        %v8154 = vsel %vm4380, %v8122, %v5565
        %v8155 = vsel %vm4380, %v8123, %v5567
        %v8156 = vsel %vm4380, %v8124, %v5569
        %v8157 = vsel %vm4380, %v8125, %v5571
        %v8158 = vsel %vm4382, %v8126, %v5605
        %v8159 = vsel %vm4382, %v8127, %v5607
        %v8160 = vsel %vm4382, %v8128, %v5609
        %v8161 = vsel %vm4382, %v8129, %v5611
        %v8162 = vsel %vm4382, %v8130, %v5613
        %v8163 = vsel %vm4382, %v8131, %v5615
        %v8164 = vsel %vm4382, %v8132, %v5617
        %v8165 = vsel %vm4382, %v8133, %v5619
        %v8166 = vsel %vm4382, %v8134, %v5621
        %v8167 = vsel %vm4382, %v8135, %v5623
        %v8168 = vsel %vm4382, %v8136, %v5625
        %v8169 = vsel %vm4382, %v8137, %v5627
        %v8170 = vsel %vm4382, %v8138, %v5629
        %v8171 = vsel %vm4382, %v8139, %v5631
        %v8172 = vsel %vm4382, %v8140, %v5633
        %v8173 = vsel %vm4382, %v8141, %v5635
        %v8174 = vsel %vm4382, %v8142, %v5637
        %v8175 = vsel %vm4382, %v8143, %v5639
        %v8176 = vsel %vm4382, %v8144, %v5641
        %v8177 = vsel %vm4382, %v8145, %v5643
        %v8178 = vsel %vm4382, %v8146, %v5645
        %v8179 = vsel %vm4382, %v8147, %v5647
        %v8180 = vsel %vm4382, %v8148, %v5649
        %v8181 = vsel %vm4382, %v8149, %v5651
        %v8182 = vsel %vm4382, %v8150, %v5653
        %v8183 = vsel %vm4382, %v8151, %v5655
        %v8184 = vsel %vm4382, %v8152, %v5657
        %v8185 = vsel %vm4382, %v8153, %v5659
        %v8186 = vsel %vm4382, %v8154, %v5661
        %v8187 = vsel %vm4382, %v8155, %v5663
        %v8188 = vsel %vm4382, %v8156, %v5665
        %v8189 = vsel %vm4382, %v8157, %v5667
        %v8190 = vsel %vm4384, %v8158, %v5701
        %v8191 = vsel %vm4384, %v8159, %v5703
        %v8192 = vsel %vm4384, %v8160, %v5705
        %v8193 = vsel %vm4384, %v8161, %v5707
        %v8194 = vsel %vm4384, %v8162, %v5709
        %v8195 = vsel %vm4384, %v8163, %v5711
        %v8196 = vsel %vm4384, %v8164, %v5713
        %v8197 = vsel %vm4384, %v8165, %v5715
        %v8198 = vsel %vm4384, %v8166, %v5717
        %v8199 = vsel %vm4384, %v8167, %v5719
        %v8200 = vsel %vm4384, %v8168, %v5721
        %v8201 = vsel %vm4384, %v8169, %v5723
        %v8202 = vsel %vm4384, %v8170, %v5725
        %v8203 = vsel %vm4384, %v8171, %v5727
        %v8204 = vsel %vm4384, %v8172, %v5729
        %v8205 = vsel %vm4384, %v8173, %v5731
        %v8206 = vsel %vm4384, %v8174, %v5733
        %v8207 = vsel %vm4384, %v8175, %v5735
        %v8208 = vsel %vm4384, %v8176, %v5737
        %v8209 = vsel %vm4384, %v8177, %v5739
        %v8210 = vsel %vm4384, %v8178, %v5741
        %v8211 = vsel %vm4384, %v8179, %v5743
        %v8212 = vsel %vm4384, %v8180, %v5745
        %v8213 = vsel %vm4384, %v8181, %v5747
        %v8214 = vsel %vm4384, %v8182, %v5749
        %v8215 = vsel %vm4384, %v8183, %v5751
        %v8216 = vsel %vm4384, %v8184, %v5753
        %v8217 = vsel %vm4384, %v8185, %v5755
        %v8218 = vsel %vm4384, %v8186, %v5757
        %v8219 = vsel %vm4384, %v8187, %v5759
        %v8220 = vsel %vm4384, %v8188, %v5761
        %v8221 = vsel %vm4384, %v8189, %v5763
        %v8230 = vrot.slane %v5419, 1
        %v8231 = vrot.slane %v5451, 1
        %v8232 = vsel %vm810, %v8230, %v8231
        %v8233 = vrot.slane %v5427, 1
        %v8234 = vrot.slane %v5459, 1
        %v8235 = vsel %vm810, %v8233, %v8234
        %v8236 = vrot.slane %v5435, 1
        %v8237 = vrot.slane %v5467, 1
        %v8238 = vsel %vm810, %v8236, %v8237
        %v8239 = vrot.slane %v5443, 1
        %v8240 = vrot.slane %v5475, 1
        %v8241 = vsel %vm810, %v8239, %v8240
        %v8246 = vmul.f32 %v6846, %v8190
        %v8247 = vmul.f32 %v6849, %v8191
        %v8248 = vmul.f32 %v6852, %v8192
        %v8249 = vmul.f32 %v6855, %v8193
        %v8250 = vmul.f32 %v6858, %v8194
        %v8251 = vmul.f32 %v6861, %v8195
        %v8252 = vmul.f32 %v6864, %v8196
        %v8253 = vmul.f32 %v8232, %v8197
        %v8254 = vmul.f32 %v6867, %v8198
        %v8255 = vmul.f32 %v6870, %v8199
        %v8256 = vmul.f32 %v6873, %v8200
        %v8257 = vmul.f32 %v6876, %v8201
        %v8258 = vmul.f32 %v6879, %v8202
        %v8259 = vmul.f32 %v6882, %v8203
        %v8260 = vmul.f32 %v6885, %v8204
        %v8261 = vmul.f32 %v8235, %v8205
        %v8262 = vmul.f32 %v6888, %v8206
        %v8263 = vmul.f32 %v6891, %v8207
        %v8264 = vmul.f32 %v6894, %v8208
        %v8265 = vmul.f32 %v6897, %v8209
        %v8266 = vmul.f32 %v6900, %v8210
        %v8267 = vmul.f32 %v6903, %v8211
        %v8268 = vmul.f32 %v6906, %v8212
        %v8269 = vmul.f32 %v8238, %v8213
        %v8270 = vmul.f32 %v6909, %v8214
        %v8271 = vmul.f32 %v6912, %v8215
        %v8272 = vmul.f32 %v6915, %v8216
        %v8273 = vmul.f32 %v6918, %v8217
        %v8274 = vmul.f32 %v6921, %v8218
        %v8275 = vmul.f32 %v6924, %v8219
        %v8276 = vmul.f32 %v6927, %v8220
        %v8277 = vmul.f32 %v8241, %v8221
        %v8278 = vadd.f32 %v7870, %v8246
        %v8279 = vadd.f32 %v7871, %v8247
        %v8280 = vadd.f32 %v7872, %v8248
        %v8281 = vadd.f32 %v7873, %v8249
        %v8282 = vadd.f32 %v7874, %v8250
        %v8283 = vadd.f32 %v7875, %v8251
        %v8284 = vadd.f32 %v7876, %v8252
        %v8285 = vadd.f32 %v7877, %v8253
        %v8286 = vadd.f32 %v7878, %v8254
        %v8287 = vadd.f32 %v7879, %v8255
        %v8288 = vadd.f32 %v7880, %v8256
        %v8289 = vadd.f32 %v7881, %v8257
        %v8290 = vadd.f32 %v7882, %v8258
        %v8291 = vadd.f32 %v7883, %v8259
        %v8292 = vadd.f32 %v7884, %v8260
        %v8293 = vadd.f32 %v7885, %v8261
        %v8294 = vadd.f32 %v7886, %v8262
        %v8295 = vadd.f32 %v7887, %v8263
        %v8296 = vadd.f32 %v7888, %v8264
        %v8297 = vadd.f32 %v7889, %v8265
        %v8298 = vadd.f32 %v7890, %v8266
        %v8299 = vadd.f32 %v7891, %v8267
        %v8300 = vadd.f32 %v7892, %v8268
        %v8301 = vadd.f32 %v7893, %v8269
        %v8302 = vadd.f32 %v7894, %v8270
        %v8303 = vadd.f32 %v7895, %v8271
        %v8304 = vadd.f32 %v7896, %v8272
        %v8305 = vadd.f32 %v7897, %v8273
        %v8306 = vadd.f32 %v7898, %v8274
        %v8307 = vadd.f32 %v7899, %v8275
        %v8308 = vadd.f32 %v7900, %v8276
        %v8309 = vadd.f32 %v7901, %v8277
        %8310 = vrot.lane.b32.xlu0 %v4715, 118
        %v8311 = vpop.permute.xlu0 %8310
        %8312 = vrot.lane.b32.xlu0 %v4716, 118
        %v8313 = vpop.permute.xlu0 %8312
        %8314 = vrot.lane.b32.xlu0 %v4717, 118
        %v8315 = vpop.permute.xlu0 %8314
        %8316 = vrot.lane.b32.xlu0 %v4718, 118
        %v8317 = vpop.permute.xlu0 %8316
        %8318 = vrot.lane.b32.xlu0 %v4719, 118
        %v8319 = vpop.permute.xlu0 %8318
        %8320 = vrot.lane.b32.xlu0 %v4720, 118
        %v8321 = vpop.permute.xlu0 %8320
        %8322 = vrot.lane.b32.xlu0 %v4721, 118
        %v8323 = vpop.permute.xlu0 %8322
        %8324 = vrot.lane.b32.xlu0 %v4722, 118
        %v8325 = vpop.permute.xlu0 %8324
        %8326 = vrot.lane.b32.xlu0 %v4723, 118
        %v8327 = vpop.permute.xlu0 %8326
        %8328 = vrot.lane.b32.xlu0 %v4724, 118
        %v8329 = vpop.permute.xlu0 %8328
        %8330 = vrot.lane.b32.xlu0 %v4725, 118
        %v8331 = vpop.permute.xlu0 %8330
        %8332 = vrot.lane.b32.xlu0 %v4726, 118
        %v8333 = vpop.permute.xlu0 %8332
        %8334 = vrot.lane.b32.xlu0 %v4727, 118
        %v8335 = vpop.permute.xlu0 %8334
        %8336 = vrot.lane.b32.xlu0 %v4728, 118
        %v8337 = vpop.permute.xlu0 %8336
        %8338 = vrot.lane.b32.xlu0 %v4729, 118
        %v8339 = vpop.permute.xlu0 %8338
        %8340 = vrot.lane.b32.xlu0 %v4730, 118
        %v8341 = vpop.permute.xlu0 %8340
        %8342 = vrot.lane.b32.xlu0 %v4731, 118
        %v8343 = vpop.permute.xlu0 %8342
        %8344 = vrot.lane.b32.xlu0 %v4732, 118
        %v8345 = vpop.permute.xlu0 %8344
        %8346 = vrot.lane.b32.xlu0 %v4733, 118
        %v8347 = vpop.permute.xlu0 %8346
        %8348 = vrot.lane.b32.xlu0 %v4734, 118
        %v8349 = vpop.permute.xlu0 %8348
        %8350 = vrot.lane.b32.xlu0 %v4735, 118
        %v8351 = vpop.permute.xlu0 %8350
        %8352 = vrot.lane.b32.xlu0 %v4736, 118
        %v8353 = vpop.permute.xlu0 %8352
        %8354 = vrot.lane.b32.xlu0 %v4737, 118
        %v8355 = vpop.permute.xlu0 %8354
        %8356 = vrot.lane.b32.xlu0 %v4738, 118
        %v8357 = vpop.permute.xlu0 %8356
        %8358 = vrot.lane.b32.xlu0 %v4739, 118
        %v8359 = vpop.permute.xlu0 %8358
        %8360 = vrot.lane.b32.xlu0 %v4740, 118
        %v8361 = vpop.permute.xlu0 %8360
        %8362 = vrot.lane.b32.xlu0 %v4741, 118
        %v8363 = vpop.permute.xlu0 %8362
        %8364 = vrot.lane.b32.xlu0 %v4742, 118
        %v8365 = vpop.permute.xlu0 %8364
        %8366 = vrot.lane.b32.xlu0 %v4743, 118
        %v8367 = vpop.permute.xlu0 %8366
        %8368 = vrot.lane.b32.xlu0 %v4744, 118
        %v8369 = vpop.permute.xlu0 %8368
        %8370 = vrot.lane.b32.xlu0 %v4745, 118
        %v8371 = vpop.permute.xlu0 %8370
        %8372 = vrot.lane.b32.xlu0 %v4746, 118
        %v8373 = vpop.permute.xlu0 %8372
        %v8406 = vsel %vm4373, %v8311, %v7903
        %v8407 = vsel %vm4373, %v8313, %v7905
        %v8408 = vsel %vm4373, %v8315, %v7907
        %v8409 = vsel %vm4373, %v8317, %v7909
        %v8410 = vsel %vm4373, %v8319, %v7911
        %v8411 = vsel %vm4373, %v8321, %v7913
        %v8412 = vsel %vm4373, %v8323, %v7915
        %v8413 = vsel %vm4373, %v8325, %v7917
        %v8414 = vsel %vm4373, %v8327, %v7919
        %v8415 = vsel %vm4373, %v8329, %v7921
        %v8416 = vsel %vm4373, %v8331, %v7923
        %v8417 = vsel %vm4373, %v8333, %v7925
        %v8418 = vsel %vm4373, %v8335, %v7927
        %v8419 = vsel %vm4373, %v8337, %v7929
        %v8420 = vsel %vm4373, %v8339, %v7931
        %v8421 = vsel %vm4373, %v8341, %v7933
        %v8422 = vsel %vm4373, %v8343, %v7935
        %v8423 = vsel %vm4373, %v8345, %v7937
        %v8424 = vsel %vm4373, %v8347, %v7939
        %v8425 = vsel %vm4373, %v8349, %v7941
        %v8426 = vsel %vm4373, %v8351, %v7943
        %v8427 = vsel %vm4373, %v8353, %v7945
        %v8428 = vsel %vm4373, %v8355, %v7947
        %v8429 = vsel %vm4373, %v8357, %v7949
        %v8430 = vsel %vm4373, %v8359, %v7951
        %v8431 = vsel %vm4373, %v8361, %v7953
        %v8432 = vsel %vm4373, %v8363, %v7955
        %v8433 = vsel %vm4373, %v8365, %v7957
        %v8434 = vsel %vm4373, %v8367, %v7959
        %v8435 = vsel %vm4373, %v8369, %v7961
        %v8436 = vsel %vm4373, %v8371, %v7963
        %v8437 = vsel %vm4373, %v8373, %v7965
        %v8438 = vsel %vm4375, %v8406, %v7519
        %v8439 = vsel %vm4375, %v8407, %v7521
        %v8440 = vsel %vm4375, %v8408, %v7523
        %v8441 = vsel %vm4375, %v8409, %v7525
        %v8442 = vsel %vm4375, %v8410, %v7527
        %v8443 = vsel %vm4375, %v8411, %v7529
        %v8444 = vsel %vm4375, %v8412, %v7531
        %v8445 = vsel %vm4375, %v8413, %v7533
        %v8446 = vsel %vm4375, %v8414, %v7535
        %v8447 = vsel %vm4375, %v8415, %v7537
        %v8448 = vsel %vm4375, %v8416, %v7539
        %v8449 = vsel %vm4375, %v8417, %v7541
        %v8450 = vsel %vm4375, %v8418, %v7543
        %v8451 = vsel %vm4375, %v8419, %v7545
        %v8452 = vsel %vm4375, %v8420, %v7547
        %v8453 = vsel %vm4375, %v8421, %v7549
        %v8454 = vsel %vm4375, %v8422, %v7551
        %v8455 = vsel %vm4375, %v8423, %v7553
        %v8456 = vsel %vm4375, %v8424, %v7555
        %v8457 = vsel %vm4375, %v8425, %v7557
        %v8458 = vsel %vm4375, %v8426, %v7559
        %v8459 = vsel %vm4375, %v8427, %v7561
        %v8460 = vsel %vm4375, %v8428, %v7563
        %v8461 = vsel %vm4375, %v8429, %v7565
        %v8462 = vsel %vm4375, %v8430, %v7567
        %v8463 = vsel %vm4375, %v8431, %v7569
        %v8464 = vsel %vm4375, %v8432, %v7571
        %v8465 = vsel %vm4375, %v8433, %v7573
        %v8466 = vsel %vm4375, %v8434, %v7575
        %v8467 = vsel %vm4375, %v8435, %v7577
        %v8468 = vsel %vm4375, %v8436, %v7579
        %v8469 = vsel %vm4375, %v8437, %v7581
        %v8470 = vsel %vm4377, %v8438, %v7022
        %v8471 = vsel %vm4377, %v8439, %v7024
        %v8472 = vsel %vm4377, %v8440, %v7026
        %v8473 = vsel %vm4377, %v8441, %v7028
        %v8474 = vsel %vm4377, %v8442, %v7030
        %v8475 = vsel %vm4377, %v8443, %v7032
        %v8476 = vsel %vm4377, %v8444, %v7034
        %v8477 = vsel %vm4377, %v8445, %v7036
        %v8478 = vsel %vm4377, %v8446, %v7038
        %v8479 = vsel %vm4377, %v8447, %v7040
        %v8480 = vsel %vm4377, %v8448, %v7042
        %v8481 = vsel %vm4377, %v8449, %v7044
        %v8482 = vsel %vm4377, %v8450, %v7046
        %v8483 = vsel %vm4377, %v8451, %v7048
        %v8484 = vsel %vm4377, %v8452, %v7050
        %v8485 = vsel %vm4377, %v8453, %v7052
        %v8486 = vsel %vm4377, %v8454, %v7054
        %v8487 = vsel %vm4377, %v8455, %v7056
        %v8488 = vsel %vm4377, %v8456, %v7058
        %v8489 = vsel %vm4377, %v8457, %v7060
        %v8490 = vsel %vm4377, %v8458, %v7062
        %v8491 = vsel %vm4377, %v8459, %v7064
        %v8492 = vsel %vm4377, %v8460, %v7066
        %v8493 = vsel %vm4377, %v8461, %v7068
        %v8494 = vsel %vm4377, %v8462, %v7070
        %v8495 = vsel %vm4377, %v8463, %v7072
        %v8496 = vsel %vm4377, %v8464, %v7074
        %v8497 = vsel %vm4377, %v8465, %v7076
        %v8498 = vsel %vm4377, %v8466, %v7078
        %v8499 = vsel %vm4377, %v8467, %v7080
        %v8500 = vsel %vm4377, %v8468, %v7082
        %v8501 = vsel %vm4377, %v8469, %v7084
        %v8502 = vsel %vm3803, %v8470, %v6469
        %v8503 = vsel %vm3803, %v8471, %v6471
        %v8504 = vsel %vm3803, %v8472, %v6473
        %v8505 = vsel %vm3803, %v8473, %v6475
        %v8506 = vsel %vm3803, %v8474, %v6477
        %v8507 = vsel %vm3803, %v8475, %v6479
        %v8508 = vsel %vm3803, %v8476, %v6481
        %v8509 = vsel %vm3803, %v8477, %v6483
        %v8510 = vsel %vm3803, %v8478, %v6485
        %v8511 = vsel %vm3803, %v8479, %v6487
        %v8512 = vsel %vm3803, %v8480, %v6489
        %v8513 = vsel %vm3803, %v8481, %v6491
        %v8514 = vsel %vm3803, %v8482, %v6493
        %v8515 = vsel %vm3803, %v8483, %v6495
        %v8516 = vsel %vm3803, %v8484, %v6497
        %v8517 = vsel %vm3803, %v8485, %v6499
        %v8518 = vsel %vm3803, %v8486, %v6501
        %v8519 = vsel %vm3803, %v8487, %v6503
        %v8520 = vsel %vm3803, %v8488, %v6505
        %v8521 = vsel %vm3803, %v8489, %v6507
        %v8522 = vsel %vm3803, %v8490, %v6509
        %v8523 = vsel %vm3803, %v8491, %v6511
        %v8524 = vsel %vm3803, %v8492, %v6513
        %v8525 = vsel %vm3803, %v8493, %v6515
        %v8526 = vsel %vm3803, %v8494, %v6517
        %v8527 = vsel %vm3803, %v8495, %v6519
        %v8528 = vsel %vm3803, %v8496, %v6521
        %v8529 = vsel %vm3803, %v8497, %v6523
        %v8530 = vsel %vm3803, %v8498, %v6525
        %v8531 = vsel %vm3803, %v8499, %v6527
        %v8532 = vsel %vm3803, %v8500, %v6529
        %v8533 = vsel %vm3803, %v8501, %v6531
        %v8534 = vsel %vm4380, %v8502, %v4715
        %v8535 = vsel %vm4380, %v8503, %v4716
        %v8536 = vsel %vm4380, %v8504, %v4717
        %v8537 = vsel %vm4380, %v8505, %v4718
        %v8538 = vsel %vm4380, %v8506, %v4719
        %v8539 = vsel %vm4380, %v8507, %v4720
        %v8540 = vsel %vm4380, %v8508, %v4721
        %v8541 = vsel %vm4380, %v8509, %v4722
        %v8542 = vsel %vm4380, %v8510, %v4723
        %v8543 = vsel %vm4380, %v8511, %v4724
        %v8544 = vsel %vm4380, %v8512, %v4725
        %v8545 = vsel %vm4380, %v8513, %v4726
        %v8546 = vsel %vm4380, %v8514, %v4727
        %v8547 = vsel %vm4380, %v8515, %v4728
        %v8548 = vsel %vm4380, %v8516, %v4729
        %v8549 = vsel %vm4380, %v8517, %v4730
        %v8550 = vsel %vm4380, %v8518, %v4731
        %v8551 = vsel %vm4380, %v8519, %v4732
        %v8552 = vsel %vm4380, %v8520, %v4733
        %v8553 = vsel %vm4380, %v8521, %v4734
        %v8554 = vsel %vm4380, %v8522, %v4735
        %v8555 = vsel %vm4380, %v8523, %v4736
        %v8556 = vsel %vm4380, %v8524, %v4737
        %v8557 = vsel %vm4380, %v8525, %v4738
        %v8558 = vsel %vm4380, %v8526, %v4739
        %v8559 = vsel %vm4380, %v8527, %v4740
        %v8560 = vsel %vm4380, %v8528, %v4741
        %v8561 = vsel %vm4380, %v8529, %v4742
        %v8562 = vsel %vm4380, %v8530, %v4743
        %v8563 = vsel %vm4380, %v8531, %v4744
        %v8564 = vsel %vm4380, %v8532, %v4745
        %v8565 = vsel %vm4380, %v8533, %v4746
        %v8566 = vsel %vm4382, %v8534, %v5509
        %v8567 = vsel %vm4382, %v8535, %v5511
        %v8568 = vsel %vm4382, %v8536, %v5513
        %v8569 = vsel %vm4382, %v8537, %v5515
        %v8570 = vsel %vm4382, %v8538, %v5517
        %v8571 = vsel %vm4382, %v8539, %v5519
        %v8572 = vsel %vm4382, %v8540, %v5521
        %v8573 = vsel %vm4382, %v8541, %v5523
        %v8574 = vsel %vm4382, %v8542, %v5525
        %v8575 = vsel %vm4382, %v8543, %v5527
        %v8576 = vsel %vm4382, %v8544, %v5529
        %v8577 = vsel %vm4382, %v8545, %v5531
        %v8578 = vsel %vm4382, %v8546, %v5533
        %v8579 = vsel %vm4382, %v8547, %v5535
        %v8580 = vsel %vm4382, %v8548, %v5537
        %v8581 = vsel %vm4382, %v8549, %v5539
        %v8582 = vsel %vm4382, %v8550, %v5541
        %v8583 = vsel %vm4382, %v8551, %v5543
        %v8584 = vsel %vm4382, %v8552, %v5545
        %v8585 = vsel %vm4382, %v8553, %v5547
        %v8586 = vsel %vm4382, %v8554, %v5549
        %v8587 = vsel %vm4382, %v8555, %v5551
        %v8588 = vsel %vm4382, %v8556, %v5553
        %v8589 = vsel %vm4382, %v8557, %v5555
        %v8590 = vsel %vm4382, %v8558, %v5557
        %v8591 = vsel %vm4382, %v8559, %v5559
        %v8592 = vsel %vm4382, %v8560, %v5561
        %v8593 = vsel %vm4382, %v8561, %v5563
        %v8594 = vsel %vm4382, %v8562, %v5565
        %v8595 = vsel %vm4382, %v8563, %v5567
        %v8596 = vsel %vm4382, %v8564, %v5569
        %v8597 = vsel %vm4382, %v8565, %v5571
        %v8598 = vsel %vm4384, %v8566, %v5605
        %v8599 = vsel %vm4384, %v8567, %v5607
        %v8600 = vsel %vm4384, %v8568, %v5609
        %v8601 = vsel %vm4384, %v8569, %v5611
        %v8602 = vsel %vm4384, %v8570, %v5613
        %v8603 = vsel %vm4384, %v8571, %v5615
        %v8604 = vsel %vm4384, %v8572, %v5617
        %v8605 = vsel %vm4384, %v8573, %v5619
        %v8606 = vsel %vm4384, %v8574, %v5621
        %v8607 = vsel %vm4384, %v8575, %v5623
        %v8608 = vsel %vm4384, %v8576, %v5625
        %v8609 = vsel %vm4384, %v8577, %v5627
        %v8610 = vsel %vm4384, %v8578, %v5629
        %v8611 = vsel %vm4384, %v8579, %v5631
        %v8612 = vsel %vm4384, %v8580, %v5633
        %v8613 = vsel %vm4384, %v8581, %v5635
        %v8614 = vsel %vm4384, %v8582, %v5637
        %v8615 = vsel %vm4384, %v8583, %v5639
        %v8616 = vsel %vm4384, %v8584, %v5641
        %v8617 = vsel %vm4384, %v8585, %v5643
        %v8618 = vsel %vm4384, %v8586, %v5645
        %v8619 = vsel %vm4384, %v8587, %v5647
        %v8620 = vsel %vm4384, %v8588, %v5649
        %v8621 = vsel %vm4384, %v8589, %v5651
        %v8622 = vsel %vm4384, %v8590, %v5653
        %v8623 = vsel %vm4384, %v8591, %v5655
        %v8624 = vsel %vm4384, %v8592, %v5657
        %v8625 = vsel %vm4384, %v8593, %v5659
        %v8626 = vsel %vm4384, %v8594, %v5661
        %v8627 = vsel %vm4384, %v8595, %v5663
        %v8628 = vsel %vm4384, %v8596, %v5665
        %v8629 = vsel %vm4384, %v8597, %v5667
        %v8630 = vrot.slane %v5419, 2
        %v8631 = vrot.slane %v5451, 2
        %v8632 = vsel %vm876, %v8630, %v8631
        %v8633 = vrot.slane %v5427, 2
        %v8634 = vrot.slane %v5459, 2
        %v8635 = vsel %vm876, %v8633, %v8634
        %v8636 = vrot.slane %v5435, 2
        %v8637 = vrot.slane %v5467, 2
        %v8638 = vsel %vm876, %v8636, %v8637
        %v8639 = vrot.slane %v5443, 2
        %v8640 = vrot.slane %v5475, 2
        %v8641 = vsel %vm876, %v8639, %v8640
        %v8646 = vmul.f32 %v7343, %v8598
        %v8647 = vmul.f32 %v7346, %v8599
        %v8648 = vmul.f32 %v7349, %v8600
        %v8649 = vmul.f32 %v7352, %v8601
        %v8650 = vmul.f32 %v7355, %v8602
        %v8651 = vmul.f32 %v7358, %v8603
        %v8652 = vmul.f32 %v7361, %v8604
        %v8653 = vmul.f32 %v8632, %v8605
        %v8654 = vmul.f32 %v7364, %v8606
        %v8655 = vmul.f32 %v7367, %v8607
        %v8656 = vmul.f32 %v7370, %v8608
        %v8657 = vmul.f32 %v7373, %v8609
        %v8658 = vmul.f32 %v7376, %v8610
        %v8659 = vmul.f32 %v7379, %v8611
        %v8660 = vmul.f32 %v7382, %v8612
        %v8661 = vmul.f32 %v8635, %v8613
        %v8662 = vmul.f32 %v7385, %v8614
        %v8663 = vmul.f32 %v7388, %v8615
        %v8664 = vmul.f32 %v7391, %v8616
        %v8665 = vmul.f32 %v7394, %v8617
        %v8666 = vmul.f32 %v7397, %v8618
        %v8667 = vmul.f32 %v7400, %v8619
        %v8668 = vmul.f32 %v7403, %v8620
        %v8669 = vmul.f32 %v8638, %v8621
        %v8670 = vmul.f32 %v7406, %v8622
        %v8671 = vmul.f32 %v7409, %v8623
        %v8672 = vmul.f32 %v7412, %v8624
        %v8673 = vmul.f32 %v7415, %v8625
        %v8674 = vmul.f32 %v7418, %v8626
        %v8675 = vmul.f32 %v7421, %v8627
        %v8676 = vmul.f32 %v7424, %v8628
        %v8677 = vmul.f32 %v8641, %v8629
        %v8678 = vadd.f32 %v8278, %v8646
        %v8679 = vadd.f32 %v8279, %v8647
        %v8680 = vadd.f32 %v8280, %v8648
        %v8681 = vadd.f32 %v8281, %v8649
        %v8682 = vadd.f32 %v8282, %v8650
        %v8683 = vadd.f32 %v8283, %v8651
        %v8684 = vadd.f32 %v8284, %v8652
        %v8685 = vadd.f32 %v8285, %v8653
        %v8686 = vadd.f32 %v8286, %v8654
        %v8687 = vadd.f32 %v8287, %v8655
        %v8688 = vadd.f32 %v8288, %v8656
        %v8689 = vadd.f32 %v8289, %v8657
        %v8690 = vadd.f32 %v8290, %v8658
        %v8691 = vadd.f32 %v8291, %v8659
        %v8692 = vadd.f32 %v8292, %v8660
        %v8693 = vadd.f32 %v8293, %v8661
        %v8694 = vadd.f32 %v8294, %v8662
        %v8695 = vadd.f32 %v8295, %v8663
        %v8696 = vadd.f32 %v8296, %v8664
        %v8697 = vadd.f32 %v8297, %v8665
        %v8698 = vadd.f32 %v8298, %v8666
        %v8699 = vadd.f32 %v8299, %v8667
        %v8700 = vadd.f32 %v8300, %v8668
        %v8701 = vadd.f32 %v8301, %v8669
        %v8702 = vadd.f32 %v8302, %v8670
        %v8703 = vadd.f32 %v8303, %v8671
        %v8704 = vadd.f32 %v8304, %v8672
        %v8705 = vadd.f32 %v8305, %v8673
        %v8706 = vadd.f32 %v8306, %v8674
        %v8707 = vadd.f32 %v8307, %v8675
        %v8708 = vadd.f32 %v8308, %v8676
        %v8709 = vadd.f32 %v8309, %v8677
        %8710 = vrot.lane.b32.xlu0 %v4715, 116
        %v8711 = vpop.permute.xlu0 %8710
        %8712 = vrot.lane.b32.xlu0 %v4716, 116
        %v8713 = vpop.permute.xlu0 %8712
        %8714 = vrot.lane.b32.xlu0 %v4717, 116
        %v8715 = vpop.permute.xlu0 %8714
        %8716 = vrot.lane.b32.xlu0 %v4718, 116
        %v8717 = vpop.permute.xlu0 %8716
        %8718 = vrot.lane.b32.xlu0 %v4719, 116
        %v8719 = vpop.permute.xlu0 %8718
        %8720 = vrot.lane.b32.xlu0 %v4720, 116
        %v8721 = vpop.permute.xlu0 %8720
        %8722 = vrot.lane.b32.xlu0 %v4721, 116
        %v8723 = vpop.permute.xlu0 %8722
        %8724 = vrot.lane.b32.xlu0 %v4722, 116
        %v8725 = vpop.permute.xlu0 %8724
        %8726 = vrot.lane.b32.xlu0 %v4723, 116
        %v8727 = vpop.permute.xlu0 %8726
        %8728 = vrot.lane.b32.xlu0 %v4724, 116
        %v8729 = vpop.permute.xlu0 %8728
        %8730 = vrot.lane.b32.xlu0 %v4725, 116
        %v8731 = vpop.permute.xlu0 %8730
        %8732 = vrot.lane.b32.xlu0 %v4726, 116
        %v8733 = vpop.permute.xlu0 %8732
        %8734 = vrot.lane.b32.xlu0 %v4727, 116
        %v8735 = vpop.permute.xlu0 %8734
        %8736 = vrot.lane.b32.xlu0 %v4728, 116
        %v8737 = vpop.permute.xlu0 %8736
        %8738 = vrot.lane.b32.xlu0 %v4729, 116
        %v8739 = vpop.permute.xlu0 %8738
        %8740 = vrot.lane.b32.xlu0 %v4730, 116
        %v8741 = vpop.permute.xlu0 %8740
        %8742 = vrot.lane.b32.xlu0 %v4731, 116
        %v8743 = vpop.permute.xlu0 %8742
        %8744 = vrot.lane.b32.xlu0 %v4732, 116
        %v8745 = vpop.permute.xlu0 %8744
        %8746 = vrot.lane.b32.xlu0 %v4733, 116
        %v8747 = vpop.permute.xlu0 %8746
        %8748 = vrot.lane.b32.xlu0 %v4734, 116
        %v8749 = vpop.permute.xlu0 %8748
        %8750 = vrot.lane.b32.xlu0 %v4735, 116
        %v8751 = vpop.permute.xlu0 %8750
        %8752 = vrot.lane.b32.xlu0 %v4736, 116
        %v8753 = vpop.permute.xlu0 %8752
        %8754 = vrot.lane.b32.xlu0 %v4737, 116
        %v8755 = vpop.permute.xlu0 %8754
        %8756 = vrot.lane.b32.xlu0 %v4738, 116
        %v8757 = vpop.permute.xlu0 %8756
        %8758 = vrot.lane.b32.xlu0 %v4739, 116
        %v8759 = vpop.permute.xlu0 %8758
        %8760 = vrot.lane.b32.xlu0 %v4740, 116
        %v8761 = vpop.permute.xlu0 %8760
        %8762 = vrot.lane.b32.xlu0 %v4741, 116
        %v8763 = vpop.permute.xlu0 %8762
        %8764 = vrot.lane.b32.xlu0 %v4742, 116
        %v8765 = vpop.permute.xlu0 %8764
        %8766 = vrot.lane.b32.xlu0 %v4743, 116
        %v8767 = vpop.permute.xlu0 %8766
        %8768 = vrot.lane.b32.xlu0 %v4744, 116
        %v8769 = vpop.permute.xlu0 %8768
        %8770 = vrot.lane.b32.xlu0 %v4745, 116
        %v8771 = vpop.permute.xlu0 %8770
        %8772 = vrot.lane.b32.xlu0 %v4746, 116
        %v8773 = vpop.permute.xlu0 %8772
        %v8806 = vsel %vm4373, %v8711, %v8311
        %v8807 = vsel %vm4373, %v8713, %v8313
        %v8808 = vsel %vm4373, %v8715, %v8315
        %v8809 = vsel %vm4373, %v8717, %v8317
        %v8810 = vsel %vm4373, %v8719, %v8319
        %v8811 = vsel %vm4373, %v8721, %v8321
        %v8812 = vsel %vm4373, %v8723, %v8323
        %v8813 = vsel %vm4373, %v8725, %v8325
        %v8814 = vsel %vm4373, %v8727, %v8327
        %v8815 = vsel %vm4373, %v8729, %v8329
        %v8816 = vsel %vm4373, %v8731, %v8331
        %v8817 = vsel %vm4373, %v8733, %v8333
        %v8818 = vsel %vm4373, %v8735, %v8335
        %v8819 = vsel %vm4373, %v8737, %v8337
        %v8820 = vsel %vm4373, %v8739, %v8339
        %v8821 = vsel %vm4373, %v8741, %v8341
        %v8822 = vsel %vm4373, %v8743, %v8343
        %v8823 = vsel %vm4373, %v8745, %v8345
        %v8824 = vsel %vm4373, %v8747, %v8347
        %v8825 = vsel %vm4373, %v8749, %v8349
        %v8826 = vsel %vm4373, %v8751, %v8351
        %v8827 = vsel %vm4373, %v8753, %v8353
        %v8828 = vsel %vm4373, %v8755, %v8355
        %v8829 = vsel %vm4373, %v8757, %v8357
        %v8830 = vsel %vm4373, %v8759, %v8359
        %v8831 = vsel %vm4373, %v8761, %v8361
        %v8832 = vsel %vm4373, %v8763, %v8363
        %v8833 = vsel %vm4373, %v8765, %v8365
        %v8834 = vsel %vm4373, %v8767, %v8367
        %v8835 = vsel %vm4373, %v8769, %v8369
        %v8836 = vsel %vm4373, %v8771, %v8371
        %v8837 = vsel %vm4373, %v8773, %v8373
        %v8838 = vsel %vm4375, %v8806, %v7903
        %v8839 = vsel %vm4375, %v8807, %v7905
        %v8840 = vsel %vm4375, %v8808, %v7907
        %v8841 = vsel %vm4375, %v8809, %v7909
        %v8842 = vsel %vm4375, %v8810, %v7911
        %v8843 = vsel %vm4375, %v8811, %v7913
        %v8844 = vsel %vm4375, %v8812, %v7915
        %v8845 = vsel %vm4375, %v8813, %v7917
        %v8846 = vsel %vm4375, %v8814, %v7919
        %v8847 = vsel %vm4375, %v8815, %v7921
        %v8848 = vsel %vm4375, %v8816, %v7923
        %v8849 = vsel %vm4375, %v8817, %v7925
        %v8850 = vsel %vm4375, %v8818, %v7927
        %v8851 = vsel %vm4375, %v8819, %v7929
        %v8852 = vsel %vm4375, %v8820, %v7931
        %v8853 = vsel %vm4375, %v8821, %v7933
        %v8854 = vsel %vm4375, %v8822, %v7935
        %v8855 = vsel %vm4375, %v8823, %v7937
        %v8856 = vsel %vm4375, %v8824, %v7939
        %v8857 = vsel %vm4375, %v8825, %v7941
        %v8858 = vsel %vm4375, %v8826, %v7943
        %v8859 = vsel %vm4375, %v8827, %v7945
        %v8860 = vsel %vm4375, %v8828, %v7947
        %v8861 = vsel %vm4375, %v8829, %v7949
        %v8862 = vsel %vm4375, %v8830, %v7951
        %v8863 = vsel %vm4375, %v8831, %v7953
        %v8864 = vsel %vm4375, %v8832, %v7955
        %v8865 = vsel %vm4375, %v8833, %v7957
        %v8866 = vsel %vm4375, %v8834, %v7959
        %v8867 = vsel %vm4375, %v8835, %v7961
        %v8868 = vsel %vm4375, %v8836, %v7963
        %v8869 = vsel %vm4375, %v8837, %v7965
        %v8870 = vsel %vm4377, %v8838, %v7519
        %v8871 = vsel %vm4377, %v8839, %v7521
        %v8872 = vsel %vm4377, %v8840, %v7523
        %v8873 = vsel %vm4377, %v8841, %v7525
        %v8874 = vsel %vm4377, %v8842, %v7527
        %v8875 = vsel %vm4377, %v8843, %v7529
        %v8876 = vsel %vm4377, %v8844, %v7531
        %v8877 = vsel %vm4377, %v8845, %v7533
        %v8878 = vsel %vm4377, %v8846, %v7535
        %v8879 = vsel %vm4377, %v8847, %v7537
        %v8880 = vsel %vm4377, %v8848, %v7539
        %v8881 = vsel %vm4377, %v8849, %v7541
        %v8882 = vsel %vm4377, %v8850, %v7543
        %v8883 = vsel %vm4377, %v8851, %v7545
        %v8884 = vsel %vm4377, %v8852, %v7547
        %v8885 = vsel %vm4377, %v8853, %v7549
        %v8886 = vsel %vm4377, %v8854, %v7551
        %v8887 = vsel %vm4377, %v8855, %v7553
        %v8888 = vsel %vm4377, %v8856, %v7555
        %v8889 = vsel %vm4377, %v8857, %v7557
        %v8890 = vsel %vm4377, %v8858, %v7559
        %v8891 = vsel %vm4377, %v8859, %v7561
        %v8892 = vsel %vm4377, %v8860, %v7563
        %v8893 = vsel %vm4377, %v8861, %v7565
        %v8894 = vsel %vm4377, %v8862, %v7567
        %v8895 = vsel %vm4377, %v8863, %v7569
        %v8896 = vsel %vm4377, %v8864, %v7571
        %v8897 = vsel %vm4377, %v8865, %v7573
        %v8898 = vsel %vm4377, %v8866, %v7575
        %v8899 = vsel %vm4377, %v8867, %v7577
        %v8900 = vsel %vm4377, %v8868, %v7579
        %v8901 = vsel %vm4377, %v8869, %v7581
        %v8902 = vsel %vm3803, %v8870, %v7022
        %v8903 = vsel %vm3803, %v8871, %v7024
        %v8904 = vsel %vm3803, %v8872, %v7026
        %v8905 = vsel %vm3803, %v8873, %v7028
        %v8906 = vsel %vm3803, %v8874, %v7030
        %v8907 = vsel %vm3803, %v8875, %v7032
        %v8908 = vsel %vm3803, %v8876, %v7034
        %v8909 = vsel %vm3803, %v8877, %v7036
        %v8910 = vsel %vm3803, %v8878, %v7038
        %v8911 = vsel %vm3803, %v8879, %v7040
        %v8912 = vsel %vm3803, %v8880, %v7042
        %v8913 = vsel %vm3803, %v8881, %v7044
        %v8914 = vsel %vm3803, %v8882, %v7046
        %v8915 = vsel %vm3803, %v8883, %v7048
        %v8916 = vsel %vm3803, %v8884, %v7050
        %v8917 = vsel %vm3803, %v8885, %v7052
        %v8918 = vsel %vm3803, %v8886, %v7054
        %v8919 = vsel %vm3803, %v8887, %v7056
        %v8920 = vsel %vm3803, %v8888, %v7058
        %v8921 = vsel %vm3803, %v8889, %v7060
        %v8922 = vsel %vm3803, %v8890, %v7062
        %v8923 = vsel %vm3803, %v8891, %v7064
        %v8924 = vsel %vm3803, %v8892, %v7066
        %v8925 = vsel %vm3803, %v8893, %v7068
        %v8926 = vsel %vm3803, %v8894, %v7070
        %v8927 = vsel %vm3803, %v8895, %v7072
        %v8928 = vsel %vm3803, %v8896, %v7074
        %v8929 = vsel %vm3803, %v8897, %v7076
        %v8930 = vsel %vm3803, %v8898, %v7078
        %v8931 = vsel %vm3803, %v8899, %v7080
        %v8932 = vsel %vm3803, %v8900, %v7082
        %v8933 = vsel %vm3803, %v8901, %v7084
        %v8934 = vsel %vm4380, %v8902, %v6469
        %v8935 = vsel %vm4380, %v8903, %v6471
        %v8936 = vsel %vm4380, %v8904, %v6473
        %v8937 = vsel %vm4380, %v8905, %v6475
        %v8938 = vsel %vm4380, %v8906, %v6477
        %v8939 = vsel %vm4380, %v8907, %v6479
        %v8940 = vsel %vm4380, %v8908, %v6481
        %v8941 = vsel %vm4380, %v8909, %v6483
        %v8942 = vsel %vm4380, %v8910, %v6485
        %v8943 = vsel %vm4380, %v8911, %v6487
        %v8944 = vsel %vm4380, %v8912, %v6489
        %v8945 = vsel %vm4380, %v8913, %v6491
        %v8946 = vsel %vm4380, %v8914, %v6493
        %v8947 = vsel %vm4380, %v8915, %v6495
        %v8948 = vsel %vm4380, %v8916, %v6497
        %v8949 = vsel %vm4380, %v8917, %v6499
        %v8950 = vsel %vm4380, %v8918, %v6501
        %v8951 = vsel %vm4380, %v8919, %v6503
        %v8952 = vsel %vm4380, %v8920, %v6505
        %v8953 = vsel %vm4380, %v8921, %v6507
        %v8954 = vsel %vm4380, %v8922, %v6509
        %v8955 = vsel %vm4380, %v8923, %v6511
        %v8956 = vsel %vm4380, %v8924, %v6513
        %v8957 = vsel %vm4380, %v8925, %v6515
        %v8958 = vsel %vm4380, %v8926, %v6517
        %v8959 = vsel %vm4380, %v8927, %v6519
        %v8960 = vsel %vm4380, %v8928, %v6521
        %v8961 = vsel %vm4380, %v8929, %v6523
        %v8962 = vsel %vm4380, %v8930, %v6525
        %v8963 = vsel %vm4380, %v8931, %v6527
        %v8964 = vsel %vm4380, %v8932, %v6529
        %v8965 = vsel %vm4380, %v8933, %v6531
        %v8966 = vsel %vm4382, %v8934, %v4715
        %v8967 = vsel %vm4382, %v8935, %v4716
        %v8968 = vsel %vm4382, %v8936, %v4717
        %v8969 = vsel %vm4382, %v8937, %v4718
        %v8970 = vsel %vm4382, %v8938, %v4719
        %v8971 = vsel %vm4382, %v8939, %v4720
        %v8972 = vsel %vm4382, %v8940, %v4721
        %v8973 = vsel %vm4382, %v8941, %v4722
        %v8974 = vsel %vm4382, %v8942, %v4723
        %v8975 = vsel %vm4382, %v8943, %v4724
        %v8976 = vsel %vm4382, %v8944, %v4725
        %v8977 = vsel %vm4382, %v8945, %v4726
        %v8978 = vsel %vm4382, %v8946, %v4727
        %v8979 = vsel %vm4382, %v8947, %v4728
        %v8980 = vsel %vm4382, %v8948, %v4729
        %v8981 = vsel %vm4382, %v8949, %v4730
        %v8982 = vsel %vm4382, %v8950, %v4731
        %v8983 = vsel %vm4382, %v8951, %v4732
        %v8984 = vsel %vm4382, %v8952, %v4733
        %v8985 = vsel %vm4382, %v8953, %v4734
        %v8986 = vsel %vm4382, %v8954, %v4735
        %v8987 = vsel %vm4382, %v8955, %v4736
        %v8988 = vsel %vm4382, %v8956, %v4737
        %v8989 = vsel %vm4382, %v8957, %v4738
        %v8990 = vsel %vm4382, %v8958, %v4739
        %v8991 = vsel %vm4382, %v8959, %v4740
        %v8992 = vsel %vm4382, %v8960, %v4741
        %v8993 = vsel %vm4382, %v8961, %v4742
        %v8994 = vsel %vm4382, %v8962, %v4743
        %v8995 = vsel %vm4382, %v8963, %v4744
        %v8996 = vsel %vm4382, %v8964, %v4745
        %v8997 = vsel %vm4382, %v8965, %v4746
        %v8998 = vsel %vm4384, %v8966, %v5509
        %v8999 = vsel %vm4384, %v8967, %v5511
        %v9000 = vsel %vm4384, %v8968, %v5513
        %v9001 = vsel %vm4384, %v8969, %v5515
        %v9002 = vsel %vm4384, %v8970, %v5517
        %v9003 = vsel %vm4384, %v8971, %v5519
        %v9004 = vsel %vm4384, %v8972, %v5521
        %v9005 = vsel %vm4384, %v8973, %v5523
        %v9006 = vsel %vm4384, %v8974, %v5525
        %v9007 = vsel %vm4384, %v8975, %v5527
        %v9008 = vsel %vm4384, %v8976, %v5529
        %v9009 = vsel %vm4384, %v8977, %v5531
        %v9010 = vsel %vm4384, %v8978, %v5533
        %v9011 = vsel %vm4384, %v8979, %v5535
        %v9012 = vsel %vm4384, %v8980, %v5537
        %v9013 = vsel %vm4384, %v8981, %v5539
        %v9014 = vsel %vm4384, %v8982, %v5541
        %v9015 = vsel %vm4384, %v8983, %v5543
        %v9016 = vsel %vm4384, %v8984, %v5545
        %v9017 = vsel %vm4384, %v8985, %v5547
        %v9018 = vsel %vm4384, %v8986, %v5549
        %v9019 = vsel %vm4384, %v8987, %v5551
        %v9020 = vsel %vm4384, %v8988, %v5553
        %v9021 = vsel %vm4384, %v8989, %v5555
        %v9022 = vsel %vm4384, %v8990, %v5557
        %v9023 = vsel %vm4384, %v8991, %v5559
        %v9024 = vsel %vm4384, %v8992, %v5561
        %v9025 = vsel %vm4384, %v8993, %v5563
        %v9026 = vsel %vm4384, %v8994, %v5565
        %v9027 = vsel %vm4384, %v8995, %v5567
        %v9028 = vsel %vm4384, %v8996, %v5569
        %v9029 = vsel %vm4384, %v8997, %v5571
        %v9030 = vmul.f32 %v5413, %v8998
        %v9031 = vmul.f32 %v5414, %v8999
        %v9032 = vmul.f32 %v5415, %v9000
        %v9033 = vmul.f32 %v5416, %v9001
        %v9034 = vmul.f32 %v5417, %v9002
        %v9035 = vmul.f32 %v5418, %v9003
        %v9036 = vmul.f32 %v5419, %v9004
        %v9037 = vmul.f32 %v9005, 0.0
        %v9038 = vmul.f32 %v5421, %v9006
        %v9039 = vmul.f32 %v5422, %v9007
        %v9040 = vmul.f32 %v5423, %v9008
        %v9041 = vmul.f32 %v5424, %v9009
        %v9042 = vmul.f32 %v5425, %v9010
        %v9043 = vmul.f32 %v5426, %v9011
        %v9044 = vmul.f32 %v5427, %v9012
        %v9045 = vmul.f32 %v9013, 0.0
        %v9046 = vmul.f32 %v5429, %v9014
        %v9047 = vmul.f32 %v5430, %v9015
        %v9048 = vmul.f32 %v5431, %v9016
        %v9049 = vmul.f32 %v5432, %v9017
        %v9050 = vmul.f32 %v5433, %v9018
        %v9051 = vmul.f32 %v5434, %v9019
        %v9052 = vmul.f32 %v5435, %v9020
        %v9053 = vmul.f32 %v9021, 0.0
        %v9054 = vmul.f32 %v5437, %v9022
        %v9055 = vmul.f32 %v5438, %v9023
        %v9056 = vmul.f32 %v5439, %v9024
        %v9057 = vmul.f32 %v5440, %v9025
        %v9058 = vmul.f32 %v5441, %v9026
        %v9059 = vmul.f32 %v5442, %v9027
        %v9060 = vmul.f32 %v5443, %v9028
        %v9061 = vmul.f32 %v9029, 0.0
        %v9062 = vadd.f32 %v8678, %v9030
        %v9063 = vadd.f32 %v8679, %v9031
        %v9064 = vadd.f32 %v8680, %v9032
        %v9065 = vadd.f32 %v8681, %v9033
        %v9066 = vadd.f32 %v8682, %v9034
        %v9067 = vadd.f32 %v8683, %v9035
        %v9068 = vadd.f32 %v8684, %v9036
        %v9069 = vadd.f32 %v8685, %v9037
        %v9070 = vadd.f32 %v8686, %v9038
        %v9071 = vadd.f32 %v8687, %v9039
        %v9072 = vadd.f32 %v8688, %v9040
        %v9073 = vadd.f32 %v8689, %v9041
        %v9074 = vadd.f32 %v8690, %v9042
        %v9075 = vadd.f32 %v8691, %v9043
        %v9076 = vadd.f32 %v8692, %v9044
        %v9077 = vadd.f32 %v8693, %v9045
        %v9078 = vadd.f32 %v8694, %v9046
        %v9079 = vadd.f32 %v8695, %v9047
        %v9080 = vadd.f32 %v8696, %v9048
        %v9081 = vadd.f32 %v8697, %v9049
        %v9082 = vadd.f32 %v8698, %v9050
        %v9083 = vadd.f32 %v8699, %v9051
        %v9084 = vadd.f32 %v8700, %v9052
        %v9085 = vadd.f32 %v8701, %v9053
        %v9086 = vadd.f32 %v8702, %v9054
        %v9087 = vadd.f32 %v8703, %v9055
        %v9088 = vadd.f32 %v8704, %v9056
        %v9089 = vadd.f32 %v8705, %v9057
        %v9090 = vadd.f32 %v8706, %v9058
        %v9091 = vadd.f32 %v8707, %v9059
        %v9092 = vadd.f32 %v8708, %v9060
        %v9093 = vadd.f32 %v8709, %v9061
        %9094 = vrot.lane.b32.xlu0 %v4715, 114
        %v9095 = vpop.permute.xlu0 %9094
        %9096 = vrot.lane.b32.xlu0 %v4716, 114
        %v9097 = vpop.permute.xlu0 %9096
        %9098 = vrot.lane.b32.xlu0 %v4717, 114
        %v9099 = vpop.permute.xlu0 %9098
        %9100 = vrot.lane.b32.xlu0 %v4718, 114
        %v9101 = vpop.permute.xlu0 %9100
        %9102 = vrot.lane.b32.xlu0 %v4719, 114
        %v9103 = vpop.permute.xlu0 %9102
        %9104 = vrot.lane.b32.xlu0 %v4720, 114
        %v9105 = vpop.permute.xlu0 %9104
        %9106 = vrot.lane.b32.xlu0 %v4721, 114
        %v9107 = vpop.permute.xlu0 %9106
        %9108 = vrot.lane.b32.xlu0 %v4722, 114
        %v9109 = vpop.permute.xlu0 %9108
        %9110 = vrot.lane.b32.xlu0 %v4723, 114
        %v9111 = vpop.permute.xlu0 %9110
        %9112 = vrot.lane.b32.xlu0 %v4724, 114
        %v9113 = vpop.permute.xlu0 %9112
        %9114 = vrot.lane.b32.xlu0 %v4725, 114
        %v9115 = vpop.permute.xlu0 %9114
        %9116 = vrot.lane.b32.xlu0 %v4726, 114
        %v9117 = vpop.permute.xlu0 %9116
        %9118 = vrot.lane.b32.xlu0 %v4727, 114
        %v9119 = vpop.permute.xlu0 %9118
        %9120 = vrot.lane.b32.xlu0 %v4728, 114
        %v9121 = vpop.permute.xlu0 %9120
        %9122 = vrot.lane.b32.xlu0 %v4729, 114
        %v9123 = vpop.permute.xlu0 %9122
        %9124 = vrot.lane.b32.xlu0 %v4730, 114
        %v9125 = vpop.permute.xlu0 %9124
        %9126 = vrot.lane.b32.xlu0 %v4731, 114
        %v9127 = vpop.permute.xlu0 %9126
        %9128 = vrot.lane.b32.xlu0 %v4732, 114
        %v9129 = vpop.permute.xlu0 %9128
        %9130 = vrot.lane.b32.xlu0 %v4733, 114
        %v9131 = vpop.permute.xlu0 %9130
        %9132 = vrot.lane.b32.xlu0 %v4734, 114
        %v9133 = vpop.permute.xlu0 %9132
        %9134 = vrot.lane.b32.xlu0 %v4735, 114
        %v9135 = vpop.permute.xlu0 %9134
        %9136 = vrot.lane.b32.xlu0 %v4736, 114
        %v9137 = vpop.permute.xlu0 %9136
        %9138 = vrot.lane.b32.xlu0 %v4737, 114
        %v9139 = vpop.permute.xlu0 %9138
        %9140 = vrot.lane.b32.xlu0 %v4738, 114
        %v9141 = vpop.permute.xlu0 %9140
        %9142 = vrot.lane.b32.xlu0 %v4739, 114
        %v9143 = vpop.permute.xlu0 %9142
        %9144 = vrot.lane.b32.xlu0 %v4740, 114
        %v9145 = vpop.permute.xlu0 %9144
        %9146 = vrot.lane.b32.xlu0 %v4741, 114
        %v9147 = vpop.permute.xlu0 %9146
        %9148 = vrot.lane.b32.xlu0 %v4742, 114
        %v9149 = vpop.permute.xlu0 %9148
        %9150 = vrot.lane.b32.xlu0 %v4743, 114
        %v9151 = vpop.permute.xlu0 %9150
        %9152 = vrot.lane.b32.xlu0 %v4744, 114
        %v9153 = vpop.permute.xlu0 %9152
        %9154 = vrot.lane.b32.xlu0 %v4745, 114
        %v9155 = vpop.permute.xlu0 %9154
        %9156 = vrot.lane.b32.xlu0 %v4746, 114
        %v9157 = vpop.permute.xlu0 %9156
        %v9190 = vsel %vm4373, %v9095, %v8711
        %v9191 = vsel %vm4373, %v9097, %v8713
        %v9192 = vsel %vm4373, %v9099, %v8715
        %v9193 = vsel %vm4373, %v9101, %v8717
        %v9194 = vsel %vm4373, %v9103, %v8719
        %v9195 = vsel %vm4373, %v9105, %v8721
        %v9196 = vsel %vm4373, %v9107, %v8723
        %v9197 = vsel %vm4373, %v9109, %v8725
        %v9198 = vsel %vm4373, %v9111, %v8727
        %v9199 = vsel %vm4373, %v9113, %v8729
        %v9200 = vsel %vm4373, %v9115, %v8731
        %v9201 = vsel %vm4373, %v9117, %v8733
        %v9202 = vsel %vm4373, %v9119, %v8735
        %v9203 = vsel %vm4373, %v9121, %v8737
        %v9204 = vsel %vm4373, %v9123, %v8739
        %v9205 = vsel %vm4373, %v9125, %v8741
        %v9206 = vsel %vm4373, %v9127, %v8743
        %v9207 = vsel %vm4373, %v9129, %v8745
        %v9208 = vsel %vm4373, %v9131, %v8747
        %v9209 = vsel %vm4373, %v9133, %v8749
        %v9210 = vsel %vm4373, %v9135, %v8751
        %v9211 = vsel %vm4373, %v9137, %v8753
        %v9212 = vsel %vm4373, %v9139, %v8755
        %v9213 = vsel %vm4373, %v9141, %v8757
        %v9214 = vsel %vm4373, %v9143, %v8759
        %v9215 = vsel %vm4373, %v9145, %v8761
        %v9216 = vsel %vm4373, %v9147, %v8763
        %v9217 = vsel %vm4373, %v9149, %v8765
        %v9218 = vsel %vm4373, %v9151, %v8767
        %v9219 = vsel %vm4373, %v9153, %v8769
        %v9220 = vsel %vm4373, %v9155, %v8771
        %v9221 = vsel %vm4373, %v9157, %v8773
        %v9222 = vsel %vm4375, %v9190, %v8311
        %v9223 = vsel %vm4375, %v9191, %v8313
        %v9224 = vsel %vm4375, %v9192, %v8315
        %v9225 = vsel %vm4375, %v9193, %v8317
        %v9226 = vsel %vm4375, %v9194, %v8319
        %v9227 = vsel %vm4375, %v9195, %v8321
        %v9228 = vsel %vm4375, %v9196, %v8323
        %v9229 = vsel %vm4375, %v9197, %v8325
        %v9230 = vsel %vm4375, %v9198, %v8327
        %v9231 = vsel %vm4375, %v9199, %v8329
        %v9232 = vsel %vm4375, %v9200, %v8331
        %v9233 = vsel %vm4375, %v9201, %v8333
        %v9234 = vsel %vm4375, %v9202, %v8335
        %v9235 = vsel %vm4375, %v9203, %v8337
        %v9236 = vsel %vm4375, %v9204, %v8339
        %v9237 = vsel %vm4375, %v9205, %v8341
        %v9238 = vsel %vm4375, %v9206, %v8343
        %v9239 = vsel %vm4375, %v9207, %v8345
        %v9240 = vsel %vm4375, %v9208, %v8347
        %v9241 = vsel %vm4375, %v9209, %v8349
        %v9242 = vsel %vm4375, %v9210, %v8351
        %v9243 = vsel %vm4375, %v9211, %v8353
        %v9244 = vsel %vm4375, %v9212, %v8355
        %v9245 = vsel %vm4375, %v9213, %v8357
        %v9246 = vsel %vm4375, %v9214, %v8359
        %v9247 = vsel %vm4375, %v9215, %v8361
        %v9248 = vsel %vm4375, %v9216, %v8363
        %v9249 = vsel %vm4375, %v9217, %v8365
        %v9250 = vsel %vm4375, %v9218, %v8367
        %v9251 = vsel %vm4375, %v9219, %v8369
        %v9252 = vsel %vm4375, %v9220, %v8371
        %v9253 = vsel %vm4375, %v9221, %v8373
        %v9254 = vsel %vm4377, %v9222, %v7903
        %v9255 = vsel %vm4377, %v9223, %v7905
        %v9256 = vsel %vm4377, %v9224, %v7907
        %v9257 = vsel %vm4377, %v9225, %v7909
        %v9258 = vsel %vm4377, %v9226, %v7911
        %v9259 = vsel %vm4377, %v9227, %v7913
        %v9260 = vsel %vm4377, %v9228, %v7915
        %v9261 = vsel %vm4377, %v9229, %v7917
        %v9262 = vsel %vm4377, %v9230, %v7919
        %v9263 = vsel %vm4377, %v9231, %v7921
        %v9264 = vsel %vm4377, %v9232, %v7923
        %v9265 = vsel %vm4377, %v9233, %v7925
        %v9266 = vsel %vm4377, %v9234, %v7927
        %v9267 = vsel %vm4377, %v9235, %v7929
        %v9268 = vsel %vm4377, %v9236, %v7931
        %v9269 = vsel %vm4377, %v9237, %v7933
        %v9270 = vsel %vm4377, %v9238, %v7935
        %v9271 = vsel %vm4377, %v9239, %v7937
        %v9272 = vsel %vm4377, %v9240, %v7939
        %v9273 = vsel %vm4377, %v9241, %v7941
        %v9274 = vsel %vm4377, %v9242, %v7943
        %v9275 = vsel %vm4377, %v9243, %v7945
        %v9276 = vsel %vm4377, %v9244, %v7947
        %v9277 = vsel %vm4377, %v9245, %v7949
        %v9278 = vsel %vm4377, %v9246, %v7951
        %v9279 = vsel %vm4377, %v9247, %v7953
        %v9280 = vsel %vm4377, %v9248, %v7955
        %v9281 = vsel %vm4377, %v9249, %v7957
        %v9282 = vsel %vm4377, %v9250, %v7959
        %v9283 = vsel %vm4377, %v9251, %v7961
        %v9284 = vsel %vm4377, %v9252, %v7963
        %v9285 = vsel %vm4377, %v9253, %v7965
        %v9286 = vsel %vm3803, %v9254, %v7519
        %v9287 = vsel %vm3803, %v9255, %v7521
        %v9288 = vsel %vm3803, %v9256, %v7523
        %v9289 = vsel %vm3803, %v9257, %v7525
        %v9290 = vsel %vm3803, %v9258, %v7527
        %v9291 = vsel %vm3803, %v9259, %v7529
        %v9292 = vsel %vm3803, %v9260, %v7531
        %v9293 = vsel %vm3803, %v9261, %v7533
        %v9294 = vsel %vm3803, %v9262, %v7535
        %v9295 = vsel %vm3803, %v9263, %v7537
        %v9296 = vsel %vm3803, %v9264, %v7539
        %v9297 = vsel %vm3803, %v9265, %v7541
        %v9298 = vsel %vm3803, %v9266, %v7543
        %v9299 = vsel %vm3803, %v9267, %v7545
        %v9300 = vsel %vm3803, %v9268, %v7547
        %v9301 = vsel %vm3803, %v9269, %v7549
        %v9302 = vsel %vm3803, %v9270, %v7551
        %v9303 = vsel %vm3803, %v9271, %v7553
        %v9304 = vsel %vm3803, %v9272, %v7555
        %v9305 = vsel %vm3803, %v9273, %v7557
        %v9306 = vsel %vm3803, %v9274, %v7559
        %v9307 = vsel %vm3803, %v9275, %v7561
        %v9308 = vsel %vm3803, %v9276, %v7563
        %v9309 = vsel %vm3803, %v9277, %v7565
        %v9310 = vsel %vm3803, %v9278, %v7567
        %v9311 = vsel %vm3803, %v9279, %v7569
        %v9312 = vsel %vm3803, %v9280, %v7571
        %v9313 = vsel %vm3803, %v9281, %v7573
        %v9314 = vsel %vm3803, %v9282, %v7575
        %v9315 = vsel %vm3803, %v9283, %v7577
        %v9316 = vsel %vm3803, %v9284, %v7579
        %v9317 = vsel %vm3803, %v9285, %v7581
        %v9318 = vsel %vm4380, %v9286, %v7022
        %v9319 = vsel %vm4380, %v9287, %v7024
        %v9320 = vsel %vm4380, %v9288, %v7026
        %v9321 = vsel %vm4380, %v9289, %v7028
        %v9322 = vsel %vm4380, %v9290, %v7030
        %v9323 = vsel %vm4380, %v9291, %v7032
        %v9324 = vsel %vm4380, %v9292, %v7034
        %v9325 = vsel %vm4380, %v9293, %v7036
        %v9326 = vsel %vm4380, %v9294, %v7038
        %v9327 = vsel %vm4380, %v9295, %v7040
        %v9328 = vsel %vm4380, %v9296, %v7042
        %v9329 = vsel %vm4380, %v9297, %v7044
        %v9330 = vsel %vm4380, %v9298, %v7046
        %v9331 = vsel %vm4380, %v9299, %v7048
        %v9332 = vsel %vm4380, %v9300, %v7050
        %v9333 = vsel %vm4380, %v9301, %v7052
        %v9334 = vsel %vm4380, %v9302, %v7054
        %v9335 = vsel %vm4380, %v9303, %v7056
        %v9336 = vsel %vm4380, %v9304, %v7058
        %v9337 = vsel %vm4380, %v9305, %v7060
        %v9338 = vsel %vm4380, %v9306, %v7062
        %v9339 = vsel %vm4380, %v9307, %v7064
        %v9340 = vsel %vm4380, %v9308, %v7066
        %v9341 = vsel %vm4380, %v9309, %v7068
        %v9342 = vsel %vm4380, %v9310, %v7070
        %v9343 = vsel %vm4380, %v9311, %v7072
        %v9344 = vsel %vm4380, %v9312, %v7074
        %v9345 = vsel %vm4380, %v9313, %v7076
        %v9346 = vsel %vm4380, %v9314, %v7078
        %v9347 = vsel %vm4380, %v9315, %v7080
        %v9348 = vsel %vm4380, %v9316, %v7082
        %v9349 = vsel %vm4380, %v9317, %v7084
        %v9350 = vsel %vm4382, %v9318, %v6469
        %v9351 = vsel %vm4382, %v9319, %v6471
        %v9352 = vsel %vm4382, %v9320, %v6473
        %v9353 = vsel %vm4382, %v9321, %v6475
        %v9354 = vsel %vm4382, %v9322, %v6477
        %v9355 = vsel %vm4382, %v9323, %v6479
        %v9356 = vsel %vm4382, %v9324, %v6481
        %v9357 = vsel %vm4382, %v9325, %v6483
        %v9358 = vsel %vm4382, %v9326, %v6485
        %v9359 = vsel %vm4382, %v9327, %v6487
        %v9360 = vsel %vm4382, %v9328, %v6489
        %v9361 = vsel %vm4382, %v9329, %v6491
        %v9362 = vsel %vm4382, %v9330, %v6493
        %v9363 = vsel %vm4382, %v9331, %v6495
        %v9364 = vsel %vm4382, %v9332, %v6497
        %v9365 = vsel %vm4382, %v9333, %v6499
        %v9366 = vsel %vm4382, %v9334, %v6501
        %v9367 = vsel %vm4382, %v9335, %v6503
        %v9368 = vsel %vm4382, %v9336, %v6505
        %v9369 = vsel %vm4382, %v9337, %v6507
        %v9370 = vsel %vm4382, %v9338, %v6509
        %v9371 = vsel %vm4382, %v9339, %v6511
        %v9372 = vsel %vm4382, %v9340, %v6513
        %v9373 = vsel %vm4382, %v9341, %v6515
        %v9374 = vsel %vm4382, %v9342, %v6517
        %v9375 = vsel %vm4382, %v9343, %v6519
        %v9376 = vsel %vm4382, %v9344, %v6521
        %v9377 = vsel %vm4382, %v9345, %v6523
        %v9378 = vsel %vm4382, %v9346, %v6525
        %v9379 = vsel %vm4382, %v9347, %v6527
        %v9380 = vsel %vm4382, %v9348, %v6529
        %v9381 = vsel %vm4382, %v9349, %v6531
        %v9382 = vsel %vm4384, %v9350, %v4715
        %v9383 = vsel %vm4384, %v9351, %v4716
        %v9384 = vsel %vm4384, %v9352, %v4717
        %v9385 = vsel %vm4384, %v9353, %v4718
        %v9386 = vsel %vm4384, %v9354, %v4719
        %v9387 = vsel %vm4384, %v9355, %v4720
        %v9388 = vsel %vm4384, %v9356, %v4721
        %v9389 = vsel %vm4384, %v9357, %v4722
        %v9390 = vsel %vm4384, %v9358, %v4723
        %v9391 = vsel %vm4384, %v9359, %v4724
        %v9392 = vsel %vm4384, %v9360, %v4725
        %v9393 = vsel %vm4384, %v9361, %v4726
        %v9394 = vsel %vm4384, %v9362, %v4727
        %v9395 = vsel %vm4384, %v9363, %v4728
        %v9396 = vsel %vm4384, %v9364, %v4729
        %v9397 = vsel %vm4384, %v9365, %v4730
        %v9398 = vsel %vm4384, %v9366, %v4731
        %v9399 = vsel %vm4384, %v9367, %v4732
        %v9400 = vsel %vm4384, %v9368, %v4733
        %v9401 = vsel %vm4384, %v9369, %v4734
        %v9402 = vsel %vm4384, %v9370, %v4735
        %v9403 = vsel %vm4384, %v9371, %v4736
        %v9404 = vsel %vm4384, %v9372, %v4737
        %v9405 = vsel %vm4384, %v9373, %v4738
        %v9406 = vsel %vm4384, %v9374, %v4739
        %v9407 = vsel %vm4384, %v9375, %v4740
        %v9408 = vsel %vm4384, %v9376, %v4741
        %v9409 = vsel %vm4384, %v9377, %v4742
        %v9410 = vsel %vm4384, %v9378, %v4743
        %v9411 = vsel %vm4384, %v9379, %v4744
        %v9412 = vsel %vm4384, %v9380, %v4745
        %v9413 = vsel %vm4384, %v9381, %v4746
        %v9414 = vmul.f32 %v6849, %v9382
        %v9415 = vmul.f32 %v6852, %v9383
        %v9416 = vmul.f32 %v6855, %v9384
        %v9417 = vmul.f32 %v6858, %v9385
        %v9418 = vmul.f32 %v6861, %v9386
        %v9419 = vmul.f32 %v6864, %v9387
        %v9420 = vmul.f32 %v8232, %v9388
        %v9421 = vmul.f32 %v812, %v9389
        %v9422 = vmul.f32 %v6870, %v9390
        %v9423 = vmul.f32 %v6873, %v9391
        %v9424 = vmul.f32 %v6876, %v9392
        %v9425 = vmul.f32 %v6879, %v9393
        %v9426 = vmul.f32 %v6882, %v9394
        %v9427 = vmul.f32 %v6885, %v9395
        %v9428 = vmul.f32 %v8235, %v9396
        %v9429 = vmul.f32 %v812, %v9397
        %v9430 = vmul.f32 %v6891, %v9398
        %v9431 = vmul.f32 %v6894, %v9399
        %v9432 = vmul.f32 %v6897, %v9400
        %v9433 = vmul.f32 %v6900, %v9401
        %v9434 = vmul.f32 %v6903, %v9402
        %v9435 = vmul.f32 %v6906, %v9403
        %v9436 = vmul.f32 %v8238, %v9404
        %v9437 = vmul.f32 %v812, %v9405
        %v9438 = vmul.f32 %v6912, %v9406
        %v9439 = vmul.f32 %v6915, %v9407
        %v9440 = vmul.f32 %v6918, %v9408
        %v9441 = vmul.f32 %v6921, %v9409
        %v9442 = vmul.f32 %v6924, %v9410
        %v9443 = vmul.f32 %v6927, %v9411
        %v9444 = vmul.f32 %v8241, %v9412
        %v9445 = vmul.f32 %v812, %v9413
        %v9446 = vadd.f32 %v9062, %v9414
        %v9447 = vadd.f32 %v9063, %v9415
        %v9448 = vadd.f32 %v9064, %v9416
        %v9449 = vadd.f32 %v9065, %v9417
        %v9450 = vadd.f32 %v9066, %v9418
        %v9451 = vadd.f32 %v9067, %v9419
        %v9452 = vadd.f32 %v9068, %v9420
        %v9453 = vadd.f32 %v9069, %v9421
        %v9454 = vadd.f32 %v9070, %v9422
        %v9455 = vadd.f32 %v9071, %v9423
        %v9456 = vadd.f32 %v9072, %v9424
        %v9457 = vadd.f32 %v9073, %v9425
        %v9458 = vadd.f32 %v9074, %v9426
        %v9459 = vadd.f32 %v9075, %v9427
        %v9460 = vadd.f32 %v9076, %v9428
        %v9461 = vadd.f32 %v9077, %v9429
        %v9462 = vadd.f32 %v9078, %v9430
        %v9463 = vadd.f32 %v9079, %v9431
        %v9464 = vadd.f32 %v9080, %v9432
        %v9465 = vadd.f32 %v9081, %v9433
        %v9466 = vadd.f32 %v9082, %v9434
        %v9467 = vadd.f32 %v9083, %v9435
        %v9468 = vadd.f32 %v9084, %v9436
        %v9469 = vadd.f32 %v9085, %v9437
        %v9470 = vadd.f32 %v9086, %v9438
        %v9471 = vadd.f32 %v9087, %v9439
        %v9472 = vadd.f32 %v9088, %v9440
        %v9473 = vadd.f32 %v9089, %v9441
        %v9474 = vadd.f32 %v9090, %v9442
        %v9475 = vadd.f32 %v9091, %v9443
        %v9476 = vadd.f32 %v9092, %v9444
        %v9477 = vadd.f32 %v9093, %v9445
        %9478 = vrot.lane.b32.xlu0 %v4715, 112
        %v9479 = vpop.permute.xlu0 %9478
        %9480 = vrot.lane.b32.xlu0 %v4716, 112
        %v9481 = vpop.permute.xlu0 %9480
        %9482 = vrot.lane.b32.xlu0 %v4717, 112
        %v9483 = vpop.permute.xlu0 %9482
        %9484 = vrot.lane.b32.xlu0 %v4718, 112
        %v9485 = vpop.permute.xlu0 %9484
        %9486 = vrot.lane.b32.xlu0 %v4719, 112
        %v9487 = vpop.permute.xlu0 %9486
        %9488 = vrot.lane.b32.xlu0 %v4720, 112
        %v9489 = vpop.permute.xlu0 %9488
        %9490 = vrot.lane.b32.xlu0 %v4721, 112
        %v9491 = vpop.permute.xlu0 %9490
        %9492 = vrot.lane.b32.xlu0 %v4722, 112
        %v9493 = vpop.permute.xlu0 %9492
        %9494 = vrot.lane.b32.xlu0 %v4723, 112
        %v9495 = vpop.permute.xlu0 %9494
        %9496 = vrot.lane.b32.xlu0 %v4724, 112
        %v9497 = vpop.permute.xlu0 %9496
        %9498 = vrot.lane.b32.xlu0 %v4725, 112
        %v9499 = vpop.permute.xlu0 %9498
        %9500 = vrot.lane.b32.xlu0 %v4726, 112
        %v9501 = vpop.permute.xlu0 %9500
        %9502 = vrot.lane.b32.xlu0 %v4727, 112
        %v9503 = vpop.permute.xlu0 %9502
        %9504 = vrot.lane.b32.xlu0 %v4728, 112
        %v9505 = vpop.permute.xlu0 %9504
        %9506 = vrot.lane.b32.xlu0 %v4729, 112
        %v9507 = vpop.permute.xlu0 %9506
        %9508 = vrot.lane.b32.xlu0 %v4730, 112
        %v9509 = vpop.permute.xlu0 %9508
        %9510 = vrot.lane.b32.xlu0 %v4731, 112
        %v9511 = vpop.permute.xlu0 %9510
        %9512 = vrot.lane.b32.xlu0 %v4732, 112
        %v9513 = vpop.permute.xlu0 %9512
        %9514 = vrot.lane.b32.xlu0 %v4733, 112
        %v9515 = vpop.permute.xlu0 %9514
        %9516 = vrot.lane.b32.xlu0 %v4734, 112
        %v9517 = vpop.permute.xlu0 %9516
        %9518 = vrot.lane.b32.xlu0 %v4735, 112
        %v9519 = vpop.permute.xlu0 %9518
        %9520 = vrot.lane.b32.xlu0 %v4736, 112
        %v9521 = vpop.permute.xlu0 %9520
        %9522 = vrot.lane.b32.xlu0 %v4737, 112
        %v9523 = vpop.permute.xlu0 %9522
        %9524 = vrot.lane.b32.xlu0 %v4738, 112
        %v9525 = vpop.permute.xlu0 %9524
        %9526 = vrot.lane.b32.xlu0 %v4739, 112
        %v9527 = vpop.permute.xlu0 %9526
        %9528 = vrot.lane.b32.xlu0 %v4740, 112
        %v9529 = vpop.permute.xlu0 %9528
        %9530 = vrot.lane.b32.xlu0 %v4741, 112
        %v9531 = vpop.permute.xlu0 %9530
        %9532 = vrot.lane.b32.xlu0 %v4742, 112
        %v9533 = vpop.permute.xlu0 %9532
        %9534 = vrot.lane.b32.xlu0 %v4743, 112
        %v9535 = vpop.permute.xlu0 %9534
        %9536 = vrot.lane.b32.xlu0 %v4744, 112
        %v9537 = vpop.permute.xlu0 %9536
        %9538 = vrot.lane.b32.xlu0 %v4745, 112
        %v9539 = vpop.permute.xlu0 %9538
        %9540 = vrot.lane.b32.xlu0 %v4746, 112
        %v9541 = vpop.permute.xlu0 %9540
        %v9574 = vsel %vm4373, %v9479, %v9095
        %v9575 = vsel %vm4373, %v9481, %v9097
        %v9576 = vsel %vm4373, %v9483, %v9099
        %v9577 = vsel %vm4373, %v9485, %v9101
        %v9578 = vsel %vm4373, %v9487, %v9103
        %v9579 = vsel %vm4373, %v9489, %v9105
        %v9580 = vsel %vm4373, %v9491, %v9107
        %v9581 = vsel %vm4373, %v9493, %v9109
        %v9582 = vsel %vm4373, %v9495, %v9111
        %v9583 = vsel %vm4373, %v9497, %v9113
        %v9584 = vsel %vm4373, %v9499, %v9115
        %v9585 = vsel %vm4373, %v9501, %v9117
        %v9586 = vsel %vm4373, %v9503, %v9119
        %v9587 = vsel %vm4373, %v9505, %v9121
        %v9588 = vsel %vm4373, %v9507, %v9123
        %v9589 = vsel %vm4373, %v9509, %v9125
        %v9590 = vsel %vm4373, %v9511, %v9127
        %v9591 = vsel %vm4373, %v9513, %v9129
        %v9592 = vsel %vm4373, %v9515, %v9131
        %v9593 = vsel %vm4373, %v9517, %v9133
        %v9594 = vsel %vm4373, %v9519, %v9135
        %v9595 = vsel %vm4373, %v9521, %v9137
        %v9596 = vsel %vm4373, %v9523, %v9139
        %v9597 = vsel %vm4373, %v9525, %v9141
        %v9598 = vsel %vm4373, %v9527, %v9143
        %v9599 = vsel %vm4373, %v9529, %v9145
        %v9600 = vsel %vm4373, %v9531, %v9147
        %v9601 = vsel %vm4373, %v9533, %v9149
        %v9602 = vsel %vm4373, %v9535, %v9151
        %v9603 = vsel %vm4373, %v9537, %v9153
        %v9604 = vsel %vm4373, %v9539, %v9155
        %v9605 = vsel %vm4373, %v9541, %v9157
        %v9606 = vsel %vm4375, %v9574, %v8711
        %v9607 = vsel %vm4375, %v9575, %v8713
        %v9608 = vsel %vm4375, %v9576, %v8715
        %v9609 = vsel %vm4375, %v9577, %v8717
        %v9610 = vsel %vm4375, %v9578, %v8719
        %v9611 = vsel %vm4375, %v9579, %v8721
        %v9612 = vsel %vm4375, %v9580, %v8723
        %v9613 = vsel %vm4375, %v9581, %v8725
        %v9614 = vsel %vm4375, %v9582, %v8727
        %v9615 = vsel %vm4375, %v9583, %v8729
        %v9616 = vsel %vm4375, %v9584, %v8731
        %v9617 = vsel %vm4375, %v9585, %v8733
        %v9618 = vsel %vm4375, %v9586, %v8735
        %v9619 = vsel %vm4375, %v9587, %v8737
        %v9620 = vsel %vm4375, %v9588, %v8739
        %v9621 = vsel %vm4375, %v9589, %v8741
        %v9622 = vsel %vm4375, %v9590, %v8743
        %v9623 = vsel %vm4375, %v9591, %v8745
        %v9624 = vsel %vm4375, %v9592, %v8747
        %v9625 = vsel %vm4375, %v9593, %v8749
        %v9626 = vsel %vm4375, %v9594, %v8751
        %v9627 = vsel %vm4375, %v9595, %v8753
        %v9628 = vsel %vm4375, %v9596, %v8755
        %v9629 = vsel %vm4375, %v9597, %v8757
        %v9630 = vsel %vm4375, %v9598, %v8759
        %v9631 = vsel %vm4375, %v9599, %v8761
        %v9632 = vsel %vm4375, %v9600, %v8763
        %v9633 = vsel %vm4375, %v9601, %v8765
        %v9634 = vsel %vm4375, %v9602, %v8767
        %v9635 = vsel %vm4375, %v9603, %v8769
        %v9636 = vsel %vm4375, %v9604, %v8771
        %v9637 = vsel %vm4375, %v9605, %v8773
        %v9638 = vsel %vm4377, %v9606, %v8311
        %v9639 = vsel %vm4377, %v9607, %v8313
        %v9640 = vsel %vm4377, %v9608, %v8315
        %v9641 = vsel %vm4377, %v9609, %v8317
        %v9642 = vsel %vm4377, %v9610, %v8319
        %v9643 = vsel %vm4377, %v9611, %v8321
        %v9644 = vsel %vm4377, %v9612, %v8323
        %v9645 = vsel %vm4377, %v9613, %v8325
        %v9646 = vsel %vm4377, %v9614, %v8327
        %v9647 = vsel %vm4377, %v9615, %v8329
        %v9648 = vsel %vm4377, %v9616, %v8331
        %v9649 = vsel %vm4377, %v9617, %v8333
        %v9650 = vsel %vm4377, %v9618, %v8335
        %v9651 = vsel %vm4377, %v9619, %v8337
        %v9652 = vsel %vm4377, %v9620, %v8339
        %v9653 = vsel %vm4377, %v9621, %v8341
        %v9654 = vsel %vm4377, %v9622, %v8343
        %v9655 = vsel %vm4377, %v9623, %v8345
        %v9656 = vsel %vm4377, %v9624, %v8347
        %v9657 = vsel %vm4377, %v9625, %v8349
        %v9658 = vsel %vm4377, %v9626, %v8351
        %v9659 = vsel %vm4377, %v9627, %v8353
        %v9660 = vsel %vm4377, %v9628, %v8355
        %v9661 = vsel %vm4377, %v9629, %v8357
        %v9662 = vsel %vm4377, %v9630, %v8359
        %v9663 = vsel %vm4377, %v9631, %v8361
        %v9664 = vsel %vm4377, %v9632, %v8363
        %v9665 = vsel %vm4377, %v9633, %v8365
        %v9666 = vsel %vm4377, %v9634, %v8367
        %v9667 = vsel %vm4377, %v9635, %v8369
        %v9668 = vsel %vm4377, %v9636, %v8371
        %v9669 = vsel %vm4377, %v9637, %v8373
        %v9670 = vsel %vm3803, %v9638, %v7903
        %v9671 = vsel %vm3803, %v9639, %v7905
        %v9672 = vsel %vm3803, %v9640, %v7907
        %v9673 = vsel %vm3803, %v9641, %v7909
        %v9674 = vsel %vm3803, %v9642, %v7911
        %v9675 = vsel %vm3803, %v9643, %v7913
        %v9676 = vsel %vm3803, %v9644, %v7915
        %v9677 = vsel %vm3803, %v9645, %v7917
        %v9678 = vsel %vm3803, %v9646, %v7919
        %v9679 = vsel %vm3803, %v9647, %v7921
        %v9680 = vsel %vm3803, %v9648, %v7923
        %v9681 = vsel %vm3803, %v9649, %v7925
        %v9682 = vsel %vm3803, %v9650, %v7927
        %v9683 = vsel %vm3803, %v9651, %v7929
        %v9684 = vsel %vm3803, %v9652, %v7931
        %v9685 = vsel %vm3803, %v9653, %v7933
        %v9686 = vsel %vm3803, %v9654, %v7935
        %v9687 = vsel %vm3803, %v9655, %v7937
        %v9688 = vsel %vm3803, %v9656, %v7939
        %v9689 = vsel %vm3803, %v9657, %v7941
        %v9690 = vsel %vm3803, %v9658, %v7943
        %v9691 = vsel %vm3803, %v9659, %v7945
        %v9692 = vsel %vm3803, %v9660, %v7947
        %v9693 = vsel %vm3803, %v9661, %v7949
        %v9694 = vsel %vm3803, %v9662, %v7951
        %v9695 = vsel %vm3803, %v9663, %v7953
        %v9696 = vsel %vm3803, %v9664, %v7955
        %v9697 = vsel %vm3803, %v9665, %v7957
        %v9698 = vsel %vm3803, %v9666, %v7959
        %v9699 = vsel %vm3803, %v9667, %v7961
        %v9700 = vsel %vm3803, %v9668, %v7963
        %v9701 = vsel %vm3803, %v9669, %v7965
        %v9702 = vsel %vm4380, %v9670, %v7519
        %v9703 = vsel %vm4380, %v9671, %v7521
        %v9704 = vsel %vm4380, %v9672, %v7523
        %v9705 = vsel %vm4380, %v9673, %v7525
        %v9706 = vsel %vm4380, %v9674, %v7527
        %v9707 = vsel %vm4380, %v9675, %v7529
        %v9708 = vsel %vm4380, %v9676, %v7531
        %v9709 = vsel %vm4380, %v9677, %v7533
        %v9710 = vsel %vm4380, %v9678, %v7535
        %v9711 = vsel %vm4380, %v9679, %v7537
        %v9712 = vsel %vm4380, %v9680, %v7539
        %v9713 = vsel %vm4380, %v9681, %v7541
        %v9714 = vsel %vm4380, %v9682, %v7543
        %v9715 = vsel %vm4380, %v9683, %v7545
        %v9716 = vsel %vm4380, %v9684, %v7547
        %v9717 = vsel %vm4380, %v9685, %v7549
        %v9718 = vsel %vm4380, %v9686, %v7551
        %v9719 = vsel %vm4380, %v9687, %v7553
        %v9720 = vsel %vm4380, %v9688, %v7555
        %v9721 = vsel %vm4380, %v9689, %v7557
        %v9722 = vsel %vm4380, %v9690, %v7559
        %v9723 = vsel %vm4380, %v9691, %v7561
        %v9724 = vsel %vm4380, %v9692, %v7563
        %v9725 = vsel %vm4380, %v9693, %v7565
        %v9726 = vsel %vm4380, %v9694, %v7567
        %v9727 = vsel %vm4380, %v9695, %v7569
        %v9728 = vsel %vm4380, %v9696, %v7571
        %v9729 = vsel %vm4380, %v9697, %v7573
        %v9730 = vsel %vm4380, %v9698, %v7575
        %v9731 = vsel %vm4380, %v9699, %v7577
        %v9732 = vsel %vm4380, %v9700, %v7579
        %v9733 = vsel %vm4380, %v9701, %v7581
        %v9734 = vsel %vm4382, %v9702, %v7022
        %v9735 = vsel %vm4382, %v9703, %v7024
        %v9736 = vsel %vm4382, %v9704, %v7026
        %v9737 = vsel %vm4382, %v9705, %v7028
        %v9738 = vsel %vm4382, %v9706, %v7030
        %v9739 = vsel %vm4382, %v9707, %v7032
        %v9740 = vsel %vm4382, %v9708, %v7034
        %v9741 = vsel %vm4382, %v9709, %v7036
        %v9742 = vsel %vm4382, %v9710, %v7038
        %v9743 = vsel %vm4382, %v9711, %v7040
        %v9744 = vsel %vm4382, %v9712, %v7042
        %v9745 = vsel %vm4382, %v9713, %v7044
        %v9746 = vsel %vm4382, %v9714, %v7046
        %v9747 = vsel %vm4382, %v9715, %v7048
        %v9748 = vsel %vm4382, %v9716, %v7050
        %v9749 = vsel %vm4382, %v9717, %v7052
        %v9750 = vsel %vm4382, %v9718, %v7054
        %v9751 = vsel %vm4382, %v9719, %v7056
        %v9752 = vsel %vm4382, %v9720, %v7058
        %v9753 = vsel %vm4382, %v9721, %v7060
        %v9754 = vsel %vm4382, %v9722, %v7062
        %v9755 = vsel %vm4382, %v9723, %v7064
        %v9756 = vsel %vm4382, %v9724, %v7066
        %v9757 = vsel %vm4382, %v9725, %v7068
        %v9758 = vsel %vm4382, %v9726, %v7070
        %v9759 = vsel %vm4382, %v9727, %v7072
        %v9760 = vsel %vm4382, %v9728, %v7074
        %v9761 = vsel %vm4382, %v9729, %v7076
        %v9762 = vsel %vm4382, %v9730, %v7078
        %v9763 = vsel %vm4382, %v9731, %v7080
        %v9764 = vsel %vm4382, %v9732, %v7082
        %v9765 = vsel %vm4382, %v9733, %v7084
        %v9766 = vsel %vm4384, %v9734, %v6469
        %v9767 = vsel %vm4384, %v9735, %v6471
        %v9768 = vsel %vm4384, %v9736, %v6473
        %v9769 = vsel %vm4384, %v9737, %v6475
        %v9770 = vsel %vm4384, %v9738, %v6477
        %v9771 = vsel %vm4384, %v9739, %v6479
        %v9772 = vsel %vm4384, %v9740, %v6481
        %v9773 = vsel %vm4384, %v9741, %v6483
        %v9774 = vsel %vm4384, %v9742, %v6485
        %v9775 = vsel %vm4384, %v9743, %v6487
        %v9776 = vsel %vm4384, %v9744, %v6489
        %v9777 = vsel %vm4384, %v9745, %v6491
        %v9778 = vsel %vm4384, %v9746, %v6493
        %v9779 = vsel %vm4384, %v9747, %v6495
        %v9780 = vsel %vm4384, %v9748, %v6497
        %v9781 = vsel %vm4384, %v9749, %v6499
        %v9782 = vsel %vm4384, %v9750, %v6501
        %v9783 = vsel %vm4384, %v9751, %v6503
        %v9784 = vsel %vm4384, %v9752, %v6505
        %v9785 = vsel %vm4384, %v9753, %v6507
        %v9786 = vsel %vm4384, %v9754, %v6509
        %v9787 = vsel %vm4384, %v9755, %v6511
        %v9788 = vsel %vm4384, %v9756, %v6513
        %v9789 = vsel %vm4384, %v9757, %v6515
        %v9790 = vsel %vm4384, %v9758, %v6517
        %v9791 = vsel %vm4384, %v9759, %v6519
        %v9792 = vsel %vm4384, %v9760, %v6521
        %v9793 = vsel %vm4384, %v9761, %v6523
        %v9794 = vsel %vm4384, %v9762, %v6525
        %v9795 = vsel %vm4384, %v9763, %v6527
        %v9796 = vsel %vm4384, %v9764, %v6529
        %v9797 = vsel %vm4384, %v9765, %v6531
        %v9798 = vmul.f32 %v7346, %v9766
        %v9799 = vmul.f32 %v7349, %v9767
        %v9800 = vmul.f32 %v7352, %v9768
        %v9801 = vmul.f32 %v7355, %v9769
        %v9802 = vmul.f32 %v7358, %v9770
        %v9803 = vmul.f32 %v7361, %v9771
        %v9804 = vmul.f32 %v8632, %v9772
        %v9805 = vmul.f32 %v878, %v9773
        %v9806 = vmul.f32 %v7367, %v9774
        %v9807 = vmul.f32 %v7370, %v9775
        %v9808 = vmul.f32 %v7373, %v9776
        %v9809 = vmul.f32 %v7376, %v9777
        %v9810 = vmul.f32 %v7379, %v9778
        %v9811 = vmul.f32 %v7382, %v9779
        %v9812 = vmul.f32 %v8635, %v9780
        %v9813 = vmul.f32 %v878, %v9781
        %v9814 = vmul.f32 %v7388, %v9782
        %v9815 = vmul.f32 %v7391, %v9783
        %v9816 = vmul.f32 %v7394, %v9784
        %v9817 = vmul.f32 %v7397, %v9785
        %v9818 = vmul.f32 %v7400, %v9786
        %v9819 = vmul.f32 %v7403, %v9787
        %v9820 = vmul.f32 %v8638, %v9788
        %v9821 = vmul.f32 %v878, %v9789
        %v9822 = vmul.f32 %v7409, %v9790
        %v9823 = vmul.f32 %v7412, %v9791
        %v9824 = vmul.f32 %v7415, %v9792
        %v9825 = vmul.f32 %v7418, %v9793
        %v9826 = vmul.f32 %v7421, %v9794
        %v9827 = vmul.f32 %v7424, %v9795
        %v9828 = vmul.f32 %v8641, %v9796
        %v9829 = vmul.f32 %v878, %v9797
        %v9830 = vadd.f32 %v9446, %v9798
        %v9831 = vadd.f32 %v9447, %v9799
        %v9832 = vadd.f32 %v9448, %v9800
        %v9833 = vadd.f32 %v9449, %v9801
        %v9834 = vadd.f32 %v9450, %v9802
        %v9835 = vadd.f32 %v9451, %v9803
        %v9836 = vadd.f32 %v9452, %v9804
        %v9837 = vadd.f32 %v9453, %v9805
        %v9838 = vadd.f32 %v9454, %v9806
        %v9839 = vadd.f32 %v9455, %v9807
        %v9840 = vadd.f32 %v9456, %v9808
        %v9841 = vadd.f32 %v9457, %v9809
        %v9842 = vadd.f32 %v9458, %v9810
        %v9843 = vadd.f32 %v9459, %v9811
        %v9844 = vadd.f32 %v9460, %v9812
        %v9845 = vadd.f32 %v9461, %v9813
        %v9846 = vadd.f32 %v9462, %v9814
        %v9847 = vadd.f32 %v9463, %v9815
        %v9848 = vadd.f32 %v9464, %v9816
        %v9849 = vadd.f32 %v9465, %v9817
        %v9850 = vadd.f32 %v9466, %v9818
        %v9851 = vadd.f32 %v9467, %v9819
        %v9852 = vadd.f32 %v9468, %v9820
        %v9853 = vadd.f32 %v9469, %v9821
        %v9854 = vadd.f32 %v9470, %v9822
        %v9855 = vadd.f32 %v9471, %v9823
        %v9856 = vadd.f32 %v9472, %v9824
        %v9857 = vadd.f32 %v9473, %v9825
        %v9858 = vadd.f32 %v9474, %v9826
        %v9859 = vadd.f32 %v9475, %v9827
        %v9860 = vadd.f32 %v9476, %v9828
        %v9861 = vadd.f32 %v9477, %v9829
        %v9862 = vld [vmem:[%s12] sm:$0x1]
        %v9864 = vlaneseq
        %v9865 = vshrl.u32 %v9864, 7
        %v9866 = vsub.s32 0, %v9865
        %v9867 = vrot.slane %v9862, %v9866
        %v9869 = vmul.f32 %v9830, %v9867
        %v9870 = vmul.f32 %v9831, %v9867
        %v9871 = vmul.f32 %v9832, %v9867
        %v9872 = vmul.f32 %v9833, %v9867
        %v9873 = vmul.f32 %v9834, %v9867
        %v9874 = vmul.f32 %v9835, %v9867
        %v9875 = vmul.f32 %v9836, %v9867
        %v9876 = vmul.f32 %v9837, %v9867
        %v9877 = vmul.f32 %v9838, %v9867
        %v9878 = vmul.f32 %v9839, %v9867
        %v9879 = vmul.f32 %v9840, %v9867
        %v9880 = vmul.f32 %v9841, %v9867
        %v9881 = vmul.f32 %v9842, %v9867
        %v9882 = vmul.f32 %v9843, %v9867
        %v9883 = vmul.f32 %v9844, %v9867
        %v9884 = vmul.f32 %v9845, %v9867
        %v9885 = vmul.f32 %v9846, %v9867
        %v9886 = vmul.f32 %v9847, %v9867
        %v9887 = vmul.f32 %v9848, %v9867
        %v9888 = vmul.f32 %v9849, %v9867
        %v9889 = vmul.f32 %v9850, %v9867
        %v9890 = vmul.f32 %v9851, %v9867
        %v9891 = vmul.f32 %v9852, %v9867
        %v9892 = vmul.f32 %v9853, %v9867
        %v9893 = vmul.f32 %v9854, %v9867
        %v9894 = vmul.f32 %v9855, %v9867
        %v9895 = vmul.f32 %v9856, %v9867
        %v9896 = vmul.f32 %v9857, %v9867
        %v9897 = vmul.f32 %v9858, %v9867
        %v9898 = vmul.f32 %v9859, %v9867
        %v9899 = vmul.f32 %v9860, %v9867
        %v9900 = vmul.f32 %v9861, %v9867
        %v9901 = vld [vmem:[%s13] sm:$0x1]
        %v9903 = vlaneseq
        %v9904 = vshrl.u32 %v9903, 7
        %v9905 = vsub.s32 0, %v9904
        %v9906 = vrot.slane %v9901, %v9905
        %v9908 = vadd.f32 %v9869, %v9906
        %v9909 = vadd.f32 %v9870, %v9906
        %v9910 = vadd.f32 %v9871, %v9906
        %v9911 = vadd.f32 %v9872, %v9906
        %v9912 = vadd.f32 %v9873, %v9906
        %v9913 = vadd.f32 %v9874, %v9906
        %v9914 = vadd.f32 %v9875, %v9906
        %v9915 = vadd.f32 %v9876, %v9906
        %v9916 = vadd.f32 %v9877, %v9906
        %v9917 = vadd.f32 %v9878, %v9906
        %v9918 = vadd.f32 %v9879, %v9906
        %v9919 = vadd.f32 %v9880, %v9906
        %v9920 = vadd.f32 %v9881, %v9906
        %v9921 = vadd.f32 %v9882, %v9906
        %v9922 = vadd.f32 %v9883, %v9906
        %v9923 = vadd.f32 %v9884, %v9906
        %v9924 = vadd.f32 %v9885, %v9906
        %v9925 = vadd.f32 %v9886, %v9906
        %v9926 = vadd.f32 %v9887, %v9906
        %v9927 = vadd.f32 %v9888, %v9906
        %v9928 = vadd.f32 %v9889, %v9906
        %v9929 = vadd.f32 %v9890, %v9906
        %v9930 = vadd.f32 %v9891, %v9906
        %v9931 = vadd.f32 %v9892, %v9906
        %v9932 = vadd.f32 %v9893, %v9906
        %v9933 = vadd.f32 %v9894, %v9906
        %v9934 = vadd.f32 %v9895, %v9906
        %v9935 = vadd.f32 %v9896, %v9906
        %v9936 = vadd.f32 %v9897, %v9906
        %v9937 = vadd.f32 %v9898, %v9906
        %v9938 = vadd.f32 %v9899, %v9906
        %v9939 = vadd.f32 %v9900, %v9906
        %v9940 = vxor.u32 %v9908, 2147483648
        %v9941 = vxor.u32 %v9909, 2147483648
        %v9942 = vxor.u32 %v9910, 2147483648
        %v9943 = vxor.u32 %v9911, 2147483648
        %v9944 = vxor.u32 %v9912, 2147483648
        %v9945 = vxor.u32 %v9913, 2147483648
        %v9946 = vxor.u32 %v9914, 2147483648
        %v9947 = vxor.u32 %v9915, 2147483648
        %v9948 = vxor.u32 %v9916, 2147483648
        %v9949 = vxor.u32 %v9917, 2147483648
        %v9950 = vxor.u32 %v9918, 2147483648
        %v9951 = vxor.u32 %v9919, 2147483648
        %v9952 = vxor.u32 %v9920, 2147483648
        %v9953 = vxor.u32 %v9921, 2147483648
        %v9954 = vxor.u32 %v9922, 2147483648
        %v9955 = vxor.u32 %v9923, 2147483648
        %v9956 = vxor.u32 %v9924, 2147483648
        %v9957 = vxor.u32 %v9925, 2147483648
        %v9958 = vxor.u32 %v9926, 2147483648
        %v9959 = vxor.u32 %v9927, 2147483648
        %v9960 = vxor.u32 %v9928, 2147483648
        %v9961 = vxor.u32 %v9929, 2147483648
        %v9962 = vxor.u32 %v9930, 2147483648
        %v9963 = vxor.u32 %v9931, 2147483648
        %v9964 = vxor.u32 %v9932, 2147483648
        %v9965 = vxor.u32 %v9933, 2147483648
        %v9966 = vxor.u32 %v9934, 2147483648
        %v9967 = vxor.u32 %v9935, 2147483648
        %v9968 = vxor.u32 %v9936, 2147483648
        %v9969 = vxor.u32 %v9937, 2147483648
        %v9970 = vxor.u32 %v9938, 2147483648
        %v9971 = vxor.u32 %v9939, 2147483648
        %v9972 = vmul.f32 %v9940, 1.442695
        %v9973 = vpow.pop %v9972
        %v9974 = vmul.f32 %v9941, 1.442695
        %v9975 = vpow.pop %v9974
        %v9976 = vmul.f32 %v9942, 1.442695
        %v9977 = vpow.pop %v9976
        %v9978 = vmul.f32 %v9943, 1.442695
        %v9979 = vpow.pop %v9978
        %v9980 = vmul.f32 %v9944, 1.442695
        %v9981 = vpow.pop %v9980
        %v9982 = vmul.f32 %v9945, 1.442695
        %v9983 = vpow.pop %v9982
        %v9984 = vmul.f32 %v9946, 1.442695
        %v9985 = vpow.pop %v9984
        %v9986 = vmul.f32 %v9947, 1.442695
        %v9987 = vpow.pop %v9986
        %v9988 = vmul.f32 %v9948, 1.442695
        %v9989 = vpow.pop %v9988
        %v9990 = vmul.f32 %v9949, 1.442695
        %v9991 = vpow.pop %v9990
        %v9992 = vmul.f32 %v9950, 1.442695
        %v9993 = vpow.pop %v9992
        %v9994 = vmul.f32 %v9951, 1.442695
        %v9995 = vpow.pop %v9994
        %v9996 = vmul.f32 %v9952, 1.442695
        %v9997 = vpow.pop %v9996
        %v9998 = vmul.f32 %v9953, 1.442695
        %v9999 = vpow.pop %v9998
        %v10000 = vmul.f32 %v9954, 1.442695
        %v10001 = vpow.pop %v10000
        %v10002 = vmul.f32 %v9955, 1.442695
        %v10003 = vpow.pop %v10002
        %v10004 = vmul.f32 %v9956, 1.442695
        %v10005 = vpow.pop %v10004
        %v10006 = vmul.f32 %v9957, 1.442695
        %v10007 = vpow.pop %v10006
        %v10008 = vmul.f32 %v9958, 1.442695
        %v10009 = vpow.pop %v10008
        %v10010 = vmul.f32 %v9959, 1.442695
        %v10011 = vpow.pop %v10010
        %v10012 = vmul.f32 %v9960, 1.442695
        %v10013 = vpow.pop %v10012
        %v10014 = vmul.f32 %v9961, 1.442695
        %v10015 = vpow.pop %v10014
        %v10016 = vmul.f32 %v9962, 1.442695
        %v10017 = vpow.pop %v10016
        %v10018 = vmul.f32 %v9963, 1.442695
        %v10019 = vpow.pop %v10018
        %v10020 = vmul.f32 %v9964, 1.442695
        %v10021 = vpow.pop %v10020
        %v10022 = vmul.f32 %v9965, 1.442695
        %v10023 = vpow.pop %v10022
        %v10024 = vmul.f32 %v9966, 1.442695
        %v10025 = vpow.pop %v10024
        %v10026 = vmul.f32 %v9967, 1.442695
        %v10027 = vpow.pop %v10026
        %v10028 = vmul.f32 %v9968, 1.442695
        %v10029 = vpow.pop %v10028
        %v10030 = vmul.f32 %v9969, 1.442695
        %v10031 = vpow.pop %v10030
        %v10032 = vmul.f32 %v9970, 1.442695
        %v10033 = vpow.pop %v10032
        %v10034 = vmul.f32 %v9971, 1.442695
        %v10035 = vpow.pop %v10034
        %v10036 = vadd.f32 %v9973, 1.0
        %v10037 = vadd.f32 %v9975, 1.0
        %v10038 = vadd.f32 %v9977, 1.0
        %v10039 = vadd.f32 %v9979, 1.0
        %v10040 = vadd.f32 %v9981, 1.0
        %v10041 = vadd.f32 %v9983, 1.0
        %v10042 = vadd.f32 %v9985, 1.0
        %v10043 = vadd.f32 %v9987, 1.0
        %v10044 = vadd.f32 %v9989, 1.0
        %v10045 = vadd.f32 %v9991, 1.0
        %v10046 = vadd.f32 %v9993, 1.0
        %v10047 = vadd.f32 %v9995, 1.0
        %v10048 = vadd.f32 %v9997, 1.0
        %v10049 = vadd.f32 %v9999, 1.0
        %v10050 = vadd.f32 %v10001, 1.0
        %v10051 = vadd.f32 %v10003, 1.0
        %v10052 = vadd.f32 %v10005, 1.0
        %v10053 = vadd.f32 %v10007, 1.0
        %v10054 = vadd.f32 %v10009, 1.0
        %v10055 = vadd.f32 %v10011, 1.0
        %v10056 = vadd.f32 %v10013, 1.0
        %v10057 = vadd.f32 %v10015, 1.0
        %v10058 = vadd.f32 %v10017, 1.0
        %v10059 = vadd.f32 %v10019, 1.0
        %v10060 = vadd.f32 %v10021, 1.0
        %v10061 = vadd.f32 %v10023, 1.0
        %v10062 = vadd.f32 %v10025, 1.0
        %v10063 = vadd.f32 %v10027, 1.0
        %v10064 = vadd.f32 %v10029, 1.0
        %v10065 = vadd.f32 %v10031, 1.0
        %v10066 = vadd.f32 %v10033, 1.0
        %v10067 = vadd.f32 %v10035, 1.0
        %v10068 = vrcp.pop %v10036
        %v10069 = vmul.f32 1.0, %v10068
        %v10070 = vrcp.pop %v10037
        %v10071 = vmul.f32 1.0, %v10070
        %v10072 = vrcp.pop %v10038
        %v10073 = vmul.f32 1.0, %v10072
        %v10074 = vrcp.pop %v10039
        %v10075 = vmul.f32 1.0, %v10074
        %v10076 = vrcp.pop %v10040
        %v10077 = vmul.f32 1.0, %v10076
        %v10078 = vrcp.pop %v10041
        %v10079 = vmul.f32 1.0, %v10078
        %v10080 = vrcp.pop %v10042
        %v10081 = vmul.f32 1.0, %v10080
        %v10082 = vrcp.pop %v10043
        %v10083 = vmul.f32 1.0, %v10082
        %v10084 = vrcp.pop %v10044
        %v10085 = vmul.f32 1.0, %v10084
        %v10086 = vrcp.pop %v10045
        %v10087 = vmul.f32 1.0, %v10086
        %v10088 = vrcp.pop %v10046
        %v10089 = vmul.f32 1.0, %v10088
        %v10090 = vrcp.pop %v10047
        %v10091 = vmul.f32 1.0, %v10090
        %v10092 = vrcp.pop %v10048
        %v10093 = vmul.f32 1.0, %v10092
        %v10094 = vrcp.pop %v10049
        %v10095 = vmul.f32 1.0, %v10094
        %v10096 = vrcp.pop %v10050
        %v10097 = vmul.f32 1.0, %v10096
        %v10098 = vrcp.pop %v10051
        %v10099 = vmul.f32 1.0, %v10098
        %v10100 = vrcp.pop %v10052
        %v10101 = vmul.f32 1.0, %v10100
        %v10102 = vrcp.pop %v10053
        %v10103 = vmul.f32 1.0, %v10102
        %v10104 = vrcp.pop %v10054
        %v10105 = vmul.f32 1.0, %v10104
        %v10106 = vrcp.pop %v10055
        %v10107 = vmul.f32 1.0, %v10106
        %v10108 = vrcp.pop %v10056
        %v10109 = vmul.f32 1.0, %v10108
        %v10110 = vrcp.pop %v10057
        %v10111 = vmul.f32 1.0, %v10110
        %v10112 = vrcp.pop %v10058
        %v10113 = vmul.f32 1.0, %v10112
        %v10114 = vrcp.pop %v10059
        %v10115 = vmul.f32 1.0, %v10114
        %v10116 = vrcp.pop %v10060
        %v10117 = vmul.f32 1.0, %v10116
        %v10118 = vrcp.pop %v10061
        %v10119 = vmul.f32 1.0, %v10118
        %v10120 = vrcp.pop %v10062
        %v10121 = vmul.f32 1.0, %v10120
        %v10122 = vrcp.pop %v10063
        %v10123 = vmul.f32 1.0, %v10122
        %v10124 = vrcp.pop %v10064
        %v10125 = vmul.f32 1.0, %v10124
        %v10126 = vrcp.pop %v10065
        %v10127 = vmul.f32 1.0, %v10126
        %v10128 = vrcp.pop %v10066
        %v10129 = vmul.f32 1.0, %v10128
        %v10130 = vrcp.pop %v10067
        %v10131 = vmul.f32 1.0, %v10130
        %v10132 = vmul.f32 %v9908, %v10069
        %v10133 = vmul.f32 %v9909, %v10071
        %v10134 = vmul.f32 %v9910, %v10073
        %v10135 = vmul.f32 %v9911, %v10075
        %v10136 = vmul.f32 %v9912, %v10077
        %v10137 = vmul.f32 %v9913, %v10079
        %v10138 = vmul.f32 %v9914, %v10081
        %v10139 = vmul.f32 %v9915, %v10083
        %v10140 = vmul.f32 %v9916, %v10085
        %v10141 = vmul.f32 %v9917, %v10087
        %v10142 = vmul.f32 %v9918, %v10089
        %v10143 = vmul.f32 %v9919, %v10091
        %v10144 = vmul.f32 %v9920, %v10093
        %v10145 = vmul.f32 %v9921, %v10095
        %v10146 = vmul.f32 %v9922, %v10097
        %v10147 = vmul.f32 %v9923, %v10099
        %v10148 = vmul.f32 %v9924, %v10101
        %v10149 = vmul.f32 %v9925, %v10103
        %v10150 = vmul.f32 %v9926, %v10105
        %v10151 = vmul.f32 %v9927, %v10107
        %v10152 = vmul.f32 %v9928, %v10109
        %v10153 = vmul.f32 %v9929, %v10111
        %v10154 = vmul.f32 %v9930, %v10113
        %v10155 = vmul.f32 %v9931, %v10115
        %v10156 = vmul.f32 %v9932, %v10117
        %v10157 = vmul.f32 %v9933, %v10119
        %v10158 = vmul.f32 %v9934, %v10121
        %v10159 = vmul.f32 %v9935, %v10123
        %v10160 = vmul.f32 %v9936, %v10125
        %v10161 = vmul.f32 %v9937, %v10127
        %v10162 = vmul.f32 %v9938, %v10129
        %v10163 = vmul.f32 %v9939, %v10131
        %v10164 = vadd.f32 %v10132, %v2765
        %v10165 = vadd.f32 %v10133, %v2766
        %v10166 = vadd.f32 %v10134, %v2767
        %v10167 = vadd.f32 %v10135, %v2768
        %v10168 = vadd.f32 %v10136, %v2769
        %v10169 = vadd.f32 %v10137, %v2770
        %v10170 = vadd.f32 %v10138, %v2771
        %v10171 = vadd.f32 %v10139, %v2772
        %v10172 = vadd.f32 %v10140, %v2773
        %v10173 = vadd.f32 %v10141, %v2774
        %v10174 = vadd.f32 %v10142, %v2775
        %v10175 = vadd.f32 %v10143, %v2776
        %v10176 = vadd.f32 %v10144, %v2777
        %v10177 = vadd.f32 %v10145, %v2778
        %v10178 = vadd.f32 %v10146, %v2779
        %v10179 = vadd.f32 %v10147, %v2780
        %v10180 = vadd.f32 %v10148, %v2781
        %v10181 = vadd.f32 %v10149, %v2782
        %v10182 = vadd.f32 %v10150, %v2783
        %v10183 = vadd.f32 %v10151, %v2784
        %v10184 = vadd.f32 %v10152, %v2785
        %v10185 = vadd.f32 %v10153, %v2786
        %v10186 = vadd.f32 %v10154, %v2787
        %v10187 = vadd.f32 %v10155, %v2788
        %v10188 = vadd.f32 %v10156, %v2789
        %v10189 = vadd.f32 %v10157, %v2790
        %v10190 = vadd.f32 %v10158, %v2791
        %v10191 = vadd.f32 %v10159, %v2792
        %v10192 = vadd.f32 %v10160, %v2793
        %v10193 = vadd.f32 %v10161, %v2794
        %v10194 = vadd.f32 %v10162, %v2795
        %v10195 = vadd.f32 %v10163, %v2796
        %v10196 = vsel %vm1455, %v10164, 0.0
        %v10197 = vsel %vm1455, %v10165, 0.0
        %v10198 = vadd.f32 %v10196, %v10197
        %v10199 = vsel %vm1455, %v10166, 0.0
        %v10200 = vadd.f32 %v10198, %v10199
        %v10201 = vsel %vm1455, %v10167, 0.0
        %v10202 = vadd.f32 %v10200, %v10201
        %v10203 = vsel %vm1455, %v10168, 0.0
        %v10204 = vadd.f32 %v10202, %v10203
        %v10205 = vsel %vm1455, %v10169, 0.0
        %v10206 = vadd.f32 %v10204, %v10205
        %v10207 = vsel %vm1455, %v10170, 0.0
        %v10208 = vadd.f32 %v10206, %v10207
        %v10209 = vsel %vm1455, %v10171, 0.0
        %v10210 = vadd.f32 %v10208, %v10209
        %v10211 = vrot.slane %v10210, 4
        %v10212 = vadd.f32 %v10210, %v10211
        %v10213 = vrot.slane %v10212, 2
        %v10214 = vadd.f32 %v10212, %v10213
        %v10215 = vrot.slane %v10214, 1
        %v10216 = vadd.f32 %v10214, %v10215
        %v10217 = vsel %vm1455, %v10172, 0.0
        %v10218 = vsel %vm1455, %v10173, 0.0
        %v10219 = vadd.f32 %v10217, %v10218
        %v10220 = vsel %vm1455, %v10174, 0.0
        %v10221 = vadd.f32 %v10219, %v10220
        %v10222 = vsel %vm1455, %v10175, 0.0
        %v10223 = vadd.f32 %v10221, %v10222
        %v10224 = vsel %vm1455, %v10176, 0.0
        %v10225 = vadd.f32 %v10223, %v10224
        %v10226 = vsel %vm1455, %v10177, 0.0
        %v10227 = vadd.f32 %v10225, %v10226
        %v10228 = vsel %vm1455, %v10178, 0.0
        %v10229 = vadd.f32 %v10227, %v10228
        %v10230 = vsel %vm1455, %v10179, 0.0
        %v10231 = vadd.f32 %v10229, %v10230
        %v10232 = vrot.slane %v10231, 4
        %v10233 = vadd.f32 %v10231, %v10232
        %v10234 = vrot.slane %v10233, 2
        %v10235 = vadd.f32 %v10233, %v10234
        %v10236 = vrot.slane %v10235, 1
        %v10237 = vadd.f32 %v10235, %v10236
        %v10238 = vsel %vm1455, %v10180, 0.0
        %v10239 = vsel %vm1455, %v10181, 0.0
        %v10240 = vadd.f32 %v10238, %v10239
        %v10241 = vsel %vm1455, %v10182, 0.0
        %v10242 = vadd.f32 %v10240, %v10241
        %v10243 = vsel %vm1455, %v10183, 0.0
        %v10244 = vadd.f32 %v10242, %v10243
        %v10245 = vsel %vm1455, %v10184, 0.0
        %v10246 = vadd.f32 %v10244, %v10245
        %v10247 = vsel %vm1455, %v10185, 0.0
        %v10248 = vadd.f32 %v10246, %v10247
        %v10249 = vsel %vm1455, %v10186, 0.0
        %v10250 = vadd.f32 %v10248, %v10249
        %v10251 = vsel %vm1455, %v10187, 0.0
        %v10252 = vadd.f32 %v10250, %v10251
        %v10253 = vrot.slane %v10252, 4
        %v10254 = vadd.f32 %v10252, %v10253
        %v10255 = vrot.slane %v10254, 2
        %v10256 = vadd.f32 %v10254, %v10255
        %v10257 = vrot.slane %v10256, 1
        %v10258 = vadd.f32 %v10256, %v10257
        %v10259 = vsel %vm1455, %v10188, 0.0
        %v10260 = vsel %vm1455, %v10189, 0.0
        %v10261 = vadd.f32 %v10259, %v10260
        %v10262 = vsel %vm1455, %v10190, 0.0
        %v10263 = vadd.f32 %v10261, %v10262
        %v10264 = vsel %vm1455, %v10191, 0.0
        %v10265 = vadd.f32 %v10263, %v10264
        %v10266 = vsel %vm1455, %v10192, 0.0
        %v10267 = vadd.f32 %v10265, %v10266
        %v10268 = vsel %vm1455, %v10193, 0.0
        %v10269 = vadd.f32 %v10267, %v10268
        %v10270 = vsel %vm1455, %v10194, 0.0
        %v10271 = vadd.f32 %v10269, %v10270
        %v10272 = vsel %vm1455, %v10195, 0.0
        %v10273 = vadd.f32 %v10271, %v10272
        %v10274 = vrot.slane %v10273, 4
        %v10275 = vadd.f32 %v10273, %v10274
        %v10276 = vrot.slane %v10275, 2
        %v10277 = vadd.f32 %v10275, %v10276
        %v10278 = vrot.slane %v10277, 1
        %v10279 = vadd.f32 %v10277, %v10278
        %v10280 = vrcp.pop 64.0
        %v10281 = vmul.f32 %v10216, %v10280
        %v10282 = vmul.f32 %v10237, %v10280
        %v10283 = vmul.f32 %v10258, %v10280
        %v10284 = vmul.f32 %v10279, %v10280
        %v10285 = vld [vmem:[%s14] sm:$0xff]
        %v10286 = vld [vmem:[%s14 + $0x8] sm:$0xff]
        %v10287 = vld [vmem:[%s14 + $0x10] sm:$0xff]
        %v10288 = vld [vmem:[%s14 + $0x18] sm:$0xff]
        %v10289 = vld [vmem:[%s14 + $0x20] sm:$0xff]
        %v10290 = vld [vmem:[%s14 + $0x28] sm:$0xff]
        %v10291 = vld [vmem:[%s15] sm:$0x1]
        %10296 = vrot.lane.b32.xlu0 %v10281, 16
        %v10297 = vpop.permute.xlu0 %10296
        %10298 = vrot.lane.b32.xlu0 %v10282, 16
        %v10299 = vpop.permute.xlu0 %10298
        %10300 = vrot.lane.b32.xlu0 %v10283, 16
        %v10301 = vpop.permute.xlu0 %10300
        %10302 = vrot.lane.b32.xlu0 %v10284, 16
        %v10303 = vpop.permute.xlu0 %10302
        %10308 = vrot.lane.b32.xlu0 %v10282, 32
        %v10309 = vpop.permute.xlu0 %10308
        %10310 = vrot.lane.b32.xlu0 %v10283, 32
        %v10311 = vpop.permute.xlu0 %10310
        %10312 = vrot.lane.b32.xlu0 %v10284, 32
        %v10313 = vpop.permute.xlu0 %10312
        %v10317 = vsel %vm1455, 0.0, %v10297
        %v10318 = vsel %vm1455, %v10281, %v10299
        %v10319 = vsel %vm1455, %v10282, %v10301
        %v10320 = vsel %vm1455, %v10283, %v10303
        %v10321 = vsel %vm1478, %v10317, %v10309
        %v10322 = vsel %vm1478, %v10318, %v10311
        %v10323 = vsel %vm1478, %v10319, %v10313
        %v10324 = vsel %vm1478, %v10320, %v4899
        %v10326 = vlaneseq
        %v10327 = vshrl.u32 %v10326, 7
        %v10328 = vsub.s32 0, %v10327
        %v10329 = vrot.slane %v10291, %v10328
        %v10335 = vrot.slane %v10322, 7
        %vm10336 = vcmask 1041409
        %v10337 = vsel %vm10336, %v10335, %v10321
        %v10338 = vrot.slane %v10323, 6
        %vm10339 = vcmask 1042434
        %v10340 = vsel %vm10339, %v10338, %v10337
        %v10341 = vrot.slane %v10324, 5
        %vm10342 = vcmask 1043459
        %v10343 = vsel %vm10342, %v10341, %v10340
        %v10344 = vsel %vm1501, %v10343, 0
        %10346 = vmatprep.subr.mxu0 0.0
        %10347 = vmatpush1.msra.mxu0 0.0
        %10348 = vmatprep.subr.mxu0 0.0
        %10349 = vmatpush1.msra.mxu0 0.0
        %10350 = vmatprep.subr.mxu0 0.0
        %10351 = vmatpush1.msra.mxu0 0.0
        %10352 = vmatprep.subr.mxu0 0.0
        %10353 = vmatpush1.msra.mxu0 0.0
        %10354 = vmatprep.subr.mxu0 0.0
        %10355 = vmatpush1.msra.mxu0 0.0
        %10356 = vmatprep.subr.mxu0 0.0
        %10357 = vmatpush1.msra.mxu0 0.0
        %10358 = vmatprep.subr.mxu0 0.0
        %10359 = vmatpush1.msra.mxu0 0.0
        %10360 = vmatprep.subr.mxu0 0.0
        %10361 = vmatpush1.msra.mxu0 0.0
        %10362 = vmatprep.subr.mxu0 0.0
        %10363 = vmatpush1.msra.mxu0 0.0
        %10364 = vmatprep.subr.mxu0 0.0
        %10365 = vmatpush1.msra.mxu0 0.0
        %10366 = vmatprep.subr.mxu0 0.0
        %10367 = vmatpush1.msra.mxu0 %v10290
        %10368 = vmatprep.subr.mxu0 0.0
        %10369 = vmatpush1.msra.mxu0 %v10289
        %10370 = vmatprep.subr.mxu0 0.0
        %10371 = vmatpush1.msra.mxu0 %v10288
        %10372 = vmatprep.subr.mxu0 0.0
        %10373 = vmatpush1.msra.mxu0 %v10287
        %10374 = vmatprep.subr.mxu0 0.0
        %10375 = vmatpush1.msra.mxu0 %v10286
        %10376 = vmatprep.subr.mxu0 0.0
        %10377 = vmatpush1.msra.mxu0 %v10285
        %10378 = vmatprep.subr.mxu0 0.0
        %10379 = vmatpush2.msra.mxu0 0.0
        %10380 = vmatprep.subr.mxu0 0.0
        %10381 = vmatpush2.msra.mxu0 0.0
        %10382 = vmatprep.subr.mxu0 0.0
        %10383 = vmatpush2.msra.mxu0 0.0
        %10384 = vmatprep.subr.mxu0 0.0
        %10385 = vmatpush2.msra.mxu0 0.0
        %10386 = vmatprep.subr.mxu0 0.0
        %10387 = vmatpush2.msra.mxu0 0.0
        %10388 = vmatprep.subr.mxu0 0.0
        %10389 = vmatpush2.msra.mxu0 0.0
        %10390 = vmatprep.subr.mxu0 0.0
        %10391 = vmatpush2.msra.mxu0 0.0
        %10392 = vmatprep.subr.mxu0 0.0
        %10393 = vmatpush2.msra.mxu0 0.0
        %10394 = vmatprep.subr.mxu0 0.0
        %10395 = vmatpush2.msra.mxu0 0.0
        %10396 = vmatprep.subr.mxu0 0.0
        %10397 = vmatpush2.msra.mxu0 0.0
        %10398 = vmatprep.subr.mxu0 0.0
        %10399 = vmatpush2.msra.mxu0 0.0
        %10400 = vmatprep.subr.mxu0 0.0
        %10401 = vmatpush2.msra.mxu0 0.0
        %10402 = vmatprep.subr.mxu0 0.0
        %10403 = vmatpush2.msra.mxu0 0.0
        %10404 = vmatprep.subr.mxu0 0.0
        %10405 = vmatpush2.msra.mxu0 0.0
        %10406 = vmatprep.subr.mxu0 0.0
        %10407 = vmatpush2.msra.mxu0 0.0
        %10408 = vmatprep.subr.mxu0 0.0
        %10409 = vmatpush2.msra.mxu0 0.0
        %10410 = vmatprep.mubr.f32.mxu0 0.0
        %10411 = vmatmul.mubr.f32.gmra.mxu0 %v10344
        %v10412 = vpop.f32.mrf.mxu0
        %v10413 = vadd.f32 %v10329, %v10412
        %v10414 = vpop.f32.mrf.mxu0
        %10415 = vdwg.mxu0
        %v10416 = vmax.f32 %v10413, 0.0
        %v10419 = vunpack.c.l.s4 1966171168
        %v10420 = vunpack.c.0.s8 %v10419
        %v10421 = vlaneseq
        %v10422 = vshrl.u32 %v10421, 7
        %v10423 = vsub.s32 %v10420, %v10422
        %v10424 = vrot.slane %v10416, %v10423
        %v10425 = vcombine.high %v10424, %v10424
        %v10427 = vunpack.c.l.s4 1966171168
        %v10428 = vunpack.c.0.s8 %v10427
        %v10429 = vlaneseq
        %v10430 = vshrl.u32 %v10429, 7
        %v10431 = vsub.s32 %v10428, %v10430
        %v10432 = vrot.slane %v10424, %v10431
        %v10434 = vunpack.c.l.s4 1966171168
        %v10435 = vunpack.c.0.s8 %v10434
        %v10436 = vlaneseq
        %v10437 = vshrl.u32 %v10436, 7
        %v10438 = vsub.s32 %v10435, %v10437
        %v10439 = vrot.slane %v10425, %v10438
        %v10440 = vcombine.high %v10432, %v10432
        %v10441 = vcombine.high %v10439, %v10439
        %v10445 = vld [vmem:[%s16] sm:$0xff]
        %v10446 = vld [vmem:[%s16 + $0x8] sm:$0xff]
        %v10447 = vld [vmem:[%s16 + $0x10] sm:$0xff]
        %v10448 = vld [vmem:[%s16 + $0x18] sm:$0xff]
        %v10449 = vld [vmem:[%s16 + $0x20] sm:$0xff]
        %v10450 = vld [vmem:[%s16 + $0x28] sm:$0xff]
        %v10451 = vld [vmem:[%s16 + $0x30] sm:$0xff]
        %v10452 = vld [vmem:[%s16 + $0x38] sm:$0xff]
        %v10453 = vld [vmem:[%s16 + $0x40] sm:$0xff]
        %v10454 = vld [vmem:[%s16 + $0x48] sm:$0xff]
        %v10455 = vld [vmem:[%s16 + $0x50] sm:$0xff]
        %v10456 = vld [vmem:[%s16 + $0x58] sm:$0xff]
        %v10457 = vld [vmem:[%s17] sm:$0x1]
        %v10458 = vlaneseq
        %v10459 = vshrl.u32 %v10458, 7
        %v10460 = vsub.s32 0, %v10459
        %v10461 = vrot.slane %v10432, %v10460
        %v10462 = vlaneseq
        %v10463 = vshrl.u32 %v10462, 7
        %v10464 = vsub.s32 0, %v10463
        %v10465 = vrot.slane %v10439, %v10464
        %v10466 = vlaneseq
        %v10467 = vshrl.u32 %v10466, 7
        %v10468 = vsub.s32 0, %v10467
        %v10469 = vrot.slane %v10440, %v10468
        %v10470 = vlaneseq
        %v10471 = vshrl.u32 %v10470, 7
        %v10472 = vsub.s32 0, %v10471
        %v10473 = vrot.slane %v10441, %v10472
        %10474 = vrot.lane.b32.xlu0 %v10461, 32
        %v10475 = vpop.permute.xlu0 %10474
        %10476 = vrot.lane.b32.xlu0 %v10465, 32
        %v10477 = vpop.permute.xlu0 %10476
        %10478 = vrot.lane.b32.xlu0 %v10469, 32
        %v10479 = vpop.permute.xlu0 %10478
        %10480 = vrot.lane.b32.xlu0 %v10473, 32
        %v10481 = vpop.permute.xlu0 %10480
        %v10486 = vlaneseq
        %v10487 = vshrl.u32 %v10486, 7
        %v10488 = vsub.s32 0, %v10487
        %v10489 = vrot.slane 0.0, %v10488
        %10490 = vrot.lane.b32.xlu0 %v10465, 64
        %v10491 = vpop.permute.xlu0 %10490
        %10492 = vrot.lane.b32.xlu0 %v10469, 64
        %v10493 = vpop.permute.xlu0 %10492
        %10494 = vrot.lane.b32.xlu0 %v10473, 64
        %v10495 = vpop.permute.xlu0 %10494
        %10496 = vrot.lane.b32.xlu0 %v10489, 64
        %v10497 = vpop.permute.xlu0 %10496
        %v10502 = vsel %vm1478, 0.0, %v10475
        %v10503 = vsel %vm1478, %v10432, %v10477
        %v10504 = vsel %vm1478, %v10439, %v10479
        %v10505 = vsel %vm1478, %v10440, %v10481
        %v10506 = vsel %vm1527, %v10502, %v10491
        %v10507 = vsel %vm1527, %v10503, %v10493
        %v10508 = vsel %vm1527, %v10504, %v10495
        %v10509 = vsel %vm1527, %v10505, %v10497
        %v10511 = vlaneseq
        %v10512 = vshrl.u32 %v10511, 7
        %v10513 = vsub.s32 0, %v10512
        %v10514 = vrot.slane %v10457, %v10513
        %v10520 = vrot.slane %v10507, 7
        %v10521 = vsel %vm10336, %v10520, %v10506
        %v10522 = vrot.slane %v10508, 6
        %v10523 = vsel %vm10339, %v10522, %v10521
        %v10524 = vrot.slane %v10509, 5
        %v10525 = vsel %vm10342, %v10524, %v10523
        %v10526 = vsel %vm1579, %v10525, 0
        %10528 = vmatprep.subr.mxu0 0.0
        %10529 = vmatpush1.msra.mxu0 0.0
        %10530 = vmatprep.subr.mxu0 0.0
        %10531 = vmatpush1.msra.mxu0 0.0
        %10532 = vmatprep.subr.mxu0 0.0
        %10533 = vmatpush1.msra.mxu0 0.0
        %10534 = vmatprep.subr.mxu0 0.0
        %10535 = vmatpush1.msra.mxu0 0.0
        %10536 = vmatprep.subr.mxu0 0.0
        %10537 = vmatpush1.msra.mxu0 %v10456
        %10538 = vmatprep.subr.mxu0 0.0
        %10539 = vmatpush1.msra.mxu0 %v10455
        %10540 = vmatprep.subr.mxu0 0.0
        %10541 = vmatpush1.msra.mxu0 %v10454
        %10542 = vmatprep.subr.mxu0 0.0
        %10543 = vmatpush1.msra.mxu0 %v10453
        %10544 = vmatprep.subr.mxu0 0.0
        %10545 = vmatpush1.msra.mxu0 %v10452
        %10546 = vmatprep.subr.mxu0 0.0
        %10547 = vmatpush1.msra.mxu0 %v10451
        %10548 = vmatprep.subr.mxu0 0.0
        %10549 = vmatpush1.msra.mxu0 %v10450
        %10550 = vmatprep.subr.mxu0 0.0
        %10551 = vmatpush1.msra.mxu0 %v10449
        %10552 = vmatprep.subr.mxu0 0.0
        %10553 = vmatpush1.msra.mxu0 %v10448
        %10554 = vmatprep.subr.mxu0 0.0
        %10555 = vmatpush1.msra.mxu0 %v10447
        %10556 = vmatprep.subr.mxu0 0.0
        %10557 = vmatpush1.msra.mxu0 %v10446
        %10558 = vmatprep.subr.mxu0 0.0
        %10559 = vmatpush1.msra.mxu0 %v10445
        %10560 = vmatprep.subr.mxu0 0.0
        %10561 = vmatpush2.msra.mxu0 0.0
        %10562 = vmatprep.subr.mxu0 0.0
        %10563 = vmatpush2.msra.mxu0 0.0
        %10564 = vmatprep.subr.mxu0 0.0
        %10565 = vmatpush2.msra.mxu0 0.0
        %10566 = vmatprep.subr.mxu0 0.0
        %10567 = vmatpush2.msra.mxu0 0.0
        %10568 = vmatprep.subr.mxu0 0.0
        %10569 = vmatpush2.msra.mxu0 0.0
        %10570 = vmatprep.subr.mxu0 0.0
        %10571 = vmatpush2.msra.mxu0 0.0
        %10572 = vmatprep.subr.mxu0 0.0
        %10573 = vmatpush2.msra.mxu0 0.0
        %10574 = vmatprep.subr.mxu0 0.0
        %10575 = vmatpush2.msra.mxu0 0.0
        %10576 = vmatprep.subr.mxu0 0.0
        %10577 = vmatpush2.msra.mxu0 0.0
        %10578 = vmatprep.subr.mxu0 0.0
        %10579 = vmatpush2.msra.mxu0 0.0
        %10580 = vmatprep.subr.mxu0 0.0
        %10581 = vmatpush2.msra.mxu0 0.0
        %10582 = vmatprep.subr.mxu0 0.0
        %10583 = vmatpush2.msra.mxu0 0.0
        %10584 = vmatprep.subr.mxu0 0.0
        %10585 = vmatpush2.msra.mxu0 0.0
        %10586 = vmatprep.subr.mxu0 0.0
        %10587 = vmatpush2.msra.mxu0 0.0
        %10588 = vmatprep.subr.mxu0 0.0
        %10589 = vmatpush2.msra.mxu0 0.0
        %10590 = vmatprep.subr.mxu0 0.0
        %10591 = vmatpush2.msra.mxu0 0.0
        %10592 = vmatprep.mubr.f32.mxu0 0.0
        %10593 = vmatmul.mubr.f32.gmra.mxu0 %v10526
        %v10594 = vpop.f32.mrf.mxu0
        %v10595 = vadd.f32 %v10514, %v10594
        %v10596 = vpop.f32.mrf.mxu0
        %10597 = vdwg.mxu0
        %10599 = vrot.lane.b32.xlu0 %v10595, 112
        %v10600 = vpop.permute.xlu0 %10599
        %v10602 = vmax.f32 %v10595, %v10600
        %v10603 = vsub.f32 %v10595, %v10602
        %v10604 = vmul.f32 %v10603, 1.442695
        %v10605 = vpow.pop %v10604
        %10607 = vrot.lane.b32.xlu0 %v10602, 16
        %v10608 = vpop.permute.xlu0 %10607
        %v10610 = vsub.f32 %v10595, %v10608
        %v10611 = vmul.f32 %v10610, 1.442695
        %v10612 = vpow.pop %v10611
        %10614 = vrot.lane.b32.xlu0 %v10612, 112
        %v10615 = vpop.permute.xlu0 %10614
        %v10617 = vadd.f32 %v10605, %v10615
        %v10618 = vrcp.pop %v10617
        %v10619 = vmul.f32 1.0, %v10618
        %v10620 = vmul.f32 %v10605, %v10619
        %v10623 = vunpack.c.l.s4 1966171168
        %v10624 = vunpack.c.0.s8 %v10623
        %v10625 = vlaneseq
        %v10626 = vshrl.u32 %v10625, 7
        %v10627 = vsub.s32 %v10624, %v10626
        %v10628 = vrot.slane %v10620, %v10627
        %v10629 = vcombine.high %v10628, %v10628
        %v10631 = vunpack.c.l.s4 1966171168
        %v10632 = vunpack.c.0.s8 %v10631
        %v10633 = vlaneseq
        %v10634 = vshrl.u32 %v10633, 7
        %v10635 = vsub.s32 %v10632, %v10634
        %v10636 = vrot.slane %v10628, %v10635
        %v10638 = vunpack.c.l.s4 1966171168
        %v10639 = vunpack.c.0.s8 %v10638
        %v10640 = vlaneseq
        %v10641 = vshrl.u32 %v10640, 7
        %v10642 = vsub.s32 %v10639, %v10641
        %v10643 = vrot.slane %v10629, %v10642
        %v10644 = vcombine.high %v10636, %v10636
        %v10645 = vcombine.high %v10643, %v10643
        %10647 = vrot.lane.b32.xlu0 %v10619, 16
        %v10648 = vpop.permute.xlu0 %10647
        %v10650 = vmul.f32 %v10612, %v10648
        %v10653 = vunpack.c.l.s4 1966171168
        %v10654 = vunpack.c.0.s8 %v10653
        %v10655 = vlaneseq
        %v10656 = vshrl.u32 %v10655, 7
        %v10657 = vsub.s32 %v10654, %v10656
        %v10658 = vrot.slane %v10650, %v10657
        %v10659 = vcombine.high %v10658, %v10658
        %v10661 = vunpack.c.l.s4 1966171168
        %v10662 = vunpack.c.0.s8 %v10661
        %v10663 = vlaneseq
        %v10664 = vshrl.u32 %v10663, 7
        %v10665 = vsub.s32 %v10662, %v10664
        %v10666 = vrot.slane %v10658, %v10665
        %v10668 = vunpack.c.l.s4 1966171168
        %v10669 = vunpack.c.0.s8 %v10668
        %v10670 = vlaneseq
        %v10671 = vshrl.u32 %v10670, 7
        %v10672 = vsub.s32 %v10669, %v10671
        %v10673 = vrot.slane %v10659, %v10672
        %v10674 = vcombine.high %v10666, %v10666
        %v10675 = vcombine.high %v10673, %v10673
        %v10676 = vlaneseq
        %v10677 = vshrl.u32 %v10676, 7
        %v10678 = vsub.s32 0, %v10677
        %v10679 = vrot.slane %v10636, %v10678
        %v10680 = vlaneseq
        %v10681 = vshrl.u32 %v10680, 7
        %v10682 = vsub.s32 0, %v10681
        %v10683 = vrot.slane %v10643, %v10682
        %v10684 = vlaneseq
        %v10685 = vshrl.u32 %v10684, 7
        %v10686 = vsub.s32 0, %v10685
        %v10687 = vrot.slane %v10644, %v10686
        %v10688 = vlaneseq
        %v10689 = vshrl.u32 %v10688, 7
        %v10690 = vsub.s32 0, %v10689
        %v10691 = vrot.slane %v10645, %v10690
        %v10696 = vmul.f32 %v10132, %v10679
        %v10697 = vmul.f32 %v10133, %v10679
        %v10698 = vmul.f32 %v10134, %v10679
        %v10699 = vmul.f32 %v10135, %v10679
        %v10700 = vmul.f32 %v10136, %v10679
        %v10701 = vmul.f32 %v10137, %v10679
        %v10702 = vmul.f32 %v10138, %v10679
        %v10703 = vmul.f32 %v10139, %v10679
        %v10704 = vmul.f32 %v10140, %v10683
        %v10705 = vmul.f32 %v10141, %v10683
        %v10706 = vmul.f32 %v10142, %v10683
        %v10707 = vmul.f32 %v10143, %v10683
        %v10708 = vmul.f32 %v10144, %v10683
        %v10709 = vmul.f32 %v10145, %v10683
        %v10710 = vmul.f32 %v10146, %v10683
        %v10711 = vmul.f32 %v10147, %v10683
        %v10712 = vmul.f32 %v10148, %v10687
        %v10713 = vmul.f32 %v10149, %v10687
        %v10714 = vmul.f32 %v10150, %v10687
        %v10715 = vmul.f32 %v10151, %v10687
        %v10716 = vmul.f32 %v10152, %v10687
        %v10717 = vmul.f32 %v10153, %v10687
        %v10718 = vmul.f32 %v10154, %v10687
        %v10719 = vmul.f32 %v10155, %v10687
        %v10720 = vmul.f32 %v10156, %v10691
        %v10721 = vmul.f32 %v10157, %v10691
        %v10722 = vmul.f32 %v10158, %v10691
        %v10723 = vmul.f32 %v10159, %v10691
        %v10724 = vmul.f32 %v10160, %v10691
        %v10725 = vmul.f32 %v10161, %v10691
        %v10726 = vmul.f32 %v10162, %v10691
        %v10727 = vmul.f32 %v10163, %v10691
        %v10728 = vlaneseq
        %v10729 = vshrl.u32 %v10728, 7
        %v10730 = vsub.s32 0, %v10729
        %v10731 = vrot.slane %v10666, %v10730
        %v10732 = vlaneseq
        %v10733 = vshrl.u32 %v10732, 7
        %v10734 = vsub.s32 0, %v10733
        %v10735 = vrot.slane %v10673, %v10734
        %v10736 = vlaneseq
        %v10737 = vshrl.u32 %v10736, 7
        %v10738 = vsub.s32 0, %v10737
        %v10739 = vrot.slane %v10674, %v10738
        %v10740 = vlaneseq
        %v10741 = vshrl.u32 %v10740, 7
        %v10742 = vsub.s32 0, %v10741
        %v10743 = vrot.slane %v10675, %v10742
        %10744 = vrot.lane.b32.xlu0 %v10731, 112
        %v10745 = vpop.permute.xlu0 %10744
        %10746 = vrot.lane.b32.xlu0 %v10735, 112
        %v10747 = vpop.permute.xlu0 %10746
        %10748 = vrot.lane.b32.xlu0 %v10739, 112
        %v10749 = vpop.permute.xlu0 %10748
        %10750 = vrot.lane.b32.xlu0 %v10743, 112
        %v10751 = vpop.permute.xlu0 %10750
        %v10756 = vmul.f32 %v2765, %v10745
        %v10757 = vmul.f32 %v2766, %v10745
        %v10758 = vmul.f32 %v2767, %v10745
        %v10759 = vmul.f32 %v2768, %v10745
        %v10760 = vmul.f32 %v2769, %v10745
        %v10761 = vmul.f32 %v2770, %v10745
        %v10762 = vmul.f32 %v2771, %v10745
        %v10763 = vmul.f32 %v2772, %v10745
        %v10764 = vmul.f32 %v2773, %v10747
        %v10765 = vmul.f32 %v2774, %v10747
        %v10766 = vmul.f32 %v2775, %v10747
        %v10767 = vmul.f32 %v2776, %v10747
        %v10768 = vmul.f32 %v2777, %v10747
        %v10769 = vmul.f32 %v2778, %v10747
        %v10770 = vmul.f32 %v2779, %v10747
        %v10771 = vmul.f32 %v2780, %v10747
        %v10772 = vmul.f32 %v2781, %v10749
        %v10773 = vmul.f32 %v2782, %v10749
        %v10774 = vmul.f32 %v2783, %v10749
        %v10775 = vmul.f32 %v2784, %v10749
        %v10776 = vmul.f32 %v2785, %v10749
        %v10777 = vmul.f32 %v2786, %v10749
        %v10778 = vmul.f32 %v2787, %v10749
        %v10779 = vmul.f32 %v2788, %v10749
        %v10780 = vmul.f32 %v2789, %v10751
        %v10781 = vmul.f32 %v2790, %v10751
        %v10782 = vmul.f32 %v2791, %v10751
        %v10783 = vmul.f32 %v2792, %v10751
        %v10784 = vmul.f32 %v2793, %v10751
        %v10785 = vmul.f32 %v2794, %v10751
        %v10786 = vmul.f32 %v2795, %v10751
        %v10787 = vmul.f32 %v2796, %v10751
        %v10788 = vadd.f32 %v10696, %v10756
        %v10789 = vadd.f32 %v10697, %v10757
        %v10790 = vadd.f32 %v10698, %v10758
        %v10791 = vadd.f32 %v10699, %v10759
        %v10792 = vadd.f32 %v10700, %v10760
        %v10793 = vadd.f32 %v10701, %v10761
        %v10794 = vadd.f32 %v10702, %v10762
        %v10795 = vadd.f32 %v10703, %v10763
        %v10796 = vadd.f32 %v10704, %v10764
        %v10797 = vadd.f32 %v10705, %v10765
        %v10798 = vadd.f32 %v10706, %v10766
        %v10799 = vadd.f32 %v10707, %v10767
        %v10800 = vadd.f32 %v10708, %v10768
        %v10801 = vadd.f32 %v10709, %v10769
        %v10802 = vadd.f32 %v10710, %v10770
        %v10803 = vadd.f32 %v10711, %v10771
        %v10804 = vadd.f32 %v10712, %v10772
        %v10805 = vadd.f32 %v10713, %v10773
        %v10806 = vadd.f32 %v10714, %v10774
        %v10807 = vadd.f32 %v10715, %v10775
        %v10808 = vadd.f32 %v10716, %v10776
        %v10809 = vadd.f32 %v10717, %v10777
        %v10810 = vadd.f32 %v10718, %v10778
        %v10811 = vadd.f32 %v10719, %v10779
        %v10812 = vadd.f32 %v10720, %v10780
        %v10813 = vadd.f32 %v10721, %v10781
        %v10814 = vadd.f32 %v10722, %v10782
        %v10815 = vadd.f32 %v10723, %v10783
        %v10816 = vadd.f32 %v10724, %v10784
        %v10817 = vadd.f32 %v10725, %v10785
        %v10818 = vadd.f32 %v10726, %v10786
        %v10819 = vadd.f32 %v10727, %v10787
        %10820 = vst.msk [vmem:[%s568] sm:$0xff] %vm1455, %v10788
        %10821 = vst.msk [vmem:[%s568 + $0x8] sm:$0xff] %vm1455, %v10789
        %10822 = vst.msk [vmem:[%s568 + $0x10] sm:$0xff] %vm1455, %v10790
        %10823 = vst.msk [vmem:[%s568 + $0x18] sm:$0xff] %vm1455, %v10791
        %10824 = vst.msk [vmem:[%s568 + $0x20] sm:$0xff] %vm1455, %v10792
        %10825 = vst.msk [vmem:[%s568 + $0x28] sm:$0xff] %vm1455, %v10793
        %10826 = vst.msk [vmem:[%s568 + $0x30] sm:$0xff] %vm1455, %v10794
        %10827 = vst.msk [vmem:[%s568 + $0x38] sm:$0xff] %vm1455, %v10795
        %10828 = vst.msk [vmem:[%s568 + $0x40] sm:$0xff] %vm1455, %v10796
        %10829 = vst.msk [vmem:[%s568 + $0x48] sm:$0xff] %vm1455, %v10797
        %10830 = vst.msk [vmem:[%s568 + $0x50] sm:$0xff] %vm1455, %v10798
        %10831 = vst.msk [vmem:[%s568 + $0x58] sm:$0xff] %vm1455, %v10799
        %10832 = vst.msk [vmem:[%s568 + $0x60] sm:$0xff] %vm1455, %v10800
        %10833 = vst.msk [vmem:[%s568 + $0x68] sm:$0xff] %vm1455, %v10801
        %10834 = vst.msk [vmem:[%s568 + $0x70] sm:$0xff] %vm1455, %v10802
        %10835 = vst.msk [vmem:[%s568 + $0x78] sm:$0xff] %vm1455, %v10803
        %10836 = vst.msk [vmem:[%s568 + $0x80] sm:$0xff] %vm1455, %v10804
        %10837 = vst.msk [vmem:[%s568 + $0x88] sm:$0xff] %vm1455, %v10805
        %10838 = vst.msk [vmem:[%s568 + $0x90] sm:$0xff] %vm1455, %v10806
        %10839 = vst.msk [vmem:[%s568 + $0x98] sm:$0xff] %vm1455, %v10807
        %10840 = vst.msk [vmem:[%s568 + $0xa0] sm:$0xff] %vm1455, %v10808
        %10841 = vst.msk [vmem:[%s568 + $0xa8] sm:$0xff] %vm1455, %v10809
        %10842 = vst.msk [vmem:[%s568 + $0xb0] sm:$0xff] %vm1455, %v10810
        %10843 = vst.msk [vmem:[%s568 + $0xb8] sm:$0xff] %vm1455, %v10811
        %10844 = vst.msk [vmem:[%s568 + $0xc0] sm:$0xff] %vm1455, %v10812
        %10845 = vst.msk [vmem:[%s568 + $0xc8] sm:$0xff] %vm1455, %v10813
        %10846 = vst.msk [vmem:[%s568 + $0xd0] sm:$0xff] %vm1455, %v10814
        %10847 = vst.msk [vmem:[%s568 + $0xd8] sm:$0xff] %vm1455, %v10815
        %10848 = vst.msk [vmem:[%s568 + $0xe0] sm:$0xff] %vm1455, %v10816
        %10849 = vst.msk [vmem:[%s568 + $0xe8] sm:$0xff] %vm1455, %v10817
        %10850 = vst.msk [vmem:[%s568 + $0xf0] sm:$0xff] %vm1455, %v10818
        %10851 = vst.msk [vmem:[%s568 + $0xf8] sm:$0xff] %vm1455, %v10819
        %s10852 = sand.u32 %s423, 1
        %s10853 = scalar_lea.sflag [#allocation3], %s10852
        %s10854 = sand.u32 %s423, 1
        %s10855 = smul.addr %s10854, 256
        %s10856 = scalar_lea.vmem [#allocation2], %s10855
        // Predicated region
        $region93: #{tpu_custom_call.1} parent=91 // pred_check
          %p10857 = pneg %p433
        $region94: #{tpu_custom_call.1} parent=91 // pred_check_branch
          %10859 = sbr.rel (%p10857) target = $region96
        $region95: #{tpu_custom_call.1} parent=91 // pred_region
          %s10861 = ssub.s32 4096, 4096
          %10862 = vsyncadd %s10853, %s10861
          %s10863 = smul.addr %s32, 32
          %s10864 = smul.addr %s10863, 128
          %s10865 = scalar_lea.hbm %s18, %s10864
          %s10866 = sshll.u32 %s10856, 4
          %s10867 = int_to_ptr.vmem [resolvable:$true] %s10866
          %10872 = dma.vmem_to_hbm [thread:$0]  %s10867, 4096, %s10865, %s10853, 128, 128, 8
        $region96: #{tpu_custom_call.1} parent=91 // pred_fallthru
          _
      $region92: #{tpu_custom_call.1} parent=5 // pred_fallthru
        _
      %p10873 = scmp.le.s32.totalorder 2, %s27
      // Predicated region
      $region97: #{tpu_custom_call.1} parent=5 // pred_check
        %p10874 = pneg %p10873
      $region98: #{tpu_custom_call.1} parent=5 // pred_check_branch
        %10876 = sbr.rel (%p10874) target = $region100
      $region99: #{tpu_custom_call.1} parent=5 // pred_region
        %s10877 = ssub.s32 %s27, 2
        // Predicated region
        $region101: #{tpu_custom_call.1} parent=99 // pred_check
          %p10878 = pneg %p439
        $region102: #{tpu_custom_call.1} parent=99 // pred_check_branch
          %10880 = sbr.rel (%p10878) target = $region104
        $region103: #{tpu_custom_call.1} parent=99 // pred_region
          %s10881 = sand.u32 %s424, 1
          %s10882 = scalar_lea.sflag [#allocation3], %s10881
          %s10883 = sand.u32 %s424, 1
          %s10884 = smul.addr %s10883, 256
          %s10885 = scalar_lea.vmem [#allocation2], %s10884
          %10886 = dma.done %s10882, 4096
        $region104: #{tpu_custom_call.1} parent=99 // pred_fallthru
          _
      $region100: #{tpu_custom_call.1} parent=5 // pred_fallthru
        _
    $region6: #{tpu_custom_call.1} parent=1 // loop_footer
      %s31 = sadd.s32 1, %s27
    $region7: #{tpu_custom_call.1} parent=1 // loop_footer_branch
      %26 = sbr.rel target = $region3
    $region8: #{tpu_custom_call.1} parent=1 // loop_exit
      _
    %10887 = vsyncpa [#allocation3], 1
    %s10888 = scalar_lea.sflag [#allocation3], 1
    %10889 = vsyncpa %s10888, 1

</llo_original>
